<compile_context>
chip_gen: v7x
topology: tpu7x:2x2x1
jax: 0.10.0
libtpu: 0.0.40
codegen_flags: <defaults>
</compile_context>

<pallas_src>
import math

import numpy as np
import jax
import jax.numpy as jnp
from jax.experimental import pallas as pl
from jax.experimental.pallas import tpu as pltpu


CFG = dict(
    transformer_dim=64,
    emo_gru_hidden=32,
    emo_gru_layers=1,
    num_emotions=4,
    num_person=3,
    transformer_heads=2,
    transformer_layers=2,
    dropout=0.1,
    bs_dim=52,
    max_seq_len=64,
    period=4,
    frame_len=32,      # audio samples per frame for the stand-in encoder
    use_prosody=False,
)

_VMEM_SPEC = pl.BlockSpec(memory_space=pltpu.MemorySpace.VMEM)


# ---------------------------------------------------------------------------
# Pallas kernels (all full-slab / grid-less: launch overhead dominated regime)
# ---------------------------------------------------------------------------

def pallas_linear(x, w, b, activation=None):
    """y = act(x @ w + b).  x: (M, K), w: (K, N), b: (N,).  Single full-slab call."""
    M, K = x.shape
    N = w.shape[1]

    def kernel(x_ref, w_ref, b_ref, o_ref):
        acc = jnp.dot(x_ref[...], w_ref[...],
                      preferred_element_type=jnp.float32) + b_ref[...]
        if activation == "relu":
            acc = jnp.maximum(acc, 0.0)
        o_ref[...] = acc.astype(o_ref.dtype)

    return pl.pallas_call(
        kernel,
        out_shape=jax.ShapeDtypeStruct((M, N), x.dtype),
        in_specs=[_VMEM_SPEC] * 3,
        out_specs=_VMEM_SPEC,
    )(x, w, b.reshape(1, N))


def pallas_linear_add_ln(x, w, b, res, lw, lb, eps=1e-5):
    """out = LayerNorm(res + (x @ w + b)).  Fuses projection + residual + LN."""
    M, K = x.shape
    N = w.shape[1]

    def kernel(x_ref, w_ref, b_ref, r_ref, lw_ref, lb_ref, o_ref):
        y = jnp.dot(x_ref[...], w_ref[...],
                    preferred_element_type=jnp.float32) + b_ref[...]
        v = y + r_ref[...].astype(jnp.float32)
        mu = jnp.mean(v, axis=-1, keepdims=True)
        var = jnp.mean((v - mu) ** 2, axis=-1, keepdims=True)
        o_ref[...] = (((v - mu) * jax.lax.rsqrt(var + eps)) * lw_ref[...]
                      + lb_ref[...]).astype(o_ref.dtype)

    return pl.pallas_call(
        kernel,
        out_shape=jax.ShapeDtypeStruct((M, N), x.dtype),
        in_specs=[_VMEM_SPEC] * 6,
        out_specs=_VMEM_SPEC,
    )(x, w, b.reshape(1, N), res, lw.reshape(1, N), lb.reshape(1, N))


def pallas_encoder(frames, p_ce, p_ee, p_cp, p_ep, wih_cat, bih_cat):
    """Fused stand-in encoders + projections + layer-0 GRU input projection.

    frames: (M, FL).  Returns cfeat (M, D) and gi0 (M, 6H) where
      cfeat = (frames @ Wce + bce) @ Wcp + bcp
      efeat = relu((frames @ Wee + bee) @ Wep + bep)
      gi0   = efeat @ Wih_cat + bih_cat        (GRU input proj, fwd|bwd gates)
    """
    M = frames.shape[0]
    D = p_cp["w"].shape[1]
    GI = wih_cat.shape[1]

    def kernel(f_ref, wce, bce, wee, bee, wcp, bcp, wep, bep, wgi, bgi,
               cfeat_ref, gi_ref):
        f = f_ref[...]
        crepr = jnp.dot(f, wce[...], preferred_element_type=jnp.float32) + bce[...]
        erepr = jnp.dot(f, wee[...], preferred_element_type=jnp.float32) + bee[...]
        cfeat_ref[...] = (jnp.dot(crepr, wcp[...],
                                  preferred_element_type=jnp.float32)
                          + bcp[...]).astype(cfeat_ref.dtype)
        efeat = jnp.maximum(
            jnp.dot(erepr, wep[...], preferred_element_type=jnp.float32)
            + bep[...], 0.0)
        gi_ref[...] = (jnp.dot(efeat, wgi[...],
                               preferred_element_type=jnp.float32)
                       + bgi[...]).astype(gi_ref.dtype)

    return pl.pallas_call(
        kernel,
        out_shape=(jax.ShapeDtypeStruct((M, D), frames.dtype),
                   jax.ShapeDtypeStruct((M, GI), frames.dtype)),
        in_specs=[_VMEM_SPEC] * 11,
        out_specs=[_VMEM_SPEC] * 2,
    )(frames,
      p_ce["w"], p_ce["b"].reshape(1, -1),
      p_ee["w"], p_ee["b"].reshape(1, -1),
      p_cp["w"], p_cp["b"].reshape(1, -1),
      p_ep["w"], p_ep["b"].reshape(1, -1),
      wih_cat, bih_cat.reshape(1, -1))


def pallas_film_mem(e2d, c2d, p_gamma, p_beta, p_mem):
    """Fused FiLM (gamma/beta linears + modulation) and memory projection."""
    M = e2d.shape[0]
    D = p_gamma["w"].shape[1]
    Dm = p_mem["w"].shape[1]

    def kernel(e_ref, c_ref, wg, bg, wb, bb, wm, bm, mod_ref, mem_ref):
        e = e_ref[...]
        gamma = jnp.dot(e, wg[...], preferred_element_type=jnp.float32) + bg[...]
        beta = jnp.dot(e, wb[...], preferred_element_type=jnp.float32) + bb[...]
        mod_ref[...] = (gamma * c_ref[...].astype(jnp.float32)
                        + beta).astype(mod_ref.dtype)
        mem_ref[...] = (jnp.dot(e, wm[...], preferred_element_type=jnp.float32)
                        + bm[...]).astype(mem_ref.dtype)

    return pl.pallas_call(
        kernel,
        out_shape=(jax.ShapeDtypeStruct((M, D), e2d.dtype),
                   jax.ShapeDtypeStruct((M, Dm), e2d.dtype)),
        in_specs=[_VMEM_SPEC] * 8,
        out_specs=[_VMEM_SPEC] * 2,
    )(e2d, c2d,
      p_gamma["w"], p_gamma["b"].reshape(1, -1),
      p_beta["w"], p_beta["b"].reshape(1, -1),
      p_mem["w"], p_mem["b"].reshape(1, -1))


def pallas_attention(q, k, v, mask_add, scale):
    """softmax(q k^T * scale + mask) v, batched over all (batch*head) at once."""
    BH, Tq, hd = q.shape
    Tk = k.shape[1]

    def kernel(q_ref, k_ref, v_ref, m_ref, o_ref):
        s = jnp.einsum("bqd,bkd->bqk", q_ref[...], k_ref[...],
                       preferred_element_type=jnp.float32)
        s = s * scale + m_ref[...]
        s = s - jnp.max(s, axis=-1, keepdims=True)
        p = jnp.exp(s)
        denom = jnp.sum(p, axis=-1, keepdims=True)
        p = p * pl.reciprocal(denom, approx=True)
        o_ref[...] = jnp.einsum("bqk,bkd->bqd", p, v_ref[...],
                                preferred_element_type=jnp.float32
                                ).astype(o_ref.dtype)

    return pl.pallas_call(
        kernel,
        out_shape=jax.ShapeDtypeStruct((BH, Tq, hd), q.dtype),
        in_specs=[_VMEM_SPEC] * 4,
        out_specs=_VMEM_SPEC,
    )(q, k, v, mask_add)


def pallas_gru_layer(gi_f, gi_b, layer, H):
    """Bidirectional GRU recurrence (both directions, one launch).

    gi_f / gi_b: (T, B, 3H) time-major, pre-computed input projections
    (gate order r,z,n as in PyTorch).  Only h_prev @ W_hh stays in the loop.
    Returns (out_fwd, out_bwd), each (T, B, H), time-aligned.
    """
    T, B, _ = gi_f.shape

    def kernel(gif_ref, gib_ref, whf_ref, whb_ref, bhf_ref, bhb_ref,
               of_ref, ob_ref):
        whf = whf_ref[...]
        whb = whb_ref[...]
        bhf = bhf_ref[...]
        bhb = bhb_ref[...]
        hf = jnp.zeros((B, H), jnp.float32)
        hb = jnp.zeros((B, H), jnp.float32)
        # Static unroll over the short fixed T: gives the scheduler full
        # visibility so the two independent recurrent matmuls, the EUP
        # sigmoid/tanh work and the per-step stores overlap.
        for s in range(T):
            tb = T - 1 - s
            gif = gif_ref[s]
            gib = gib_ref[tb]
            ghf = jnp.dot(hf, whf, preferred_element_type=jnp.float32) + bhf
            ghb = jnp.dot(hb, whb, preferred_element_type=jnp.float32) + bhb
            rf = jax.nn.sigmoid(gif[:, 0:H] + ghf[:, 0:H])
            zf = jax.nn.sigmoid(gif[:, H:2 * H] + ghf[:, H:2 * H])
            nf = jnp.tanh(gif[:, 2 * H:3 * H] + rf * ghf[:, 2 * H:3 * H])
            hf = (1.0 - zf) * nf + zf * hf
            rb = jax.nn.sigmoid(gib[:, 0:H] + ghb[:, 0:H])
            zb = jax.nn.sigmoid(gib[:, H:2 * H] + ghb[:, H:2 * H])
            nb = jnp.tanh(gib[:, 2 * H:3 * H] + rb * ghb[:, 2 * H:3 * H])
            hb = (1.0 - zb) * nb + zb * hb
            of_ref[s] = hf.astype(of_ref.dtype)
            ob_ref[tb] = hb.astype(ob_ref.dtype)

    return pl.pallas_call(
        kernel,
        out_shape=(jax.ShapeDtypeStruct((T, B, H), gi_f.dtype),
                   jax.ShapeDtypeStruct((T, B, H), gi_f.dtype)),
        in_specs=[_VMEM_SPEC] * 6,
        out_specs=[_VMEM_SPEC] * 2,
    )(gi_f, gi_b, layer["whh_f"], layer["whh_b"],
      layer["bhh_f"].reshape(1, -1), layer["bhh_b"].reshape(1, -1))


# ---------------------------------------------------------------------------
# Model glue (plain JAX around the Pallas kernels)
# ---------------------------------------------------------------------------

def bigru(gi0_2d, gru_params, H, B, T):
    """Bidirectional (possibly multi-layer) GRU.

    gi0_2d: (B*T, 6H) batch-major input projection for layer 0 (produced by
    the fused encoder kernel).  Returns (B, T, 2H).
    """
    gi = gi0_2d.reshape(B, T, 6 * H).transpose(1, 0, 2)       # (T, B, 6H)
    out = None
    for li, layer in enumerate(gru_params):
        if li > 0:
            gi2d = pallas_linear(out.reshape(T * B, 2 * H),
                                 layer["wih_cat"], layer["bih_cat"])
            gi = gi2d.reshape(T, B, 6 * H)
        of, ob = pallas_gru_layer(gi[..., :3 * H], gi[..., 3 * H:], layer, H)
        out = jnp.concatenate([of, ob], axis=-1)               # (T, B, 2H)
    return out.transpose(1, 0, 2)                              # (B, T, 2H)


def decoder_layer(x2d, mem2d, tgt_bh, mem_bh, p, nhead, B, T):
    """PyTorch TransformerDecoderLayer (post-LN, ReLU FFN), eval mode."""
    d = x2d.shape[1]
    hd = d // nhead
    scale = 1.0 / math.sqrt(hd)

    def split_heads(t2d):
        return (t2d.reshape(B, T, nhead, hd)
                .transpose(0, 2, 1, 3).reshape(B * nhead, T, hd))

    def merge_heads(o):
        return (o.reshape(B, nhead, T, hd)
                .transpose(0, 2, 1, 3).reshape(B * T, d))

    # self-attention (fused QKV projection)
    qkv = pallas_linear(x2d, p["self_attn"]["qkv"]["w"], p["self_attn"]["qkv"]["b"])
    q, k, v = jnp.split(qkv, 3, axis=-1)
    o = pallas_attention(split_heads(q), split_heads(k), split_heads(v),
                         tgt_bh, scale)
    x2d = pallas_linear_add_ln(merge_heads(o),
                               p["self_attn"]["o"]["w"], p["self_attn"]["o"]["b"],
                               x2d, p["ln1"]["w"], p["ln1"]["b"])

    # cross-attention (fused KV projection of the memory)
    q = pallas_linear(x2d, p["cross_attn"]["q"]["w"], p["cross_attn"]["q"]["b"])
    kv = pallas_linear(mem2d, p["cross_attn"]["kv"]["w"], p["cross_attn"]["kv"]["b"])
    k, v = jnp.split(kv, 2, axis=-1)
    o = pallas_attention(split_heads(q), split_heads(k), split_heads(v),
                         mem_bh, scale)
    x2d = pallas_linear_add_ln(merge_heads(o),
                               p["cross_attn"]["o"]["w"], p["cross_attn"]["o"]["b"],
                               x2d, p["ln2"]["w"], p["ln2"]["b"])

    # feed-forward
    h = pallas_linear(x2d, p["ff1"]["w"], p["ff1"]["b"], activation="relu")
    x2d = pallas_linear_add_ln(h, p["ff2"]["w"], p["ff2"]["b"],
                               x2d, p["ln3"]["w"], p["ln3"]["b"])
    return x2d


def _get_slopes(n):
    def pow2(m):
        start = 2 ** (-(2 ** -(math.log2(m) - 3)))
        return [start * (start ** i) for i in range(m)]
    if math.log2(n).is_integer():
        return pow2(n)
    closest = 2 ** math.floor(math.log2(n))
    return pow2(closest) + _get_slopes(2 * closest)[0::2][: n - closest]


def init_biased_mask(n_head, max_seq_len, period):
    slopes = np.array(_get_slopes(n_head), dtype=np.float32)
    bias = np.arange(0, max_seq_len, period, dtype=np.int64)
    bias = np.repeat(bias[:, None], period, axis=1).reshape(-1) // period
    bias = (-bias[::-1]).astype(np.float32)
    alibi = np.zeros((max_seq_len, max_seq_len), dtype=np.float32)
    for i in range(max_seq_len):
        alibi[i, : i + 1] = bias[len(bias) - (i + 1):]
    alibi = slopes[:, None, None] * alibi[None]
    causal = np.triu(np.ones((max_seq_len, max_seq_len), dtype=np.float32)).T
    causal = np.where(causal == 1, 0.0, -np.inf).astype(np.float32)
    return jnp.asarray(causal[None] + alibi)                 # (n_head, S, S)


def init_params(key, cfg):
    D = cfg["transformer_dim"]
    H = cfg["emo_gru_hidden"]
    Ddec = D + 64
    keys = iter(jax.random.split(key, 256))

    def lin(din, dout):
        return {"w": jax.random.normal(next(keys), (din, dout), jnp.float32) * 0.02,
                "b": jax.random.normal(next(keys), (dout,), jnp.float32) * 0.02}

    def ln(d):
        return {"w": jnp.ones((d,), jnp.float32), "b": jnp.zeros((d,), jnp.float32)}

    p = {
        "content_enc": lin(cfg["frame_len"], 1024),
        "emo_enc": lin(cfg["frame_len"], 1024),
        "extractor_proj": lin(1024, D),
        "audio_feature_map_emo": lin(1024, D),
        "film_gamma": lin(2 * H, D),
        "film_beta": lin(2 * H, D),
        "obj_vector_level": jax.random.normal(next(keys), (cfg["num_emotions"], 32), jnp.float32) * 0.02,
        "obj_vector_person": jax.random.normal(next(keys), (cfg["num_person"], 32), jnp.float32) * 0.02,
        "emo_memory_proj": lin(2 * H, Ddec),
        "bs_map_r": lin(Ddec, cfg["bs_dim"]),
        "emotion_cls": lin(2 * H, cfg["num_emotions"]),
    }

    gru = []
    din = D
    for _ in range(cfg["emo_gru_layers"]):
        wih_f = jax.random.normal(next(keys), (din, 3 * H), jnp.float32) * 0.02
        wih_b = jax.random.normal(next(keys), (din, 3 * H), jnp.float32) * 0.02
        gru.append({
            "wih_cat": jnp.concatenate([wih_f, wih_b], axis=1),   # (din, 6H)
            "bih_cat": jnp.zeros((6 * H,), jnp.float32),
            "whh_f": jax.random.normal(next(keys), (H, 3 * H), jnp.float32) * 0.02,
            "whh_b": jax.random.normal(next(keys), (H, 3 * H), jnp.float32) * 0.02,
            "bhh_f": jnp.zeros((3 * H,), jnp.float32),
            "bhh_b": jnp.zeros((3 * H,), jnp.float32),
        })
        din = 2 * H
    p["gru"] = gru

    dec = []
    for _ in range(cfg["transformer_layers"]):
        dec.append({
            "self_attn": {"qkv": lin(Ddec, 3 * Ddec), "o": lin(Ddec, Ddec)},
            "cross_attn": {"q": lin(Ddec, Ddec), "kv": lin(Ddec, 2 * Ddec),
                           "o": lin(Ddec, Ddec)},
            "ff1": lin(Ddec, 4 * Ddec),
            "ff2": lin(4 * Ddec, Ddec),
            "ln1": ln(Ddec), "ln2": ln(Ddec), "ln3": ln(Ddec),
        })
    p["decoder"] = dec
    return p


def forward(params, biased_mask, audio, level, person):
    if audio.ndim == 4:
        audio = audio[:, 0, 0, :]
    elif audio.ndim == 3:
        audio = audio[:, 0, :]
    elif audio.ndim != 2:
        raise ValueError(f"Unsupported audio shape: {audio.shape}")

    B, L = audio.shape
    D = CFG["transformer_dim"]
    H = CFG["emo_gru_hidden"]
    Ddec = D + 64
    nhead = CFG["transformer_heads"]
    FL = CFG["frame_len"]
    T = L // FL

    # Wav2Vec2FeatureExtractor zero-mean / unit-variance normalization.
    # Content and emotion extractors apply the identical normalization to the
    # same audio, so compute it once.
    mu = jnp.mean(audio, axis=1, keepdims=True)
    var = jnp.var(audio, axis=1, keepdims=True)
    normed = (audio - mu) / jnp.sqrt(var + 1e-7)
    frames = normed[:, : T * FL].reshape(B * T, FL)

    # Fused: content enc + emo enc + both 1024->D projections + layer-0 GRU
    # input projection (hoisted out of the recurrent loop).
    gp0 = params["gru"][0]
    cfeat2d, gi0 = pallas_encoder(
        frames, params["content_enc"], params["emo_enc"],
        params["extractor_proj"], params["audio_feature_map_emo"],
        gp0["wih_cat"], gp0["bih_cat"])

    efeat_bi = bigru(gi0, params["gru"], H, B, T)              # (B, T, 2H)
    efeat_bi_2d = efeat_bi.reshape(B * T, 2 * H)

    # Fused FiLM (gamma/beta linears + modulation) + emo_memory_proj.
    modfeat2d, mem2d = pallas_film_mem(efeat_bi_2d, cfeat2d,
                                       params["film_gamma"],
                                       params["film_beta"],
                                       params["emo_memory_proj"])
    modfeat = modfeat2d.reshape(B, T, D)

    lvl = jnp.take(params["obj_vector_level"], level, axis=0)
    prs = jnp.take(params["obj_vector_person"], person, axis=0)
    lvl = jnp.broadcast_to(lvl[:, None, :], (B, T, 32))
    prs = jnp.broadcast_to(prs[:, None, :], (B, T, 32))
    x = jnp.concatenate([modfeat, lvl, prs], axis=-1)          # (B, T, Ddec)
    # dropout: eval-mode identity

    tgt = biased_mask[:, :T, :T]                               # (nhead, T, T)
    tgt_bh = jnp.broadcast_to(tgt[None], (B, nhead, T, T)).reshape(B * nhead, T, T)
    eye = jnp.eye(T, dtype=bool)
    mem_mask = jnp.where(eye, 0.0, -jnp.inf).astype(jnp.float32)   # enc_dec_mask
    mem_bh = jnp.broadcast_to(mem_mask[None], (B * nhead, T, T))

    d2d = x.reshape(B * T, Ddec)
    for layer_p in params["decoder"]:
        d2d = decoder_layer(d2d, mem2d, tgt_bh, mem_bh, layer_p, nhead, B, T)

    bs = pallas_linear(d2d, params["bs_map_r"]["w"],
                       params["bs_map_r"]["b"]).reshape(B, T, CFG["bs_dim"])
    pooled = jnp.mean(efeat_bi, axis=1)                        # (B, 2H)
    cls_logits = pallas_linear(pooled, params["emotion_cls"]["w"],
                               params["emotion_cls"]["b"])
    return bs, cls_logits


if __name__ == "__main__":
    key = jax.random.PRNGKey(0)
    pkey, akey = jax.random.split(key)

    params = init_params(pkey, CFG)
    biased_mask = init_biased_mask(CFG["transformer_heads"], CFG["max_seq_len"], CFG["period"])

    B = 2
    T = 8
    L = T * CFG["frame_len"]
    audio = jax.random.normal(akey, (B, 1, L), jnp.float32)    # (B, 1, L) -> squeezed like torch
    level = jnp.array([0, 2], dtype=jnp.int32)
    person = jnp.array([1, 0], dtype=jnp.int32)

    fwd = jax.jit(forward)
    bs, cls_logits = fwd(params, biased_mask, audio, level, person)
    jax.block_until_ready((bs, cls_logits))

    assert bs.shape == (B, T, CFG["bs_dim"])
    assert cls_logits.shape == (B, CFG["num_emotions"])
    assert bool(jnp.all(jnp.isfinite(bs))) and bool(jnp.all(jnp.isfinite(cls_logits)))
    print("KERNEL_OK")
</pallas_src>

<mosaic_0001>
module attributes {stable_mosaic.version = 11 : i64} {
  func.func @kernel(%arg0: memref<16x32xf32, #tpu.memory_space<vmem>>, %arg1: memref<32x1024xf32, #tpu.memory_space<vmem>>, %arg2: memref<1x1024xf32, #tpu.memory_space<vmem>>, %arg3: memref<32x1024xf32, #tpu.memory_space<vmem>>, %arg4: memref<1x1024xf32, #tpu.memory_space<vmem>>, %arg5: memref<1024x64xf32, #tpu.memory_space<vmem>>, %arg6: memref<1x64xf32, #tpu.memory_space<vmem>>, %arg7: memref<1024x64xf32, #tpu.memory_space<vmem>>, %arg8: memref<1x64xf32, #tpu.memory_space<vmem>>, %arg9: memref<64x192xf32, #tpu.memory_space<vmem>>, %arg10: memref<1x192xf32, #tpu.memory_space<vmem>>, %arg11: memref<16x64xf32, #tpu.memory_space<vmem>>, %arg12: memref<16x192xf32, #tpu.memory_space<vmem>>) attributes {dimension_semantics = [], scalar_prefetch = 0 : i64, scratch_operands = 0 : i64, tpu.core_type = #tpu.core_type<tc>} {
    %c0 = arith.constant 0 : index
    %c0_0 = arith.constant 0 : index
    %0 = vector.load %arg0[%c0, %c0_0] : memref<16x32xf32, #tpu.memory_space<vmem>>, vector<16x32xf32>
    %c0_1 = arith.constant 0 : index
    %c0_2 = arith.constant 0 : index
    %1 = vector.load %arg1[%c0_1, %c0_2] : memref<32x1024xf32, #tpu.memory_space<vmem>>, vector<32x1024xf32>
    %cst = arith.constant dense<0.000000e+00> : vector<16x1024xf32>
    %2 = tpu.matmul %0, %1, %cst {dimension_numbers = #tpu.dot_dimension_numbers<[1], [0], [0], [1], [0, 0, 1, 1], [], []>} : vector<16x32xf32>, vector<32x1024xf32>, vector<16x1024xf32> -> vector<16x1024xf32>
    %c0_3 = arith.constant 0 : index
    %c0_4 = arith.constant 0 : index
    %3 = vector.load %arg2[%c0_3, %c0_4] : memref<1x1024xf32, #tpu.memory_space<vmem>>, vector<1x1024xf32>
    %4 = vector.broadcast %3 : vector<1x1024xf32> to vector<16x1024xf32>
    %5 = arith.addf %2, %4 : vector<16x1024xf32>
    %c0_5 = arith.constant 0 : index
    %c0_6 = arith.constant 0 : index
    %6 = vector.load %arg3[%c0_5, %c0_6] : memref<32x1024xf32, #tpu.memory_space<vmem>>, vector<32x1024xf32>
    %cst_7 = arith.constant dense<0.000000e+00> : vector<16x1024xf32>
    %7 = tpu.matmul %0, %6, %cst_7 {dimension_numbers = #tpu.dot_dimension_numbers<[1], [0], [0], [1], [0, 0, 1, 1], [], []>} : vector<16x32xf32>, vector<32x1024xf32>, vector<16x1024xf32> -> vector<16x1024xf32>
    %c0_8 = arith.constant 0 : index
    %c0_9 = arith.constant 0 : index
    %8 = vector.load %arg4[%c0_8, %c0_9] : memref<1x1024xf32, #tpu.memory_space<vmem>>, vector<1x1024xf32>
    %9 = vector.broadcast %8 : vector<1x1024xf32> to vector<16x1024xf32>
    %10 = arith.addf %7, %9 : vector<16x1024xf32>
    %c0_10 = arith.constant 0 : index
    %c0_11 = arith.constant 0 : index
    %11 = vector.load %arg5[%c0_10, %c0_11] : memref<1024x64xf32, #tpu.memory_space<vmem>>, vector<1024x64xf32>
    %cst_12 = arith.constant dense<0.000000e+00> : vector<16x64xf32>
    %12 = tpu.matmul %5, %11, %cst_12 {dimension_numbers = #tpu.dot_dimension_numbers<[1], [0], [0], [1], [0, 0, 1, 1], [], []>} : vector<16x1024xf32>, vector<1024x64xf32>, vector<16x64xf32> -> vector<16x64xf32>
    %c0_13 = arith.constant 0 : index
    %c0_14 = arith.constant 0 : index
    %13 = vector.load %arg6[%c0_13, %c0_14] : memref<1x64xf32, #tpu.memory_space<vmem>>, vector<1x64xf32>
    %14 = vector.broadcast %13 : vector<1x64xf32> to vector<16x64xf32>
    %15 = arith.addf %12, %14 : vector<16x64xf32>
    %c0_15 = arith.constant 0 : index
    %c0_16 = arith.constant 0 : index
    %16 = vector.load %arg11[%c0_15, %c0_16] : memref<16x64xf32, #tpu.memory_space<vmem>>, vector<16x64xf32>
    tpu.vector_store %arg11[%c0_15, %c0_16], %15 {strides = array<i32>} : memref<16x64xf32, #tpu.memory_space<vmem>>, vector<16x64xf32>,
    %c0_17 = arith.constant 0 : index
    %c0_18 = arith.constant 0 : index
    %17 = vector.load %arg7[%c0_17, %c0_18] : memref<1024x64xf32, #tpu.memory_space<vmem>>, vector<1024x64xf32>
    %cst_19 = arith.constant dense<0.000000e+00> : vector<16x64xf32>
    %18 = tpu.matmul %10, %17, %cst_19 {dimension_numbers = #tpu.dot_dimension_numbers<[1], [0], [0], [1], [0, 0, 1, 1], [], []>} : vector<16x1024xf32>, vector<1024x64xf32>, vector<16x64xf32> -> vector<16x64xf32>
    %c0_20 = arith.constant 0 : index
    %c0_21 = arith.constant 0 : index
    %19 = vector.load %arg8[%c0_20, %c0_21] : memref<1x64xf32, #tpu.memory_space<vmem>>, vector<1x64xf32>
    %20 = vector.broadcast %19 : vector<1x64xf32> to vector<16x64xf32>
    %21 = arith.addf %18, %20 : vector<16x64xf32>
    %cst_22 = arith.constant 0.000000e+00 : f32
    %22 = vector.broadcast %cst_22 : f32 to vector<16x64xf32>
    %23 = arith.maximumf %21, %22 : vector<16x64xf32>
    %c0_23 = arith.constant 0 : index
    %c0_24 = arith.constant 0 : index
    %24 = vector.load %arg9[%c0_23, %c0_24] : memref<64x192xf32, #tpu.memory_space<vmem>>, vector<64x192xf32>
    %cst_25 = arith.constant dense<0.000000e+00> : vector<16x192xf32>
    %25 = tpu.matmul %23, %24, %cst_25 {dimension_numbers = #tpu.dot_dimension_numbers<[1], [0], [0], [1], [0, 0, 1, 1], [], []>} : vector<16x64xf32>, vector<64x192xf32>, vector<16x192xf32> -> vector<16x192xf32>
    %c0_26 = arith.constant 0 : index
    %c0_27 = arith.constant 0 : index
    %26 = vector.load %arg10[%c0_26, %c0_27] : memref<1x192xf32, #tpu.memory_space<vmem>>, vector<1x192xf32>
    %27 = vector.broadcast %26 : vector<1x192xf32> to vector<16x192xf32>
    %28 = arith.addf %25, %27 : vector<16x192xf32>
    %c0_28 = arith.constant 0 : index
    %c0_29 = arith.constant 0 : index
    %29 = vector.load %arg12[%c0_28, %c0_29] : memref<16x192xf32, #tpu.memory_space<vmem>>, vector<16x192xf32>
    tpu.vector_store %arg12[%c0_28, %c0_29], %28 {strides = array<i32>} : memref<16x192xf32, #tpu.memory_space<vmem>>, vector<16x192xf32>,
    return
  }
}

module attributes {stable_mosaic.version = 11 : i64} {
  func.func @kernel(%arg0: memref<16x64xf32, #tpu.memory_space<vmem>>, %arg1: memref<16x64xf32, #tpu.memory_space<vmem>>, %arg2: memref<64x64xf32, #tpu.memory_space<vmem>>, %arg3: memref<1x64xf32, #tpu.memory_space<vmem>>, %arg4: memref<64x64xf32, #tpu.memory_space<vmem>>, %arg5: memref<1x64xf32, #tpu.memory_space<vmem>>, %arg6: memref<64x128xf32, #tpu.memory_space<vmem>>, %arg7: memref<1x128xf32, #tpu.memory_space<vmem>>, %arg8: memref<16x64xf32, #tpu.memory_space<vmem>>, %arg9: memref<16x128xf32, #tpu.memory_space<vmem>>) attributes {dimension_semantics = [], scalar_prefetch = 0 : i64, scratch_operands = 0 : i64, tpu.core_type = #tpu.core_type<tc>} {
    %c0 = arith.constant 0 : index
    %c0_0 = arith.constant 0 : index
    %0 = vector.load %arg0[%c0, %c0_0] : memref<16x64xf32, #tpu.memory_space<vmem>>, vector<16x64xf32>
    %c0_1 = arith.constant 0 : index
    %c0_2 = arith.constant 0 : index
    %1 = vector.load %arg2[%c0_1, %c0_2] : memref<64x64xf32, #tpu.memory_space<vmem>>, vector<64x64xf32>
    %cst = arith.constant dense<0.000000e+00> : vector<16x64xf32>
    %2 = tpu.matmul %0, %1, %cst {dimension_numbers = #tpu.dot_dimension_numbers<[1], [0], [0], [1], [0, 0, 1, 1], [], []>} : vector<16x64xf32>, vector<64x64xf32>, vector<16x64xf32> -> vector<16x64xf32>
    %c0_3 = arith.constant 0 : index
    %c0_4 = arith.constant 0 : index
    %3 = vector.load %arg3[%c0_3, %c0_4] : memref<1x64xf32, #tpu.memory_space<vmem>>, vector<1x64xf32>
    %4 = vector.broadcast %3 : vector<1x64xf32> to vector<16x64xf32>
    %5 = arith.addf %2, %4 : vector<16x64xf32>
    %c0_5 = arith.constant 0 : index
    %c0_6 = arith.constant 0 : index
    %6 = vector.load %arg4[%c0_5, %c0_6] : memref<64x64xf32, #tpu.memory_space<vmem>>, vector<64x64xf32>
    %cst_7 = arith.constant dense<0.000000e+00> : vector<16x64xf32>
    %7 = tpu.matmul %0, %6, %cst_7 {dimension_numbers = #tpu.dot_dimension_numbers<[1], [0], [0], [1], [0, 0, 1, 1], [], []>} : vector<16x64xf32>, vector<64x64xf32>, vector<16x64xf32> -> vector<16x64xf32>
    %c0_8 = arith.constant 0 : index
    %c0_9 = arith.constant 0 : index
    %8 = vector.load %arg5[%c0_8, %c0_9] : memref<1x64xf32, #tpu.memory_space<vmem>>, vector<1x64xf32>
    %9 = vector.broadcast %8 : vector<1x64xf32> to vector<16x64xf32>
    %10 = arith.addf %7, %9 : vector<16x64xf32>
    %c0_10 = arith.constant 0 : index
    %c0_11 = arith.constant 0 : index
    %11 = vector.load %arg1[%c0_10, %c0_11] : memref<16x64xf32, #tpu.memory_space<vmem>>, vector<16x64xf32>
    %12 = arith.mulf %5, %11 : vector<16x64xf32>
    %13 = arith.addf %12, %10 : vector<16x64xf32>
    %c0_12 = arith.constant 0 : index
    %c0_13 = arith.constant 0 : index
    %14 = vector.load %arg8[%c0_12, %c0_13] : memref<16x64xf32, #tpu.memory_space<vmem>>, vector<16x64xf32>
    tpu.vector_store %arg8[%c0_12, %c0_13], %13 {strides = array<i32>} : memref<16x64xf32, #tpu.memory_space<vmem>>, vector<16x64xf32>,
    %c0_14 = arith.constant 0 : index
    %c0_15 = arith.constant 0 : index
    %15 = vector.load %arg6[%c0_14, %c0_15] : memref<64x128xf32, #tpu.memory_space<vmem>>, vector<64x128xf32>
    %cst_16 = arith.constant dense<0.000000e+00> : vector<16x128xf32>
    %16 = tpu.matmul %0, %15, %cst_16 {dimension_numbers = #tpu.dot_dimension_numbers<[1], [0], [0], [1], [0, 0, 1, 1], [], []>} : vector<16x64xf32>, vector<64x128xf32>, vector<16x128xf32> -> vector<16x128xf32>
    %c0_17 = arith.constant 0 : index
    %c0_18 = arith.constant 0 : index
    %17 = vector.load %arg7[%c0_17, %c0_18] : memref<1x128xf32, #tpu.memory_space<vmem>>, vector<1x128xf32>
    %18 = vector.broadcast %17 : vector<1x128xf32> to vector<16x128xf32>
    %19 = arith.addf %16, %18 : vector<16x128xf32>
    %c0_19 = arith.constant 0 : index
    %c0_20 = arith.constant 0 : index
    %20 = vector.load %arg9[%c0_19, %c0_20] : memref<16x128xf32, #tpu.memory_space<vmem>>, vector<16x128xf32>
    tpu.vector_store %arg9[%c0_19, %c0_20], %19 {strides = array<i32>} : memref<16x128xf32, #tpu.memory_space<vmem>>, vector<16x128xf32>,
    return
  }
}

module attributes {stable_mosaic.version = 11 : i64} {
  func.func @kernel(%arg0: memref<8x2x96xf32, #tpu.memory_space<vmem>>, %arg1: memref<8x2x96xf32, #tpu.memory_space<vmem>>, %arg2: memref<32x96xf32, #tpu.memory_space<vmem>>, %arg3: memref<32x96xf32, #tpu.memory_space<vmem>>, %arg4: memref<1x96xf32, #tpu.memory_space<vmem>>, %arg5: memref<1x96xf32, #tpu.memory_space<vmem>>, %arg6: memref<8x2x32xf32, #tpu.memory_space<vmem>>, %arg7: memref<8x2x32xf32, #tpu.memory_space<vmem>>) attributes {dimension_semantics = [], scalar_prefetch = 0 : i64, scratch_operands = 0 : i64, tpu.core_type = #tpu.core_type<tc>} {
    %c0 = arith.constant 0 : index
    %c0_0 = arith.constant 0 : index
    %0 = vector.load %arg2[%c0, %c0_0] : memref<32x96xf32, #tpu.memory_space<vmem>>, vector<32x96xf32>
    %c0_1 = arith.constant 0 : index
    %c0_2 = arith.constant 0 : index
    %1 = vector.load %arg3[%c0_1, %c0_2] : memref<32x96xf32, #tpu.memory_space<vmem>>, vector<32x96xf32>
    %c0_3 = arith.constant 0 : index
    %c0_4 = arith.constant 0 : index
    %2 = vector.load %arg4[%c0_3, %c0_4] : memref<1x96xf32, #tpu.memory_space<vmem>>, vector<1x96xf32>
    %c0_5 = arith.constant 0 : index
    %c0_6 = arith.constant 0 : index
    %3 = vector.load %arg5[%c0_5, %c0_6] : memref<1x96xf32, #tpu.memory_space<vmem>>, vector<1x96xf32>
    %cst = arith.constant 0.000000e+00 : f32
    %4 = vector.broadcast %cst : f32 to vector<2x32xf32>
    %cst_7 = arith.constant 0.000000e+00 : f32
    %5 = vector.broadcast %cst_7 : f32 to vector<2x32xf32>
    %c0_8 = arith.constant 0 : index
    %c0_9 = arith.constant 0 : index
    %c0_10 = arith.constant 0 : index
    %6 = vector.load %arg0[%c0_8, %c0_9, %c0_10] : memref<8x2x96xf32, #tpu.memory_space<vmem>>, vector<1x2x96xf32>
    %7 = vector.shape_cast %6 : vector<1x2x96xf32> to vector<2x96xf32>
    %c7 = arith.constant 7 : index
    %c0_11 = arith.constant 0 : index
    %c0_12 = arith.constant 0 : index
    %8 = vector.load %arg1[%c7, %c0_11, %c0_12] : memref<8x2x96xf32, #tpu.memory_space<vmem>>, vector<1x2x96xf32>
    %9 = vector.shape_cast %8 : vector<1x2x96xf32> to vector<2x96xf32>
    %cst_13 = arith.constant dense<0.000000e+00> : vector<2x96xf32>
    %10 = tpu.matmul %4, %0, %cst_13 {dimension_numbers = #tpu.dot_dimension_numbers<[1], [0], [0], [1], [0, 0, 1, 1], [], []>} : vector<2x32xf32>, vector<32x96xf32>, vector<2x96xf32> -> vector<2x96xf32>
    %11 = vector.broadcast %2 : vector<1x96xf32> to vector<2x96xf32>
    %12 = arith.addf %10, %11 : vector<2x96xf32>
    %cst_14 = arith.constant dense<0.000000e+00> : vector<2x96xf32>
    %13 = tpu.matmul %5, %1, %cst_14 {dimension_numbers = #tpu.dot_dimension_numbers<[1], [0], [0], [1], [0, 0, 1, 1], [], []>} : vector<2x32xf32>, vector<32x96xf32>, vector<2x96xf32> -> vector<2x96xf32>
    %14 = vector.broadcast %3 : vector<1x96xf32> to vector<2x96xf32>
    %15 = arith.addf %13, %14 : vector<2x96xf32>
    %16 = vector.extract_strided_slice %7 {offsets = [0, 0], sizes = [2, 32], strides = [1, 1]} : vector<2x96xf32> to vector<2x32xf32>
    %17 = vector.extract_strided_slice %12 {offsets = [0, 0], sizes = [2, 32], strides = [1, 1]} : vector<2x96xf32> to vector<2x32xf32>
    %18 = arith.addf %16, %17 : vector<2x32xf32>
    %19 = arith.negf %18 : vector<2x32xf32>
    %20 = math.exp %19 : vector<2x32xf32>
    %cst_15 = arith.constant 1.000000e+00 : f32
    %21 = vector.broadcast %cst_15 : f32 to vector<2x32xf32>
    %22 = arith.addf %21, %20 : vector<2x32xf32>
    %23 = arith.divf %21, %22 : vector<2x32xf32>
    %24 = vector.extract_strided_slice %7 {offsets = [0, 32], sizes = [2, 32], strides = [1, 1]} : vector<2x96xf32> to vector<2x32xf32>
    %25 = vector.extract_strided_slice %12 {offsets = [0, 32], sizes = [2, 32], strides = [1, 1]} : vector<2x96xf32> to vector<2x32xf32>
    %26 = arith.addf %24, %25 : vector<2x32xf32>
    %27 = arith.negf %26 : vector<2x32xf32>
    %28 = math.exp %27 : vector<2x32xf32>
    %cst_16 = arith.constant 1.000000e+00 : f32
    %29 = vector.broadcast %cst_16 : f32 to vector<2x32xf32>
    %30 = arith.addf %29, %28 : vector<2x32xf32>
    %31 = arith.divf %29, %30 : vector<2x32xf32>
    %32 = vector.extract_strided_slice %7 {offsets = [0, 64], sizes = [2, 32], strides = [1, 1]} : vector<2x96xf32> to vector<2x32xf32>
    %33 = vector.extract_strided_slice %12 {offsets = [0, 64], sizes = [2, 32], strides = [1, 1]} : vector<2x96xf32> to vector<2x32xf32>
    %34 = arith.mulf %23, %33 : vector<2x32xf32>
    %35 = arith.addf %32, %34 : vector<2x32xf32>
    %36 = math.tanh %35 : vector<2x32xf32>
    %cst_17 = arith.constant 1.000000e+00 : f32
    %37 = vector.broadcast %cst_17 : f32 to vector<2x32xf32>
    %38 = arith.subf %37, %31 : vector<2x32xf32>
    %39 = arith.mulf %38, %36 : vector<2x32xf32>
    %40 = arith.mulf %31, %4 : vector<2x32xf32>
    %41 = arith.addf %39, %40 : vector<2x32xf32>
    %42 = vector.extract_strided_slice %9 {offsets = [0, 0], sizes = [2, 32], strides = [1, 1]} : vector<2x96xf32> to vector<2x32xf32>
    %43 = vector.extract_strided_slice %15 {offsets = [0, 0], sizes = [2, 32], strides = [1, 1]} : vector<2x96xf32> to vector<2x32xf32>
    %44 = arith.addf %42, %43 : vector<2x32xf32>
    %45 = arith.negf %44 : vector<2x32xf32>
    %46 = math.exp %45 : vector<2x32xf32>
    %cst_18 = arith.constant 1.000000e+00 : f32
    %47 = vector.broadcast %cst_18 : f32 to vector<2x32xf32>
    %48 = arith.addf %47, %46 : vector<2x32xf32>
    %49 = arith.divf %47, %48 : vector<2x32xf32>
    %50 = vector.extract_strided_slice %9 {offsets = [0, 32], sizes = [2, 32], strides = [1, 1]} : vector<2x96xf32> to vector<2x32xf32>
    %51 = vector.extract_strided_slice %15 {offsets = [0, 32], sizes = [2, 32], strides = [1, 1]} : vector<2x96xf32> to vector<2x32xf32>
    %52 = arith.addf %50, %51 : vector<2x32xf32>
    %53 = arith.negf %52 : vector<2x32xf32>
    %54 = math.exp %53 : vector<2x32xf32>
    %cst_19 = arith.constant 1.000000e+00 : f32
    %55 = vector.broadcast %cst_19 : f32 to vector<2x32xf32>
    %56 = arith.addf %55, %54 : vector<2x32xf32>
    %57 = arith.divf %55, %56 : vector<2x32xf32>
    %58 = vector.extract_strided_slice %9 {offsets = [0, 64], sizes = [2, 32], strides = [1, 1]} : vector<2x96xf32> to vector<2x32xf32>
    %59 = vector.extract_strided_slice %15 {offsets = [0, 64], sizes = [2, 32], strides = [1, 1]} : vector<2x96xf32> to vector<2x32xf32>
    %60 = arith.mulf %49, %59 : vector<2x32xf32>
    %61 = arith.addf %58, %60 : vector<2x32xf32>
    %62 = math.tanh %61 : vector<2x32xf32>
    %cst_20 = arith.constant 1.000000e+00 : f32
    %63 = vector.broadcast %cst_20 : f32 to vector<2x32xf32>
    %64 = arith.subf %63, %57 : vector<2x32xf32>
    %65 = arith.mulf %64, %62 : vector<2x32xf32>
    %66 = arith.mulf %57, %5 : vector<2x32xf32>
    %67 = arith.addf %65, %66 : vector<2x32xf32>
    %c0_21 = arith.constant 0 : index
    %c0_22 = arith.constant 0 : index
    %c0_23 = arith.constant 0 : index
    %68 = vector.load %arg6[%c0_21, %c0_22, %c0_23] : memref<8x2x32xf32, #tpu.memory_space<vmem>>, vector<1x2x32xf32>
    %69 = vector.shape_cast %68 : vector<1x2x32xf32> to vector<2x32xf32>
    %70 = vector.shape_cast %41 : vector<2x32xf32> to vector<1x2x32xf32>
    tpu.vector_store %arg6[%c0_21, %c0_22, %c0_23], %70 {strides = array<i32>} : memref<8x2x32xf32, #tpu.memory_space<vmem>>, vector<1x2x32xf32>,
    %c7_24 = arith.constant 7 : index
    %c0_25 = arith.constant 0 : index
    %c0_26 = arith.constant 0 : index
    %71 = vector.load %arg7[%c7_24, %c0_25, %c0_26] : memref<8x2x32xf32, #tpu.memory_space<vmem>>, vector<1x2x32xf32>
    %72 = vector.shape_cast %71 : vector<1x2x32xf32> to vector<2x32xf32>
    %73 = vector.shape_cast %67 : vector<2x32xf32> to vector<1x2x32xf32>
    tpu.vector_store %arg7[%c7_24, %c0_25, %c0_26], %73 {strides = array<i32>} : memref<8x2x32xf32, #tpu.memory_space<vmem>>, vector<1x2x32xf32>,
    %c1 = arith.constant 1 : index
    %c0_27 = arith.constant 0 : index
    %c0_28 = arith.constant 0 : index
    %74 = vector.load %arg0[%c1, %c0_27, %c0_28] : memref<8x2x96xf32, #tpu.memory_space<vmem>>, vector<1x2x96xf32>
    %75 = vector.shape_cast %74 : vector<1x2x96xf32> to vector<2x96xf32>
    %c6 = arith.constant 6 : index
    %c0_29 = arith.constant 0 : index
    %c0_30 = arith.constant 0 : index
    %76 = vector.load %arg1[%c6, %c0_29, %c0_30] : memref<8x2x96xf32, #tpu.memory_space<vmem>>, vector<1x2x96xf32>
    %77 = vector.shape_cast %76 : vector<1x2x96xf32> to vector<2x96xf32>
    %cst_31 = arith.constant dense<0.000000e+00> : vector<2x96xf32>
    %78 = tpu.matmul %41, %0, %cst_31 {dimension_numbers = #tpu.dot_dimension_numbers<[1], [0], [0], [1], [0, 0, 1, 1], [], []>} : vector<2x32xf32>, vector<32x96xf32>, vector<2x96xf32> -> vector<2x96xf32>
    %79 = vector.broadcast %2 : vector<1x96xf32> to vector<2x96xf32>
    %80 = arith.addf %78, %79 : vector<2x96xf32>
    %cst_32 = arith.constant dense<0.000000e+00> : vector<2x96xf32>
    %81 = tpu.matmul %67, %1, %cst_32 {dimension_numbers = #tpu.dot_dimension_numbers<[1], [0], [0], [1], [0, 0, 1, 1], [], []>} : vector<2x32xf32>, vector<32x96xf32>, vector<2x96xf32> -> vector<2x96xf32>
    %82 = vector.broadcast %3 : vector<1x96xf32> to vector<2x96xf32>
    %83 = arith.addf %81, %82 : vector<2x96xf32>
    %84 = vector.extract_strided_slice %75 {offsets = [0, 0], sizes = [2, 32], strides = [1, 1]} : vector<2x96xf32> to vector<2x32xf32>
    %85 = vector.extract_strided_slice %80 {offsets = [0, 0], sizes = [2, 32], strides = [1, 1]} : vector<2x96xf32> to vector<2x32xf32>
    %86 = arith.addf %84, %85 : vector<2x32xf32>
    %87 = arith.negf %86 : vector<2x32xf32>
    %88 = math.exp %87 : vector<2x32xf32>
    %cst_33 = arith.constant 1.000000e+00 : f32
    %89 = vector.broadcast %cst_33 : f32 to vector<2x32xf32>
    %90 = arith.addf %89, %88 : vector<2x32xf32>
    %91 = arith.divf %89, %90 : vector<2x32xf32>
    %92 = vector.extract_strided_slice %75 {offsets = [0, 32], sizes = [2, 32], strides = [1, 1]} : vector<2x96xf32> to vector<2x32xf32>
    %93 = vector.extract_strided_slice %80 {offsets = [0, 32], sizes = [2, 32], strides = [1, 1]} : vector<2x96xf32> to vector<2x32xf32>
    %94 = arith.addf %92, %93 : vector<2x32xf32>
    %95 = arith.negf %94 : vector<2x32xf32>
    %96 = math.exp %95 : vector<2x32xf32>
    %cst_34 = arith.constant 1.000000e+00 : f32
    %97 = vector.broadcast %cst_34 : f32 to vector<2x32xf32>
    %98 = arith.addf %97, %96 : vector<2x32xf32>
    %99 = arith.divf %97, %98 : vector<2x32xf32>
    %100 = vector.extract_strided_slice %75 {offsets = [0, 64], sizes = [2, 32], strides = [1, 1]} : vector<2x96xf32> to vector<2x32xf32>
    %101 = vector.extract_strided_slice %80 {offsets = [0, 64], sizes = [2, 32], strides = [1, 1]} : vector<2x96xf32> to vector<2x32xf32>
    %102 = arith.mulf %91, %101 : vector<2x32xf32>
    %103 = arith.addf %100, %102 : vector<2x32xf32>
    %104 = math.tanh %103 : vector<2x32xf32>
    %cst_35 = arith.constant 1.000000e+00 : f32
    %105 = vector.broadcast %cst_35 : f32 to vector<2x32xf32>
    %106 = arith.subf %105, %99 : vector<2x32xf32>
    %107 = arith.mulf %106, %104 : vector<2x32xf32>
    %108 = arith.mulf %99, %41 : vector<2x32xf32>
    %109 = arith.addf %107, %108 : vector<2x32xf32>
    %110 = vector.extract_strided_slice %77 {offsets = [0, 0], sizes = [2, 32], strides = [1, 1]} : vector<2x96xf32> to vector<2x32xf32>
    %111 = vector.extract_strided_slice %83 {offsets = [0, 0], sizes = [2, 32], strides = [1, 1]} : vector<2x96xf32> to vector<2x32xf32>
    %112 = arith.addf %110, %111 : vector<2x32xf32>
    %113 = arith.negf %112 : vector<2x32xf32>
    %114 = math.exp %113 : vector<2x32xf32>
    %cst_36 = arith.constant 1.000000e+00 : f32
    %115 = vector.broadcast %cst_36 : f32 to vector<2x32xf32>
    %116 = arith.addf %115, %114 : vector<2x32xf32>
    %117 = arith.divf %115, %116 : vector<2x32xf32>
    %118 = vector.extract_strided_slice %77 {offsets = [0, 32], sizes = [2, 32], strides = [1, 1]} : vector<2x96xf32> to vector<2x32xf32>
    %119 = vector.extract_strided_slice %83 {offsets = [0, 32], sizes = [2, 32], strides = [1, 1]} : vector<2x96xf32> to vector<2x32xf32>
    %120 = arith.addf %118, %119 : vector<2x32xf32>
    %121 = arith.negf %120 : vector<2x32xf32>
    %122 = math.exp %121 : vector<2x32xf32>
    %cst_37 = arith.constant 1.000000e+00 : f32
    %123 = vector.broadcast %cst_37 : f32 to vector<2x32xf32>
    %124 = arith.addf %123, %122 : vector<2x32xf32>
    %125 = arith.divf %123, %124 : vector<2x32xf32>
    %126 = vector.extract_strided_slice %77 {offsets = [0, 64], sizes = [2, 32], strides = [1, 1]} : vector<2x96xf32> to vector<2x32xf32>
    %127 = vector.extract_strided_slice %83 {offsets = [0, 64], sizes = [2, 32], strides = [1, 1]} : vector<2x96xf32> to vector<2x32xf32>
    %128 = arith.mulf %117, %127 : vector<2x32xf32>
    %129 = arith.addf %126, %128 : vector<2x32xf32>
    %130 = math.tanh %129 : vector<2x32xf32>
    %cst_38 = arith.constant 1.000000e+00 : f32
    %131 = vector.broadcast %cst_38 : f32 to vector<2x32xf32>
    %132 = arith.subf %131, %125 : vector<2x32xf32>
    %133 = arith.mulf %132, %130 : vector<2x32xf32>
    %134 = arith.mulf %125, %67 : vector<2x32xf32>
    %135 = arith.addf %133, %134 : vector<2x32xf32>
    %c1_39 = arith.constant 1 : index
    %c0_40 = arith.constant 0 : index
    %c0_41 = arith.constant 0 : index
    %136 = vector.load %arg6[%c1_39, %c0_40, %c0_41] : memref<8x2x32xf32, #tpu.memory_space<vmem>>, vector<1x2x32xf32>
    %137 = vector.shape_cast %136 : vector<1x2x32xf32> to vector<2x32xf32>
    %138 = vector.shape_cast %109 : vector<2x32xf32> to vector<1x2x32xf32>
    tpu.vector_store %arg6[%c1_39, %c0_40, %c0_41], %138 {strides = array<i32>} : memref<8x2x32xf32, #tpu.memory_space<vmem>>, vector<1x2x32xf32>,
    %c6_42 = arith.constant 6 : index
    %c0_43 = arith.constant 0 : index
    %c0_44 = arith.constant 0 : index
    %139 = vector.load %arg7[%c6_42, %c0_43, %c0_44] : memref<8x2x32xf32, #tpu.memory_space<vmem>>, vector<1x2x32xf32>
    %140 = vector.shape_cast %139 : vector<1x2x32xf32> to vector<2x32xf32>
    %141 = vector.shape_cast %135 : vector<2x32xf32> to vector<1x2x32xf32>
    tpu.vector_store %arg7[%c6_42, %c0_43, %c0_44], %141 {strides = array<i32>} : memref<8x2x32xf32, #tpu.memory_space<vmem>>, vector<1x2x32xf32>,
    %c2 = arith.constant 2 : index
    %c0_45 = arith.constant 0 : index
    %c0_46 = arith.constant 0 : index
    %142 = vector.load %arg0[%c2, %c0_45, %c0_46] : memref<8x2x96xf32, #tpu.memory_space<vmem>>, vector<1x2x96xf32>
    %143 = vector.shape_cast %142 : vector<1x2x96xf32> to vector<2x96xf32>
    %c5 = arith.constant 5 : index
    %c0_47 = arith.constant 0 : index
    %c0_48 = arith.constant 0 : index
    %144 = vector.load %arg1[%c5, %c0_47, %c0_48] : memref<8x2x96xf32, #tpu.memory_space<vmem>>, vector<1x2x96xf32>
    %145 = vector.shape_cast %144 : vector<1x2x96xf32> to vector<2x96xf32>
    %cst_49 = arith.constant dense<0.000000e+00> : vector<2x96xf32>
    %146 = tpu.matmul %109, %0, %cst_49 {dimension_numbers = #tpu.dot_dimension_numbers<[1], [0], [0], [1], [0, 0, 1, 1], [], []>} : vector<2x32xf32>, vector<32x96xf32>, vector<2x96xf32> -> vector<2x96xf32>
    %147 = vector.broadcast %2 : vector<1x96xf32> to vector<2x96xf32>
    %148 = arith.addf %146, %147 : vector<2x96xf32>
    %cst_50 = arith.constant dense<0.000000e+00> : vector<2x96xf32>
    %149 = tpu.matmul %135, %1, %cst_50 {dimension_numbers = #tpu.dot_dimension_numbers<[1], [0], [0], [1], [0, 0, 1, 1], [], []>} : vector<2x32xf32>, vector<32x96xf32>, vector<2x96xf32> -> vector<2x96xf32>
    %150 = vector.broadcast %3 : vector<1x96xf32> to vector<2x96xf32>
    %151 = arith.addf %149, %150 : vector<2x96xf32>
    %152 = vector.extract_strided_slice %143 {offsets = [0, 0], sizes = [2, 32], strides = [1, 1]} : vector<2x96xf32> to vector<2x32xf32>
    %153 = vector.extract_strided_slice %148 {offsets = [0, 0], sizes = [2, 32], strides = [1, 1]} : vector<2x96xf32> to vector<2x32xf32>
    %154 = arith.addf %152, %153 : vector<2x32xf32>
    %155 = arith.negf %154 : vector<2x32xf32>
    %156 = math.exp %155 : vector<2x32xf32>
    %cst_51 = arith.constant 1.000000e+00 : f32
    %157 = vector.broadcast %cst_51 : f32 to vector<2x32xf32>
    %158 = arith.addf %157, %156 : vector<2x32xf32>
    %159 = arith.divf %157, %158 : vector<2x32xf32>
    %160 = vector.extract_strided_slice %143 {offsets = [0, 32], sizes = [2, 32], strides = [1, 1]} : vector<2x96xf32> to vector<2x32xf32>
    %161 = vector.extract_strided_slice %148 {offsets = [0, 32], sizes = [2, 32], strides = [1, 1]} : vector<2x96xf32> to vector<2x32xf32>
    %162 = arith.addf %160, %161 : vector<2x32xf32>
    %163 = arith.negf %162 : vector<2x32xf32>
    %164 = math.exp %163 : vector<2x32xf32>
    %cst_52 = arith.constant 1.000000e+00 : f32
    %165 = vector.broadcast %cst_52 : f32 to vector<2x32xf32>
    %166 = arith.addf %165, %164 : vector<2x32xf32>
    %167 = arith.divf %165, %166 : vector<2x32xf32>
    %168 = vector.extract_strided_slice %143 {offsets = [0, 64], sizes = [2, 32], strides = [1, 1]} : vector<2x96xf32> to vector<2x32xf32>
    %169 = vector.extract_strided_slice %148 {offsets = [0, 64], sizes = [2, 32], strides = [1, 1]} : vector<2x96xf32> to vector<2x32xf32>
    %170 = arith.mulf %159, %169 : vector<2x32xf32>
    %171 = arith.addf %168, %170 : vector<2x32xf32>
    %172 = math.tanh %171 : vector<2x32xf32>
    %cst_53 = arith.constant 1.000000e+00 : f32
    %173 = vector.broadcast %cst_53 : f32 to vector<2x32xf32>
    %174 = arith.subf %173, %167 : vector<2x32xf32>
    %175 = arith.mulf %174, %172 : vector<2x32xf32>
    %176 = arith.mulf %167, %109 : vector<2x32xf32>
    %177 = arith.addf %175, %176 : vector<2x32xf32>
    %178 = vector.extract_strided_slice %145 {offsets = [0, 0], sizes = [2, 32], strides = [1, 1]} : vector<2x96xf32> to vector<2x32xf32>
    %179 = vector.extract_strided_slice %151 {offsets = [0, 0], sizes = [2, 32], strides = [1, 1]} : vector<2x96xf32> to vector<2x32xf32>
    %180 = arith.addf %178, %179 : vector<2x32xf32>
    %181 = arith.negf %180 : vector<2x32xf32>
    %182 = math.exp %181 : vector<2x32xf32>
    %cst_54 = arith.constant 1.000000e+00 : f32
    %183 = vector.broadcast %cst_54 : f32 to vector<2x32xf32>
    %184 = arith.addf %183, %182 : vector<2x32xf32>
    %185 = arith.divf %183, %184 : vector<2x32xf32>
    %186 = vector.extract_strided_slice %145 {offsets = [0, 32], sizes = [2, 32], strides = [1, 1]} : vector<2x96xf32> to vector<2x32xf32>
    %187 = vector.extract_strided_slice %151 {offsets = [0, 32], sizes = [2, 32], strides = [1, 1]} : vector<2x96xf32> to vector<2x32xf32>
    %188 = arith.addf %186, %187 : vector<2x32xf32>
    %189 = arith.negf %188 : vector<2x32xf32>
    %190 = math.exp %189 : vector<2x32xf32>
    %cst_55 = arith.constant 1.000000e+00 : f32
    %191 = vector.broadcast %cst_55 : f32 to vector<2x32xf32>
    %192 = arith.addf %191, %190 : vector<2x32xf32>
    %193 = arith.divf %191, %192 : vector<2x32xf32>
    %194 = vector.extract_strided_slice %145 {offsets = [0, 64], sizes = [2, 32], strides = [1, 1]} : vector<2x96xf32> to vector<2x32xf32>
    %195 = vector.extract_strided_slice %151 {offsets = [0, 64], sizes = [2, 32], strides = [1, 1]} : vector<2x96xf32> to vector<2x32xf32>
    %196 = arith.mulf %185, %195 : vector<2x32xf32>
    %197 = arith.addf %194, %196 : vector<2x32xf32>
    %198 = math.tanh %197 : vector<2x32xf32>
    %cst_56 = arith.constant 1.000000e+00 : f32
    %199 = vector.broadcast %cst_56 : f32 to vector<2x32xf32>
    %200 = arith.subf %199, %193 : vector<2x32xf32>
    %201 = arith.mulf %200, %198 : vector<2x32xf32>
    %202 = arith.mulf %193, %135 : vector<2x32xf32>
    %203 = arith.addf %201, %202 : vector<2x32xf32>
    %c2_57 = arith.constant 2 : index
    %c0_58 = arith.constant 0 : index
    %c0_59 = arith.constant 0 : index
    %204 = vector.load %arg6[%c2_57, %c0_58, %c0_59] : memref<8x2x32xf32, #tpu.memory_space<vmem>>, vector<1x2x32xf32>
    %205 = vector.shape_cast %204 : vector<1x2x32xf32> to vector<2x32xf32>
    %206 = vector.shape_cast %177 : vector<2x32xf32> to vector<1x2x32xf32>
    tpu.vector_store %arg6[%c2_57, %c0_58, %c0_59], %206 {strides = array<i32>} : memref<8x2x32xf32, #tpu.memory_space<vmem>>, vector<1x2x32xf32>,
    %c5_60 = arith.constant 5 : index
    %c0_61 = arith.constant 0 : index
    %c0_62 = arith.constant 0 : index
    %207 = vector.load %arg7[%c5_60, %c0_61, %c0_62] : memref<8x2x32xf32, #tpu.memory_space<vmem>>, vector<1x2x32xf32>
    %208 = vector.shape_cast %207 : vector<1x2x32xf32> to vector<2x32xf32>
    %209 = vector.shape_cast %203 : vector<2x32xf32> to vector<1x2x32xf32>
    tpu.vector_store %arg7[%c5_60, %c0_61, %c0_62], %209 {strides = array<i32>} : memref<8x2x32xf32, #tpu.memory_space<vmem>>, vector<1x2x32xf32>,
    %c3 = arith.constant 3 : index
    %c0_63 = arith.constant 0 : index
    %c0_64 = arith.constant 0 : index
    %210 = vector.load %arg0[%c3, %c0_63, %c0_64] : memref<8x2x96xf32, #tpu.memory_space<vmem>>, vector<1x2x96xf32>
    %211 = vector.shape_cast %210 : vector<1x2x96xf32> to vector<2x96xf32>
    %c4 = arith.constant 4 : index
    %c0_65 = arith.constant 0 : index
    %c0_66 = arith.constant 0 : index
    %212 = vector.load %arg1[%c4, %c0_65, %c0_66] : memref<8x2x96xf32, #tpu.memory_space<vmem>>, vector<1x2x96xf32>
    %213 = vector.shape_cast %212 : vector<1x2x96xf32> to vector<2x96xf32>
    %cst_67 = arith.constant dense<0.000000e+00> : vector<2x96xf32>
    %214 = tpu.matmul %177, %0, %cst_67 {dimension_numbers = #tpu.dot_dimension_numbers<[1], [0], [0], [1], [0, 0, 1, 1], [], []>} : vector<2x32xf32>, vector<32x96xf32>, vector<2x96xf32> -> vector<2x96xf32>
    %215 = vector.broadcast %2 : vector<1x96xf32> to vector<2x96xf32>
    %216 = arith.addf %214, %215 : vector<2x96xf32>
    %cst_68 = arith.constant dense<0.000000e+00> : vector<2x96xf32>
    %217 = tpu.matmul %203, %1, %cst_68 {dimension_numbers = #tpu.dot_dimension_numbers<[1], [0], [0], [1], [0, 0, 1, 1], [], []>} : vector<2x32xf32>, vector<32x96xf32>, vector<2x96xf32> -> vector<2x96xf32>
    %218 = vector.broadcast %3 : vector<1x96xf32> to vector<2x96xf32>
    %219 = arith.addf %217, %218 : vector<2x96xf32>
    %220 = vector.extract_strided_slice %211 {offsets = [0, 0], sizes = [2, 32], strides = [1, 1]} : vector<2x96xf32> to vector<2x32xf32>
    %221 = vector.extract_strided_slice %216 {offsets = [0, 0], sizes = [2, 32], strides = [1, 1]} : vector<2x96xf32> to vector<2x32xf32>
    %222 = arith.addf %220, %221 : vector<2x32xf32>
    %223 = arith.negf %222 : vector<2x32xf32>
    %224 = math.exp %223 : vector<2x32xf32>
    %cst_69 = arith.constant 1.000000e+00 : f32
    %225 = vector.broadcast %cst_69 : f32 to vector<2x32xf32>
    %226 = arith.addf %225, %224 : vector<2x32xf32>
    %227 = arith.divf %225, %226 : vector<2x32xf32>
    %228 = vector.extract_strided_slice %211 {offsets = [0, 32], sizes = [2, 32], strides = [1, 1]} : vector<2x96xf32> to vector<2x32xf32>
    %229 = vector.extract_strided_slice %216 {offsets = [0, 32], sizes = [2, 32], strides = [1, 1]} : vector<2x96xf32> to vector<2x32xf32>
    %230 = arith.addf %228, %229 : vector<2x32xf32>
    %231 = arith.negf %230 : vector<2x32xf32>
    %232 = math.exp %231 : vector<2x32xf32>
    %cst_70 = arith.constant 1.000000e+00 : f32
    %233 = vector.broadcast %cst_70 : f32 to vector<2x32xf32>
    %234 = arith.addf %233, %232 : vector<2x32xf32>
    %235 = arith.divf %233, %234 : vector<2x32xf32>
    %236 = vector.extract_strided_slice %211 {offsets = [0, 64], sizes = [2, 32], strides = [1, 1]} : vector<2x96xf32> to vector<2x32xf32>
    %237 = vector.extract_strided_slice %216 {offsets = [0, 64], sizes = [2, 32], strides = [1, 1]} : vector<2x96xf32> to vector<2x32xf32>
    %238 = arith.mulf %227, %237 : vector<2x32xf32>
    %239 = arith.addf %236, %238 : vector<2x32xf32>
    %240 = math.tanh %239 : vector<2x32xf32>
    %cst_71 = arith.constant 1.000000e+00 : f32
    %241 = vector.broadcast %cst_71 : f32 to vector<2x32xf32>
    %242 = arith.subf %241, %235 : vector<2x32xf32>
    %243 = arith.mulf %242, %240 : vector<2x32xf32>
    %244 = arith.mulf %235, %177 : vector<2x32xf32>
    %245 = arith.addf %243, %244 : vector<2x32xf32>
    %246 = vector.extract_strided_slice %213 {offsets = [0, 0], sizes = [2, 32], strides = [1, 1]} : vector<2x96xf32> to vector<2x32xf32>
    %247 = vector.extract_strided_slice %219 {offsets = [0, 0], sizes = [2, 32], strides = [1, 1]} : vector<2x96xf32> to vector<2x32xf32>
    %248 = arith.addf %246, %247 : vector<2x32xf32>
    %249 = arith.negf %248 : vector<2x32xf32>
    %250 = math.exp %249 : vector<2x32xf32>
    %cst_72 = arith.constant 1.000000e+00 : f32
    %251 = vector.broadcast %cst_72 : f32 to vector<2x32xf32>
    %252 = arith.addf %251, %250 : vector<2x32xf32>
    %253 = arith.divf %251, %252 : vector<2x32xf32>
    %254 = vector.extract_strided_slice %213 {offsets = [0, 32], sizes = [2, 32], strides = [1, 1]} : vector<2x96xf32> to vector<2x32xf32>
    %255 = vector.extract_strided_slice %219 {offsets = [0, 32], sizes = [2, 32], strides = [1, 1]} : vector<2x96xf32> to vector<2x32xf32>
    %256 = arith.addf %254, %255 : vector<2x32xf32>
    %257 = arith.negf %256 : vector<2x32xf32>
    %258 = math.exp %257 : vector<2x32xf32>
    %cst_73 = arith.constant 1.000000e+00 : f32
    %259 = vector.broadcast %cst_73 : f32 to vector<2x32xf32>
    %260 = arith.addf %259, %258 : vector<2x32xf32>
    %261 = arith.divf %259, %260 : vector<2x32xf32>
    %262 = vector.extract_strided_slice %213 {offsets = [0, 64], sizes = [2, 32], strides = [1, 1]} : vector<2x96xf32> to vector<2x32xf32>
    %263 = vector.extract_strided_slice %219 {offsets = [0, 64], sizes = [2, 32], strides = [1, 1]} : vector<2x96xf32> to vector<2x32xf32>
    %264 = arith.mulf %253, %263 : vector<2x32xf32>
    %265 = arith.addf %262, %264 : vector<2x32xf32>
    %266 = math.tanh %265 : vector<2x32xf32>
    %cst_74 = arith.constant 1.000000e+00 : f32
    %267 = vector.broadcast %cst_74 : f32 to vector<2x32xf32>
    %268 = arith.subf %267, %261 : vector<2x32xf32>
    %269 = arith.mulf %268, %266 : vector<2x32xf32>
    %270 = arith.mulf %261, %203 : vector<2x32xf32>
    %271 = arith.addf %269, %270 : vector<2x32xf32>
    %c3_75 = arith.constant 3 : index
    %c0_76 = arith.constant 0 : index
    %c0_77 = arith.constant 0 : index
    %272 = vector.load %arg6[%c3_75, %c0_76, %c0_77] : memref<8x2x32xf32, #tpu.memory_space<vmem>>, vector<1x2x32xf32>
    %273 = vector.shape_cast %272 : vector<1x2x32xf32> to vector<2x32xf32>
    %274 = vector.shape_cast %245 : vector<2x32xf32> to vector<1x2x32xf32>
    tpu.vector_store %arg6[%c3_75, %c0_76, %c0_77], %274 {strides = array<i32>} : memref<8x2x32xf32, #tpu.memory_space<vmem>>, vector<1x2x32xf32>,
    %c4_78 = arith.constant 4 : index
    %c0_79 = arith.constant 0 : index
    %c0_80 = arith.constant 0 : index
    %275 = vector.load %arg7[%c4_78, %c0_79, %c0_80] : memref<8x2x32xf32, #tpu.memory_space<vmem>>, vector<1x2x32xf32>
    %276 = vector.shape_cast %275 : vector<1x2x32xf32> to vector<2x32xf32>
    %277 = vector.shape_cast %271 : vector<2x32xf32> to vector<1x2x32xf32>
    tpu.vector_store %arg7[%c4_78, %c0_79, %c0_80], %277 {strides = array<i32>} : memref<8x2x32xf32, #tpu.memory_space<vmem>>, vector<1x2x32xf32>,
    %c4_81 = arith.constant 4 : index
    %c0_82 = arith.constant 0 : index
    %c0_83 = arith.constant 0 : index
    %278 = vector.load %arg0[%c4_81, %c0_82, %c0_83] : memref<8x2x96xf32, #tpu.memory_space<vmem>>, vector<1x2x96xf32>
    %279 = vector.shape_cast %278 : vector<1x2x96xf32> to vector<2x96xf32>
    %c3_84 = arith.constant 3 : index
    %c0_85 = arith.constant 0 : index
    %c0_86 = arith.constant 0 : index
    %280 = vector.load %arg1[%c3_84, %c0_85, %c0_86] : memref<8x2x96xf32, #tpu.memory_space<vmem>>, vector<1x2x96xf32>
    %281 = vector.shape_cast %280 : vector<1x2x96xf32> to vector<2x96xf32>
    %cst_87 = arith.constant dense<0.000000e+00> : vector<2x96xf32>
    %282 = tpu.matmul %245, %0, %cst_87 {dimension_numbers = #tpu.dot_dimension_numbers<[1], [0], [0], [1], [0, 0, 1, 1], [], []>} : vector<2x32xf32>, vector<32x96xf32>, vector<2x96xf32> -> vector<2x96xf32>
    %283 = vector.broadcast %2 : vector<1x96xf32> to vector<2x96xf32>
    %284 = arith.addf %282, %283 : vector<2x96xf32>
    %cst_88 = arith.constant dense<0.000000e+00> : vector<2x96xf32>
    %285 = tpu.matmul %271, %1, %cst_88 {dimension_numbers = #tpu.dot_dimension_numbers<[1], [0], [0], [1], [0, 0, 1, 1], [], []>} : vector<2x32xf32>, vector<32x96xf32>, vector<2x96xf32> -> vector<2x96xf32>
    %286 = vector.broadcast %3 : vector<1x96xf32> to vector<2x96xf32>
    %287 = arith.addf %285, %286 : vector<2x96xf32>
    %288 = vector.extract_strided_slice %279 {offsets = [0, 0], sizes = [2, 32], strides = [1, 1]} : vector<2x96xf32> to vector<2x32xf32>
    %289 = vector.extract_strided_slice %284 {offsets = [0, 0], sizes = [2, 32], strides = [1, 1]} : vector<2x96xf32> to vector<2x32xf32>
    %290 = arith.addf %288, %289 : vector<2x32xf32>
    %291 = arith.negf %290 : vector<2x32xf32>
    %292 = math.exp %291 : vector<2x32xf32>
    %cst_89 = arith.constant 1.000000e+00 : f32
    %293 = vector.broadcast %cst_89 : f32 to vector<2x32xf32>
    %294 = arith.addf %293, %292 : vector<2x32xf32>
    %295 = arith.divf %293, %294 : vector<2x32xf32>
    %296 = vector.extract_strided_slice %279 {offsets = [0, 32], sizes = [2, 32], strides = [1, 1]} : vector<2x96xf32> to vector<2x32xf32>
    %297 = vector.extract_strided_slice %284 {offsets = [0, 32], sizes = [2, 32], strides = [1, 1]} : vector<2x96xf32> to vector<2x32xf32>
    %298 = arith.addf %296, %297 : vector<2x32xf32>
    %299 = arith.negf %298 : vector<2x32xf32>
    %300 = math.exp %299 : vector<2x32xf32>
    %cst_90 = arith.constant 1.000000e+00 : f32
    %301 = vector.broadcast %cst_90 : f32 to vector<2x32xf32>
    %302 = arith.addf %301, %300 : vector<2x32xf32>
    %303 = arith.divf %301, %302 : vector<2x32xf32>
    %304 = vector.extract_strided_slice %279 {offsets = [0, 64], sizes = [2, 32], strides = [1, 1]} : vector<2x96xf32> to vector<2x32xf32>
    %305 = vector.extract_strided_slice %284 {offsets = [0, 64], sizes = [2, 32], strides = [1, 1]} : vector<2x96xf32> to vector<2x32xf32>
    %306 = arith.mulf %295, %305 : vector<2x32xf32>
    %307 = arith.addf %304, %306 : vector<2x32xf32>
    %308 = math.tanh %307 : vector<2x32xf32>
    %cst_91 = arith.constant 1.000000e+00 : f32
    %309 = vector.broadcast %cst_91 : f32 to vector<2x32xf32>
    %310 = arith.subf %309, %303 : vector<2x32xf32>
    %311 = arith.mulf %310, %308 : vector<2x32xf32>
    %312 = arith.mulf %303, %245 : vector<2x32xf32>
    %313 = arith.addf %311, %312 : vector<2x32xf32>
    %314 = vector.extract_strided_slice %281 {offsets = [0, 0], sizes = [2, 32], strides = [1, 1]} : vector<2x96xf32> to vector<2x32xf32>
    %315 = vector.extract_strided_slice %287 {offsets = [0, 0], sizes = [2, 32], strides = [1, 1]} : vector<2x96xf32> to vector<2x32xf32>
    %316 = arith.addf %314, %315 : vector<2x32xf32>
    %317 = arith.negf %316 : vector<2x32xf32>
    %318 = math.exp %317 : vector<2x32xf32>
    %cst_92 = arith.constant 1.000000e+00 : f32
    %319 = vector.broadcast %cst_92 : f32 to vector<2x32xf32>
    %320 = arith.addf %319, %318 : vector<2x32xf32>
    %321 = arith.divf %319, %320 : vector<2x32xf32>
    %322 = vector.extract_strided_slice %281 {offsets = [0, 32], sizes = [2, 32], strides = [1, 1]} : vector<2x96xf32> to vector<2x32xf32>
    %323 = vector.extract_strided_slice %287 {offsets = [0, 32], sizes = [2, 32], strides = [1, 1]} : vector<2x96xf32> to vector<2x32xf32>
    %324 = arith.addf %322, %323 : vector<2x32xf32>
    %325 = arith.negf %324 : vector<2x32xf32>
    %326 = math.exp %325 : vector<2x32xf32>
    %cst_93 = arith.constant 1.000000e+00 : f32
    %327 = vector.broadcast %cst_93 : f32 to vector<2x32xf32>
    %328 = arith.addf %327, %326 : vector<2x32xf32>
    %329 = arith.divf %327, %328 : vector<2x32xf32>
    %330 = vector.extract_strided_slice %281 {offsets = [0, 64], sizes = [2, 32], strides = [1, 1]} : vector<2x96xf32> to vector<2x32xf32>
    %331 = vector.extract_strided_slice %287 {offsets = [0, 64], sizes = [2, 32], strides = [1, 1]} : vector<2x96xf32> to vector<2x32xf32>
    %332 = arith.mulf %321, %331 : vector<2x32xf32>
    %333 = arith.addf %330, %332 : vector<2x32xf32>
    %334 = math.tanh %333 : vector<2x32xf32>
    %cst_94 = arith.constant 1.000000e+00 : f32
    %335 = vector.broadcast %cst_94 : f32 to vector<2x32xf32>
    %336 = arith.subf %335, %329 : vector<2x32xf32>
    %337 = arith.mulf %336, %334 : vector<2x32xf32>
    %338 = arith.mulf %329, %271 : vector<2x32xf32>
    %339 = arith.addf %337, %338 : vector<2x32xf32>
    %c4_95 = arith.constant 4 : index
    %c0_96 = arith.constant 0 : index
    %c0_97 = arith.constant 0 : index
    %340 = vector.load %arg6[%c4_95, %c0_96, %c0_97] : memref<8x2x32xf32, #tpu.memory_space<vmem>>, vector<1x2x32xf32>
    %341 = vector.shape_cast %340 : vector<1x2x32xf32> to vector<2x32xf32>
    %342 = vector.shape_cast %313 : vector<2x32xf32> to vector<1x2x32xf32>
    tpu.vector_store %arg6[%c4_95, %c0_96, %c0_97], %342 {strides = array<i32>} : memref<8x2x32xf32, #tpu.memory_space<vmem>>, vector<1x2x32xf32>,
    %c3_98 = arith.constant 3 : index
    %c0_99 = arith.constant 0 : index
    %c0_100 = arith.constant 0 : index
    %343 = vector.load %arg7[%c3_98, %c0_99, %c0_100] : memref<8x2x32xf32, #tpu.memory_space<vmem>>, vector<1x2x32xf32>
    %344 = vector.shape_cast %343 : vector<1x2x32xf32> to vector<2x32xf32>
    %345 = vector.shape_cast %339 : vector<2x32xf32> to vector<1x2x32xf32>
    tpu.vector_store %arg7[%c3_98, %c0_99, %c0_100], %345 {strides = array<i32>} : memref<8x2x32xf32, #tpu.memory_space<vmem>>, vector<1x2x32xf32>,
    %c5_101 = arith.constant 5 : index
    %c0_102 = arith.constant 0 : index
    %c0_103 = arith.constant 0 : index
    %346 = vector.load %arg0[%c5_101, %c0_102, %c0_103] : memref<8x2x96xf32, #tpu.memory_space<vmem>>, vector<1x2x96xf32>
    %347 = vector.shape_cast %346 : vector<1x2x96xf32> to vector<2x96xf32>
    %c2_104 = arith.constant 2 : index
    %c0_105 = arith.constant 0 : index
    %c0_106 = arith.constant 0 : index
    %348 = vector.load %arg1[%c2_104, %c0_105, %c0_106] : memref<8x2x96xf32, #tpu.memory_space<vmem>>, vector<1x2x96xf32>
    %349 = vector.shape_cast %348 : vector<1x2x96xf32> to vector<2x96xf32>
    %cst_107 = arith.constant dense<0.000000e+00> : vector<2x96xf32>
    %350 = tpu.matmul %313, %0, %cst_107 {dimension_numbers = #tpu.dot_dimension_numbers<[1], [0], [0], [1], [0, 0, 1, 1], [], []>} : vector<2x32xf32>, vector<32x96xf32>, vector<2x96xf32> -> vector<2x96xf32>
    %351 = vector.broadcast %2 : vector<1x96xf32> to vector<2x96xf32>
    %352 = arith.addf %350, %351 : vector<2x96xf32>
    %cst_108 = arith.constant dense<0.000000e+00> : vector<2x96xf32>
    %353 = tpu.matmul %339, %1, %cst_108 {dimension_numbers = #tpu.dot_dimension_numbers<[1], [0], [0], [1], [0, 0, 1, 1], [], []>} : vector<2x32xf32>, vector<32x96xf32>, vector<2x96xf32> -> vector<2x96xf32>
    %354 = vector.broadcast %3 : vector<1x96xf32> to vector<2x96xf32>
    %355 = arith.addf %353, %354 : vector<2x96xf32>
    %356 = vector.extract_strided_slice %347 {offsets = [0, 0], sizes = [2, 32], strides = [1, 1]} : vector<2x96xf32> to vector<2x32xf32>
    %357 = vector.extract_strided_slice %352 {offsets = [0, 0], sizes = [2, 32], strides = [1, 1]} : vector<2x96xf32> to vector<2x32xf32>
    %358 = arith.addf %356, %357 : vector<2x32xf32>
    %359 = arith.negf %358 : vector<2x32xf32>
    %360 = math.exp %359 : vector<2x32xf32>
    %cst_109 = arith.constant 1.000000e+00 : f32
    %361 = vector.broadcast %cst_109 : f32 to vector<2x32xf32>
    %362 = arith.addf %361, %360 : vector<2x32xf32>
    %363 = arith.divf %361, %362 : vector<2x32xf32>
    %364 = vector.extract_strided_slice %347 {offsets = [0, 32], sizes = [2, 32], strides = [1, 1]} : vector<2x96xf32> to vector<2x32xf32>
    %365 = vector.extract_strided_slice %352 {offsets = [0, 32], sizes = [2, 32], strides = [1, 1]} : vector<2x96xf32> to vector<2x32xf32>
    %366 = arith.addf %364, %365 : vector<2x32xf32>
    %367 = arith.negf %366 : vector<2x32xf32>
    %368 = math.exp %367 : vector<2x32xf32>
    %cst_110 = arith.constant 1.000000e+00 : f32
    %369 = vector.broadcast %cst_110 : f32 to vector<2x32xf32>
    %370 = arith.addf %369, %368 : vector<2x32xf32>
    %371 = arith.divf %369, %370 : vector<2x32xf32>
    %372 = vector.extract_strided_slice %347 {offsets = [0, 64], sizes = [2, 32], strides = [1, 1]} : vector<2x96xf32> to vector<2x32xf32>
    %373 = vector.extract_strided_slice %352 {offsets = [0, 64], sizes = [2, 32], strides = [1, 1]} : vector<2x96xf32> to vector<2x32xf32>
    %374 = arith.mulf %363, %373 : vector<2x32xf32>
    %375 = arith.addf %372, %374 : vector<2x32xf32>
    %376 = math.tanh %375 : vector<2x32xf32>
    %cst_111 = arith.constant 1.000000e+00 : f32
    %377 = vector.broadcast %cst_111 : f32 to vector<2x32xf32>
    %378 = arith.subf %377, %371 : vector<2x32xf32>
    %379 = arith.mulf %378, %376 : vector<2x32xf32>
    %380 = arith.mulf %371, %313 : vector<2x32xf32>
    %381 = arith.addf %379, %380 : vector<2x32xf32>
    %382 = vector.extract_strided_slice %349 {offsets = [0, 0], sizes = [2, 32], strides = [1, 1]} : vector<2x96xf32> to vector<2x32xf32>
    %383 = vector.extract_strided_slice %355 {offsets = [0, 0], sizes = [2, 32], strides = [1, 1]} : vector<2x96xf32> to vector<2x32xf32>
    %384 = arith.addf %382, %383 : vector<2x32xf32>
    %385 = arith.negf %384 : vector<2x32xf32>
    %386 = math.exp %385 : vector<2x32xf32>
    %cst_112 = arith.constant 1.000000e+00 : f32
    %387 = vector.broadcast %cst_112 : f32 to vector<2x32xf32>
    %388 = arith.addf %387, %386 : vector<2x32xf32>
    %389 = arith.divf %387, %388 : vector<2x32xf32>
    %390 = vector.extract_strided_slice %349 {offsets = [0, 32], sizes = [2, 32], strides = [1, 1]} : vector<2x96xf32> to vector<2x32xf32>
    %391 = vector.extract_strided_slice %355 {offsets = [0, 32], sizes = [2, 32], strides = [1, 1]} : vector<2x96xf32> to vector<2x32xf32>
    %392 = arith.addf %390, %391 : vector<2x32xf32>
    %393 = arith.negf %392 : vector<2x32xf32>
    %394 = math.exp %393 : vector<2x32xf32>
    %cst_113 = arith.constant 1.000000e+00 : f32
    %395 = vector.broadcast %cst_113 : f32 to vector<2x32xf32>
    %396 = arith.addf %395, %394 : vector<2x32xf32>
    %397 = arith.divf %395, %396 : vector<2x32xf32>
    %398 = vector.extract_strided_slice %349 {offsets = [0, 64], sizes = [2, 32], strides = [1, 1]} : vector<2x96xf32> to vector<2x32xf32>
    %399 = vector.extract_strided_slice %355 {offsets = [0, 64], sizes = [2, 32], strides = [1, 1]} : vector<2x96xf32> to vector<2x32xf32>
    %400 = arith.mulf %389, %399 : vector<2x32xf32>
    %401 = arith.addf %398, %400 : vector<2x32xf32>
    %402 = math.tanh %401 : vector<2x32xf32>
    %cst_114 = arith.constant 1.000000e+00 : f32
    %403 = vector.broadcast %cst_114 : f32 to vector<2x32xf32>
    %404 = arith.subf %403, %397 : vector<2x32xf32>
    %405 = arith.mulf %404, %402 : vector<2x32xf32>
    %406 = arith.mulf %397, %339 : vector<2x32xf32>
    %407 = arith.addf %405, %406 : vector<2x32xf32>
    %c5_115 = arith.constant 5 : index
    %c0_116 = arith.constant 0 : index
    %c0_117 = arith.constant 0 : index
    %408 = vector.load %arg6[%c5_115, %c0_116, %c0_117] : memref<8x2x32xf32, #tpu.memory_space<vmem>>, vector<1x2x32xf32>
    %409 = vector.shape_cast %408 : vector<1x2x32xf32> to vector<2x32xf32>
    %410 = vector.shape_cast %381 : vector<2x32xf32> to vector<1x2x32xf32>
    tpu.vector_store %arg6[%c5_115, %c0_116, %c0_117], %410 {strides = array<i32>} : memref<8x2x32xf32, #tpu.memory_space<vmem>>, vector<1x2x32xf32>,
    %c2_118 = arith.constant 2 : index
    %c0_119 = arith.constant 0 : index
    %c0_120 = arith.constant 0 : index
    %411 = vector.load %arg7[%c2_118, %c0_119, %c0_120] : memref<8x2x32xf32, #tpu.memory_space<vmem>>, vector<1x2x32xf32>
    %412 = vector.shape_cast %411 : vector<1x2x32xf32> to vector<2x32xf32>
    %413 = vector.shape_cast %407 : vector<2x32xf32> to vector<1x2x32xf32>
    tpu.vector_store %arg7[%c2_118, %c0_119, %c0_120], %413 {strides = array<i32>} : memref<8x2x32xf32, #tpu.memory_space<vmem>>, vector<1x2x32xf32>,
    %c6_121 = arith.constant 6 : index
    %c0_122 = arith.constant 0 : index
    %c0_123 = arith.constant 0 : index
    %414 = vector.load %arg0[%c6_121, %c0_122, %c0_123] : memref<8x2x96xf32, #tpu.memory_space<vmem>>, vector<1x2x96xf32>
    %415 = vector.shape_cast %414 : vector<1x2x96xf32> to vector<2x96xf32>
    %c1_124 = arith.constant 1 : index
    %c0_125 = arith.constant 0 : index
    %c0_126 = arith.constant 0 : index
    %416 = vector.load %arg1[%c1_124, %c0_125, %c0_126] : memref<8x2x96xf32, #tpu.memory_space<vmem>>, vector<1x2x96xf32>
    %417 = vector.shape_cast %416 : vector<1x2x96xf32> to vector<2x96xf32>
    %cst_127 = arith.constant dense<0.000000e+00> : vector<2x96xf32>
    %418 = tpu.matmul %381, %0, %cst_127 {dimension_numbers = #tpu.dot_dimension_numbers<[1], [0], [0], [1], [0, 0, 1, 1], [], []>} : vector<2x32xf32>, vector<32x96xf32>, vector<2x96xf32> -> vector<2x96xf32>
    %419 = vector.broadcast %2 : vector<1x96xf32> to vector<2x96xf32>
    %420 = arith.addf %418, %419 : vector<2x96xf32>
    %cst_128 = arith.constant dense<0.000000e+00> : vector<2x96xf32>
    %421 = tpu.matmul %407, %1, %cst_128 {dimension_numbers = #tpu.dot_dimension_numbers<[1], [0], [0], [1], [0, 0, 1, 1], [], []>} : vector<2x32xf32>, vector<32x96xf32>, vector<2x96xf32> -> vector<2x96xf32>
    %422 = vector.broadcast %3 : vector<1x96xf32> to vector<2x96xf32>
    %423 = arith.addf %421, %422 : vector<2x96xf32>
    %424 = vector.extract_strided_slice %415 {offsets = [0, 0], sizes = [2, 32], strides = [1, 1]} : vector<2x96xf32> to vector<2x32xf32>
    %425 = vector.extract_strided_slice %420 {offsets = [0, 0], sizes = [2, 32], strides = [1, 1]} : vector<2x96xf32> to vector<2x32xf32>
    %426 = arith.addf %424, %425 : vector<2x32xf32>
    %427 = arith.negf %426 : vector<2x32xf32>
    %428 = math.exp %427 : vector<2x32xf32>
    %cst_129 = arith.constant 1.000000e+00 : f32
    %429 = vector.broadcast %cst_129 : f32 to vector<2x32xf32>
    %430 = arith.addf %429, %428 : vector<2x32xf32>
    %431 = arith.divf %429, %430 : vector<2x32xf32>
    %432 = vector.extract_strided_slice %415 {offsets = [0, 32], sizes = [2, 32], strides = [1, 1]} : vector<2x96xf32> to vector<2x32xf32>
    %433 = vector.extract_strided_slice %420 {offsets = [0, 32], sizes = [2, 32], strides = [1, 1]} : vector<2x96xf32> to vector<2x32xf32>
    %434 = arith.addf %432, %433 : vector<2x32xf32>
    %435 = arith.negf %434 : vector<2x32xf32>
    %436 = math.exp %435 : vector<2x32xf32>
    %cst_130 = arith.constant 1.000000e+00 : f32
    %437 = vector.broadcast %cst_130 : f32 to vector<2x32xf32>
    %438 = arith.addf %437, %436 : vector<2x32xf32>
    %439 = arith.divf %437, %438 : vector<2x32xf32>
    %440 = vector.extract_strided_slice %415 {offsets = [0, 64], sizes = [2, 32], strides = [1, 1]} : vector<2x96xf32> to vector<2x32xf32>
    %441 = vector.extract_strided_slice %420 {offsets = [0, 64], sizes = [2, 32], strides = [1, 1]} : vector<2x96xf32> to vector<2x32xf32>
    %442 = arith.mulf %431, %441 : vector<2x32xf32>
    %443 = arith.addf %440, %442 : vector<2x32xf32>
    %444 = math.tanh %443 : vector<2x32xf32>
    %cst_131 = arith.constant 1.000000e+00 : f32
    %445 = vector.broadcast %cst_131 : f32 to vector<2x32xf32>
    %446 = arith.subf %445, %439 : vector<2x32xf32>
    %447 = arith.mulf %446, %444 : vector<2x32xf32>
    %448 = arith.mulf %439, %381 : vector<2x32xf32>
    %449 = arith.addf %447, %448 : vector<2x32xf32>
    %450 = vector.extract_strided_slice %417 {offsets = [0, 0], sizes = [2, 32], strides = [1, 1]} : vector<2x96xf32> to vector<2x32xf32>
    %451 = vector.extract_strided_slice %423 {offsets = [0, 0], sizes = [2, 32], strides = [1, 1]} : vector<2x96xf32> to vector<2x32xf32>
    %452 = arith.addf %450, %451 : vector<2x32xf32>
    %453 = arith.negf %452 : vector<2x32xf32>
    %454 = math.exp %453 : vector<2x32xf32>
    %cst_132 = arith.constant 1.000000e+00 : f32
    %455 = vector.broadcast %cst_132 : f32 to vector<2x32xf32>
    %456 = arith.addf %455, %454 : vector<2x32xf32>
    %457 = arith.divf %455, %456 : vector<2x32xf32>
    %458 = vector.extract_strided_slice %417 {offsets = [0, 32], sizes = [2, 32], strides = [1, 1]} : vector<2x96xf32> to vector<2x32xf32>
    %459 = vector.extract_strided_slice %423 {offsets = [0, 32], sizes = [2, 32], strides = [1, 1]} : vector<2x96xf32> to vector<2x32xf32>
    %460 = arith.addf %458, %459 : vector<2x32xf32>
    %461 = arith.negf %460 : vector<2x32xf32>
    %462 = math.exp %461 : vector<2x32xf32>
    %cst_133 = arith.constant 1.000000e+00 : f32
    %463 = vector.broadcast %cst_133 : f32 to vector<2x32xf32>
    %464 = arith.addf %463, %462 : vector<2x32xf32>
    %465 = arith.divf %463, %464 : vector<2x32xf32>
    %466 = vector.extract_strided_slice %417 {offsets = [0, 64], sizes = [2, 32], strides = [1, 1]} : vector<2x96xf32> to vector<2x32xf32>
    %467 = vector.extract_strided_slice %423 {offsets = [0, 64], sizes = [2, 32], strides = [1, 1]} : vector<2x96xf32> to vector<2x32xf32>
    %468 = arith.mulf %457, %467 : vector<2x32xf32>
    %469 = arith.addf %466, %468 : vector<2x32xf32>
    %470 = math.tanh %469 : vector<2x32xf32>
    %cst_134 = arith.constant 1.000000e+00 : f32
    %471 = vector.broadcast %cst_134 : f32 to vector<2x32xf32>
    %472 = arith.subf %471, %465 : vector<2x32xf32>
    %473 = arith.mulf %472, %470 : vector<2x32xf32>
    %474 = arith.mulf %465, %407 : vector<2x32xf32>
    %475 = arith.addf %473, %474 : vector<2x32xf32>
    %c6_135 = arith.constant 6 : index
    %c0_136 = arith.constant 0 : index
    %c0_137 = arith.constant 0 : index
    %476 = vector.load %arg6[%c6_135, %c0_136, %c0_137] : memref<8x2x32xf32, #tpu.memory_space<vmem>>, vector<1x2x32xf32>
    %477 = vector.shape_cast %476 : vector<1x2x32xf32> to vector<2x32xf32>
    %478 = vector.shape_cast %449 : vector<2x32xf32> to vector<1x2x32xf32>
    tpu.vector_store %arg6[%c6_135, %c0_136, %c0_137], %478 {strides = array<i32>} : memref<8x2x32xf32, #tpu.memory_space<vmem>>, vector<1x2x32xf32>,
    %c1_138 = arith.constant 1 : index
    %c0_139 = arith.constant 0 : index
    %c0_140 = arith.constant 0 : index
    %479 = vector.load %arg7[%c1_138, %c0_139, %c0_140] : memref<8x2x32xf32, #tpu.memory_space<vmem>>, vector<1x2x32xf32>
    %480 = vector.shape_cast %479 : vector<1x2x32xf32> to vector<2x32xf32>
    %481 = vector.shape_cast %475 : vector<2x32xf32> to vector<1x2x32xf32>
    tpu.vector_store %arg7[%c1_138, %c0_139, %c0_140], %481 {strides = array<i32>} : memref<8x2x32xf32, #tpu.memory_space<vmem>>, vector<1x2x32xf32>,
    %c7_141 = arith.constant 7 : index
    %c0_142 = arith.constant 0 : index
    %c0_143 = arith.constant 0 : index
    %482 = vector.load %arg0[%c7_141, %c0_142, %c0_143] : memref<8x2x96xf32, #tpu.memory_space<vmem>>, vector<1x2x96xf32>
    %483 = vector.shape_cast %482 : vector<1x2x96xf32> to vector<2x96xf32>
    %c0_144 = arith.constant 0 : index
    %c0_145 = arith.constant 0 : index
    %c0_146 = arith.constant 0 : index
    %484 = vector.load %arg1[%c0_144, %c0_145, %c0_146] : memref<8x2x96xf32, #tpu.memory_space<vmem>>, vector<1x2x96xf32>
    %485 = vector.shape_cast %484 : vector<1x2x96xf32> to vector<2x96xf32>
    %cst_147 = arith.constant dense<0.000000e+00> : vector<2x96xf32>
    %486 = tpu.matmul %449, %0, %cst_147 {dimension_numbers = #tpu.dot_dimension_numbers<[1], [0], [0], [1], [0, 0, 1, 1], [], []>} : vector<2x32xf32>, vector<32x96xf32>, vector<2x96xf32> -> vector<2x96xf32>
    %487 = vector.broadcast %2 : vector<1x96xf32> to vector<2x96xf32>
    %488 = arith.addf %486, %487 : vector<2x96xf32>
    %cst_148 = arith.constant dense<0.000000e+00> : vector<2x96xf32>
    %489 = tpu.matmul %475, %1, %cst_148 {dimension_numbers = #tpu.dot_dimension_numbers<[1], [0], [0], [1], [0, 0, 1, 1], [], []>} : vector<2x32xf32>, vector<32x96xf32>, vector<2x96xf32> -> vector<2x96xf32>
    %490 = vector.broadcast %3 : vector<1x96xf32> to vector<2x96xf32>
    %491 = arith.addf %489, %490 : vector<2x96xf32>
    %492 = vector.extract_strided_slice %483 {offsets = [0, 0], sizes = [2, 32], strides = [1, 1]} : vector<2x96xf32> to vector<2x32xf32>
    %493 = vector.extract_strided_slice %488 {offsets = [0, 0], sizes = [2, 32], strides = [1, 1]} : vector<2x96xf32> to vector<2x32xf32>
    %494 = arith.addf %492, %493 : vector<2x32xf32>
    %495 = arith.negf %494 : vector<2x32xf32>
    %496 = math.exp %495 : vector<2x32xf32>
    %cst_149 = arith.constant 1.000000e+00 : f32
    %497 = vector.broadcast %cst_149 : f32 to vector<2x32xf32>
    %498 = arith.addf %497, %496 : vector<2x32xf32>
    %499 = arith.divf %497, %498 : vector<2x32xf32>
    %500 = vector.extract_strided_slice %483 {offsets = [0, 32], sizes = [2, 32], strides = [1, 1]} : vector<2x96xf32> to vector<2x32xf32>
    %501 = vector.extract_strided_slice %488 {offsets = [0, 32], sizes = [2, 32], strides = [1, 1]} : vector<2x96xf32> to vector<2x32xf32>
    %502 = arith.addf %500, %501 : vector<2x32xf32>
    %503 = arith.negf %502 : vector<2x32xf32>
    %504 = math.exp %503 : vector<2x32xf32>
    %cst_150 = arith.constant 1.000000e+00 : f32
    %505 = vector.broadcast %cst_150 : f32 to vector<2x32xf32>
    %506 = arith.addf %505, %504 : vector<2x32xf32>
    %507 = arith.divf %505, %506 : vector<2x32xf32>
    %508 = vector.extract_strided_slice %483 {offsets = [0, 64], sizes = [2, 32], strides = [1, 1]} : vector<2x96xf32> to vector<2x32xf32>
    %509 = vector.extract_strided_slice %488 {offsets = [0, 64], sizes = [2, 32], strides = [1, 1]} : vector<2x96xf32> to vector<2x32xf32>
    %510 = arith.mulf %499, %509 : vector<2x32xf32>
    %511 = arith.addf %508, %510 : vector<2x32xf32>
    %512 = math.tanh %511 : vector<2x32xf32>
    %cst_151 = arith.constant 1.000000e+00 : f32
    %513 = vector.broadcast %cst_151 : f32 to vector<2x32xf32>
    %514 = arith.subf %513, %507 : vector<2x32xf32>
    %515 = arith.mulf %514, %512 : vector<2x32xf32>
    %516 = arith.mulf %507, %449 : vector<2x32xf32>
    %517 = arith.addf %515, %516 : vector<2x32xf32>
    %518 = vector.extract_strided_slice %485 {offsets = [0, 0], sizes = [2, 32], strides = [1, 1]} : vector<2x96xf32> to vector<2x32xf32>
    %519 = vector.extract_strided_slice %491 {offsets = [0, 0], sizes = [2, 32], strides = [1, 1]} : vector<2x96xf32> to vector<2x32xf32>
    %520 = arith.addf %518, %519 : vector<2x32xf32>
    %521 = arith.negf %520 : vector<2x32xf32>
    %522 = math.exp %521 : vector<2x32xf32>
    %cst_152 = arith.constant 1.000000e+00 : f32
    %523 = vector.broadcast %cst_152 : f32 to vector<2x32xf32>
    %524 = arith.addf %523, %522 : vector<2x32xf32>
    %525 = arith.divf %523, %524 : vector<2x32xf32>
    %526 = vector.extract_strided_slice %485 {offsets = [0, 32], sizes = [2, 32], strides = [1, 1]} : vector<2x96xf32> to vector<2x32xf32>
    %527 = vector.extract_strided_slice %491 {offsets = [0, 32], sizes = [2, 32], strides = [1, 1]} : vector<2x96xf32> to vector<2x32xf32>
    %528 = arith.addf %526, %527 : vector<2x32xf32>
    %529 = arith.negf %528 : vector<2x32xf32>
    %530 = math.exp %529 : vector<2x32xf32>
    %cst_153 = arith.constant 1.000000e+00 : f32
    %531 = vector.broadcast %cst_153 : f32 to vector<2x32xf32>
    %532 = arith.addf %531, %530 : vector<2x32xf32>
    %533 = arith.divf %531, %532 : vector<2x32xf32>
    %534 = vector.extract_strided_slice %485 {offsets = [0, 64], sizes = [2, 32], strides = [1, 1]} : vector<2x96xf32> to vector<2x32xf32>
    %535 = vector.extract_strided_slice %491 {offsets = [0, 64], sizes = [2, 32], strides = [1, 1]} : vector<2x96xf32> to vector<2x32xf32>
    %536 = arith.mulf %525, %535 : vector<2x32xf32>
    %537 = arith.addf %534, %536 : vector<2x32xf32>
    %538 = math.tanh %537 : vector<2x32xf32>
    %cst_154 = arith.constant 1.000000e+00 : f32
    %539 = vector.broadcast %cst_154 : f32 to vector<2x32xf32>
    %540 = arith.subf %539, %533 : vector<2x32xf32>
    %541 = arith.mulf %540, %538 : vector<2x32xf32>
    %542 = arith.mulf %533, %475 : vector<2x32xf32>
    %543 = arith.addf %541, %542 : vector<2x32xf32>
    %c7_155 = arith.constant 7 : index
    %c0_156 = arith.constant 0 : index
    %c0_157 = arith.constant 0 : index
    %544 = vector.load %arg6[%c7_155, %c0_156, %c0_157] : memref<8x2x32xf32, #tpu.memory_space<vmem>>, vector<1x2x32xf32>
    %545 = vector.shape_cast %544 : vector<1x2x32xf32> to vector<2x32xf32>
    %546 = vector.shape_cast %517 : vector<2x32xf32> to vector<1x2x32xf32>
    tpu.vector_store %arg6[%c7_155, %c0_156, %c0_157], %546 {strides = array<i32>} : memref<8x2x32xf32, #tpu.memory_space<vmem>>, vector<1x2x32xf32>,
    %c0_158 = arith.constant 0 : index
    %c0_159 = arith.constant 0 : index
    %c0_160 = arith.constant 0 : index
    %547 = vector.load %arg7[%c0_158, %c0_159, %c0_160] : memref<8x2x32xf32, #tpu.memory_space<vmem>>, vector<1x2x32xf32>
    %548 = vector.shape_cast %547 : vector<1x2x32xf32> to vector<2x32xf32>
    %549 = vector.shape_cast %543 : vector<2x32xf32> to vector<1x2x32xf32>
    tpu.vector_store %arg7[%c0_158, %c0_159, %c0_160], %549 {strides = array<i32>} : memref<8x2x32xf32, #tpu.memory_space<vmem>>, vector<1x2x32xf32>,
    return
  }
}

module attributes {stable_mosaic.version = 11 : i64} {
  func.func @kernel(%arg0: memref<16x128xf32, #tpu.memory_space<vmem>>, %arg1: memref<128x384xf32, #tpu.memory_space<vmem>>, %arg2: memref<1x384xf32, #tpu.memory_space<vmem>>, %arg3: memref<16x384xf32, #tpu.memory_space<vmem>>) attributes {dimension_semantics = [], scalar_prefetch = 0 : i64, scratch_operands = 0 : i64, tpu.core_type = #tpu.core_type<tc>} {
    %c0 = arith.constant 0 : index
    %c0_0 = arith.constant 0 : index
    %0 = vector.load %arg0[%c0, %c0_0] : memref<16x128xf32, #tpu.memory_space<vmem>>, vector<16x128xf32>
    %c0_1 = arith.constant 0 : index
    %c0_2 = arith.constant 0 : index
    %1 = vector.load %arg1[%c0_1, %c0_2] : memref<128x384xf32, #tpu.memory_space<vmem>>, vector<128x384xf32>
    %cst = arith.constant dense<0.000000e+00> : vector<16x384xf32>
    %2 = tpu.matmul %0, %1, %cst {dimension_numbers = #tpu.dot_dimension_numbers<[1], [0], [0], [1], [0, 0, 1, 1], [], []>} : vector<16x128xf32>, vector<128x384xf32>, vector<16x384xf32> -> vector<16x384xf32>
    %c0_3 = arith.constant 0 : index
    %c0_4 = arith.constant 0 : index
    %3 = vector.load %arg2[%c0_3, %c0_4] : memref<1x384xf32, #tpu.memory_space<vmem>>, vector<1x384xf32>
    %4 = vector.broadcast %3 : vector<1x384xf32> to vector<16x384xf32>
    %5 = arith.addf %2, %4 : vector<16x384xf32>
    %c0_5 = arith.constant 0 : index
    %c0_6 = arith.constant 0 : index
    %6 = vector.load %arg3[%c0_5, %c0_6] : memref<16x384xf32, #tpu.memory_space<vmem>>, vector<16x384xf32>
    tpu.vector_store %arg3[%c0_5, %c0_6], %5 {strides = array<i32>} : memref<16x384xf32, #tpu.memory_space<vmem>>, vector<16x384xf32>,
    return
  }
}

module attributes {stable_mosaic.version = 11 : i64} {
  func.func @kernel(%arg0: memref<4x8x64xf32, #tpu.memory_space<vmem>>, %arg1: memref<4x8x64xf32, #tpu.memory_space<vmem>>, %arg2: memref<4x8x64xf32, #tpu.memory_space<vmem>>, %arg3: memref<4x8x8xf32, #tpu.memory_space<vmem>>, %arg4: memref<4x8x64xf32, #tpu.memory_space<vmem>>) attributes {dimension_semantics = [], scalar_prefetch = 0 : i64, scratch_operands = 0 : i64, tpu.core_type = #tpu.core_type<tc>} {
    %c0 = arith.constant 0 : index
    %c0_0 = arith.constant 0 : index
    %c0_1 = arith.constant 0 : index
    %0 = vector.load %arg0[%c0, %c0_0, %c0_1] : memref<4x8x64xf32, #tpu.memory_space<vmem>>, vector<4x8x64xf32>
    %c0_2 = arith.constant 0 : index
    %c0_3 = arith.constant 0 : index
    %c0_4 = arith.constant 0 : index
    %1 = vector.load %arg1[%c0_2, %c0_3, %c0_4] : memref<4x8x64xf32, #tpu.memory_space<vmem>>, vector<4x8x64xf32>
    "tpu.trace_start"() <{level = 10 : i32, message = "bqd,bkd->bqk"}> : () -> ()
    %cst = arith.constant dense<0.000000e+00> : vector<4x8x8xf32>
    %2 = tpu.matmul %0, %1, %cst {dimension_numbers = #tpu.dot_dimension_numbers<[2], [2], [1], [1], [0, 0, 0, 1, 1, 1], [0], [0]>} : vector<4x8x64xf32>, vector<4x8x64xf32>, vector<4x8x8xf32> -> vector<4x8x8xf32>
    "tpu.trace_stop"() : () -> ()
    %cst_5 = arith.constant 1.250000e-01 : f32
    %3 = vector.broadcast %cst_5 : f32 to vector<4x8x8xf32>
    %4 = arith.mulf %2, %3 : vector<4x8x8xf32>
    %c0_6 = arith.constant 0 : index
    %c0_7 = arith.constant 0 : index
    %c0_8 = arith.constant 0 : index
    %5 = vector.load %arg3[%c0_6, %c0_7, %c0_8] : memref<4x8x8xf32, #tpu.memory_space<vmem>>, vector<4x8x8xf32>
    %6 = arith.addf %4, %5 : vector<4x8x8xf32>
    %cst_9 = arith.constant dense<0xFF800000> : vector<4x8xf32>
    %7 = vector.multi_reduction <maximumf>, %6, %cst_9 [2] : vector<4x8x8xf32> to vector<4x8xf32>
    %8 = vector.shape_cast %7 : vector<4x8xf32> to vector<4x8x1xf32>
    %9 = vector.broadcast %8 : vector<4x8x1xf32> to vector<4x8x8xf32>
    %10 = arith.subf %6, %9 : vector<4x8x8xf32>
    %11 = math.exp %10 : vector<4x8x8xf32>
    %cst_10 = arith.constant dense<0.000000e+00> : vector<4x8xf32>
    %12 = vector.multi_reduction <add>, %11, %cst_10 [2] : vector<4x8x8xf32> to vector<4x8xf32>
    %13 = vector.shape_cast %12 : vector<4x8xf32> to vector<4x8x1xf32>
    %14 = tpu.reciprocal %13 {approx = true} : vector<4x8x1xf32> -> vector<4x8x1xf32>
    %15 = vector.broadcast %14 : vector<4x8x1xf32> to vector<4x8x8xf32>
    %16 = arith.mulf %11, %15 : vector<4x8x8xf32>
    %c0_11 = arith.constant 0 : index
    %c0_12 = arith.constant 0 : index
    %c0_13 = arith.constant 0 : index
    %17 = vector.load %arg2[%c0_11, %c0_12, %c0_13] : memref<4x8x64xf32, #tpu.memory_space<vmem>>, vector<4x8x64xf32>
    "tpu.trace_start"() <{level = 10 : i32, message = "bqk,bkd->bqd"}> : () -> ()
    %cst_14 = arith.constant dense<0.000000e+00> : vector<4x8x64xf32>
    %18 = tpu.matmul %16, %17, %cst_14 {dimension_numbers = #tpu.dot_dimension_numbers<[2], [1], [1], [2], [0, 0, 0, 1, 1, 2], [0], [0]>} : vector<4x8x8xf32>, vector<4x8x64xf32>, vector<4x8x64xf32> -> vector<4x8x64xf32>
    "tpu.trace_stop"() : () -> ()
    %c0_15 = arith.constant 0 : index
    %c0_16 = arith.constant 0 : index
    %c0_17 = arith.constant 0 : index
    %19 = vector.load %arg4[%c0_15, %c0_16, %c0_17] : memref<4x8x64xf32, #tpu.memory_space<vmem>>, vector<4x8x64xf32>
    tpu.vector_store %arg4[%c0_15, %c0_16, %c0_17], %18 {strides = array<i32>} : memref<4x8x64xf32, #tpu.memory_space<vmem>>, vector<4x8x64xf32>,
    return
  }
}

module attributes {stable_mosaic.version = 11 : i64} {
  func.func @kernel(%arg0: memref<16x128xf32, #tpu.memory_space<vmem>>, %arg1: memref<128x128xf32, #tpu.memory_space<vmem>>, %arg2: memref<1x128xf32, #tpu.memory_space<vmem>>, %arg3: memref<16x128xf32, #tpu.memory_space<vmem>>) attributes {dimension_semantics = [], scalar_prefetch = 0 : i64, scratch_operands = 0 : i64, tpu.core_type = #tpu.core_type<tc>} {
    %c0 = arith.constant 0 : index
    %c0_0 = arith.constant 0 : index
    %0 = vector.load %arg0[%c0, %c0_0] : memref<16x128xf32, #tpu.memory_space<vmem>>, vector<16x128xf32>
    %c0_1 = arith.constant 0 : index
    %c0_2 = arith.constant 0 : index
    %1 = vector.load %arg1[%c0_1, %c0_2] : memref<128x128xf32, #tpu.memory_space<vmem>>, vector<128x128xf32>
    %cst = arith.constant dense<0.000000e+00> : vector<16x128xf32>
    %2 = tpu.matmul %0, %1, %cst {dimension_numbers = #tpu.dot_dimension_numbers<[1], [0], [0], [1], [0, 0, 1, 1], [], []>} : vector<16x128xf32>, vector<128x128xf32>, vector<16x128xf32> -> vector<16x128xf32>
    %c0_3 = arith.constant 0 : index
    %c0_4 = arith.constant 0 : index
    %3 = vector.load %arg2[%c0_3, %c0_4] : memref<1x128xf32, #tpu.memory_space<vmem>>, vector<1x128xf32>
    %4 = vector.broadcast %3 : vector<1x128xf32> to vector<16x128xf32>
    %5 = arith.addf %2, %4 : vector<16x128xf32>
    %c0_5 = arith.constant 0 : index
    %c0_6 = arith.constant 0 : index
    %6 = vector.load %arg3[%c0_5, %c0_6] : memref<16x128xf32, #tpu.memory_space<vmem>>, vector<16x128xf32>
    tpu.vector_store %arg3[%c0_5, %c0_6], %5 {strides = array<i32>} : memref<16x128xf32, #tpu.memory_space<vmem>>, vector<16x128xf32>,
    return
  }
}

module attributes {stable_mosaic.version = 11 : i64} {
  func.func @kernel(%arg0: memref<16x128xf32, #tpu.memory_space<vmem>>, %arg1: memref<128x128xf32, #tpu.memory_space<vmem>>, %arg2: memref<1x128xf32, #tpu.memory_space<vmem>>, %arg3: memref<16x128xf32, #tpu.memory_space<vmem>>, %arg4: memref<1x128xf32, #tpu.memory_space<vmem>>, %arg5: memref<1x128xf32, #tpu.memory_space<vmem>>, %arg6: memref<16x128xf32, #tpu.memory_space<vmem>>) attributes {dimension_semantics = [], scalar_prefetch = 0 : i64, scratch_operands = 0 : i64, tpu.core_type = #tpu.core_type<tc>} {
    %c0 = arith.constant 0 : index
    %c0_0 = arith.constant 0 : index
    %0 = vector.load %arg0[%c0, %c0_0] : memref<16x128xf32, #tpu.memory_space<vmem>>, vector<16x128xf32>
    %c0_1 = arith.constant 0 : index
    %c0_2 = arith.constant 0 : index
    %1 = vector.load %arg1[%c0_1, %c0_2] : memref<128x128xf32, #tpu.memory_space<vmem>>, vector<128x128xf32>
    %cst = arith.constant dense<0.000000e+00> : vector<16x128xf32>
    %2 = tpu.matmul %0, %1, %cst {dimension_numbers = #tpu.dot_dimension_numbers<[1], [0], [0], [1], [0, 0, 1, 1], [], []>} : vector<16x128xf32>, vector<128x128xf32>, vector<16x128xf32> -> vector<16x128xf32>
    %c0_3 = arith.constant 0 : index
    %c0_4 = arith.constant 0 : index
    %3 = vector.load %arg2[%c0_3, %c0_4] : memref<1x128xf32, #tpu.memory_space<vmem>>, vector<1x128xf32>
    %4 = vector.broadcast %3 : vector<1x128xf32> to vector<16x128xf32>
    %5 = arith.addf %2, %4 : vector<16x128xf32>
    %c0_5 = arith.constant 0 : index
    %c0_6 = arith.constant 0 : index
    %6 = vector.load %arg3[%c0_5, %c0_6] : memref<16x128xf32, #tpu.memory_space<vmem>>, vector<16x128xf32>
    %7 = arith.addf %5, %6 : vector<16x128xf32>
    %cst_7 = arith.constant dense<0.000000e+00> : vector<16xf32>
    %8 = vector.multi_reduction <add>, %7, %cst_7 [1] : vector<16x128xf32> to vector<16xf32>
    %9 = vector.shape_cast %8 : vector<16xf32> to vector<16x1xf32>
    %cst_8 = arith.constant 1.280000e+02 : f32
    %10 = vector.broadcast %cst_8 : f32 to vector<16x1xf32>
    %11 = arith.divf %9, %10 : vector<16x1xf32>
    %12 = vector.broadcast %11 : vector<16x1xf32> to vector<16x128xf32>
    %13 = arith.subf %7, %12 : vector<16x128xf32>
    %14 = arith.mulf %13, %13 : vector<16x128xf32>
    %cst_9 = arith.constant dense<0.000000e+00> : vector<16xf32>
    %15 = vector.multi_reduction <add>, %14, %cst_9 [1] : vector<16x128xf32> to vector<16xf32>
    %16 = vector.shape_cast %15 : vector<16xf32> to vector<16x1xf32>
    %cst_10 = arith.constant 1.280000e+02 : f32
    %17 = vector.broadcast %cst_10 : f32 to vector<16x1xf32>
    %18 = arith.divf %16, %17 : vector<16x1xf32>
    %19 = vector.broadcast %11 : vector<16x1xf32> to vector<16x128xf32>
    %20 = arith.subf %7, %19 : vector<16x128xf32>
    %cst_11 = arith.constant 9.99999974E-6 : f32
    %21 = vector.broadcast %cst_11 : f32 to vector<16x1xf32>
    %22 = arith.addf %18, %21 : vector<16x1xf32>
    %23 = math.rsqrt %22 : vector<16x1xf32>
    %24 = vector.broadcast %23 : vector<16x1xf32> to vector<16x128xf32>
    %25 = arith.mulf %20, %24 : vector<16x128xf32>
    %c0_12 = arith.constant 0 : index
    %c0_13 = arith.constant 0 : index
    %26 = vector.load %arg4[%c0_12, %c0_13] : memref<1x128xf32, #tpu.memory_space<vmem>>, vector<1x128xf32>
    %27 = vector.broadcast %26 : vector<1x128xf32> to vector<16x128xf32>
    %28 = arith.mulf %25, %27 : vector<16x128xf32>
    %c0_14 = arith.constant 0 : index
    %c0_15 = arith.constant 0 : index
    %29 = vector.load %arg5[%c0_14, %c0_15] : memref<1x128xf32, #tpu.memory_space<vmem>>, vector<1x128xf32>
    %30 = vector.broadcast %29 : vector<1x128xf32> to vector<16x128xf32>
    %31 = arith.addf %28, %30 : vector<16x128xf32>
    %c0_16 = arith.constant 0 : index
    %c0_17 = arith.constant 0 : index
    %32 = vector.load %arg6[%c0_16, %c0_17] : memref<16x128xf32, #tpu.memory_space<vmem>>, vector<16x128xf32>
    tpu.vector_store %arg6[%c0_16, %c0_17], %31 {strides = array<i32>} : memref<16x128xf32, #tpu.memory_space<vmem>>, vector<16x128xf32>,
    return
  }
}

module attributes {stable_mosaic.version = 11 : i64} {
  func.func @kernel(%arg0: memref<16x128xf32, #tpu.memory_space<vmem>>, %arg1: memref<128x256xf32, #tpu.memory_space<vmem>>, %arg2: memref<1x256xf32, #tpu.memory_space<vmem>>, %arg3: memref<16x256xf32, #tpu.memory_space<vmem>>) attributes {dimension_semantics = [], scalar_prefetch = 0 : i64, scratch_operands = 0 : i64, tpu.core_type = #tpu.core_type<tc>} {
    %c0 = arith.constant 0 : index
    %c0_0 = arith.constant 0 : index
    %0 = vector.load %arg0[%c0, %c0_0] : memref<16x128xf32, #tpu.memory_space<vmem>>, vector<16x128xf32>
    %c0_1 = arith.constant 0 : index
    %c0_2 = arith.constant 0 : index
    %1 = vector.load %arg1[%c0_1, %c0_2] : memref<128x256xf32, #tpu.memory_space<vmem>>, vector<128x256xf32>
    %cst = arith.constant dense<0.000000e+00> : vector<16x256xf32>
    %2 = tpu.matmul %0, %1, %cst {dimension_numbers = #tpu.dot_dimension_numbers<[1], [0], [0], [1], [0, 0, 1, 1], [], []>} : vector<16x128xf32>, vector<128x256xf32>, vector<16x256xf32> -> vector<16x256xf32>
    %c0_3 = arith.constant 0 : index
    %c0_4 = arith.constant 0 : index
    %3 = vector.load %arg2[%c0_3, %c0_4] : memref<1x256xf32, #tpu.memory_space<vmem>>, vector<1x256xf32>
    %4 = vector.broadcast %3 : vector<1x256xf32> to vector<16x256xf32>
    %5 = arith.addf %2, %4 : vector<16x256xf32>
    %c0_5 = arith.constant 0 : index
    %c0_6 = arith.constant 0 : index
    %6 = vector.load %arg3[%c0_5, %c0_6] : memref<16x256xf32, #tpu.memory_space<vmem>>, vector<16x256xf32>
    tpu.vector_store %arg3[%c0_5, %c0_6], %5 {strides = array<i32>} : memref<16x256xf32, #tpu.memory_space<vmem>>, vector<16x256xf32>,
    return
  }
}

module attributes {stable_mosaic.version = 11 : i64} {
  func.func @kernel(%arg0: memref<16x512xf32, #tpu.memory_space<vmem>>, %arg1: memref<512x128xf32, #tpu.memory_space<vmem>>, %arg2: memref<1x128xf32, #tpu.memory_space<vmem>>, %arg3: memref<16x128xf32, #tpu.memory_space<vmem>>, %arg4: memref<1x128xf32, #tpu.memory_space<vmem>>, %arg5: memref<1x128xf32, #tpu.memory_space<vmem>>, %arg6: memref<16x128xf32, #tpu.memory_space<vmem>>) attributes {dimension_semantics = [], scalar_prefetch = 0 : i64, scratch_operands = 0 : i64, tpu.core_type = #tpu.core_type<tc>} {
    %c0 = arith.constant 0 : index
    %c0_0 = arith.constant 0 : index
    %0 = vector.load %arg0[%c0, %c0_0] : memref<16x512xf32, #tpu.memory_space<vmem>>, vector<16x512xf32>
    %c0_1 = arith.constant 0 : index
    %c0_2 = arith.constant 0 : index
    %1 = vector.load %arg1[%c0_1, %c0_2] : memref<512x128xf32, #tpu.memory_space<vmem>>, vector<512x128xf32>
    %cst = arith.constant dense<0.000000e+00> : vector<16x128xf32>
    %2 = tpu.matmul %0, %1, %cst {dimension_numbers = #tpu.dot_dimension_numbers<[1], [0], [0], [1], [0, 0, 1, 1], [], []>} : vector<16x512xf32>, vector<512x128xf32>, vector<16x128xf32> -> vector<16x128xf32>
    %c0_3 = arith.constant 0 : index
    %c0_4 = arith.constant 0 : index
    %3 = vector.load %arg2[%c0_3, %c0_4] : memref<1x128xf32, #tpu.memory_space<vmem>>, vector<1x128xf32>
    %4 = vector.broadcast %3 : vector<1x128xf32> to vector<16x128xf32>
    %5 = arith.addf %2, %4 : vector<16x128xf32>
    %c0_5 = arith.constant 0 : index
    %c0_6 = arith.constant 0 : index
    %6 = vector.load %arg3[%c0_5, %c0_6] : memref<16x128xf32, #tpu.memory_space<vmem>>, vector<16x128xf32>
    %7 = arith.addf %5, %6 : vector<16x128xf32>
    %cst_7 = arith.constant dense<0.000000e+00> : vector<16xf32>
    %8 = vector.multi_reduction <add>, %7, %cst_7 [1] : vector<16x128xf32> to vector<16xf32>
    %9 = vector.shape_cast %8 : vector<16xf32> to vector<16x1xf32>
    %cst_8 = arith.constant 1.280000e+02 : f32
    %10 = vector.broadcast %cst_8 : f32 to vector<16x1xf32>
    %11 = arith.divf %9, %10 : vector<16x1xf32>
    %12 = vector.broadcast %11 : vector<16x1xf32> to vector<16x128xf32>
    %13 = arith.subf %7, %12 : vector<16x128xf32>
    %14 = arith.mulf %13, %13 : vector<16x128xf32>
    %cst_9 = arith.constant dense<0.000000e+00> : vector<16xf32>
    %15 = vector.multi_reduction <add>, %14, %cst_9 [1] : vector<16x128xf32> to vector<16xf32>
    %16 = vector.shape_cast %15 : vector<16xf32> to vector<16x1xf32>
    %cst_10 = arith.constant 1.280000e+02 : f32
    %17 = vector.broadcast %cst_10 : f32 to vector<16x1xf32>
    %18 = arith.divf %16, %17 : vector<16x1xf32>
    %19 = vector.broadcast %11 : vector<16x1xf32> to vector<16x128xf32>
    %20 = arith.subf %7, %19 : vector<16x128xf32>
    %cst_11 = arith.constant 9.99999974E-6 : f32
    %21 = vector.broadcast %cst_11 : f32 to vector<16x1xf32>
    %22 = arith.addf %18, %21 : vector<16x1xf32>
    %23 = math.rsqrt %22 : vector<16x1xf32>
    %24 = vector.broadcast %23 : vector<16x1xf32> to vector<16x128xf32>
    %25 = arith.mulf %20, %24 : vector<16x128xf32>
    %c0_12 = arith.constant 0 : index
    %c0_13 = arith.constant 0 : index
    %26 = vector.load %arg4[%c0_12, %c0_13] : memref<1x128xf32, #tpu.memory_space<vmem>>, vector<1x128xf32>
    %27 = vector.broadcast %26 : vector<1x128xf32> to vector<16x128xf32>
    %28 = arith.mulf %25, %27 : vector<16x128xf32>
    %c0_14 = arith.constant 0 : index
    %c0_15 = arith.constant 0 : index
    %29 = vector.load %arg5[%c0_14, %c0_15] : memref<1x128xf32, #tpu.memory_space<vmem>>, vector<1x128xf32>
    %30 = vector.broadcast %29 : vector<1x128xf32> to vector<16x128xf32>
    %31 = arith.addf %28, %30 : vector<16x128xf32>
    %c0_16 = arith.constant 0 : index
    %c0_17 = arith.constant 0 : index
    %32 = vector.load %arg6[%c0_16, %c0_17] : memref<16x128xf32, #tpu.memory_space<vmem>>, vector<16x128xf32>
    tpu.vector_store %arg6[%c0_16, %c0_17], %31 {strides = array<i32>} : memref<16x128xf32, #tpu.memory_space<vmem>>, vector<16x128xf32>,
    return
  }
}

module attributes {stable_mosaic.version = 11 : i64} {
  func.func @kernel(%arg0: memref<16x128xf32, #tpu.memory_space<vmem>>, %arg1: memref<128x512xf32, #tpu.memory_space<vmem>>, %arg2: memref<1x512xf32, #tpu.memory_space<vmem>>, %arg3: memref<16x512xf32, #tpu.memory_space<vmem>>) attributes {dimension_semantics = [], scalar_prefetch = 0 : i64, scratch_operands = 0 : i64, tpu.core_type = #tpu.core_type<tc>} {
    %c0 = arith.constant 0 : index
    %c0_0 = arith.constant 0 : index
    %0 = vector.load %arg0[%c0, %c0_0] : memref<16x128xf32, #tpu.memory_space<vmem>>, vector<16x128xf32>
    %c0_1 = arith.constant 0 : index
    %c0_2 = arith.constant 0 : index
    %1 = vector.load %arg1[%c0_1, %c0_2] : memref<128x512xf32, #tpu.memory_space<vmem>>, vector<128x512xf32>
    %cst = arith.constant dense<0.000000e+00> : vector<16x512xf32>
    %2 = tpu.matmul %0, %1, %cst {dimension_numbers = #tpu.dot_dimension_numbers<[1], [0], [0], [1], [0, 0, 1, 1], [], []>} : vector<16x128xf32>, vector<128x512xf32>, vector<16x512xf32> -> vector<16x512xf32>
    %c0_3 = arith.constant 0 : index
    %c0_4 = arith.constant 0 : index
    %3 = vector.load %arg2[%c0_3, %c0_4] : memref<1x512xf32, #tpu.memory_space<vmem>>, vector<1x512xf32>
    %4 = vector.broadcast %3 : vector<1x512xf32> to vector<16x512xf32>
    %5 = arith.addf %2, %4 : vector<16x512xf32>
    %cst_5 = arith.constant 0.000000e+00 : f32
    %6 = vector.broadcast %cst_5 : f32 to vector<16x512xf32>
    %7 = arith.maximumf %5, %6 : vector<16x512xf32>
    %c0_6 = arith.constant 0 : index
    %c0_7 = arith.constant 0 : index
    %8 = vector.load %arg3[%c0_6, %c0_7] : memref<16x512xf32, #tpu.memory_space<vmem>>, vector<16x512xf32>
    tpu.vector_store %arg3[%c0_6, %c0_7], %7 {strides = array<i32>} : memref<16x512xf32, #tpu.memory_space<vmem>>, vector<16x512xf32>,
    return
  }
}

module attributes {stable_mosaic.version = 11 : i64} {
  func.func @kernel(%arg0: memref<16x128xf32, #tpu.memory_space<vmem>>, %arg1: memref<128x52xf32, #tpu.memory_space<vmem>>, %arg2: memref<1x52xf32, #tpu.memory_space<vmem>>, %arg3: memref<16x52xf32, #tpu.memory_space<vmem>>) attributes {dimension_semantics = [], scalar_prefetch = 0 : i64, scratch_operands = 0 : i64, tpu.core_type = #tpu.core_type<tc>} {
    %c0 = arith.constant 0 : index
    %c0_0 = arith.constant 0 : index
    %0 = vector.load %arg0[%c0, %c0_0] : memref<16x128xf32, #tpu.memory_space<vmem>>, vector<16x128xf32>
    %c0_1 = arith.constant 0 : index
    %c0_2 = arith.constant 0 : index
    %1 = vector.load %arg1[%c0_1, %c0_2] : memref<128x52xf32, #tpu.memory_space<vmem>>, vector<128x52xf32>
    %cst = arith.constant dense<0.000000e+00> : vector<16x52xf32>
    %2 = tpu.matmul %0, %1, %cst {dimension_numbers = #tpu.dot_dimension_numbers<[1], [0], [0], [1], [0, 0, 1, 1], [], []>} : vector<16x128xf32>, vector<128x52xf32>, vector<16x52xf32> -> vector<16x52xf32>
    %c0_3 = arith.constant 0 : index
    %c0_4 = arith.constant 0 : index
    %3 = vector.load %arg2[%c0_3, %c0_4] : memref<1x52xf32, #tpu.memory_space<vmem>>, vector<1x52xf32>
    %4 = vector.broadcast %3 : vector<1x52xf32> to vector<16x52xf32>
    %5 = arith.addf %2, %4 : vector<16x52xf32>
    %c0_5 = arith.constant 0 : index
    %c0_6 = arith.constant 0 : index
    %6 = vector.load %arg3[%c0_5, %c0_6] : memref<16x52xf32, #tpu.memory_space<vmem>>, vector<16x52xf32>
    tpu.vector_store %arg3[%c0_5, %c0_6], %5 {strides = array<i32>} : memref<16x52xf32, #tpu.memory_space<vmem>>, vector<16x52xf32>,
    return
  }
}

module attributes {stable_mosaic.version = 11 : i64} {
  func.func @kernel(%arg0: memref<2x64xf32, #tpu.memory_space<vmem>>, %arg1: memref<64x4xf32, #tpu.memory_space<vmem>>, %arg2: memref<1x4xf32, #tpu.memory_space<vmem>>, %arg3: memref<2x4xf32, #tpu.memory_space<vmem>>) attributes {dimension_semantics = [], scalar_prefetch = 0 : i64, scratch_operands = 0 : i64, tpu.core_type = #tpu.core_type<tc>} {
    %c0 = arith.constant 0 : index
    %c0_0 = arith.constant 0 : index
    %0 = vector.load %arg0[%c0, %c0_0] : memref<2x64xf32, #tpu.memory_space<vmem>>, vector<2x64xf32>
    %c0_1 = arith.constant 0 : index
    %c0_2 = arith.constant 0 : index
    %1 = vector.load %arg1[%c0_1, %c0_2] : memref<64x4xf32, #tpu.memory_space<vmem>>, vector<64x4xf32>
    %cst = arith.constant dense<0.000000e+00> : vector<2x4xf32>
    %2 = tpu.matmul %0, %1, %cst {dimension_numbers = #tpu.dot_dimension_numbers<[1], [0], [0], [1], [0, 0, 1, 1], [], []>} : vector<2x64xf32>, vector<64x4xf32>, vector<2x4xf32> -> vector<2x4xf32>
    %c0_3 = arith.constant 0 : index
    %c0_4 = arith.constant 0 : index
    %3 = vector.load %arg2[%c0_3, %c0_4] : memref<1x4xf32, #tpu.memory_space<vmem>>, vector<1x4xf32>
    %4 = vector.broadcast %3 : vector<1x4xf32> to vector<2x4xf32>
    %5 = arith.addf %2, %4 : vector<2x4xf32>
    %c0_5 = arith.constant 0 : index
    %c0_6 = arith.constant 0 : index
    %6 = vector.load %arg3[%c0_5, %c0_6] : memref<2x4xf32, #tpu.memory_space<vmem>>, vector<2x4xf32>
    tpu.vector_store %arg3[%c0_5, %c0_6], %5 {strides = array<i32>} : memref<2x4xf32, #tpu.memory_space<vmem>>, vector<2x4xf32>,
    return
  }
}

</mosaic_0001>

<llo_original>
// kernel: forward.25
$region0: #{forward.25}
  #allocation0 [shape = 'u32[]', space=smem, size = 0x4, offset = 0x4, fixed_abs, tag = 'smem constant byte address 0x4 - core index']
  #allocation1 [shape = 'u32[144,128]{1,0:T(1,128)}', space=vmem, size = 0x12000, scoped, tag = 'internal scratch']
  %s0 = inlined_call_operand.vmem [shape: f32[16,64], index: 0, kind: input, shape index: {}]
  %s1 = inlined_call_operand.vmem [shape: f32[16,64], index: 1, kind: input, shape index: {}]
  %s2 = inlined_call_operand.vmem [shape: f32[64,64], index: 2, kind: input, shape index: {}]
  %s3 = inlined_call_operand.vmem [shape: f32[1,64], index: 3, kind: input, shape index: {}]
  %s4 = inlined_call_operand.vmem [shape: f32[64,64], index: 4, kind: input, shape index: {}]
  %s5 = inlined_call_operand.vmem [shape: f32[1,64], index: 5, kind: input, shape index: {}]
  %s6 = inlined_call_operand.vmem [shape: f32[64,128], index: 6, kind: input, shape index: {}]
  %s7 = inlined_call_operand.vmem [shape: f32[1,128], index: 7, kind: input, shape index: {}]
  %s8 = inlined_call_operand.vmem [shape: f32[16,64], index: 8, kind: output, shape index: {0}]
  %s9 = inlined_call_operand.vmem [shape: f32[16,128], index: 9, kind: output, shape index: {1}]
  %10 = xla_tuple %s8, %s9
  %s11 = sld [smem:[#allocation0]]
  $region50: #{forward.25} parent=0
    _
  %s13 = ssub.s32 1, %s11
  %s14 = scalar_select 0, %s13, %s11
  // Predicated region
  $region2: #{forward.25} parent=0 // pred_check
    _
  $region3: #{forward.25} parent=0 // pred_check_branch
    %16 = sbr.rel (0) target = $region5
  $region4: #{forward.25} parent=0 // pred_region
    _
  $region5: #{forward.25} parent=0 // pred_fallthru
    _
  // Predicated region
  $region6: #{forward.25} parent=0 // pred_check
    _
  $region7: #{forward.25} parent=0 // pred_check_branch
    %18 = sbr.rel (0) target = $region9
  $region8: #{forward.25} parent=0 // pred_region
    _
  $region9: #{forward.25} parent=0 // pred_fallthru
    _
  // Predicated region
  $region10: #{forward.25} parent=0 // pred_check
    _
  $region11: #{forward.25} parent=0 // pred_check_branch
    %20 = sbr.rel (0) target = $region13
  $region12: #{forward.25} parent=0 // pred_region
    _
  $region13: #{forward.25} parent=0 // pred_fallthru
    _
  // Predicated region
  $region14: #{forward.25} parent=0 // pred_check
    _
  $region15: #{forward.25} parent=0 // pred_check_branch
    %22 = sbr.rel (0) target = $region17
  $region16: #{forward.25} parent=0 // pred_region
    _
  $region17: #{forward.25} parent=0 // pred_fallthru
    _
  // Predicated region
  $region18: #{forward.25} parent=0 // pred_check
    _
  $region19: #{forward.25} parent=0 // pred_check_branch
    %24 = sbr.rel (0) target = $region21
  $region20: #{forward.25} parent=0 // pred_region
    _
  $region21: #{forward.25} parent=0 // pred_fallthru
    _
  // Predicated region
  $region22: #{forward.25} parent=0 // pred_check
    _
  $region23: #{forward.25} parent=0 // pred_check_branch
    %26 = sbr.rel (0) target = $region25
  $region24: #{forward.25} parent=0 // pred_region
    _
  $region25: #{forward.25} parent=0 // pred_fallthru
    _
  // Predicated region
  $region26: #{forward.25} parent=0 // pred_check
    _
  $region27: #{forward.25} parent=0 // pred_check_branch
    %28 = sbr.rel (0) target = $region29
  $region28: #{forward.25} parent=0 // pred_region
    _
  $region29: #{forward.25} parent=0 // pred_fallthru
    _
  // Predicated region
  $region30: #{forward.25} parent=0 // pred_check
    _
  $region31: #{forward.25} parent=0 // pred_check_branch
    %30 = sbr.rel (0) target = $region33
  $region32: #{forward.25} parent=0 // pred_region
    _
  $region33: #{forward.25} parent=0 // pred_fallthru
    _
  %v31 = vld [vmem:[%s0] sm:$0xff]
  %v32 = vld [vmem:[%s0 + $0x8] sm:$0xff]
  %v33 = vld [vmem:[%s2] sm:$0xff]
  %v34 = vld [vmem:[%s2 + $0x8] sm:$0xff]
  %v35 = vld [vmem:[%s2 + $0x10] sm:$0xff]
  %v36 = vld [vmem:[%s2 + $0x18] sm:$0xff]
  %v37 = vld [vmem:[%s2 + $0x20] sm:$0xff]
  %v38 = vld [vmem:[%s2 + $0x28] sm:$0xff]
  %v39 = vld [vmem:[%s2 + $0x30] sm:$0xff]
  %v40 = vld [vmem:[%s2 + $0x38] sm:$0xff]
  %v41 = vld [vmem:[%s3] sm:$0x1]
  %v43 = vlaneseq
  %v44 = vshrl.u32 %v43, 7
  %v45 = vsub.s32 0, %v44
  %v46 = vrot.slane %v41, %v45
  %vm48 = vcmask 523264
  %v50 = vsel %vm48, %v31, 0
  %v53 = vsel %vm48, %v32, 0
  %55 = vmatprep.subr.mxu0 0.0
  %56 = vmatpush1.msra.mxu0 %v33
  %57 = vmatprep.subr.mxu0 0.0
  %58 = vmatpush1.msra.mxu0 %v34
  %59 = vmatprep.subr.mxu0 0.0
  %60 = vmatpush1.msra.mxu0 %v35
  %61 = vmatprep.subr.mxu0 0.0
  %62 = vmatpush1.msra.mxu0 %v36
  %63 = vmatprep.subr.mxu0 0.0
  %64 = vmatpush1.msra.mxu0 %v37
  %65 = vmatprep.subr.mxu0 0.0
  %66 = vmatpush1.msra.mxu0 %v38
  %67 = vmatprep.subr.mxu0 0.0
  %68 = vmatpush1.msra.mxu0 %v39
  %69 = vmatprep.subr.mxu0 0.0
  %70 = vmatpush1.msra.mxu0 %v40
  %71 = vmatprep.subr.mxu0 0.0
  %72 = vmatpush1.msra.mxu0 0.0
  %73 = vmatprep.subr.mxu0 0.0
  %74 = vmatpush1.msra.mxu0 0.0
  %75 = vmatprep.subr.mxu0 0.0
  %76 = vmatpush1.msra.mxu0 0.0
  %77 = vmatprep.subr.mxu0 0.0
  %78 = vmatpush1.msra.mxu0 0.0
  %79 = vmatprep.subr.mxu0 0.0
  %80 = vmatpush1.msra.mxu0 0.0
  %81 = vmatprep.subr.mxu0 0.0
  %82 = vmatpush1.msra.mxu0 0.0
  %83 = vmatprep.subr.mxu0 0.0
  %84 = vmatpush1.msra.mxu0 0.0
  %85 = vmatprep.subr.mxu0 0.0
  %86 = vmatpush1.msra.mxu0 0.0
  %87 = vmatprep.subr.mxu0 0.0
  %88 = vmatpush1.msra.mxu0 0.0
  %89 = vmatprep.subr.mxu0 0.0
  %90 = vmatpush1.msra.mxu0 0.0
  %91 = vmatprep.subr.mxu0 0.0
  %92 = vmatpush1.msra.mxu0 0.0
  %93 = vmatprep.subr.mxu0 0.0
  %94 = vmatpush1.msra.mxu0 0.0
  %95 = vmatprep.subr.mxu0 0.0
  %96 = vmatpush1.msra.mxu0 0.0
  %97 = vmatprep.subr.mxu0 0.0
  %98 = vmatpush1.msra.mxu0 0.0
  %99 = vmatprep.subr.mxu0 0.0
  %100 = vmatpush1.msra.mxu0 0.0
  %101 = vmatprep.subr.mxu0 0.0
  %102 = vmatpush1.msra.mxu0 0.0
  %103 = vmatprep.subr.mxu0 0.0
  %104 = vmatpush1.msra.mxu0 0.0
  %105 = vmatprep.subr.mxu0 0.0
  %106 = vmatpush1.msra.mxu0 0.0
  %107 = vmatprep.subr.mxu0 0.0
  %108 = vmatpush1.msra.mxu0 0.0
  %109 = vmatprep.subr.mxu0 0.0
  %110 = vmatpush1.msra.mxu0 0.0
  %111 = vmatprep.subr.mxu0 0.0
  %112 = vmatpush1.msra.mxu0 0.0
  %113 = vmatprep.subr.mxu0 0.0
  %114 = vmatpush1.msra.mxu0 0.0
  %115 = vmatprep.subr.mxu0 0.0
  %116 = vmatpush1.msra.mxu0 0.0
  %117 = vmatprep.subr.mxu0 0.0
  %118 = vmatpush1.msra.mxu0 0.0
  %119 = vmatprep.mubr.f32.mxu0 0.0
  %120 = vmatmul.mubr.f32.gmra.mrb[0].mxu0 %v50
  %v121 = vpop.f32.mrb[0].mxu0
  %v122 = vadd.f32 %v46, %v121
  %v123 = vpop.f32.mrb[0].mxu0
  %124 = vmatprep.mubr.f32.mxu0 0.0
  %125 = vmatmul.mubr.f32.gmra.mrb[0].mxu0 %v53
  %v126 = vpop.f32.mrb[0].mxu0
  %v127 = vadd.f32 %v46, %v126
  %v128 = vpop.f32.mrb[0].mxu0
  %129 = vdwg.mxu0
  %v130 = vld [vmem:[%s4] sm:$0xff]
  %v131 = vld [vmem:[%s4 + $0x8] sm:$0xff]
  %v132 = vld [vmem:[%s4 + $0x10] sm:$0xff]
  %v133 = vld [vmem:[%s4 + $0x18] sm:$0xff]
  %v134 = vld [vmem:[%s4 + $0x20] sm:$0xff]
  %v135 = vld [vmem:[%s4 + $0x28] sm:$0xff]
  %v136 = vld [vmem:[%s4 + $0x30] sm:$0xff]
  %v137 = vld [vmem:[%s4 + $0x38] sm:$0xff]
  %v138 = vld [vmem:[%s5] sm:$0x1]
  %v140 = vlaneseq
  %v141 = vshrl.u32 %v140, 7
  %v142 = vsub.s32 0, %v141
  %v143 = vrot.slane %v138, %v142
  %145 = vmatprep.subr.mxu0 0.0
  %146 = vmatpush1.msra.mxu0 %v130
  %147 = vmatprep.subr.mxu0 0.0
  %148 = vmatpush1.msra.mxu0 %v131
  %149 = vmatprep.subr.mxu0 0.0
  %150 = vmatpush1.msra.mxu0 %v132
  %151 = vmatprep.subr.mxu0 0.0
  %152 = vmatpush1.msra.mxu0 %v133
  %153 = vmatprep.subr.mxu0 0.0
  %154 = vmatpush1.msra.mxu0 %v134
  %155 = vmatprep.subr.mxu0 0.0
  %156 = vmatpush1.msra.mxu0 %v135
  %157 = vmatprep.subr.mxu0 0.0
  %158 = vmatpush1.msra.mxu0 %v136
  %159 = vmatprep.subr.mxu0 0.0
  %160 = vmatpush1.msra.mxu0 %v137
  %161 = vmatprep.subr.mxu0 0.0
  %162 = vmatpush1.msra.mxu0 0.0
  %163 = vmatprep.subr.mxu0 0.0
  %164 = vmatpush1.msra.mxu0 0.0
  %165 = vmatprep.subr.mxu0 0.0
  %166 = vmatpush1.msra.mxu0 0.0
  %167 = vmatprep.subr.mxu0 0.0
  %168 = vmatpush1.msra.mxu0 0.0
  %169 = vmatprep.subr.mxu0 0.0
  %170 = vmatpush1.msra.mxu0 0.0
  %171 = vmatprep.subr.mxu0 0.0
  %172 = vmatpush1.msra.mxu0 0.0
  %173 = vmatprep.subr.mxu0 0.0
  %174 = vmatpush1.msra.mxu0 0.0
  %175 = vmatprep.subr.mxu0 0.0
  %176 = vmatpush1.msra.mxu0 0.0
  %177 = vmatprep.subr.mxu0 0.0
  %178 = vmatpush1.msra.mxu0 0.0
  %179 = vmatprep.subr.mxu0 0.0
  %180 = vmatpush1.msra.mxu0 0.0
  %181 = vmatprep.subr.mxu0 0.0
  %182 = vmatpush1.msra.mxu0 0.0
  %183 = vmatprep.subr.mxu0 0.0
  %184 = vmatpush1.msra.mxu0 0.0
  %185 = vmatprep.subr.mxu0 0.0
  %186 = vmatpush1.msra.mxu0 0.0
  %187 = vmatprep.subr.mxu0 0.0
  %188 = vmatpush1.msra.mxu0 0.0
  %189 = vmatprep.subr.mxu0 0.0
  %190 = vmatpush1.msra.mxu0 0.0
  %191 = vmatprep.subr.mxu0 0.0
  %192 = vmatpush1.msra.mxu0 0.0
  %193 = vmatprep.subr.mxu0 0.0
  %194 = vmatpush1.msra.mxu0 0.0
  %195 = vmatprep.subr.mxu0 0.0
  %196 = vmatpush1.msra.mxu0 0.0
  %197 = vmatprep.subr.mxu0 0.0
  %198 = vmatpush1.msra.mxu0 0.0
  %199 = vmatprep.subr.mxu0 0.0
  %200 = vmatpush1.msra.mxu0 0.0
  %201 = vmatprep.subr.mxu0 0.0
  %202 = vmatpush1.msra.mxu0 0.0
  %203 = vmatprep.subr.mxu0 0.0
  %204 = vmatpush1.msra.mxu0 0.0
  %205 = vmatprep.subr.mxu0 0.0
  %206 = vmatpush1.msra.mxu0 0.0
  %207 = vmatprep.subr.mxu0 0.0
  %208 = vmatpush1.msra.mxu0 0.0
  %209 = vmatprep.mubr.f32.mxu0 0.0
  %210 = vmatmul.mubr.f32.gmra.mrb[0].mxu0 %v50
  %v211 = vpop.f32.mrb[0].mxu0
  %v212 = vadd.f32 %v143, %v211
  %v213 = vpop.f32.mrb[0].mxu0
  %214 = vmatprep.mubr.f32.mxu0 0.0
  %215 = vmatmul.mubr.f32.gmra.mrb[0].mxu0 %v53
  %v216 = vpop.f32.mrb[0].mxu0
  %v217 = vadd.f32 %v143, %v216
  %v218 = vpop.f32.mrb[0].mxu0
  %219 = vdwg.mxu0
  %v220 = vld [vmem:[%s1] sm:$0xff]
  %v221 = vld [vmem:[%s1 + $0x8] sm:$0xff]
  %v222 = vmul.f32 %v122, %v220
  %v223 = vmul.f32 %v127, %v221
  %v224 = vadd.f32 %v222, %v212
  %v225 = vadd.f32 %v223, %v217
  %226 = vst.msk [vmem:[%s8] sm:$0xff] %vm48, %v224
  %227 = vst.msk [vmem:[%s8 + $0x8] sm:$0xff] %vm48, %v225
  %v228 = vld [vmem:[%s6] sm:$0xff]
  %v229 = vld [vmem:[%s6 + $0x8] sm:$0xff]
  %v230 = vld [vmem:[%s6 + $0x10] sm:$0xff]
  %v231 = vld [vmem:[%s6 + $0x18] sm:$0xff]
  %v232 = vld [vmem:[%s6 + $0x20] sm:$0xff]
  %v233 = vld [vmem:[%s6 + $0x28] sm:$0xff]
  %v234 = vld [vmem:[%s6 + $0x30] sm:$0xff]
  %v235 = vld [vmem:[%s6 + $0x38] sm:$0xff]
  %v236 = vld [vmem:[%s7] sm:$0x1]
  %v238 = vlaneseq
  %v239 = vshrl.u32 %v238, 7
  %v240 = vsub.s32 0, %v239
  %v241 = vrot.slane %v236, %v240
  %243 = vmatprep.subr.mxu0 0.0
  %244 = vmatpush1.msra.mxu0 %v228
  %245 = vmatprep.subr.mxu0 0.0
  %246 = vmatpush1.msra.mxu0 %v229
  %247 = vmatprep.subr.mxu0 0.0
  %248 = vmatpush1.msra.mxu0 %v230
  %249 = vmatprep.subr.mxu0 0.0
  %250 = vmatpush1.msra.mxu0 %v231
  %251 = vmatprep.subr.mxu0 0.0
  %252 = vmatpush1.msra.mxu0 %v232
  %253 = vmatprep.subr.mxu0 0.0
  %254 = vmatpush1.msra.mxu0 %v233
  %255 = vmatprep.subr.mxu0 0.0
  %256 = vmatpush1.msra.mxu0 %v234
  %257 = vmatprep.subr.mxu0 0.0
  %258 = vmatpush1.msra.mxu0 %v235
  %259 = vmatprep.subr.mxu0 0.0
  %260 = vmatpush1.msra.mxu0 0.0
  %261 = vmatprep.subr.mxu0 0.0
  %262 = vmatpush1.msra.mxu0 0.0
  %263 = vmatprep.subr.mxu0 0.0
  %264 = vmatpush1.msra.mxu0 0.0
  %265 = vmatprep.subr.mxu0 0.0
  %266 = vmatpush1.msra.mxu0 0.0
  %267 = vmatprep.subr.mxu0 0.0
  %268 = vmatpush1.msra.mxu0 0.0
  %269 = vmatprep.subr.mxu0 0.0
  %270 = vmatpush1.msra.mxu0 0.0
  %271 = vmatprep.subr.mxu0 0.0
  %272 = vmatpush1.msra.mxu0 0.0
  %273 = vmatprep.subr.mxu0 0.0
  %274 = vmatpush1.msra.mxu0 0.0
  %275 = vmatprep.subr.mxu0 0.0
  %276 = vmatpush1.msra.mxu0 0.0
  %277 = vmatprep.subr.mxu0 0.0
  %278 = vmatpush1.msra.mxu0 0.0
  %279 = vmatprep.subr.mxu0 0.0
  %280 = vmatpush1.msra.mxu0 0.0
  %281 = vmatprep.subr.mxu0 0.0
  %282 = vmatpush1.msra.mxu0 0.0
  %283 = vmatprep.subr.mxu0 0.0
  %284 = vmatpush1.msra.mxu0 0.0
  %285 = vmatprep.subr.mxu0 0.0
  %286 = vmatpush1.msra.mxu0 0.0
  %287 = vmatprep.subr.mxu0 0.0
  %288 = vmatpush1.msra.mxu0 0.0
  %289 = vmatprep.subr.mxu0 0.0
  %290 = vmatpush1.msra.mxu0 0.0
  %291 = vmatprep.subr.mxu0 0.0
  %292 = vmatpush1.msra.mxu0 0.0
  %293 = vmatprep.subr.mxu0 0.0
  %294 = vmatpush1.msra.mxu0 0.0
  %295 = vmatprep.subr.mxu0 0.0
  %296 = vmatpush1.msra.mxu0 0.0
  %297 = vmatprep.subr.mxu0 0.0
  %298 = vmatpush1.msra.mxu0 0.0
  %299 = vmatprep.subr.mxu0 0.0
  %300 = vmatpush1.msra.mxu0 0.0
  %301 = vmatprep.subr.mxu0 0.0
  %302 = vmatpush1.msra.mxu0 0.0
  %303 = vmatprep.subr.mxu0 0.0
  %304 = vmatpush1.msra.mxu0 0.0
  %305 = vmatprep.subr.mxu0 0.0
  %306 = vmatpush1.msra.mxu0 0.0
  %307 = vmatprep.mubr.f32.mxu0 0.0
  %308 = vmatmul.mubr.f32.gmra.mrb[0].mxu0 %v50
  %v309 = vpop.f32.mrb[0].mxu0
  %v310 = vadd.f32 %v241, %v309
  %v311 = vpop.f32.mrb[0].mxu0
  %312 = vmatprep.mubr.f32.mxu0 0.0
  %313 = vmatmul.mubr.f32.gmra.mrb[0].mxu0 %v53
  %v314 = vpop.f32.mrb[0].mxu0
  %v315 = vadd.f32 %v241, %v314
  %v316 = vpop.f32.mrb[0].mxu0
  %317 = vdwg.mxu0
  %318 = vst [vmem:[%s9] sm:$0xff] %v310
  %319 = vst [vmem:[%s9 + $0x8] sm:$0xff] %v315
  // Predicated region
  $region34: #{forward.25} parent=0 // pred_check
    _
  $region35: #{forward.25} parent=0 // pred_check_branch
    %321 = sbr.rel (0) target = $region37
  $region36: #{forward.25} parent=0 // pred_region
    _
  $region37: #{forward.25} parent=0 // pred_fallthru
    _
  // Predicated region
  $region38: #{forward.25} parent=0 // pred_check
    _
  $region39: #{forward.25} parent=0 // pred_check_branch
    %323 = sbr.rel (0) target = $region41
  $region40: #{forward.25} parent=0 // pred_region
    _
  $region41: #{forward.25} parent=0 // pred_fallthru
    _
  // Predicated region
  $region42: #{forward.25} parent=0 // pred_check
    _
  $region43: #{forward.25} parent=0 // pred_check_branch
    %325 = sbr.rel (0) target = $region45
  $region44: #{forward.25} parent=0 // pred_region
    _
  $region45: #{forward.25} parent=0 // pred_fallthru
    _
  // Predicated region
  $region46: #{forward.25} parent=0 // pred_check
    _
  $region47: #{forward.25} parent=0 // pred_check_branch
    %327 = sbr.rel (0) target = $region49
  $region48: #{forward.25} parent=0 // pred_region
    _
  $region49: #{forward.25} parent=0 // pred_fallthru
    _

// kernel: forward.23
$region0: #{forward.23}
  #allocation0 [shape = 'u32[]', space=smem, size = 0x4, offset = 0x4, fixed_abs, tag = 'smem constant byte address 0x4 - core index']
  #allocation1 [shape = 'u32[144,128]{1,0:T(1,128)}', space=vmem, size = 0x12000, scoped, tag = 'internal scratch']
  %s0 = inlined_call_operand.vmem [shape: f32[16,32], index: 0, kind: input, shape index: {}]
  %s1 = inlined_call_operand.vmem [shape: f32[32,1024], index: 1, kind: input, shape index: {}]
  %s2 = inlined_call_operand.vmem [shape: f32[1,1024], index: 2, kind: input, shape index: {}]
  %s3 = inlined_call_operand.vmem [shape: f32[32,1024], index: 3, kind: input, shape index: {}]
  %s4 = inlined_call_operand.vmem [shape: f32[1,1024], index: 4, kind: input, shape index: {}]
  %s5 = inlined_call_operand.vmem [shape: f32[1024,64], index: 5, kind: input, shape index: {}]
  %s6 = inlined_call_operand.vmem [shape: f32[1,64], index: 6, kind: input, shape index: {}]
  %s7 = inlined_call_operand.vmem [shape: f32[1024,64], index: 7, kind: input, shape index: {}]
  %s8 = inlined_call_operand.vmem [shape: f32[1,64], index: 8, kind: input, shape index: {}]
  %s9 = inlined_call_operand.vmem [shape: f32[64,192], index: 9, kind: input, shape index: {}]
  %s10 = inlined_call_operand.vmem [shape: f32[1,192], index: 10, kind: input, shape index: {}]
  %s11 = inlined_call_operand.vmem [shape: f32[16,64], index: 11, kind: output, shape index: {0}]
  %s12 = inlined_call_operand.vmem [shape: f32[16,192], index: 12, kind: output, shape index: {1}]
  %13 = xla_tuple %s11, %s12
  %s14 = sld [smem:[#allocation0]]
  $region62: #{forward.23} parent=0
    _
  %s16 = ssub.s32 1, %s14
  %s17 = scalar_select 0, %s16, %s14
  // Predicated region
  $region2: #{forward.23} parent=0 // pred_check
    _
  $region3: #{forward.23} parent=0 // pred_check_branch
    %19 = sbr.rel (0) target = $region5
  $region4: #{forward.23} parent=0 // pred_region
    _
  $region5: #{forward.23} parent=0 // pred_fallthru
    _
  // Predicated region
  $region6: #{forward.23} parent=0 // pred_check
    _
  $region7: #{forward.23} parent=0 // pred_check_branch
    %21 = sbr.rel (0) target = $region9
  $region8: #{forward.23} parent=0 // pred_region
    _
  $region9: #{forward.23} parent=0 // pred_fallthru
    _
  // Predicated region
  $region10: #{forward.23} parent=0 // pred_check
    _
  $region11: #{forward.23} parent=0 // pred_check_branch
    %23 = sbr.rel (0) target = $region13
  $region12: #{forward.23} parent=0 // pred_region
    _
  $region13: #{forward.23} parent=0 // pred_fallthru
    _
  // Predicated region
  $region14: #{forward.23} parent=0 // pred_check
    _
  $region15: #{forward.23} parent=0 // pred_check_branch
    %25 = sbr.rel (0) target = $region17
  $region16: #{forward.23} parent=0 // pred_region
    _
  $region17: #{forward.23} parent=0 // pred_fallthru
    _
  // Predicated region
  $region18: #{forward.23} parent=0 // pred_check
    _
  $region19: #{forward.23} parent=0 // pred_check_branch
    %27 = sbr.rel (0) target = $region21
  $region20: #{forward.23} parent=0 // pred_region
    _
  $region21: #{forward.23} parent=0 // pred_fallthru
    _
  // Predicated region
  $region22: #{forward.23} parent=0 // pred_check
    _
  $region23: #{forward.23} parent=0 // pred_check_branch
    %29 = sbr.rel (0) target = $region25
  $region24: #{forward.23} parent=0 // pred_region
    _
  $region25: #{forward.23} parent=0 // pred_fallthru
    _
  // Predicated region
  $region26: #{forward.23} parent=0 // pred_check
    _
  $region27: #{forward.23} parent=0 // pred_check_branch
    %31 = sbr.rel (0) target = $region29
  $region28: #{forward.23} parent=0 // pred_region
    _
  $region29: #{forward.23} parent=0 // pred_fallthru
    _
  // Predicated region
  $region30: #{forward.23} parent=0 // pred_check
    _
  $region31: #{forward.23} parent=0 // pred_check_branch
    %33 = sbr.rel (0) target = $region33
  $region32: #{forward.23} parent=0 // pred_region
    _
  $region33: #{forward.23} parent=0 // pred_fallthru
    _
  // Predicated region
  $region34: #{forward.23} parent=0 // pred_check
    _
  $region35: #{forward.23} parent=0 // pred_check_branch
    %35 = sbr.rel (0) target = $region37
  $region36: #{forward.23} parent=0 // pred_region
    _
  $region37: #{forward.23} parent=0 // pred_fallthru
    _
  // Predicated region
  $region38: #{forward.23} parent=0 // pred_check
    _
  $region39: #{forward.23} parent=0 // pred_check_branch
    %37 = sbr.rel (0) target = $region41
  $region40: #{forward.23} parent=0 // pred_region
    _
  $region41: #{forward.23} parent=0 // pred_fallthru
    _
  // Predicated region
  $region42: #{forward.23} parent=0 // pred_check
    _
  $region43: #{forward.23} parent=0 // pred_check_branch
    %39 = sbr.rel (0) target = $region45
  $region44: #{forward.23} parent=0 // pred_region
    _
  $region45: #{forward.23} parent=0 // pred_fallthru
    _
  %v40 = vld [vmem:[%s0] sm:$0xff]
  %v41 = vld [vmem:[%s0 + $0x8] sm:$0xff]
  %v42 = vld [vmem:[%s1] sm:$0xff]
  %v43 = vld [vmem:[%s1 + $0x8] sm:$0xff]
  %v44 = vld [vmem:[%s1 + $0x10] sm:$0xff]
  %v45 = vld [vmem:[%s1 + $0x18] sm:$0xff]
  %v46 = vld [vmem:[%s1 + $0x20] sm:$0xff]
  %v47 = vld [vmem:[%s1 + $0x28] sm:$0xff]
  %v48 = vld [vmem:[%s1 + $0x30] sm:$0xff]
  %v49 = vld [vmem:[%s1 + $0x38] sm:$0xff]
  %v50 = vld [vmem:[%s1 + $0x40] sm:$0xff]
  %v51 = vld [vmem:[%s1 + $0x48] sm:$0xff]
  %v52 = vld [vmem:[%s1 + $0x50] sm:$0xff]
  %v53 = vld [vmem:[%s1 + $0x58] sm:$0xff]
  %v54 = vld [vmem:[%s1 + $0x60] sm:$0xff]
  %v55 = vld [vmem:[%s1 + $0x68] sm:$0xff]
  %v56 = vld [vmem:[%s1 + $0x70] sm:$0xff]
  %v57 = vld [vmem:[%s1 + $0x78] sm:$0xff]
  %v58 = vld [vmem:[%s1 + $0x80] sm:$0xff]
  %v59 = vld [vmem:[%s1 + $0x88] sm:$0xff]
  %v60 = vld [vmem:[%s1 + $0x90] sm:$0xff]
  %v61 = vld [vmem:[%s1 + $0x98] sm:$0xff]
  %v62 = vld [vmem:[%s1 + $0xa0] sm:$0xff]
  %v63 = vld [vmem:[%s1 + $0xa8] sm:$0xff]
  %v64 = vld [vmem:[%s1 + $0xb0] sm:$0xff]
  %v65 = vld [vmem:[%s1 + $0xb8] sm:$0xff]
  %v66 = vld [vmem:[%s1 + $0xc0] sm:$0xff]
  %v67 = vld [vmem:[%s1 + $0xc8] sm:$0xff]
  %v68 = vld [vmem:[%s1 + $0xd0] sm:$0xff]
  %v69 = vld [vmem:[%s1 + $0xd8] sm:$0xff]
  %v70 = vld [vmem:[%s1 + $0xe0] sm:$0xff]
  %v71 = vld [vmem:[%s1 + $0xe8] sm:$0xff]
  %v72 = vld [vmem:[%s1 + $0xf0] sm:$0xff]
  %v73 = vld [vmem:[%s1 + $0xf8] sm:$0xff]
  %v74 = vld [vmem:[%s2] sm:$0xff]
  %v76 = vlaneseq
  %v77 = vshrl.u32 %v76, 7
  %v78 = vsub.s32 0, %v77
  %v79 = vrot.slane %v74, %v78
  %v80 = vlaneseq
  %v81 = vshrl.u32 %v80, 7
  %v82 = vsub.s32 1, %v81
  %v83 = vrot.slane %v74, %v82
  %v84 = vlaneseq
  %v85 = vshrl.u32 %v84, 7
  %v86 = vsub.s32 2, %v85
  %v87 = vrot.slane %v74, %v86
  %v88 = vlaneseq
  %v89 = vshrl.u32 %v88, 7
  %v90 = vsub.s32 3, %v89
  %v91 = vrot.slane %v74, %v90
  %v92 = vlaneseq
  %v93 = vshrl.u32 %v92, 7
  %v94 = vsub.s32 4, %v93
  %v95 = vrot.slane %v74, %v94
  %v96 = vlaneseq
  %v97 = vshrl.u32 %v96, 7
  %v98 = vsub.s32 5, %v97
  %v99 = vrot.slane %v74, %v98
  %v100 = vlaneseq
  %v101 = vshrl.u32 %v100, 7
  %v102 = vsub.s32 6, %v101
  %v103 = vrot.slane %v74, %v102
  %v104 = vlaneseq
  %v105 = vshrl.u32 %v104, 7
  %v106 = vsub.s32 7, %v105
  %v107 = vrot.slane %v74, %v106
  %vm116 = vcmask 261120
  %v118 = vsel %vm116, %v40, 0
  %v121 = vsel %vm116, %v41, 0
  %123 = vmatprep.subr.mxu0 %v43
  %124 = vmatpush1.msra.mxu0 %v42
  %125 = vmatprep.subr.mxu0 %v51
  %126 = vmatpush1.msra.mxu0 %v50
  %127 = vmatprep.subr.mxu0 %v59
  %128 = vmatpush1.msra.mxu0 %v58
  %129 = vmatprep.subr.mxu0 %v67
  %130 = vmatpush1.msra.mxu0 %v66
  %131 = vmatprep.subr.mxu0 0.0
  %132 = vmatpush1.msra.mxu0 0.0
  %133 = vmatprep.subr.mxu0 0.0
  %134 = vmatpush1.msra.mxu0 0.0
  %135 = vmatprep.subr.mxu0 0.0
  %136 = vmatpush1.msra.mxu0 0.0
  %137 = vmatprep.subr.mxu0 0.0
  %138 = vmatpush1.msra.mxu0 0.0
  %139 = vmatprep.subr.mxu0 0.0
  %140 = vmatpush1.msra.mxu0 0.0
  %141 = vmatprep.subr.mxu0 0.0
  %142 = vmatpush1.msra.mxu0 0.0
  %143 = vmatprep.subr.mxu0 0.0
  %144 = vmatpush1.msra.mxu0 0.0
  %145 = vmatprep.subr.mxu0 0.0
  %146 = vmatpush1.msra.mxu0 0.0
  %147 = vmatprep.subr.mxu0 0.0
  %148 = vmatpush1.msra.mxu0 0.0
  %149 = vmatprep.subr.mxu0 0.0
  %150 = vmatpush1.msra.mxu0 0.0
  %151 = vmatprep.subr.mxu0 0.0
  %152 = vmatpush1.msra.mxu0 0.0
  %153 = vmatprep.subr.mxu0 0.0
  %154 = vmatpush1.msra.mxu0 0.0
  %155 = vmatprep.subr.mxu0 0.0
  %156 = vmatpush1.msra.mxu0 0.0
  %157 = vmatprep.subr.mxu0 0.0
  %158 = vmatpush1.msra.mxu0 0.0
  %159 = vmatprep.subr.mxu0 0.0
  %160 = vmatpush1.msra.mxu0 0.0
  %161 = vmatprep.subr.mxu0 0.0
  %162 = vmatpush1.msra.mxu0 0.0
  %163 = vmatprep.subr.mxu0 0.0
  %164 = vmatpush1.msra.mxu0 0.0
  %165 = vmatprep.subr.mxu0 0.0
  %166 = vmatpush1.msra.mxu0 0.0
  %167 = vmatprep.subr.mxu0 0.0
  %168 = vmatpush1.msra.mxu0 0.0
  %169 = vmatprep.subr.mxu0 0.0
  %170 = vmatpush1.msra.mxu0 0.0
  %171 = vmatprep.subr.mxu0 0.0
  %172 = vmatpush1.msra.mxu0 0.0
  %173 = vmatprep.subr.mxu0 0.0
  %174 = vmatpush1.msra.mxu0 0.0
  %175 = vmatprep.subr.mxu0 0.0
  %176 = vmatpush1.msra.mxu0 0.0
  %177 = vmatprep.subr.mxu0 0.0
  %178 = vmatpush1.msra.mxu0 0.0
  %179 = vmatprep.subr.mxu0 0.0
  %180 = vmatpush1.msra.mxu0 0.0
  %181 = vmatprep.subr.mxu0 0.0
  %182 = vmatpush1.msra.mxu0 0.0
  %183 = vmatprep.subr.mxu0 0.0
  %184 = vmatpush1.msra.mxu0 0.0
  %185 = vmatprep.subr.mxu0 0.0
  %186 = vmatpush1.msra.mxu0 0.0
  %187 = vmatprep.mubr.f32.mxu0 0.0
  %188 = vmatmul.mubr.f32.gmra.mrb[0].mxu0 %v118
  %v189 = vpop.f32.mrb[0].mxu0
  %v190 = vadd.f32 %v79, %v189
  %v191 = vpop.f32.mrb[0].mxu0
  %v192 = vadd.f32 %v83, %v191
  %193 = vmatprep.mubr.f32.mxu0 0.0
  %194 = vmatmul.mubr.f32.gmra.mrb[0].mxu0 %v121
  %v195 = vpop.f32.mrb[0].mxu0
  %v196 = vadd.f32 %v79, %v195
  %v197 = vpop.f32.mrb[0].mxu0
  %v198 = vadd.f32 %v83, %v197
  %199 = vdwg.mxu0
  %200 = vmatprep.subr.mxu0 %v45
  %201 = vmatpush1.msra.mxu0 %v44
  %202 = vmatprep.subr.mxu0 %v53
  %203 = vmatpush1.msra.mxu0 %v52
  %204 = vmatprep.subr.mxu0 %v61
  %205 = vmatpush1.msra.mxu0 %v60
  %206 = vmatprep.subr.mxu0 %v69
  %207 = vmatpush1.msra.mxu0 %v68
  %208 = vmatprep.subr.mxu0 0.0
  %209 = vmatpush1.msra.mxu0 0.0
  %210 = vmatprep.subr.mxu0 0.0
  %211 = vmatpush1.msra.mxu0 0.0
  %212 = vmatprep.subr.mxu0 0.0
  %213 = vmatpush1.msra.mxu0 0.0
  %214 = vmatprep.subr.mxu0 0.0
  %215 = vmatpush1.msra.mxu0 0.0
  %216 = vmatprep.subr.mxu0 0.0
  %217 = vmatpush1.msra.mxu0 0.0
  %218 = vmatprep.subr.mxu0 0.0
  %219 = vmatpush1.msra.mxu0 0.0
  %220 = vmatprep.subr.mxu0 0.0
  %221 = vmatpush1.msra.mxu0 0.0
  %222 = vmatprep.subr.mxu0 0.0
  %223 = vmatpush1.msra.mxu0 0.0
  %224 = vmatprep.subr.mxu0 0.0
  %225 = vmatpush1.msra.mxu0 0.0
  %226 = vmatprep.subr.mxu0 0.0
  %227 = vmatpush1.msra.mxu0 0.0
  %228 = vmatprep.subr.mxu0 0.0
  %229 = vmatpush1.msra.mxu0 0.0
  %230 = vmatprep.subr.mxu0 0.0
  %231 = vmatpush1.msra.mxu0 0.0
  %232 = vmatprep.subr.mxu0 0.0
  %233 = vmatpush1.msra.mxu0 0.0
  %234 = vmatprep.subr.mxu0 0.0
  %235 = vmatpush1.msra.mxu0 0.0
  %236 = vmatprep.subr.mxu0 0.0
  %237 = vmatpush1.msra.mxu0 0.0
  %238 = vmatprep.subr.mxu0 0.0
  %239 = vmatpush1.msra.mxu0 0.0
  %240 = vmatprep.subr.mxu0 0.0
  %241 = vmatpush1.msra.mxu0 0.0
  %242 = vmatprep.subr.mxu0 0.0
  %243 = vmatpush1.msra.mxu0 0.0
  %244 = vmatprep.subr.mxu0 0.0
  %245 = vmatpush1.msra.mxu0 0.0
  %246 = vmatprep.subr.mxu0 0.0
  %247 = vmatpush1.msra.mxu0 0.0
  %248 = vmatprep.subr.mxu0 0.0
  %249 = vmatpush1.msra.mxu0 0.0
  %250 = vmatprep.subr.mxu0 0.0
  %251 = vmatpush1.msra.mxu0 0.0
  %252 = vmatprep.subr.mxu0 0.0
  %253 = vmatpush1.msra.mxu0 0.0
  %254 = vmatprep.subr.mxu0 0.0
  %255 = vmatpush1.msra.mxu0 0.0
  %256 = vmatprep.subr.mxu0 0.0
  %257 = vmatpush1.msra.mxu0 0.0
  %258 = vmatprep.subr.mxu0 0.0
  %259 = vmatpush1.msra.mxu0 0.0
  %260 = vmatprep.subr.mxu0 0.0
  %261 = vmatpush1.msra.mxu0 0.0
  %262 = vmatprep.subr.mxu0 0.0
  %263 = vmatpush1.msra.mxu0 0.0
  %264 = vmatprep.mubr.f32.mxu0 0.0
  %265 = vmatmul.mubr.f32.gmra.mrb[0].mxu0 %v118
  %v266 = vpop.f32.mrb[0].mxu0
  %v267 = vadd.f32 %v87, %v266
  %v268 = vpop.f32.mrb[0].mxu0
  %v269 = vadd.f32 %v91, %v268
  %270 = vmatprep.mubr.f32.mxu0 0.0
  %271 = vmatmul.mubr.f32.gmra.mrb[0].mxu0 %v121
  %v272 = vpop.f32.mrb[0].mxu0
  %v273 = vadd.f32 %v87, %v272
  %v274 = vpop.f32.mrb[0].mxu0
  %v275 = vadd.f32 %v91, %v274
  %276 = vdwg.mxu0
  %277 = vmatprep.subr.mxu0 %v47
  %278 = vmatpush1.msra.mxu0 %v46
  %279 = vmatprep.subr.mxu0 %v55
  %280 = vmatpush1.msra.mxu0 %v54
  %281 = vmatprep.subr.mxu0 %v63
  %282 = vmatpush1.msra.mxu0 %v62
  %283 = vmatprep.subr.mxu0 %v71
  %284 = vmatpush1.msra.mxu0 %v70
  %285 = vmatprep.subr.mxu0 0.0
  %286 = vmatpush1.msra.mxu0 0.0
  %287 = vmatprep.subr.mxu0 0.0
  %288 = vmatpush1.msra.mxu0 0.0
  %289 = vmatprep.subr.mxu0 0.0
  %290 = vmatpush1.msra.mxu0 0.0
  %291 = vmatprep.subr.mxu0 0.0
  %292 = vmatpush1.msra.mxu0 0.0
  %293 = vmatprep.subr.mxu0 0.0
  %294 = vmatpush1.msra.mxu0 0.0
  %295 = vmatprep.subr.mxu0 0.0
  %296 = vmatpush1.msra.mxu0 0.0
  %297 = vmatprep.subr.mxu0 0.0
  %298 = vmatpush1.msra.mxu0 0.0
  %299 = vmatprep.subr.mxu0 0.0
  %300 = vmatpush1.msra.mxu0 0.0
  %301 = vmatprep.subr.mxu0 0.0
  %302 = vmatpush1.msra.mxu0 0.0
  %303 = vmatprep.subr.mxu0 0.0
  %304 = vmatpush1.msra.mxu0 0.0
  %305 = vmatprep.subr.mxu0 0.0
  %306 = vmatpush1.msra.mxu0 0.0
  %307 = vmatprep.subr.mxu0 0.0
  %308 = vmatpush1.msra.mxu0 0.0
  %309 = vmatprep.subr.mxu0 0.0
  %310 = vmatpush1.msra.mxu0 0.0
  %311 = vmatprep.subr.mxu0 0.0
  %312 = vmatpush1.msra.mxu0 0.0
  %313 = vmatprep.subr.mxu0 0.0
  %314 = vmatpush1.msra.mxu0 0.0
  %315 = vmatprep.subr.mxu0 0.0
  %316 = vmatpush1.msra.mxu0 0.0
  %317 = vmatprep.subr.mxu0 0.0
  %318 = vmatpush1.msra.mxu0 0.0
  %319 = vmatprep.subr.mxu0 0.0
  %320 = vmatpush1.msra.mxu0 0.0
  %321 = vmatprep.subr.mxu0 0.0
  %322 = vmatpush1.msra.mxu0 0.0
  %323 = vmatprep.subr.mxu0 0.0
  %324 = vmatpush1.msra.mxu0 0.0
  %325 = vmatprep.subr.mxu0 0.0
  %326 = vmatpush1.msra.mxu0 0.0
  %327 = vmatprep.subr.mxu0 0.0
  %328 = vmatpush1.msra.mxu0 0.0
  %329 = vmatprep.subr.mxu0 0.0
  %330 = vmatpush1.msra.mxu0 0.0
  %331 = vmatprep.subr.mxu0 0.0
  %332 = vmatpush1.msra.mxu0 0.0
  %333 = vmatprep.subr.mxu0 0.0
  %334 = vmatpush1.msra.mxu0 0.0
  %335 = vmatprep.subr.mxu0 0.0
  %336 = vmatpush1.msra.mxu0 0.0
  %337 = vmatprep.subr.mxu0 0.0
  %338 = vmatpush1.msra.mxu0 0.0
  %339 = vmatprep.subr.mxu0 0.0
  %340 = vmatpush1.msra.mxu0 0.0
  %341 = vmatprep.mubr.f32.mxu0 0.0
  %342 = vmatmul.mubr.f32.gmra.mrb[0].mxu0 %v118
  %v343 = vpop.f32.mrb[0].mxu0
  %v344 = vadd.f32 %v95, %v343
  %v345 = vpop.f32.mrb[0].mxu0
  %v346 = vadd.f32 %v99, %v345
  %347 = vmatprep.mubr.f32.mxu0 0.0
  %348 = vmatmul.mubr.f32.gmra.mrb[0].mxu0 %v121
  %v349 = vpop.f32.mrb[0].mxu0
  %v350 = vadd.f32 %v95, %v349
  %v351 = vpop.f32.mrb[0].mxu0
  %v352 = vadd.f32 %v99, %v351
  %353 = vdwg.mxu0
  %354 = vmatprep.subr.mxu0 %v49
  %355 = vmatpush1.msra.mxu0 %v48
  %356 = vmatprep.subr.mxu0 %v57
  %357 = vmatpush1.msra.mxu0 %v56
  %358 = vmatprep.subr.mxu0 %v65
  %359 = vmatpush1.msra.mxu0 %v64
  %360 = vmatprep.subr.mxu0 %v73
  %361 = vmatpush1.msra.mxu0 %v72
  %362 = vmatprep.subr.mxu0 0.0
  %363 = vmatpush1.msra.mxu0 0.0
  %364 = vmatprep.subr.mxu0 0.0
  %365 = vmatpush1.msra.mxu0 0.0
  %366 = vmatprep.subr.mxu0 0.0
  %367 = vmatpush1.msra.mxu0 0.0
  %368 = vmatprep.subr.mxu0 0.0
  %369 = vmatpush1.msra.mxu0 0.0
  %370 = vmatprep.subr.mxu0 0.0
  %371 = vmatpush1.msra.mxu0 0.0
  %372 = vmatprep.subr.mxu0 0.0
  %373 = vmatpush1.msra.mxu0 0.0
  %374 = vmatprep.subr.mxu0 0.0
  %375 = vmatpush1.msra.mxu0 0.0
  %376 = vmatprep.subr.mxu0 0.0
  %377 = vmatpush1.msra.mxu0 0.0
  %378 = vmatprep.subr.mxu0 0.0
  %379 = vmatpush1.msra.mxu0 0.0
  %380 = vmatprep.subr.mxu0 0.0
  %381 = vmatpush1.msra.mxu0 0.0
  %382 = vmatprep.subr.mxu0 0.0
  %383 = vmatpush1.msra.mxu0 0.0
  %384 = vmatprep.subr.mxu0 0.0
  %385 = vmatpush1.msra.mxu0 0.0
  %386 = vmatprep.subr.mxu0 0.0
  %387 = vmatpush1.msra.mxu0 0.0
  %388 = vmatprep.subr.mxu0 0.0
  %389 = vmatpush1.msra.mxu0 0.0
  %390 = vmatprep.subr.mxu0 0.0
  %391 = vmatpush1.msra.mxu0 0.0
  %392 = vmatprep.subr.mxu0 0.0
  %393 = vmatpush1.msra.mxu0 0.0
  %394 = vmatprep.subr.mxu0 0.0
  %395 = vmatpush1.msra.mxu0 0.0
  %396 = vmatprep.subr.mxu0 0.0
  %397 = vmatpush1.msra.mxu0 0.0
  %398 = vmatprep.subr.mxu0 0.0
  %399 = vmatpush1.msra.mxu0 0.0
  %400 = vmatprep.subr.mxu0 0.0
  %401 = vmatpush1.msra.mxu0 0.0
  %402 = vmatprep.subr.mxu0 0.0
  %403 = vmatpush1.msra.mxu0 0.0
  %404 = vmatprep.subr.mxu0 0.0
  %405 = vmatpush1.msra.mxu0 0.0
  %406 = vmatprep.subr.mxu0 0.0
  %407 = vmatpush1.msra.mxu0 0.0
  %408 = vmatprep.subr.mxu0 0.0
  %409 = vmatpush1.msra.mxu0 0.0
  %410 = vmatprep.subr.mxu0 0.0
  %411 = vmatpush1.msra.mxu0 0.0
  %412 = vmatprep.subr.mxu0 0.0
  %413 = vmatpush1.msra.mxu0 0.0
  %414 = vmatprep.subr.mxu0 0.0
  %415 = vmatpush1.msra.mxu0 0.0
  %416 = vmatprep.subr.mxu0 0.0
  %417 = vmatpush1.msra.mxu0 0.0
  %418 = vmatprep.mubr.f32.mxu0 0.0
  %419 = vmatmul.mubr.f32.gmra.mrb[0].mxu0 %v118
  %v420 = vpop.f32.mrb[0].mxu0
  %v421 = vadd.f32 %v103, %v420
  %v422 = vpop.f32.mrb[0].mxu0
  %v423 = vadd.f32 %v107, %v422
  %424 = vmatprep.mubr.f32.mxu0 0.0
  %425 = vmatmul.mubr.f32.gmra.mrb[0].mxu0 %v121
  %v426 = vpop.f32.mrb[0].mxu0
  %v427 = vadd.f32 %v103, %v426
  %v428 = vpop.f32.mrb[0].mxu0
  %v429 = vadd.f32 %v107, %v428
  %430 = vdwg.mxu0
  %v431 = vld [vmem:[%s3] sm:$0xff]
  %v432 = vld [vmem:[%s3 + $0x8] sm:$0xff]
  %v433 = vld [vmem:[%s3 + $0x10] sm:$0xff]
  %v434 = vld [vmem:[%s3 + $0x18] sm:$0xff]
  %v435 = vld [vmem:[%s3 + $0x20] sm:$0xff]
  %v436 = vld [vmem:[%s3 + $0x28] sm:$0xff]
  %v437 = vld [vmem:[%s3 + $0x30] sm:$0xff]
  %v438 = vld [vmem:[%s3 + $0x38] sm:$0xff]
  %v439 = vld [vmem:[%s3 + $0x40] sm:$0xff]
  %v440 = vld [vmem:[%s3 + $0x48] sm:$0xff]
  %v441 = vld [vmem:[%s3 + $0x50] sm:$0xff]
  %v442 = vld [vmem:[%s3 + $0x58] sm:$0xff]
  %v443 = vld [vmem:[%s3 + $0x60] sm:$0xff]
  %v444 = vld [vmem:[%s3 + $0x68] sm:$0xff]
  %v445 = vld [vmem:[%s3 + $0x70] sm:$0xff]
  %v446 = vld [vmem:[%s3 + $0x78] sm:$0xff]
  %v447 = vld [vmem:[%s3 + $0x80] sm:$0xff]
  %v448 = vld [vmem:[%s3 + $0x88] sm:$0xff]
  %v449 = vld [vmem:[%s3 + $0x90] sm:$0xff]
  %v450 = vld [vmem:[%s3 + $0x98] sm:$0xff]
  %v451 = vld [vmem:[%s3 + $0xa0] sm:$0xff]
  %v452 = vld [vmem:[%s3 + $0xa8] sm:$0xff]
  %v453 = vld [vmem:[%s3 + $0xb0] sm:$0xff]
  %v454 = vld [vmem:[%s3 + $0xb8] sm:$0xff]
  %v455 = vld [vmem:[%s3 + $0xc0] sm:$0xff]
  %v456 = vld [vmem:[%s3 + $0xc8] sm:$0xff]
  %v457 = vld [vmem:[%s3 + $0xd0] sm:$0xff]
  %v458 = vld [vmem:[%s3 + $0xd8] sm:$0xff]
  %v459 = vld [vmem:[%s3 + $0xe0] sm:$0xff]
  %v460 = vld [vmem:[%s3 + $0xe8] sm:$0xff]
  %v461 = vld [vmem:[%s3 + $0xf0] sm:$0xff]
  %v462 = vld [vmem:[%s3 + $0xf8] sm:$0xff]
  %v463 = vld [vmem:[%s4] sm:$0xff]
  %v465 = vlaneseq
  %v466 = vshrl.u32 %v465, 7
  %v467 = vsub.s32 0, %v466
  %v468 = vrot.slane %v463, %v467
  %v469 = vlaneseq
  %v470 = vshrl.u32 %v469, 7
  %v471 = vsub.s32 1, %v470
  %v472 = vrot.slane %v463, %v471
  %v473 = vlaneseq
  %v474 = vshrl.u32 %v473, 7
  %v475 = vsub.s32 2, %v474
  %v476 = vrot.slane %v463, %v475
  %v477 = vlaneseq
  %v478 = vshrl.u32 %v477, 7
  %v479 = vsub.s32 3, %v478
  %v480 = vrot.slane %v463, %v479
  %v481 = vlaneseq
  %v482 = vshrl.u32 %v481, 7
  %v483 = vsub.s32 4, %v482
  %v484 = vrot.slane %v463, %v483
  %v485 = vlaneseq
  %v486 = vshrl.u32 %v485, 7
  %v487 = vsub.s32 5, %v486
  %v488 = vrot.slane %v463, %v487
  %v489 = vlaneseq
  %v490 = vshrl.u32 %v489, 7
  %v491 = vsub.s32 6, %v490
  %v492 = vrot.slane %v463, %v491
  %v493 = vlaneseq
  %v494 = vshrl.u32 %v493, 7
  %v495 = vsub.s32 7, %v494
  %v496 = vrot.slane %v463, %v495
  %505 = vmatprep.subr.mxu0 %v432
  %506 = vmatpush1.msra.mxu0 %v431
  %507 = vmatprep.subr.mxu0 %v440
  %508 = vmatpush1.msra.mxu0 %v439
  %509 = vmatprep.subr.mxu0 %v448
  %510 = vmatpush1.msra.mxu0 %v447
  %511 = vmatprep.subr.mxu0 %v456
  %512 = vmatpush1.msra.mxu0 %v455
  %513 = vmatprep.subr.mxu0 0.0
  %514 = vmatpush1.msra.mxu0 0.0
  %515 = vmatprep.subr.mxu0 0.0
  %516 = vmatpush1.msra.mxu0 0.0
  %517 = vmatprep.subr.mxu0 0.0
  %518 = vmatpush1.msra.mxu0 0.0
  %519 = vmatprep.subr.mxu0 0.0
  %520 = vmatpush1.msra.mxu0 0.0
  %521 = vmatprep.subr.mxu0 0.0
  %522 = vmatpush1.msra.mxu0 0.0
  %523 = vmatprep.subr.mxu0 0.0
  %524 = vmatpush1.msra.mxu0 0.0
  %525 = vmatprep.subr.mxu0 0.0
  %526 = vmatpush1.msra.mxu0 0.0
  %527 = vmatprep.subr.mxu0 0.0
  %528 = vmatpush1.msra.mxu0 0.0
  %529 = vmatprep.subr.mxu0 0.0
  %530 = vmatpush1.msra.mxu0 0.0
  %531 = vmatprep.subr.mxu0 0.0
  %532 = vmatpush1.msra.mxu0 0.0
  %533 = vmatprep.subr.mxu0 0.0
  %534 = vmatpush1.msra.mxu0 0.0
  %535 = vmatprep.subr.mxu0 0.0
  %536 = vmatpush1.msra.mxu0 0.0
  %537 = vmatprep.subr.mxu0 0.0
  %538 = vmatpush1.msra.mxu0 0.0
  %539 = vmatprep.subr.mxu0 0.0
  %540 = vmatpush1.msra.mxu0 0.0
  %541 = vmatprep.subr.mxu0 0.0
  %542 = vmatpush1.msra.mxu0 0.0
  %543 = vmatprep.subr.mxu0 0.0
  %544 = vmatpush1.msra.mxu0 0.0
  %545 = vmatprep.subr.mxu0 0.0
  %546 = vmatpush1.msra.mxu0 0.0
  %547 = vmatprep.subr.mxu0 0.0
  %548 = vmatpush1.msra.mxu0 0.0
  %549 = vmatprep.subr.mxu0 0.0
  %550 = vmatpush1.msra.mxu0 0.0
  %551 = vmatprep.subr.mxu0 0.0
  %552 = vmatpush1.msra.mxu0 0.0
  %553 = vmatprep.subr.mxu0 0.0
  %554 = vmatpush1.msra.mxu0 0.0
  %555 = vmatprep.subr.mxu0 0.0
  %556 = vmatpush1.msra.mxu0 0.0
  %557 = vmatprep.subr.mxu0 0.0
  %558 = vmatpush1.msra.mxu0 0.0
  %559 = vmatprep.subr.mxu0 0.0
  %560 = vmatpush1.msra.mxu0 0.0
  %561 = vmatprep.subr.mxu0 0.0
  %562 = vmatpush1.msra.mxu0 0.0
  %563 = vmatprep.subr.mxu0 0.0
  %564 = vmatpush1.msra.mxu0 0.0
  %565 = vmatprep.subr.mxu0 0.0
  %566 = vmatpush1.msra.mxu0 0.0
  %567 = vmatprep.subr.mxu0 0.0
  %568 = vmatpush1.msra.mxu0 0.0
  %569 = vmatprep.mubr.f32.mxu0 0.0
  %570 = vmatmul.mubr.f32.gmra.mrb[0].mxu0 %v118
  %v571 = vpop.f32.mrb[0].mxu0
  %v572 = vadd.f32 %v468, %v571
  %v573 = vpop.f32.mrb[0].mxu0
  %v574 = vadd.f32 %v472, %v573
  %575 = vmatprep.mubr.f32.mxu0 0.0
  %576 = vmatmul.mubr.f32.gmra.mrb[0].mxu0 %v121
  %v577 = vpop.f32.mrb[0].mxu0
  %v578 = vadd.f32 %v468, %v577
  %v579 = vpop.f32.mrb[0].mxu0
  %v580 = vadd.f32 %v472, %v579
  %581 = vdwg.mxu0
  %582 = vmatprep.subr.mxu0 %v434
  %583 = vmatpush1.msra.mxu0 %v433
  %584 = vmatprep.subr.mxu0 %v442
  %585 = vmatpush1.msra.mxu0 %v441
  %586 = vmatprep.subr.mxu0 %v450
  %587 = vmatpush1.msra.mxu0 %v449
  %588 = vmatprep.subr.mxu0 %v458
  %589 = vmatpush1.msra.mxu0 %v457
  %590 = vmatprep.subr.mxu0 0.0
  %591 = vmatpush1.msra.mxu0 0.0
  %592 = vmatprep.subr.mxu0 0.0
  %593 = vmatpush1.msra.mxu0 0.0
  %594 = vmatprep.subr.mxu0 0.0
  %595 = vmatpush1.msra.mxu0 0.0
  %596 = vmatprep.subr.mxu0 0.0
  %597 = vmatpush1.msra.mxu0 0.0
  %598 = vmatprep.subr.mxu0 0.0
  %599 = vmatpush1.msra.mxu0 0.0
  %600 = vmatprep.subr.mxu0 0.0
  %601 = vmatpush1.msra.mxu0 0.0
  %602 = vmatprep.subr.mxu0 0.0
  %603 = vmatpush1.msra.mxu0 0.0
  %604 = vmatprep.subr.mxu0 0.0
  %605 = vmatpush1.msra.mxu0 0.0
  %606 = vmatprep.subr.mxu0 0.0
  %607 = vmatpush1.msra.mxu0 0.0
  %608 = vmatprep.subr.mxu0 0.0
  %609 = vmatpush1.msra.mxu0 0.0
  %610 = vmatprep.subr.mxu0 0.0
  %611 = vmatpush1.msra.mxu0 0.0
  %612 = vmatprep.subr.mxu0 0.0
  %613 = vmatpush1.msra.mxu0 0.0
  %614 = vmatprep.subr.mxu0 0.0
  %615 = vmatpush1.msra.mxu0 0.0
  %616 = vmatprep.subr.mxu0 0.0
  %617 = vmatpush1.msra.mxu0 0.0
  %618 = vmatprep.subr.mxu0 0.0
  %619 = vmatpush1.msra.mxu0 0.0
  %620 = vmatprep.subr.mxu0 0.0
  %621 = vmatpush1.msra.mxu0 0.0
  %622 = vmatprep.subr.mxu0 0.0
  %623 = vmatpush1.msra.mxu0 0.0
  %624 = vmatprep.subr.mxu0 0.0
  %625 = vmatpush1.msra.mxu0 0.0
  %626 = vmatprep.subr.mxu0 0.0
  %627 = vmatpush1.msra.mxu0 0.0
  %628 = vmatprep.subr.mxu0 0.0
  %629 = vmatpush1.msra.mxu0 0.0
  %630 = vmatprep.subr.mxu0 0.0
  %631 = vmatpush1.msra.mxu0 0.0
  %632 = vmatprep.subr.mxu0 0.0
  %633 = vmatpush1.msra.mxu0 0.0
  %634 = vmatprep.subr.mxu0 0.0
  %635 = vmatpush1.msra.mxu0 0.0
  %636 = vmatprep.subr.mxu0 0.0
  %637 = vmatpush1.msra.mxu0 0.0
  %638 = vmatprep.subr.mxu0 0.0
  %639 = vmatpush1.msra.mxu0 0.0
  %640 = vmatprep.subr.mxu0 0.0
  %641 = vmatpush1.msra.mxu0 0.0
  %642 = vmatprep.subr.mxu0 0.0
  %643 = vmatpush1.msra.mxu0 0.0
  %644 = vmatprep.subr.mxu0 0.0
  %645 = vmatpush1.msra.mxu0 0.0
  %646 = vmatprep.mubr.f32.mxu0 0.0
  %647 = vmatmul.mubr.f32.gmra.mrb[0].mxu0 %v118
  %v648 = vpop.f32.mrb[0].mxu0
  %v649 = vadd.f32 %v476, %v648
  %v650 = vpop.f32.mrb[0].mxu0
  %v651 = vadd.f32 %v480, %v650
  %652 = vmatprep.mubr.f32.mxu0 0.0
  %653 = vmatmul.mubr.f32.gmra.mrb[0].mxu0 %v121
  %v654 = vpop.f32.mrb[0].mxu0
  %v655 = vadd.f32 %v476, %v654
  %v656 = vpop.f32.mrb[0].mxu0
  %v657 = vadd.f32 %v480, %v656
  %658 = vdwg.mxu0
  %659 = vmatprep.subr.mxu0 %v436
  %660 = vmatpush1.msra.mxu0 %v435
  %661 = vmatprep.subr.mxu0 %v444
  %662 = vmatpush1.msra.mxu0 %v443
  %663 = vmatprep.subr.mxu0 %v452
  %664 = vmatpush1.msra.mxu0 %v451
  %665 = vmatprep.subr.mxu0 %v460
  %666 = vmatpush1.msra.mxu0 %v459
  %667 = vmatprep.subr.mxu0 0.0
  %668 = vmatpush1.msra.mxu0 0.0
  %669 = vmatprep.subr.mxu0 0.0
  %670 = vmatpush1.msra.mxu0 0.0
  %671 = vmatprep.subr.mxu0 0.0
  %672 = vmatpush1.msra.mxu0 0.0
  %673 = vmatprep.subr.mxu0 0.0
  %674 = vmatpush1.msra.mxu0 0.0
  %675 = vmatprep.subr.mxu0 0.0
  %676 = vmatpush1.msra.mxu0 0.0
  %677 = vmatprep.subr.mxu0 0.0
  %678 = vmatpush1.msra.mxu0 0.0
  %679 = vmatprep.subr.mxu0 0.0
  %680 = vmatpush1.msra.mxu0 0.0
  %681 = vmatprep.subr.mxu0 0.0
  %682 = vmatpush1.msra.mxu0 0.0
  %683 = vmatprep.subr.mxu0 0.0
  %684 = vmatpush1.msra.mxu0 0.0
  %685 = vmatprep.subr.mxu0 0.0
  %686 = vmatpush1.msra.mxu0 0.0
  %687 = vmatprep.subr.mxu0 0.0
  %688 = vmatpush1.msra.mxu0 0.0
  %689 = vmatprep.subr.mxu0 0.0
  %690 = vmatpush1.msra.mxu0 0.0
  %691 = vmatprep.subr.mxu0 0.0
  %692 = vmatpush1.msra.mxu0 0.0
  %693 = vmatprep.subr.mxu0 0.0
  %694 = vmatpush1.msra.mxu0 0.0
  %695 = vmatprep.subr.mxu0 0.0
  %696 = vmatpush1.msra.mxu0 0.0
  %697 = vmatprep.subr.mxu0 0.0
  %698 = vmatpush1.msra.mxu0 0.0
  %699 = vmatprep.subr.mxu0 0.0
  %700 = vmatpush1.msra.mxu0 0.0
  %701 = vmatprep.subr.mxu0 0.0
  %702 = vmatpush1.msra.mxu0 0.0
  %703 = vmatprep.subr.mxu0 0.0
  %704 = vmatpush1.msra.mxu0 0.0
  %705 = vmatprep.subr.mxu0 0.0
  %706 = vmatpush1.msra.mxu0 0.0
  %707 = vmatprep.subr.mxu0 0.0
  %708 = vmatpush1.msra.mxu0 0.0
  %709 = vmatprep.subr.mxu0 0.0
  %710 = vmatpush1.msra.mxu0 0.0
  %711 = vmatprep.subr.mxu0 0.0
  %712 = vmatpush1.msra.mxu0 0.0
  %713 = vmatprep.subr.mxu0 0.0
  %714 = vmatpush1.msra.mxu0 0.0
  %715 = vmatprep.subr.mxu0 0.0
  %716 = vmatpush1.msra.mxu0 0.0
  %717 = vmatprep.subr.mxu0 0.0
  %718 = vmatpush1.msra.mxu0 0.0
  %719 = vmatprep.subr.mxu0 0.0
  %720 = vmatpush1.msra.mxu0 0.0
  %721 = vmatprep.subr.mxu0 0.0
  %722 = vmatpush1.msra.mxu0 0.0
  %723 = vmatprep.mubr.f32.mxu0 0.0
  %724 = vmatmul.mubr.f32.gmra.mrb[0].mxu0 %v118
  %v725 = vpop.f32.mrb[0].mxu0
  %v726 = vadd.f32 %v484, %v725
  %v727 = vpop.f32.mrb[0].mxu0
  %v728 = vadd.f32 %v488, %v727
  %729 = vmatprep.mubr.f32.mxu0 0.0
  %730 = vmatmul.mubr.f32.gmra.mrb[0].mxu0 %v121
  %v731 = vpop.f32.mrb[0].mxu0
  %v732 = vadd.f32 %v484, %v731
  %v733 = vpop.f32.mrb[0].mxu0
  %v734 = vadd.f32 %v488, %v733
  %735 = vdwg.mxu0
  %736 = vmatprep.subr.mxu0 %v438
  %737 = vmatpush1.msra.mxu0 %v437
  %738 = vmatprep.subr.mxu0 %v446
  %739 = vmatpush1.msra.mxu0 %v445
  %740 = vmatprep.subr.mxu0 %v454
  %741 = vmatpush1.msra.mxu0 %v453
  %742 = vmatprep.subr.mxu0 %v462
  %743 = vmatpush1.msra.mxu0 %v461
  %744 = vmatprep.subr.mxu0 0.0
  %745 = vmatpush1.msra.mxu0 0.0
  %746 = vmatprep.subr.mxu0 0.0
  %747 = vmatpush1.msra.mxu0 0.0
  %748 = vmatprep.subr.mxu0 0.0
  %749 = vmatpush1.msra.mxu0 0.0
  %750 = vmatprep.subr.mxu0 0.0
  %751 = vmatpush1.msra.mxu0 0.0
  %752 = vmatprep.subr.mxu0 0.0
  %753 = vmatpush1.msra.mxu0 0.0
  %754 = vmatprep.subr.mxu0 0.0
  %755 = vmatpush1.msra.mxu0 0.0
  %756 = vmatprep.subr.mxu0 0.0
  %757 = vmatpush1.msra.mxu0 0.0
  %758 = vmatprep.subr.mxu0 0.0
  %759 = vmatpush1.msra.mxu0 0.0
  %760 = vmatprep.subr.mxu0 0.0
  %761 = vmatpush1.msra.mxu0 0.0
  %762 = vmatprep.subr.mxu0 0.0
  %763 = vmatpush1.msra.mxu0 0.0
  %764 = vmatprep.subr.mxu0 0.0
  %765 = vmatpush1.msra.mxu0 0.0
  %766 = vmatprep.subr.mxu0 0.0
  %767 = vmatpush1.msra.mxu0 0.0
  %768 = vmatprep.subr.mxu0 0.0
  %769 = vmatpush1.msra.mxu0 0.0
  %770 = vmatprep.subr.mxu0 0.0
  %771 = vmatpush1.msra.mxu0 0.0
  %772 = vmatprep.subr.mxu0 0.0
  %773 = vmatpush1.msra.mxu0 0.0
  %774 = vmatprep.subr.mxu0 0.0
  %775 = vmatpush1.msra.mxu0 0.0
  %776 = vmatprep.subr.mxu0 0.0
  %777 = vmatpush1.msra.mxu0 0.0
  %778 = vmatprep.subr.mxu0 0.0
  %779 = vmatpush1.msra.mxu0 0.0
  %780 = vmatprep.subr.mxu0 0.0
  %781 = vmatpush1.msra.mxu0 0.0
  %782 = vmatprep.subr.mxu0 0.0
  %783 = vmatpush1.msra.mxu0 0.0
  %784 = vmatprep.subr.mxu0 0.0
  %785 = vmatpush1.msra.mxu0 0.0
  %786 = vmatprep.subr.mxu0 0.0
  %787 = vmatpush1.msra.mxu0 0.0
  %788 = vmatprep.subr.mxu0 0.0
  %789 = vmatpush1.msra.mxu0 0.0
  %790 = vmatprep.subr.mxu0 0.0
  %791 = vmatpush1.msra.mxu0 0.0
  %792 = vmatprep.subr.mxu0 0.0
  %793 = vmatpush1.msra.mxu0 0.0
  %794 = vmatprep.subr.mxu0 0.0
  %795 = vmatpush1.msra.mxu0 0.0
  %796 = vmatprep.subr.mxu0 0.0
  %797 = vmatpush1.msra.mxu0 0.0
  %798 = vmatprep.subr.mxu0 0.0
  %799 = vmatpush1.msra.mxu0 0.0
  %800 = vmatprep.mubr.f32.mxu0 0.0
  %801 = vmatmul.mubr.f32.gmra.mrb[0].mxu0 %v118
  %v802 = vpop.f32.mrb[0].mxu0
  %v803 = vadd.f32 %v492, %v802
  %v804 = vpop.f32.mrb[0].mxu0
  %v805 = vadd.f32 %v496, %v804
  %806 = vmatprep.mubr.f32.mxu0 0.0
  %807 = vmatmul.mubr.f32.gmra.mrb[0].mxu0 %v121
  %v808 = vpop.f32.mrb[0].mxu0
  %v809 = vadd.f32 %v492, %v808
  %v810 = vpop.f32.mrb[0].mxu0
  %v811 = vadd.f32 %v496, %v810
  %812 = vdwg.mxu0
  %v813 = vld [vmem:[%s5] sm:$0xff]
  %v814 = vld [vmem:[%s5 + $0x8] sm:$0xff]
  %v815 = vld [vmem:[%s5 + $0x10] sm:$0xff]
  %v816 = vld [vmem:[%s5 + $0x18] sm:$0xff]
  %v817 = vld [vmem:[%s5 + $0x20] sm:$0xff]
  %v818 = vld [vmem:[%s5 + $0x28] sm:$0xff]
  %v819 = vld [vmem:[%s5 + $0x30] sm:$0xff]
  %v820 = vld [vmem:[%s5 + $0x38] sm:$0xff]
  %v821 = vld [vmem:[%s5 + $0x40] sm:$0xff]
  %v822 = vld [vmem:[%s5 + $0x48] sm:$0xff]
  %v823 = vld [vmem:[%s5 + $0x50] sm:$0xff]
  %v824 = vld [vmem:[%s5 + $0x58] sm:$0xff]
  %v825 = vld [vmem:[%s5 + $0x60] sm:$0xff]
  %v826 = vld [vmem:[%s5 + $0x68] sm:$0xff]
  %v827 = vld [vmem:[%s5 + $0x70] sm:$0xff]
  %v828 = vld [vmem:[%s5 + $0x78] sm:$0xff]
  %v829 = vld [vmem:[%s5 + $0x80] sm:$0xff]
  %v830 = vld [vmem:[%s5 + $0x88] sm:$0xff]
  %v831 = vld [vmem:[%s5 + $0x90] sm:$0xff]
  %v832 = vld [vmem:[%s5 + $0x98] sm:$0xff]
  %v833 = vld [vmem:[%s5 + $0xa0] sm:$0xff]
  %v834 = vld [vmem:[%s5 + $0xa8] sm:$0xff]
  %v835 = vld [vmem:[%s5 + $0xb0] sm:$0xff]
  %v836 = vld [vmem:[%s5 + $0xb8] sm:$0xff]
  %v837 = vld [vmem:[%s5 + $0xc0] sm:$0xff]
  %v838 = vld [vmem:[%s5 + $0xc8] sm:$0xff]
  %v839 = vld [vmem:[%s5 + $0xd0] sm:$0xff]
  %v840 = vld [vmem:[%s5 + $0xd8] sm:$0xff]
  %v841 = vld [vmem:[%s5 + $0xe0] sm:$0xff]
  %v842 = vld [vmem:[%s5 + $0xe8] sm:$0xff]
  %v843 = vld [vmem:[%s5 + $0xf0] sm:$0xff]
  %v844 = vld [vmem:[%s5 + $0xf8] sm:$0xff]
  %v845 = vld [vmem:[%s5 + $0x100] sm:$0xff]
  %v846 = vld [vmem:[%s5 + $0x108] sm:$0xff]
  %v847 = vld [vmem:[%s5 + $0x110] sm:$0xff]
  %v848 = vld [vmem:[%s5 + $0x118] sm:$0xff]
  %v849 = vld [vmem:[%s5 + $0x120] sm:$0xff]
  %v850 = vld [vmem:[%s5 + $0x128] sm:$0xff]
  %v851 = vld [vmem:[%s5 + $0x130] sm:$0xff]
  %v852 = vld [vmem:[%s5 + $0x138] sm:$0xff]
  %v853 = vld [vmem:[%s5 + $0x140] sm:$0xff]
  %v854 = vld [vmem:[%s5 + $0x148] sm:$0xff]
  %v855 = vld [vmem:[%s5 + $0x150] sm:$0xff]
  %v856 = vld [vmem:[%s5 + $0x158] sm:$0xff]
  %v857 = vld [vmem:[%s5 + $0x160] sm:$0xff]
  %v858 = vld [vmem:[%s5 + $0x168] sm:$0xff]
  %v859 = vld [vmem:[%s5 + $0x170] sm:$0xff]
  %v860 = vld [vmem:[%s5 + $0x178] sm:$0xff]
  %v861 = vld [vmem:[%s5 + $0x180] sm:$0xff]
  %v862 = vld [vmem:[%s5 + $0x188] sm:$0xff]
  %v863 = vld [vmem:[%s5 + $0x190] sm:$0xff]
  %v864 = vld [vmem:[%s5 + $0x198] sm:$0xff]
  %v865 = vld [vmem:[%s5 + $0x1a0] sm:$0xff]
  %v866 = vld [vmem:[%s5 + $0x1a8] sm:$0xff]
  %v867 = vld [vmem:[%s5 + $0x1b0] sm:$0xff]
  %v868 = vld [vmem:[%s5 + $0x1b8] sm:$0xff]
  %v869 = vld [vmem:[%s5 + $0x1c0] sm:$0xff]
  %v870 = vld [vmem:[%s5 + $0x1c8] sm:$0xff]
  %v871 = vld [vmem:[%s5 + $0x1d0] sm:$0xff]
  %v872 = vld [vmem:[%s5 + $0x1d8] sm:$0xff]
  %v873 = vld [vmem:[%s5 + $0x1e0] sm:$0xff]
  %v874 = vld [vmem:[%s5 + $0x1e8] sm:$0xff]
  %v875 = vld [vmem:[%s5 + $0x1f0] sm:$0xff]
  %v876 = vld [vmem:[%s5 + $0x1f8] sm:$0xff]
  %v877 = vld [vmem:[%s5 + $0x200] sm:$0xff]
  %v878 = vld [vmem:[%s5 + $0x208] sm:$0xff]
  %v879 = vld [vmem:[%s5 + $0x210] sm:$0xff]
  %v880 = vld [vmem:[%s5 + $0x218] sm:$0xff]
  %v881 = vld [vmem:[%s5 + $0x220] sm:$0xff]
  %v882 = vld [vmem:[%s5 + $0x228] sm:$0xff]
  %v883 = vld [vmem:[%s5 + $0x230] sm:$0xff]
  %v884 = vld [vmem:[%s5 + $0x238] sm:$0xff]
  %v885 = vld [vmem:[%s5 + $0x240] sm:$0xff]
  %v886 = vld [vmem:[%s5 + $0x248] sm:$0xff]
  %v887 = vld [vmem:[%s5 + $0x250] sm:$0xff]
  %v888 = vld [vmem:[%s5 + $0x258] sm:$0xff]
  %v889 = vld [vmem:[%s5 + $0x260] sm:$0xff]
  %v890 = vld [vmem:[%s5 + $0x268] sm:$0xff]
  %v891 = vld [vmem:[%s5 + $0x270] sm:$0xff]
  %v892 = vld [vmem:[%s5 + $0x278] sm:$0xff]
  %v893 = vld [vmem:[%s5 + $0x280] sm:$0xff]
  %v894 = vld [vmem:[%s5 + $0x288] sm:$0xff]
  %v895 = vld [vmem:[%s5 + $0x290] sm:$0xff]
  %v896 = vld [vmem:[%s5 + $0x298] sm:$0xff]
  %v897 = vld [vmem:[%s5 + $0x2a0] sm:$0xff]
  %v898 = vld [vmem:[%s5 + $0x2a8] sm:$0xff]
  %v899 = vld [vmem:[%s5 + $0x2b0] sm:$0xff]
  %v900 = vld [vmem:[%s5 + $0x2b8] sm:$0xff]
  %v901 = vld [vmem:[%s5 + $0x2c0] sm:$0xff]
  %v902 = vld [vmem:[%s5 + $0x2c8] sm:$0xff]
  %v903 = vld [vmem:[%s5 + $0x2d0] sm:$0xff]
  %v904 = vld [vmem:[%s5 + $0x2d8] sm:$0xff]
  %v905 = vld [vmem:[%s5 + $0x2e0] sm:$0xff]
  %v906 = vld [vmem:[%s5 + $0x2e8] sm:$0xff]
  %v907 = vld [vmem:[%s5 + $0x2f0] sm:$0xff]
  %v908 = vld [vmem:[%s5 + $0x2f8] sm:$0xff]
  %v909 = vld [vmem:[%s5 + $0x300] sm:$0xff]
  %v910 = vld [vmem:[%s5 + $0x308] sm:$0xff]
  %v911 = vld [vmem:[%s5 + $0x310] sm:$0xff]
  %v912 = vld [vmem:[%s5 + $0x318] sm:$0xff]
  %v913 = vld [vmem:[%s5 + $0x320] sm:$0xff]
  %v914 = vld [vmem:[%s5 + $0x328] sm:$0xff]
  %v915 = vld [vmem:[%s5 + $0x330] sm:$0xff]
  %v916 = vld [vmem:[%s5 + $0x338] sm:$0xff]
  %v917 = vld [vmem:[%s5 + $0x340] sm:$0xff]
  %v918 = vld [vmem:[%s5 + $0x348] sm:$0xff]
  %v919 = vld [vmem:[%s5 + $0x350] sm:$0xff]
  %v920 = vld [vmem:[%s5 + $0x358] sm:$0xff]
  %v921 = vld [vmem:[%s5 + $0x360] sm:$0xff]
  %v922 = vld [vmem:[%s5 + $0x368] sm:$0xff]
  %v923 = vld [vmem:[%s5 + $0x370] sm:$0xff]
  %v924 = vld [vmem:[%s5 + $0x378] sm:$0xff]
  %v925 = vld [vmem:[%s5 + $0x380] sm:$0xff]
  %v926 = vld [vmem:[%s5 + $0x388] sm:$0xff]
  %v927 = vld [vmem:[%s5 + $0x390] sm:$0xff]
  %v928 = vld [vmem:[%s5 + $0x398] sm:$0xff]
  %v929 = vld [vmem:[%s5 + $0x3a0] sm:$0xff]
  %v930 = vld [vmem:[%s5 + $0x3a8] sm:$0xff]
  %v931 = vld [vmem:[%s5 + $0x3b0] sm:$0xff]
  %v932 = vld [vmem:[%s5 + $0x3b8] sm:$0xff]
  %v933 = vld [vmem:[%s5 + $0x3c0] sm:$0xff]
  %v934 = vld [vmem:[%s5 + $0x3c8] sm:$0xff]
  %v935 = vld [vmem:[%s5 + $0x3d0] sm:$0xff]
  %v936 = vld [vmem:[%s5 + $0x3d8] sm:$0xff]
  %v937 = vld [vmem:[%s5 + $0x3e0] sm:$0xff]
  %v938 = vld [vmem:[%s5 + $0x3e8] sm:$0xff]
  %v939 = vld [vmem:[%s5 + $0x3f0] sm:$0xff]
  %v940 = vld [vmem:[%s5 + $0x3f8] sm:$0xff]
  %v941 = vld [vmem:[%s6] sm:$0x1]
  %v943 = vlaneseq
  %v944 = vshrl.u32 %v943, 7
  %v945 = vsub.s32 0, %v944
  %v946 = vrot.slane %v941, %v945
  %948 = vmatprep.subr.mxu0 0.0
  %949 = vmatpush1.msra.mxu0 %v813
  %950 = vmatprep.subr.mxu0 0.0
  %951 = vmatpush1.msra.mxu0 %v814
  %952 = vmatprep.subr.mxu0 0.0
  %953 = vmatpush1.msra.mxu0 %v815
  %954 = vmatprep.subr.mxu0 0.0
  %955 = vmatpush1.msra.mxu0 %v816
  %956 = vmatprep.subr.mxu0 0.0
  %957 = vmatpush1.msra.mxu0 %v817
  %958 = vmatprep.subr.mxu0 0.0
  %959 = vmatpush1.msra.mxu0 %v818
  %960 = vmatprep.subr.mxu0 0.0
  %961 = vmatpush1.msra.mxu0 %v819
  %962 = vmatprep.subr.mxu0 0.0
  %963 = vmatpush1.msra.mxu0 %v820
  %964 = vmatprep.subr.mxu0 0.0
  %965 = vmatpush1.msra.mxu0 %v821
  %966 = vmatprep.subr.mxu0 0.0
  %967 = vmatpush1.msra.mxu0 %v822
  %968 = vmatprep.subr.mxu0 0.0
  %969 = vmatpush1.msra.mxu0 %v823
  %970 = vmatprep.subr.mxu0 0.0
  %971 = vmatpush1.msra.mxu0 %v824
  %972 = vmatprep.subr.mxu0 0.0
  %973 = vmatpush1.msra.mxu0 %v825
  %974 = vmatprep.subr.mxu0 0.0
  %975 = vmatpush1.msra.mxu0 %v826
  %976 = vmatprep.subr.mxu0 0.0
  %977 = vmatpush1.msra.mxu0 %v827
  %978 = vmatprep.subr.mxu0 0.0
  %979 = vmatpush1.msra.mxu0 %v828
  %980 = vmatprep.subr.mxu0 0.0
  %981 = vmatpush1.msra.mxu0 %v829
  %982 = vmatprep.subr.mxu0 0.0
  %983 = vmatpush1.msra.mxu0 %v830
  %984 = vmatprep.subr.mxu0 0.0
  %985 = vmatpush1.msra.mxu0 %v831
  %986 = vmatprep.subr.mxu0 0.0
  %987 = vmatpush1.msra.mxu0 %v832
  %988 = vmatprep.subr.mxu0 0.0
  %989 = vmatpush1.msra.mxu0 %v833
  %990 = vmatprep.subr.mxu0 0.0
  %991 = vmatpush1.msra.mxu0 %v834
  %992 = vmatprep.subr.mxu0 0.0
  %993 = vmatpush1.msra.mxu0 %v835
  %994 = vmatprep.subr.mxu0 0.0
  %995 = vmatpush1.msra.mxu0 %v836
  %996 = vmatprep.subr.mxu0 0.0
  %997 = vmatpush1.msra.mxu0 %v837
  %998 = vmatprep.subr.mxu0 0.0
  %999 = vmatpush1.msra.mxu0 %v838
  %1000 = vmatprep.subr.mxu0 0.0
  %1001 = vmatpush1.msra.mxu0 %v839
  %1002 = vmatprep.subr.mxu0 0.0
  %1003 = vmatpush1.msra.mxu0 %v840
  %1004 = vmatprep.subr.mxu0 0.0
  %1005 = vmatpush1.msra.mxu0 %v841
  %1006 = vmatprep.subr.mxu0 0.0
  %1007 = vmatpush1.msra.mxu0 %v842
  %1008 = vmatprep.subr.mxu0 0.0
  %1009 = vmatpush1.msra.mxu0 %v843
  %1010 = vmatprep.subr.mxu0 0.0
  %1011 = vmatpush1.msra.mxu0 %v844
  %1012 = vmatprep.mubr.f32.mxu0 %v192
  %1013 = vmatmul.mubr.f32.gmra.mrb[0].mxu0 %v190
  %v1014 = vpop.f32.mrb[0].mxu0
  %v1015 = vadd.f32 %v946, %v1014
  %v1016 = vpop.f32.mrb[0].mxu0
  %1017 = vmatprep.mubr.f32.mxu0 %v198
  %1018 = vmatmul.mubr.f32.gmra.mrb[0].mxu0 %v196
  %v1019 = vpop.f32.mrb[0].mxu0
  %v1020 = vadd.f32 %v946, %v1019
  %v1021 = vpop.f32.mrb[0].mxu0
  %1022 = vdwg.mxu0
  %1023 = vmatprep.subr.mxu0 0.0
  %1024 = vmatpush1.msra.mxu0 %v845
  %1025 = vmatprep.subr.mxu0 0.0
  %1026 = vmatpush1.msra.mxu0 %v846
  %1027 = vmatprep.subr.mxu0 0.0
  %1028 = vmatpush1.msra.mxu0 %v847
  %1029 = vmatprep.subr.mxu0 0.0
  %1030 = vmatpush1.msra.mxu0 %v848
  %1031 = vmatprep.subr.mxu0 0.0
  %1032 = vmatpush1.msra.mxu0 %v849
  %1033 = vmatprep.subr.mxu0 0.0
  %1034 = vmatpush1.msra.mxu0 %v850
  %1035 = vmatprep.subr.mxu0 0.0
  %1036 = vmatpush1.msra.mxu0 %v851
  %1037 = vmatprep.subr.mxu0 0.0
  %1038 = vmatpush1.msra.mxu0 %v852
  %1039 = vmatprep.subr.mxu0 0.0
  %1040 = vmatpush1.msra.mxu0 %v853
  %1041 = vmatprep.subr.mxu0 0.0
  %1042 = vmatpush1.msra.mxu0 %v854
  %1043 = vmatprep.subr.mxu0 0.0
  %1044 = vmatpush1.msra.mxu0 %v855
  %1045 = vmatprep.subr.mxu0 0.0
  %1046 = vmatpush1.msra.mxu0 %v856
  %1047 = vmatprep.subr.mxu0 0.0
  %1048 = vmatpush1.msra.mxu0 %v857
  %1049 = vmatprep.subr.mxu0 0.0
  %1050 = vmatpush1.msra.mxu0 %v858
  %1051 = vmatprep.subr.mxu0 0.0
  %1052 = vmatpush1.msra.mxu0 %v859
  %1053 = vmatprep.subr.mxu0 0.0
  %1054 = vmatpush1.msra.mxu0 %v860
  %1055 = vmatprep.subr.mxu0 0.0
  %1056 = vmatpush1.msra.mxu0 %v861
  %1057 = vmatprep.subr.mxu0 0.0
  %1058 = vmatpush1.msra.mxu0 %v862
  %1059 = vmatprep.subr.mxu0 0.0
  %1060 = vmatpush1.msra.mxu0 %v863
  %1061 = vmatprep.subr.mxu0 0.0
  %1062 = vmatpush1.msra.mxu0 %v864
  %1063 = vmatprep.subr.mxu0 0.0
  %1064 = vmatpush1.msra.mxu0 %v865
  %1065 = vmatprep.subr.mxu0 0.0
  %1066 = vmatpush1.msra.mxu0 %v866
  %1067 = vmatprep.subr.mxu0 0.0
  %1068 = vmatpush1.msra.mxu0 %v867
  %1069 = vmatprep.subr.mxu0 0.0
  %1070 = vmatpush1.msra.mxu0 %v868
  %1071 = vmatprep.subr.mxu0 0.0
  %1072 = vmatpush1.msra.mxu0 %v869
  %1073 = vmatprep.subr.mxu0 0.0
  %1074 = vmatpush1.msra.mxu0 %v870
  %1075 = vmatprep.subr.mxu0 0.0
  %1076 = vmatpush1.msra.mxu0 %v871
  %1077 = vmatprep.subr.mxu0 0.0
  %1078 = vmatpush1.msra.mxu0 %v872
  %1079 = vmatprep.subr.mxu0 0.0
  %1080 = vmatpush1.msra.mxu0 %v873
  %1081 = vmatprep.subr.mxu0 0.0
  %1082 = vmatpush1.msra.mxu0 %v874
  %1083 = vmatprep.subr.mxu0 0.0
  %1084 = vmatpush1.msra.mxu0 %v875
  %1085 = vmatprep.subr.mxu0 0.0
  %1086 = vmatpush1.msra.mxu0 %v876
  %1087 = vmatprep.mubr.f32.mxu0 %v269
  %1088 = vmatmul.mubr.f32.gmra.mrb[0].mxu0 %v267
  %v1089 = vpop.f32.mrb[0].mxu0
  %v1090 = vadd.f32 %v1015, %v1089
  %v1091 = vpop.f32.mrb[0].mxu0
  %1092 = vmatprep.mubr.f32.mxu0 %v275
  %1093 = vmatmul.mubr.f32.gmra.mrb[0].mxu0 %v273
  %v1094 = vpop.f32.mrb[0].mxu0
  %v1095 = vadd.f32 %v1020, %v1094
  %v1096 = vpop.f32.mrb[0].mxu0
  %1097 = vdwg.mxu0
  %1098 = vmatprep.subr.mxu0 0.0
  %1099 = vmatpush1.msra.mxu0 %v877
  %1100 = vmatprep.subr.mxu0 0.0
  %1101 = vmatpush1.msra.mxu0 %v878
  %1102 = vmatprep.subr.mxu0 0.0
  %1103 = vmatpush1.msra.mxu0 %v879
  %1104 = vmatprep.subr.mxu0 0.0
  %1105 = vmatpush1.msra.mxu0 %v880
  %1106 = vmatprep.subr.mxu0 0.0
  %1107 = vmatpush1.msra.mxu0 %v881
  %1108 = vmatprep.subr.mxu0 0.0
  %1109 = vmatpush1.msra.mxu0 %v882
  %1110 = vmatprep.subr.mxu0 0.0
  %1111 = vmatpush1.msra.mxu0 %v883
  %1112 = vmatprep.subr.mxu0 0.0
  %1113 = vmatpush1.msra.mxu0 %v884
  %1114 = vmatprep.subr.mxu0 0.0
  %1115 = vmatpush1.msra.mxu0 %v885
  %1116 = vmatprep.subr.mxu0 0.0
  %1117 = vmatpush1.msra.mxu0 %v886
  %1118 = vmatprep.subr.mxu0 0.0
  %1119 = vmatpush1.msra.mxu0 %v887
  %1120 = vmatprep.subr.mxu0 0.0
  %1121 = vmatpush1.msra.mxu0 %v888
  %1122 = vmatprep.subr.mxu0 0.0
  %1123 = vmatpush1.msra.mxu0 %v889
  %1124 = vmatprep.subr.mxu0 0.0
  %1125 = vmatpush1.msra.mxu0 %v890
  %1126 = vmatprep.subr.mxu0 0.0
  %1127 = vmatpush1.msra.mxu0 %v891
  %1128 = vmatprep.subr.mxu0 0.0
  %1129 = vmatpush1.msra.mxu0 %v892
  %1130 = vmatprep.subr.mxu0 0.0
  %1131 = vmatpush1.msra.mxu0 %v893
  %1132 = vmatprep.subr.mxu0 0.0
  %1133 = vmatpush1.msra.mxu0 %v894
  %1134 = vmatprep.subr.mxu0 0.0
  %1135 = vmatpush1.msra.mxu0 %v895
  %1136 = vmatprep.subr.mxu0 0.0
  %1137 = vmatpush1.msra.mxu0 %v896
  %1138 = vmatprep.subr.mxu0 0.0
  %1139 = vmatpush1.msra.mxu0 %v897
  %1140 = vmatprep.subr.mxu0 0.0
  %1141 = vmatpush1.msra.mxu0 %v898
  %1142 = vmatprep.subr.mxu0 0.0
  %1143 = vmatpush1.msra.mxu0 %v899
  %1144 = vmatprep.subr.mxu0 0.0
  %1145 = vmatpush1.msra.mxu0 %v900
  %1146 = vmatprep.subr.mxu0 0.0
  %1147 = vmatpush1.msra.mxu0 %v901
  %1148 = vmatprep.subr.mxu0 0.0
  %1149 = vmatpush1.msra.mxu0 %v902
  %1150 = vmatprep.subr.mxu0 0.0
  %1151 = vmatpush1.msra.mxu0 %v903
  %1152 = vmatprep.subr.mxu0 0.0
  %1153 = vmatpush1.msra.mxu0 %v904
  %1154 = vmatprep.subr.mxu0 0.0
  %1155 = vmatpush1.msra.mxu0 %v905
  %1156 = vmatprep.subr.mxu0 0.0
  %1157 = vmatpush1.msra.mxu0 %v906
  %1158 = vmatprep.subr.mxu0 0.0
  %1159 = vmatpush1.msra.mxu0 %v907
  %1160 = vmatprep.subr.mxu0 0.0
  %1161 = vmatpush1.msra.mxu0 %v908
  %1162 = vmatprep.mubr.f32.mxu0 %v346
  %1163 = vmatmul.mubr.f32.gmra.mrb[0].mxu0 %v344
  %v1164 = vpop.f32.mrb[0].mxu0
  %v1165 = vadd.f32 %v1090, %v1164
  %v1166 = vpop.f32.mrb[0].mxu0
  %1167 = vmatprep.mubr.f32.mxu0 %v352
  %1168 = vmatmul.mubr.f32.gmra.mrb[0].mxu0 %v350
  %v1169 = vpop.f32.mrb[0].mxu0
  %v1170 = vadd.f32 %v1095, %v1169
  %v1171 = vpop.f32.mrb[0].mxu0
  %1172 = vdwg.mxu0
  %1173 = vmatprep.subr.mxu0 0.0
  %1174 = vmatpush1.msra.mxu0 %v909
  %1175 = vmatprep.subr.mxu0 0.0
  %1176 = vmatpush1.msra.mxu0 %v910
  %1177 = vmatprep.subr.mxu0 0.0
  %1178 = vmatpush1.msra.mxu0 %v911
  %1179 = vmatprep.subr.mxu0 0.0
  %1180 = vmatpush1.msra.mxu0 %v912
  %1181 = vmatprep.subr.mxu0 0.0
  %1182 = vmatpush1.msra.mxu0 %v913
  %1183 = vmatprep.subr.mxu0 0.0
  %1184 = vmatpush1.msra.mxu0 %v914
  %1185 = vmatprep.subr.mxu0 0.0
  %1186 = vmatpush1.msra.mxu0 %v915
  %1187 = vmatprep.subr.mxu0 0.0
  %1188 = vmatpush1.msra.mxu0 %v916
  %1189 = vmatprep.subr.mxu0 0.0
  %1190 = vmatpush1.msra.mxu0 %v917
  %1191 = vmatprep.subr.mxu0 0.0
  %1192 = vmatpush1.msra.mxu0 %v918
  %1193 = vmatprep.subr.mxu0 0.0
  %1194 = vmatpush1.msra.mxu0 %v919
  %1195 = vmatprep.subr.mxu0 0.0
  %1196 = vmatpush1.msra.mxu0 %v920
  %1197 = vmatprep.subr.mxu0 0.0
  %1198 = vmatpush1.msra.mxu0 %v921
  %1199 = vmatprep.subr.mxu0 0.0
  %1200 = vmatpush1.msra.mxu0 %v922
  %1201 = vmatprep.subr.mxu0 0.0
  %1202 = vmatpush1.msra.mxu0 %v923
  %1203 = vmatprep.subr.mxu0 0.0
  %1204 = vmatpush1.msra.mxu0 %v924
  %1205 = vmatprep.subr.mxu0 0.0
  %1206 = vmatpush1.msra.mxu0 %v925
  %1207 = vmatprep.subr.mxu0 0.0
  %1208 = vmatpush1.msra.mxu0 %v926
  %1209 = vmatprep.subr.mxu0 0.0
  %1210 = vmatpush1.msra.mxu0 %v927
  %1211 = vmatprep.subr.mxu0 0.0
  %1212 = vmatpush1.msra.mxu0 %v928
  %1213 = vmatprep.subr.mxu0 0.0
  %1214 = vmatpush1.msra.mxu0 %v929
  %1215 = vmatprep.subr.mxu0 0.0
  %1216 = vmatpush1.msra.mxu0 %v930
  %1217 = vmatprep.subr.mxu0 0.0
  %1218 = vmatpush1.msra.mxu0 %v931
  %1219 = vmatprep.subr.mxu0 0.0
  %1220 = vmatpush1.msra.mxu0 %v932
  %1221 = vmatprep.subr.mxu0 0.0
  %1222 = vmatpush1.msra.mxu0 %v933
  %1223 = vmatprep.subr.mxu0 0.0
  %1224 = vmatpush1.msra.mxu0 %v934
  %1225 = vmatprep.subr.mxu0 0.0
  %1226 = vmatpush1.msra.mxu0 %v935
  %1227 = vmatprep.subr.mxu0 0.0
  %1228 = vmatpush1.msra.mxu0 %v936
  %1229 = vmatprep.subr.mxu0 0.0
  %1230 = vmatpush1.msra.mxu0 %v937
  %1231 = vmatprep.subr.mxu0 0.0
  %1232 = vmatpush1.msra.mxu0 %v938
  %1233 = vmatprep.subr.mxu0 0.0
  %1234 = vmatpush1.msra.mxu0 %v939
  %1235 = vmatprep.subr.mxu0 0.0
  %1236 = vmatpush1.msra.mxu0 %v940
  %1237 = vmatprep.mubr.f32.mxu0 %v423
  %1238 = vmatmul.mubr.f32.gmra.mrb[0].mxu0 %v421
  %v1239 = vpop.f32.mrb[0].mxu0
  %v1240 = vadd.f32 %v1165, %v1239
  %v1241 = vpop.f32.mrb[0].mxu0
  %1242 = vmatprep.mubr.f32.mxu0 %v429
  %1243 = vmatmul.mubr.f32.gmra.mrb[0].mxu0 %v427
  %v1244 = vpop.f32.mrb[0].mxu0
  %v1245 = vadd.f32 %v1170, %v1244
  %v1246 = vpop.f32.mrb[0].mxu0
  %1247 = vdwg.mxu0
  %vm1248 = vcmask 523264
  %1249 = vst.msk [vmem:[%s11] sm:$0xff] %vm1248, %v1240
  %1250 = vst.msk [vmem:[%s11 + $0x8] sm:$0xff] %vm1248, %v1245
  %v1251 = vld [vmem:[%s7] sm:$0xff]
  %v1252 = vld [vmem:[%s7 + $0x8] sm:$0xff]
  %v1253 = vld [vmem:[%s7 + $0x10] sm:$0xff]
  %v1254 = vld [vmem:[%s7 + $0x18] sm:$0xff]
  %v1255 = vld [vmem:[%s7 + $0x20] sm:$0xff]
  %v1256 = vld [vmem:[%s7 + $0x28] sm:$0xff]
  %v1257 = vld [vmem:[%s7 + $0x30] sm:$0xff]
  %v1258 = vld [vmem:[%s7 + $0x38] sm:$0xff]
  %v1259 = vld [vmem:[%s7 + $0x40] sm:$0xff]
  %v1260 = vld [vmem:[%s7 + $0x48] sm:$0xff]
  %v1261 = vld [vmem:[%s7 + $0x50] sm:$0xff]
  %v1262 = vld [vmem:[%s7 + $0x58] sm:$0xff]
  %v1263 = vld [vmem:[%s7 + $0x60] sm:$0xff]
  %v1264 = vld [vmem:[%s7 + $0x68] sm:$0xff]
  %v1265 = vld [vmem:[%s7 + $0x70] sm:$0xff]
  %v1266 = vld [vmem:[%s7 + $0x78] sm:$0xff]
  %v1267 = vld [vmem:[%s7 + $0x80] sm:$0xff]
  %v1268 = vld [vmem:[%s7 + $0x88] sm:$0xff]
  %v1269 = vld [vmem:[%s7 + $0x90] sm:$0xff]
  %v1270 = vld [vmem:[%s7 + $0x98] sm:$0xff]
  %v1271 = vld [vmem:[%s7 + $0xa0] sm:$0xff]
  %v1272 = vld [vmem:[%s7 + $0xa8] sm:$0xff]
  %v1273 = vld [vmem:[%s7 + $0xb0] sm:$0xff]
  %v1274 = vld [vmem:[%s7 + $0xb8] sm:$0xff]
  %v1275 = vld [vmem:[%s7 + $0xc0] sm:$0xff]
  %v1276 = vld [vmem:[%s7 + $0xc8] sm:$0xff]
  %v1277 = vld [vmem:[%s7 + $0xd0] sm:$0xff]
  %v1278 = vld [vmem:[%s7 + $0xd8] sm:$0xff]
  %v1279 = vld [vmem:[%s7 + $0xe0] sm:$0xff]
  %v1280 = vld [vmem:[%s7 + $0xe8] sm:$0xff]
  %v1281 = vld [vmem:[%s7 + $0xf0] sm:$0xff]
  %v1282 = vld [vmem:[%s7 + $0xf8] sm:$0xff]
  %v1283 = vld [vmem:[%s7 + $0x100] sm:$0xff]
  %v1284 = vld [vmem:[%s7 + $0x108] sm:$0xff]
  %v1285 = vld [vmem:[%s7 + $0x110] sm:$0xff]
  %v1286 = vld [vmem:[%s7 + $0x118] sm:$0xff]
  %v1287 = vld [vmem:[%s7 + $0x120] sm:$0xff]
  %v1288 = vld [vmem:[%s7 + $0x128] sm:$0xff]
  %v1289 = vld [vmem:[%s7 + $0x130] sm:$0xff]
  %v1290 = vld [vmem:[%s7 + $0x138] sm:$0xff]
  %v1291 = vld [vmem:[%s7 + $0x140] sm:$0xff]
  %v1292 = vld [vmem:[%s7 + $0x148] sm:$0xff]
  %v1293 = vld [vmem:[%s7 + $0x150] sm:$0xff]
  %v1294 = vld [vmem:[%s7 + $0x158] sm:$0xff]
  %v1295 = vld [vmem:[%s7 + $0x160] sm:$0xff]
  %v1296 = vld [vmem:[%s7 + $0x168] sm:$0xff]
  %v1297 = vld [vmem:[%s7 + $0x170] sm:$0xff]
  %v1298 = vld [vmem:[%s7 + $0x178] sm:$0xff]
  %v1299 = vld [vmem:[%s7 + $0x180] sm:$0xff]
  %v1300 = vld [vmem:[%s7 + $0x188] sm:$0xff]
  %v1301 = vld [vmem:[%s7 + $0x190] sm:$0xff]
  %v1302 = vld [vmem:[%s7 + $0x198] sm:$0xff]
  %v1303 = vld [vmem:[%s7 + $0x1a0] sm:$0xff]
  %v1304 = vld [vmem:[%s7 + $0x1a8] sm:$0xff]
  %v1305 = vld [vmem:[%s7 + $0x1b0] sm:$0xff]
  %v1306 = vld [vmem:[%s7 + $0x1b8] sm:$0xff]
  %v1307 = vld [vmem:[%s7 + $0x1c0] sm:$0xff]
  %v1308 = vld [vmem:[%s7 + $0x1c8] sm:$0xff]
  %v1309 = vld [vmem:[%s7 + $0x1d0] sm:$0xff]
  %v1310 = vld [vmem:[%s7 + $0x1d8] sm:$0xff]
  %v1311 = vld [vmem:[%s7 + $0x1e0] sm:$0xff]
  %v1312 = vld [vmem:[%s7 + $0x1e8] sm:$0xff]
  %v1313 = vld [vmem:[%s7 + $0x1f0] sm:$0xff]
  %v1314 = vld [vmem:[%s7 + $0x1f8] sm:$0xff]
  %v1315 = vld [vmem:[%s7 + $0x200] sm:$0xff]
  %v1316 = vld [vmem:[%s7 + $0x208] sm:$0xff]
  %v1317 = vld [vmem:[%s7 + $0x210] sm:$0xff]
  %v1318 = vld [vmem:[%s7 + $0x218] sm:$0xff]
  %v1319 = vld [vmem:[%s7 + $0x220] sm:$0xff]
  %v1320 = vld [vmem:[%s7 + $0x228] sm:$0xff]
  %v1321 = vld [vmem:[%s7 + $0x230] sm:$0xff]
  %v1322 = vld [vmem:[%s7 + $0x238] sm:$0xff]
  %v1323 = vld [vmem:[%s7 + $0x240] sm:$0xff]
  %v1324 = vld [vmem:[%s7 + $0x248] sm:$0xff]
  %v1325 = vld [vmem:[%s7 + $0x250] sm:$0xff]
  %v1326 = vld [vmem:[%s7 + $0x258] sm:$0xff]
  %v1327 = vld [vmem:[%s7 + $0x260] sm:$0xff]
  %v1328 = vld [vmem:[%s7 + $0x268] sm:$0xff]
  %v1329 = vld [vmem:[%s7 + $0x270] sm:$0xff]
  %v1330 = vld [vmem:[%s7 + $0x278] sm:$0xff]
  %v1331 = vld [vmem:[%s7 + $0x280] sm:$0xff]
  %v1332 = vld [vmem:[%s7 + $0x288] sm:$0xff]
  %v1333 = vld [vmem:[%s7 + $0x290] sm:$0xff]
  %v1334 = vld [vmem:[%s7 + $0x298] sm:$0xff]
  %v1335 = vld [vmem:[%s7 + $0x2a0] sm:$0xff]
  %v1336 = vld [vmem:[%s7 + $0x2a8] sm:$0xff]
  %v1337 = vld [vmem:[%s7 + $0x2b0] sm:$0xff]
  %v1338 = vld [vmem:[%s7 + $0x2b8] sm:$0xff]
  %v1339 = vld [vmem:[%s7 + $0x2c0] sm:$0xff]
  %v1340 = vld [vmem:[%s7 + $0x2c8] sm:$0xff]
  %v1341 = vld [vmem:[%s7 + $0x2d0] sm:$0xff]
  %v1342 = vld [vmem:[%s7 + $0x2d8] sm:$0xff]
  %v1343 = vld [vmem:[%s7 + $0x2e0] sm:$0xff]
  %v1344 = vld [vmem:[%s7 + $0x2e8] sm:$0xff]
  %v1345 = vld [vmem:[%s7 + $0x2f0] sm:$0xff]
  %v1346 = vld [vmem:[%s7 + $0x2f8] sm:$0xff]
  %v1347 = vld [vmem:[%s7 + $0x300] sm:$0xff]
  %v1348 = vld [vmem:[%s7 + $0x308] sm:$0xff]
  %v1349 = vld [vmem:[%s7 + $0x310] sm:$0xff]
  %v1350 = vld [vmem:[%s7 + $0x318] sm:$0xff]
  %v1351 = vld [vmem:[%s7 + $0x320] sm:$0xff]
  %v1352 = vld [vmem:[%s7 + $0x328] sm:$0xff]
  %v1353 = vld [vmem:[%s7 + $0x330] sm:$0xff]
  %v1354 = vld [vmem:[%s7 + $0x338] sm:$0xff]
  %v1355 = vld [vmem:[%s7 + $0x340] sm:$0xff]
  %v1356 = vld [vmem:[%s7 + $0x348] sm:$0xff]
  %v1357 = vld [vmem:[%s7 + $0x350] sm:$0xff]
  %v1358 = vld [vmem:[%s7 + $0x358] sm:$0xff]
  %v1359 = vld [vmem:[%s7 + $0x360] sm:$0xff]
  %v1360 = vld [vmem:[%s7 + $0x368] sm:$0xff]
  %v1361 = vld [vmem:[%s7 + $0x370] sm:$0xff]
  %v1362 = vld [vmem:[%s7 + $0x378] sm:$0xff]
  %v1363 = vld [vmem:[%s7 + $0x380] sm:$0xff]
  %v1364 = vld [vmem:[%s7 + $0x388] sm:$0xff]
  %v1365 = vld [vmem:[%s7 + $0x390] sm:$0xff]
  %v1366 = vld [vmem:[%s7 + $0x398] sm:$0xff]
  %v1367 = vld [vmem:[%s7 + $0x3a0] sm:$0xff]
  %v1368 = vld [vmem:[%s7 + $0x3a8] sm:$0xff]
  %v1369 = vld [vmem:[%s7 + $0x3b0] sm:$0xff]
  %v1370 = vld [vmem:[%s7 + $0x3b8] sm:$0xff]
  %v1371 = vld [vmem:[%s7 + $0x3c0] sm:$0xff]
  %v1372 = vld [vmem:[%s7 + $0x3c8] sm:$0xff]
  %v1373 = vld [vmem:[%s7 + $0x3d0] sm:$0xff]
  %v1374 = vld [vmem:[%s7 + $0x3d8] sm:$0xff]
  %v1375 = vld [vmem:[%s7 + $0x3e0] sm:$0xff]
  %v1376 = vld [vmem:[%s7 + $0x3e8] sm:$0xff]
  %v1377 = vld [vmem:[%s7 + $0x3f0] sm:$0xff]
  %v1378 = vld [vmem:[%s7 + $0x3f8] sm:$0xff]
  %v1379 = vld [vmem:[%s8] sm:$0x1]
  %v1381 = vlaneseq
  %v1382 = vshrl.u32 %v1381, 7
  %v1383 = vsub.s32 0, %v1382
  %v1384 = vrot.slane %v1379, %v1383
  %1386 = vmatprep.subr.mxu0 0.0
  %1387 = vmatpush1.msra.mxu0 %v1251
  %1388 = vmatprep.subr.mxu0 0.0
  %1389 = vmatpush1.msra.mxu0 %v1252
  %1390 = vmatprep.subr.mxu0 0.0
  %1391 = vmatpush1.msra.mxu0 %v1253
  %1392 = vmatprep.subr.mxu0 0.0
  %1393 = vmatpush1.msra.mxu0 %v1254
  %1394 = vmatprep.subr.mxu0 0.0
  %1395 = vmatpush1.msra.mxu0 %v1255
  %1396 = vmatprep.subr.mxu0 0.0
  %1397 = vmatpush1.msra.mxu0 %v1256
  %1398 = vmatprep.subr.mxu0 0.0
  %1399 = vmatpush1.msra.mxu0 %v1257
  %1400 = vmatprep.subr.mxu0 0.0
  %1401 = vmatpush1.msra.mxu0 %v1258
  %1402 = vmatprep.subr.mxu0 0.0
  %1403 = vmatpush1.msra.mxu0 %v1259
  %1404 = vmatprep.subr.mxu0 0.0
  %1405 = vmatpush1.msra.mxu0 %v1260
  %1406 = vmatprep.subr.mxu0 0.0
  %1407 = vmatpush1.msra.mxu0 %v1261
  %1408 = vmatprep.subr.mxu0 0.0
  %1409 = vmatpush1.msra.mxu0 %v1262
  %1410 = vmatprep.subr.mxu0 0.0
  %1411 = vmatpush1.msra.mxu0 %v1263
  %1412 = vmatprep.subr.mxu0 0.0
  %1413 = vmatpush1.msra.mxu0 %v1264
  %1414 = vmatprep.subr.mxu0 0.0
  %1415 = vmatpush1.msra.mxu0 %v1265
  %1416 = vmatprep.subr.mxu0 0.0
  %1417 = vmatpush1.msra.mxu0 %v1266
  %1418 = vmatprep.subr.mxu0 0.0
  %1419 = vmatpush1.msra.mxu0 %v1267
  %1420 = vmatprep.subr.mxu0 0.0
  %1421 = vmatpush1.msra.mxu0 %v1268
  %1422 = vmatprep.subr.mxu0 0.0
  %1423 = vmatpush1.msra.mxu0 %v1269
  %1424 = vmatprep.subr.mxu0 0.0
  %1425 = vmatpush1.msra.mxu0 %v1270
  %1426 = vmatprep.subr.mxu0 0.0
  %1427 = vmatpush1.msra.mxu0 %v1271
  %1428 = vmatprep.subr.mxu0 0.0
  %1429 = vmatpush1.msra.mxu0 %v1272
  %1430 = vmatprep.subr.mxu0 0.0
  %1431 = vmatpush1.msra.mxu0 %v1273
  %1432 = vmatprep.subr.mxu0 0.0
  %1433 = vmatpush1.msra.mxu0 %v1274
  %1434 = vmatprep.subr.mxu0 0.0
  %1435 = vmatpush1.msra.mxu0 %v1275
  %1436 = vmatprep.subr.mxu0 0.0
  %1437 = vmatpush1.msra.mxu0 %v1276
  %1438 = vmatprep.subr.mxu0 0.0
  %1439 = vmatpush1.msra.mxu0 %v1277
  %1440 = vmatprep.subr.mxu0 0.0
  %1441 = vmatpush1.msra.mxu0 %v1278
  %1442 = vmatprep.subr.mxu0 0.0
  %1443 = vmatpush1.msra.mxu0 %v1279
  %1444 = vmatprep.subr.mxu0 0.0
  %1445 = vmatpush1.msra.mxu0 %v1280
  %1446 = vmatprep.subr.mxu0 0.0
  %1447 = vmatpush1.msra.mxu0 %v1281
  %1448 = vmatprep.subr.mxu0 0.0
  %1449 = vmatpush1.msra.mxu0 %v1282
  %1450 = vmatprep.mubr.f32.mxu0 %v574
  %1451 = vmatmul.mubr.f32.gmra.mrb[0].mxu0 %v572
  %v1452 = vpop.f32.mrb[0].mxu0
  %v1453 = vadd.f32 %v1384, %v1452
  %v1454 = vpop.f32.mrb[0].mxu0
  %1455 = vmatprep.mubr.f32.mxu0 %v580
  %1456 = vmatmul.mubr.f32.gmra.mrb[0].mxu0 %v578
  %v1457 = vpop.f32.mrb[0].mxu0
  %v1458 = vadd.f32 %v1384, %v1457
  %v1459 = vpop.f32.mrb[0].mxu0
  %1460 = vdwg.mxu0
  %1461 = vmatprep.subr.mxu0 0.0
  %1462 = vmatpush1.msra.mxu0 %v1283
  %1463 = vmatprep.subr.mxu0 0.0
  %1464 = vmatpush1.msra.mxu0 %v1284
  %1465 = vmatprep.subr.mxu0 0.0
  %1466 = vmatpush1.msra.mxu0 %v1285
  %1467 = vmatprep.subr.mxu0 0.0
  %1468 = vmatpush1.msra.mxu0 %v1286
  %1469 = vmatprep.subr.mxu0 0.0
  %1470 = vmatpush1.msra.mxu0 %v1287
  %1471 = vmatprep.subr.mxu0 0.0
  %1472 = vmatpush1.msra.mxu0 %v1288
  %1473 = vmatprep.subr.mxu0 0.0
  %1474 = vmatpush1.msra.mxu0 %v1289
  %1475 = vmatprep.subr.mxu0 0.0
  %1476 = vmatpush1.msra.mxu0 %v1290
  %1477 = vmatprep.subr.mxu0 0.0
  %1478 = vmatpush1.msra.mxu0 %v1291
  %1479 = vmatprep.subr.mxu0 0.0
  %1480 = vmatpush1.msra.mxu0 %v1292
  %1481 = vmatprep.subr.mxu0 0.0
  %1482 = vmatpush1.msra.mxu0 %v1293
  %1483 = vmatprep.subr.mxu0 0.0
  %1484 = vmatpush1.msra.mxu0 %v1294
  %1485 = vmatprep.subr.mxu0 0.0
  %1486 = vmatpush1.msra.mxu0 %v1295
  %1487 = vmatprep.subr.mxu0 0.0
  %1488 = vmatpush1.msra.mxu0 %v1296
  %1489 = vmatprep.subr.mxu0 0.0
  %1490 = vmatpush1.msra.mxu0 %v1297
  %1491 = vmatprep.subr.mxu0 0.0
  %1492 = vmatpush1.msra.mxu0 %v1298
  %1493 = vmatprep.subr.mxu0 0.0
  %1494 = vmatpush1.msra.mxu0 %v1299
  %1495 = vmatprep.subr.mxu0 0.0
  %1496 = vmatpush1.msra.mxu0 %v1300
  %1497 = vmatprep.subr.mxu0 0.0
  %1498 = vmatpush1.msra.mxu0 %v1301
  %1499 = vmatprep.subr.mxu0 0.0
  %1500 = vmatpush1.msra.mxu0 %v1302
  %1501 = vmatprep.subr.mxu0 0.0
  %1502 = vmatpush1.msra.mxu0 %v1303
  %1503 = vmatprep.subr.mxu0 0.0
  %1504 = vmatpush1.msra.mxu0 %v1304
  %1505 = vmatprep.subr.mxu0 0.0
  %1506 = vmatpush1.msra.mxu0 %v1305
  %1507 = vmatprep.subr.mxu0 0.0
  %1508 = vmatpush1.msra.mxu0 %v1306
  %1509 = vmatprep.subr.mxu0 0.0
  %1510 = vmatpush1.msra.mxu0 %v1307
  %1511 = vmatprep.subr.mxu0 0.0
  %1512 = vmatpush1.msra.mxu0 %v1308
  %1513 = vmatprep.subr.mxu0 0.0
  %1514 = vmatpush1.msra.mxu0 %v1309
  %1515 = vmatprep.subr.mxu0 0.0
  %1516 = vmatpush1.msra.mxu0 %v1310
  %1517 = vmatprep.subr.mxu0 0.0
  %1518 = vmatpush1.msra.mxu0 %v1311
  %1519 = vmatprep.subr.mxu0 0.0
  %1520 = vmatpush1.msra.mxu0 %v1312
  %1521 = vmatprep.subr.mxu0 0.0
  %1522 = vmatpush1.msra.mxu0 %v1313
  %1523 = vmatprep.subr.mxu0 0.0
  %1524 = vmatpush1.msra.mxu0 %v1314
  %1525 = vmatprep.mubr.f32.mxu0 %v651
  %1526 = vmatmul.mubr.f32.gmra.mrb[0].mxu0 %v649
  %v1527 = vpop.f32.mrb[0].mxu0
  %v1528 = vadd.f32 %v1453, %v1527
  %v1529 = vpop.f32.mrb[0].mxu0
  %1530 = vmatprep.mubr.f32.mxu0 %v657
  %1531 = vmatmul.mubr.f32.gmra.mrb[0].mxu0 %v655
  %v1532 = vpop.f32.mrb[0].mxu0
  %v1533 = vadd.f32 %v1458, %v1532
  %v1534 = vpop.f32.mrb[0].mxu0
  %1535 = vdwg.mxu0
  %1536 = vmatprep.subr.mxu0 0.0
  %1537 = vmatpush1.msra.mxu0 %v1315
  %1538 = vmatprep.subr.mxu0 0.0
  %1539 = vmatpush1.msra.mxu0 %v1316
  %1540 = vmatprep.subr.mxu0 0.0
  %1541 = vmatpush1.msra.mxu0 %v1317
  %1542 = vmatprep.subr.mxu0 0.0
  %1543 = vmatpush1.msra.mxu0 %v1318
  %1544 = vmatprep.subr.mxu0 0.0
  %1545 = vmatpush1.msra.mxu0 %v1319
  %1546 = vmatprep.subr.mxu0 0.0
  %1547 = vmatpush1.msra.mxu0 %v1320
  %1548 = vmatprep.subr.mxu0 0.0
  %1549 = vmatpush1.msra.mxu0 %v1321
  %1550 = vmatprep.subr.mxu0 0.0
  %1551 = vmatpush1.msra.mxu0 %v1322
  %1552 = vmatprep.subr.mxu0 0.0
  %1553 = vmatpush1.msra.mxu0 %v1323
  %1554 = vmatprep.subr.mxu0 0.0
  %1555 = vmatpush1.msra.mxu0 %v1324
  %1556 = vmatprep.subr.mxu0 0.0
  %1557 = vmatpush1.msra.mxu0 %v1325
  %1558 = vmatprep.subr.mxu0 0.0
  %1559 = vmatpush1.msra.mxu0 %v1326
  %1560 = vmatprep.subr.mxu0 0.0
  %1561 = vmatpush1.msra.mxu0 %v1327
  %1562 = vmatprep.subr.mxu0 0.0
  %1563 = vmatpush1.msra.mxu0 %v1328
  %1564 = vmatprep.subr.mxu0 0.0
  %1565 = vmatpush1.msra.mxu0 %v1329
  %1566 = vmatprep.subr.mxu0 0.0
  %1567 = vmatpush1.msra.mxu0 %v1330
  %1568 = vmatprep.subr.mxu0 0.0
  %1569 = vmatpush1.msra.mxu0 %v1331
  %1570 = vmatprep.subr.mxu0 0.0
  %1571 = vmatpush1.msra.mxu0 %v1332
  %1572 = vmatprep.subr.mxu0 0.0
  %1573 = vmatpush1.msra.mxu0 %v1333
  %1574 = vmatprep.subr.mxu0 0.0
  %1575 = vmatpush1.msra.mxu0 %v1334
  %1576 = vmatprep.subr.mxu0 0.0
  %1577 = vmatpush1.msra.mxu0 %v1335
  %1578 = vmatprep.subr.mxu0 0.0
  %1579 = vmatpush1.msra.mxu0 %v1336
  %1580 = vmatprep.subr.mxu0 0.0
  %1581 = vmatpush1.msra.mxu0 %v1337
  %1582 = vmatprep.subr.mxu0 0.0
  %1583 = vmatpush1.msra.mxu0 %v1338
  %1584 = vmatprep.subr.mxu0 0.0
  %1585 = vmatpush1.msra.mxu0 %v1339
  %1586 = vmatprep.subr.mxu0 0.0
  %1587 = vmatpush1.msra.mxu0 %v1340
  %1588 = vmatprep.subr.mxu0 0.0
  %1589 = vmatpush1.msra.mxu0 %v1341
  %1590 = vmatprep.subr.mxu0 0.0
  %1591 = vmatpush1.msra.mxu0 %v1342
  %1592 = vmatprep.subr.mxu0 0.0
  %1593 = vmatpush1.msra.mxu0 %v1343
  %1594 = vmatprep.subr.mxu0 0.0
  %1595 = vmatpush1.msra.mxu0 %v1344
  %1596 = vmatprep.subr.mxu0 0.0
  %1597 = vmatpush1.msra.mxu0 %v1345
  %1598 = vmatprep.subr.mxu0 0.0
  %1599 = vmatpush1.msra.mxu0 %v1346
  %1600 = vmatprep.mubr.f32.mxu0 %v728
  %1601 = vmatmul.mubr.f32.gmra.mrb[0].mxu0 %v726
  %v1602 = vpop.f32.mrb[0].mxu0
  %v1603 = vadd.f32 %v1528, %v1602
  %v1604 = vpop.f32.mrb[0].mxu0
  %1605 = vmatprep.mubr.f32.mxu0 %v734
  %1606 = vmatmul.mubr.f32.gmra.mrb[0].mxu0 %v732
  %v1607 = vpop.f32.mrb[0].mxu0
  %v1608 = vadd.f32 %v1533, %v1607
  %v1609 = vpop.f32.mrb[0].mxu0
  %1610 = vdwg.mxu0
  %1611 = vmatprep.subr.mxu0 0.0
  %1612 = vmatpush1.msra.mxu0 %v1347
  %1613 = vmatprep.subr.mxu0 0.0
  %1614 = vmatpush1.msra.mxu0 %v1348
  %1615 = vmatprep.subr.mxu0 0.0
  %1616 = vmatpush1.msra.mxu0 %v1349
  %1617 = vmatprep.subr.mxu0 0.0
  %1618 = vmatpush1.msra.mxu0 %v1350
  %1619 = vmatprep.subr.mxu0 0.0
  %1620 = vmatpush1.msra.mxu0 %v1351
  %1621 = vmatprep.subr.mxu0 0.0
  %1622 = vmatpush1.msra.mxu0 %v1352
  %1623 = vmatprep.subr.mxu0 0.0
  %1624 = vmatpush1.msra.mxu0 %v1353
  %1625 = vmatprep.subr.mxu0 0.0
  %1626 = vmatpush1.msra.mxu0 %v1354
  %1627 = vmatprep.subr.mxu0 0.0
  %1628 = vmatpush1.msra.mxu0 %v1355
  %1629 = vmatprep.subr.mxu0 0.0
  %1630 = vmatpush1.msra.mxu0 %v1356
  %1631 = vmatprep.subr.mxu0 0.0
  %1632 = vmatpush1.msra.mxu0 %v1357
  %1633 = vmatprep.subr.mxu0 0.0
  %1634 = vmatpush1.msra.mxu0 %v1358
  %1635 = vmatprep.subr.mxu0 0.0
  %1636 = vmatpush1.msra.mxu0 %v1359
  %1637 = vmatprep.subr.mxu0 0.0
  %1638 = vmatpush1.msra.mxu0 %v1360
  %1639 = vmatprep.subr.mxu0 0.0
  %1640 = vmatpush1.msra.mxu0 %v1361
  %1641 = vmatprep.subr.mxu0 0.0
  %1642 = vmatpush1.msra.mxu0 %v1362
  %1643 = vmatprep.subr.mxu0 0.0
  %1644 = vmatpush1.msra.mxu0 %v1363
  %1645 = vmatprep.subr.mxu0 0.0
  %1646 = vmatpush1.msra.mxu0 %v1364
  %1647 = vmatprep.subr.mxu0 0.0
  %1648 = vmatpush1.msra.mxu0 %v1365
  %1649 = vmatprep.subr.mxu0 0.0
  %1650 = vmatpush1.msra.mxu0 %v1366
  %1651 = vmatprep.subr.mxu0 0.0
  %1652 = vmatpush1.msra.mxu0 %v1367
  %1653 = vmatprep.subr.mxu0 0.0
  %1654 = vmatpush1.msra.mxu0 %v1368
  %1655 = vmatprep.subr.mxu0 0.0
  %1656 = vmatpush1.msra.mxu0 %v1369
  %1657 = vmatprep.subr.mxu0 0.0
  %1658 = vmatpush1.msra.mxu0 %v1370
  %1659 = vmatprep.subr.mxu0 0.0
  %1660 = vmatpush1.msra.mxu0 %v1371
  %1661 = vmatprep.subr.mxu0 0.0
  %1662 = vmatpush1.msra.mxu0 %v1372
  %1663 = vmatprep.subr.mxu0 0.0
  %1664 = vmatpush1.msra.mxu0 %v1373
  %1665 = vmatprep.subr.mxu0 0.0
  %1666 = vmatpush1.msra.mxu0 %v1374
  %1667 = vmatprep.subr.mxu0 0.0
  %1668 = vmatpush1.msra.mxu0 %v1375
  %1669 = vmatprep.subr.mxu0 0.0
  %1670 = vmatpush1.msra.mxu0 %v1376
  %1671 = vmatprep.subr.mxu0 0.0
  %1672 = vmatpush1.msra.mxu0 %v1377
  %1673 = vmatprep.subr.mxu0 0.0
  %1674 = vmatpush1.msra.mxu0 %v1378
  %1675 = vmatprep.mubr.f32.mxu0 %v805
  %1676 = vmatmul.mubr.f32.gmra.mrb[0].mxu0 %v803
  %v1677 = vpop.f32.mrb[0].mxu0
  %v1678 = vadd.f32 %v1603, %v1677
  %v1679 = vpop.f32.mrb[0].mxu0
  %1680 = vmatprep.mubr.f32.mxu0 %v811
  %1681 = vmatmul.mubr.f32.gmra.mrb[0].mxu0 %v809
  %v1682 = vpop.f32.mrb[0].mxu0
  %v1683 = vadd.f32 %v1608, %v1682
  %v1684 = vpop.f32.mrb[0].mxu0
  %1685 = vdwg.mxu0
  %v1686 = vmax.f32 %v1678, 0.0
  %v1687 = vmax.f32 %v1683, 0.0
  %v1688 = vld [vmem:[%s9] sm:$0xff]
  %v1689 = vld [vmem:[%s9 + $0x8] sm:$0xff]
  %v1690 = vld [vmem:[%s9 + $0x10] sm:$0xff]
  %v1691 = vld [vmem:[%s9 + $0x18] sm:$0xff]
  %v1692 = vld [vmem:[%s9 + $0x20] sm:$0xff]
  %v1693 = vld [vmem:[%s9 + $0x28] sm:$0xff]
  %v1694 = vld [vmem:[%s9 + $0x30] sm:$0xff]
  %v1695 = vld [vmem:[%s9 + $0x38] sm:$0xff]
  %v1696 = vld [vmem:[%s9 + $0x40] sm:$0xff]
  %v1697 = vld [vmem:[%s9 + $0x48] sm:$0xff]
  %v1698 = vld [vmem:[%s9 + $0x50] sm:$0xff]
  %v1699 = vld [vmem:[%s9 + $0x58] sm:$0xff]
  %v1700 = vld [vmem:[%s9 + $0x60] sm:$0xff]
  %v1701 = vld [vmem:[%s9 + $0x68] sm:$0xff]
  %v1702 = vld [vmem:[%s9 + $0x70] sm:$0xff]
  %v1703 = vld [vmem:[%s9 + $0x78] sm:$0xff]
  %v1704 = vld [vmem:[%s10] sm:$0x3]
  %v1706 = vlaneseq
  %v1707 = vshrl.u32 %v1706, 7
  %v1708 = vsub.s32 0, %v1707
  %v1709 = vrot.slane %v1704, %v1708
  %v1710 = vlaneseq
  %v1711 = vshrl.u32 %v1710, 7
  %v1712 = vsub.s32 1, %v1711
  %v1713 = vrot.slane %v1704, %v1712
  %v1717 = vsel %vm1248, %v1686, 0
  %v1720 = vsel %vm1248, %v1687, 0
  %1722 = vmatprep.subr.mxu0 %v1689
  %1723 = vmatpush1.msra.mxu0 %v1688
  %1724 = vmatprep.subr.mxu0 %v1691
  %1725 = vmatpush1.msra.mxu0 %v1690
  %1726 = vmatprep.subr.mxu0 %v1693
  %1727 = vmatpush1.msra.mxu0 %v1692
  %1728 = vmatprep.subr.mxu0 %v1695
  %1729 = vmatpush1.msra.mxu0 %v1694
  %1730 = vmatprep.subr.mxu0 %v1697
  %1731 = vmatpush1.msra.mxu0 %v1696
  %1732 = vmatprep.subr.mxu0 %v1699
  %1733 = vmatpush1.msra.mxu0 %v1698
  %1734 = vmatprep.subr.mxu0 %v1701
  %1735 = vmatpush1.msra.mxu0 %v1700
  %1736 = vmatprep.subr.mxu0 %v1703
  %1737 = vmatpush1.msra.mxu0 %v1702
  %1738 = vmatprep.subr.mxu0 0.0
  %1739 = vmatpush1.msra.mxu0 0.0
  %1740 = vmatprep.subr.mxu0 0.0
  %1741 = vmatpush1.msra.mxu0 0.0
  %1742 = vmatprep.subr.mxu0 0.0
  %1743 = vmatpush1.msra.mxu0 0.0
  %1744 = vmatprep.subr.mxu0 0.0
  %1745 = vmatpush1.msra.mxu0 0.0
  %1746 = vmatprep.subr.mxu0 0.0
  %1747 = vmatpush1.msra.mxu0 0.0
  %1748 = vmatprep.subr.mxu0 0.0
  %1749 = vmatpush1.msra.mxu0 0.0
  %1750 = vmatprep.subr.mxu0 0.0
  %1751 = vmatpush1.msra.mxu0 0.0
  %1752 = vmatprep.subr.mxu0 0.0
  %1753 = vmatpush1.msra.mxu0 0.0
  %1754 = vmatprep.subr.mxu0 0.0
  %1755 = vmatpush1.msra.mxu0 0.0
  %1756 = vmatprep.subr.mxu0 0.0
  %1757 = vmatpush1.msra.mxu0 0.0
  %1758 = vmatprep.subr.mxu0 0.0
  %1759 = vmatpush1.msra.mxu0 0.0
  %1760 = vmatprep.subr.mxu0 0.0
  %1761 = vmatpush1.msra.mxu0 0.0
  %1762 = vmatprep.subr.mxu0 0.0
  %1763 = vmatpush1.msra.mxu0 0.0
  %1764 = vmatprep.subr.mxu0 0.0
  %1765 = vmatpush1.msra.mxu0 0.0
  %1766 = vmatprep.subr.mxu0 0.0
  %1767 = vmatpush1.msra.mxu0 0.0
  %1768 = vmatprep.subr.mxu0 0.0
  %1769 = vmatpush1.msra.mxu0 0.0
  %1770 = vmatprep.subr.mxu0 0.0
  %1771 = vmatpush1.msra.mxu0 0.0
  %1772 = vmatprep.subr.mxu0 0.0
  %1773 = vmatpush1.msra.mxu0 0.0
  %1774 = vmatprep.subr.mxu0 0.0
  %1775 = vmatpush1.msra.mxu0 0.0
  %1776 = vmatprep.subr.mxu0 0.0
  %1777 = vmatpush1.msra.mxu0 0.0
  %1778 = vmatprep.subr.mxu0 0.0
  %1779 = vmatpush1.msra.mxu0 0.0
  %1780 = vmatprep.subr.mxu0 0.0
  %1781 = vmatpush1.msra.mxu0 0.0
  %1782 = vmatprep.subr.mxu0 0.0
  %1783 = vmatpush1.msra.mxu0 0.0
  %1784 = vmatprep.subr.mxu0 0.0
  %1785 = vmatpush1.msra.mxu0 0.0
  %1786 = vmatprep.mubr.f32.mxu0 0.0
  %1787 = vmatmul.mubr.f32.gmra.mrb[0].mxu0 %v1717
  %v1788 = vpop.f32.mrb[0].mxu0
  %v1789 = vadd.f32 %v1709, %v1788
  %v1790 = vpop.f32.mrb[0].mxu0
  %v1791 = vadd.f32 %v1713, %v1790
  %1792 = vmatprep.mubr.f32.mxu0 0.0
  %1793 = vmatmul.mubr.f32.gmra.mrb[0].mxu0 %v1720
  %v1794 = vpop.f32.mrb[0].mxu0
  %v1795 = vadd.f32 %v1709, %v1794
  %v1796 = vpop.f32.mrb[0].mxu0
  %v1797 = vadd.f32 %v1713, %v1796
  %1798 = vdwg.mxu0
  %1799 = vst [vmem:[%s12] sm:$0xff] %v1789
  %1800 = vst.msk [vmem:[%s12 + $0x8] sm:$0xff] %vm1248, %v1791
  %1801 = vst [vmem:[%s12 + $0x10] sm:$0xff] %v1795
  %1802 = vst.msk [vmem:[%s12 + $0x18] sm:$0xff] %vm1248, %v1797
  // Predicated region
  $region46: #{forward.23} parent=0 // pred_check
    _
  $region47: #{forward.23} parent=0 // pred_check_branch
    %1804 = sbr.rel (0) target = $region49
  $region48: #{forward.23} parent=0 // pred_region
    _
  $region49: #{forward.23} parent=0 // pred_fallthru
    _
  // Predicated region
  $region50: #{forward.23} parent=0 // pred_check
    _
  $region51: #{forward.23} parent=0 // pred_check_branch
    %1806 = sbr.rel (0) target = $region53
  $region52: #{forward.23} parent=0 // pred_region
    _
  $region53: #{forward.23} parent=0 // pred_fallthru
    _
  // Predicated region
  $region54: #{forward.23} parent=0 // pred_check
    _
  $region55: #{forward.23} parent=0 // pred_check_branch
    %1808 = sbr.rel (0) target = $region57
  $region56: #{forward.23} parent=0 // pred_region
    _
  $region57: #{forward.23} parent=0 // pred_fallthru
    _
  // Predicated region
  $region58: #{forward.23} parent=0 // pred_check
    _
  $region59: #{forward.23} parent=0 // pred_check_branch
    %1810 = sbr.rel (0) target = $region61
  $region60: #{forward.23} parent=0 // pred_region
    _
  $region61: #{forward.23} parent=0 // pred_fallthru
    _

// kernel: forward.26
$region0: #{forward.26}
  #allocation0 [shape = 'u32[]', space=smem, size = 0x4, offset = 0x4, fixed_abs, tag = 'smem constant byte address 0x4 - core index']
  #allocation1 [shape = 'u32[144,128]{1,0:T(1,128)}', space=vmem, size = 0x12000, scoped, tag = 'internal scratch']
  %s0 = inlined_call_operand.vmem [shape: f32[16,128], index: 0, kind: input, shape index: {}]
  %s1 = inlined_call_operand.vmem [shape: f32[128,384], index: 1, kind: input, shape index: {}]
  %s2 = inlined_call_operand.vmem [shape: f32[1,384], index: 2, kind: input, shape index: {}]
  %s3 = inlined_call_operand.vmem [shape: f32[16,384], index: 3, kind: output, shape index: {}]
  %s4 = sld [smem:[#allocation0]]
  $region22: #{forward.26} parent=0
    _
  %s6 = ssub.s32 1, %s4
  %s7 = scalar_select 0, %s6, %s4
  // Predicated region
  $region2: #{forward.26} parent=0 // pred_check
    _
  $region3: #{forward.26} parent=0 // pred_check_branch
    %9 = sbr.rel (0) target = $region5
  $region4: #{forward.26} parent=0 // pred_region
    _
  $region5: #{forward.26} parent=0 // pred_fallthru
    _
  // Predicated region
  $region6: #{forward.26} parent=0 // pred_check
    _
  $region7: #{forward.26} parent=0 // pred_check_branch
    %11 = sbr.rel (0) target = $region9
  $region8: #{forward.26} parent=0 // pred_region
    _
  $region9: #{forward.26} parent=0 // pred_fallthru
    _
  // Predicated region
  $region10: #{forward.26} parent=0 // pred_check
    _
  $region11: #{forward.26} parent=0 // pred_check_branch
    %13 = sbr.rel (0) target = $region13
  $region12: #{forward.26} parent=0 // pred_region
    _
  $region13: #{forward.26} parent=0 // pred_fallthru
    _
  %v14 = vld [vmem:[%s0] sm:$0xff]
  %v15 = vld [vmem:[%s0 + $0x8] sm:$0xff]
  %v16 = vld [vmem:[%s1] sm:$0xff]
  %v17 = vld [vmem:[%s1 + $0x8] sm:$0xff]
  %v18 = vld [vmem:[%s1 + $0x10] sm:$0xff]
  %v19 = vld [vmem:[%s1 + $0x18] sm:$0xff]
  %v20 = vld [vmem:[%s1 + $0x20] sm:$0xff]
  %v21 = vld [vmem:[%s1 + $0x28] sm:$0xff]
  %v22 = vld [vmem:[%s1 + $0x30] sm:$0xff]
  %v23 = vld [vmem:[%s1 + $0x38] sm:$0xff]
  %v24 = vld [vmem:[%s1 + $0x40] sm:$0xff]
  %v25 = vld [vmem:[%s1 + $0x48] sm:$0xff]
  %v26 = vld [vmem:[%s1 + $0x50] sm:$0xff]
  %v27 = vld [vmem:[%s1 + $0x58] sm:$0xff]
  %v28 = vld [vmem:[%s1 + $0x60] sm:$0xff]
  %v29 = vld [vmem:[%s1 + $0x68] sm:$0xff]
  %v30 = vld [vmem:[%s1 + $0x70] sm:$0xff]
  %v31 = vld [vmem:[%s1 + $0x78] sm:$0xff]
  %v32 = vld [vmem:[%s1 + $0x80] sm:$0xff]
  %v33 = vld [vmem:[%s1 + $0x88] sm:$0xff]
  %v34 = vld [vmem:[%s1 + $0x90] sm:$0xff]
  %v35 = vld [vmem:[%s1 + $0x98] sm:$0xff]
  %v36 = vld [vmem:[%s1 + $0xa0] sm:$0xff]
  %v37 = vld [vmem:[%s1 + $0xa8] sm:$0xff]
  %v38 = vld [vmem:[%s1 + $0xb0] sm:$0xff]
  %v39 = vld [vmem:[%s1 + $0xb8] sm:$0xff]
  %v40 = vld [vmem:[%s1 + $0xc0] sm:$0xff]
  %v41 = vld [vmem:[%s1 + $0xc8] sm:$0xff]
  %v42 = vld [vmem:[%s1 + $0xd0] sm:$0xff]
  %v43 = vld [vmem:[%s1 + $0xd8] sm:$0xff]
  %v44 = vld [vmem:[%s1 + $0xe0] sm:$0xff]
  %v45 = vld [vmem:[%s1 + $0xe8] sm:$0xff]
  %v46 = vld [vmem:[%s1 + $0xf0] sm:$0xff]
  %v47 = vld [vmem:[%s1 + $0xf8] sm:$0xff]
  %v48 = vld [vmem:[%s1 + $0x100] sm:$0xff]
  %v49 = vld [vmem:[%s1 + $0x108] sm:$0xff]
  %v50 = vld [vmem:[%s1 + $0x110] sm:$0xff]
  %v51 = vld [vmem:[%s1 + $0x118] sm:$0xff]
  %v52 = vld [vmem:[%s1 + $0x120] sm:$0xff]
  %v53 = vld [vmem:[%s1 + $0x128] sm:$0xff]
  %v54 = vld [vmem:[%s1 + $0x130] sm:$0xff]
  %v55 = vld [vmem:[%s1 + $0x138] sm:$0xff]
  %v56 = vld [vmem:[%s1 + $0x140] sm:$0xff]
  %v57 = vld [vmem:[%s1 + $0x148] sm:$0xff]
  %v58 = vld [vmem:[%s1 + $0x150] sm:$0xff]
  %v59 = vld [vmem:[%s1 + $0x158] sm:$0xff]
  %v60 = vld [vmem:[%s1 + $0x160] sm:$0xff]
  %v61 = vld [vmem:[%s1 + $0x168] sm:$0xff]
  %v62 = vld [vmem:[%s1 + $0x170] sm:$0xff]
  %v63 = vld [vmem:[%s1 + $0x178] sm:$0xff]
  %v64 = vld [vmem:[%s2] sm:$0x7]
  %v66 = vlaneseq
  %v67 = vshrl.u32 %v66, 7
  %v68 = vsub.s32 0, %v67
  %v69 = vrot.slane %v64, %v68
  %v70 = vlaneseq
  %v71 = vshrl.u32 %v70, 7
  %v72 = vsub.s32 1, %v71
  %v73 = vrot.slane %v64, %v72
  %v74 = vlaneseq
  %v75 = vshrl.u32 %v74, 7
  %v76 = vsub.s32 2, %v75
  %v77 = vrot.slane %v64, %v76
  %81 = vmatprep.subr.mxu0 %v17
  %82 = vmatpush1.msra.mxu0 %v16
  %83 = vmatprep.subr.mxu0 %v20
  %84 = vmatpush1.msra.mxu0 %v19
  %85 = vmatprep.subr.mxu0 %v23
  %86 = vmatpush1.msra.mxu0 %v22
  %87 = vmatprep.subr.mxu0 %v26
  %88 = vmatpush1.msra.mxu0 %v25
  %89 = vmatprep.subr.mxu0 %v29
  %90 = vmatpush1.msra.mxu0 %v28
  %91 = vmatprep.subr.mxu0 %v32
  %92 = vmatpush1.msra.mxu0 %v31
  %93 = vmatprep.subr.mxu0 %v35
  %94 = vmatpush1.msra.mxu0 %v34
  %95 = vmatprep.subr.mxu0 %v38
  %96 = vmatpush1.msra.mxu0 %v37
  %97 = vmatprep.subr.mxu0 %v41
  %98 = vmatpush1.msra.mxu0 %v40
  %99 = vmatprep.subr.mxu0 %v44
  %100 = vmatpush1.msra.mxu0 %v43
  %101 = vmatprep.subr.mxu0 %v47
  %102 = vmatpush1.msra.mxu0 %v46
  %103 = vmatprep.subr.mxu0 %v50
  %104 = vmatpush1.msra.mxu0 %v49
  %105 = vmatprep.subr.mxu0 %v53
  %106 = vmatpush1.msra.mxu0 %v52
  %107 = vmatprep.subr.mxu0 %v56
  %108 = vmatpush1.msra.mxu0 %v55
  %109 = vmatprep.subr.mxu0 %v59
  %110 = vmatpush1.msra.mxu0 %v58
  %111 = vmatprep.subr.mxu0 %v62
  %112 = vmatpush1.msra.mxu0 %v61
  %113 = vmatprep.subr.mxu0 0.0
  %114 = vmatpush1.msra.mxu0 0.0
  %115 = vmatprep.subr.mxu0 0.0
  %116 = vmatpush1.msra.mxu0 0.0
  %117 = vmatprep.subr.mxu0 0.0
  %118 = vmatpush1.msra.mxu0 0.0
  %119 = vmatprep.subr.mxu0 0.0
  %120 = vmatpush1.msra.mxu0 0.0
  %121 = vmatprep.subr.mxu0 0.0
  %122 = vmatpush1.msra.mxu0 0.0
  %123 = vmatprep.subr.mxu0 0.0
  %124 = vmatpush1.msra.mxu0 0.0
  %125 = vmatprep.subr.mxu0 0.0
  %126 = vmatpush1.msra.mxu0 0.0
  %127 = vmatprep.subr.mxu0 0.0
  %128 = vmatpush1.msra.mxu0 0.0
  %129 = vmatprep.subr.mxu0 0.0
  %130 = vmatpush1.msra.mxu0 0.0
  %131 = vmatprep.subr.mxu0 0.0
  %132 = vmatpush1.msra.mxu0 0.0
  %133 = vmatprep.subr.mxu0 0.0
  %134 = vmatpush1.msra.mxu0 0.0
  %135 = vmatprep.subr.mxu0 0.0
  %136 = vmatpush1.msra.mxu0 0.0
  %137 = vmatprep.subr.mxu0 0.0
  %138 = vmatpush1.msra.mxu0 0.0
  %139 = vmatprep.subr.mxu0 0.0
  %140 = vmatpush1.msra.mxu0 0.0
  %141 = vmatprep.subr.mxu0 0.0
  %142 = vmatpush1.msra.mxu0 0.0
  %143 = vmatprep.subr.mxu0 0.0
  %144 = vmatpush1.msra.mxu0 0.0
  %145 = vmatprep.mubr.f32.mxu0 0.0
  %146 = vmatmul.mubr.f32.gmra.mrb[0].mxu0 %v14
  %v147 = vpop.f32.mrb[0].mxu0
  %v148 = vadd.f32 %v69, %v147
  %v149 = vpop.f32.mrb[0].mxu0
  %v150 = vadd.f32 %v73, %v149
  %151 = vmatprep.mubr.f32.mxu0 0.0
  %152 = vmatmul.mubr.f32.gmra.mrb[0].mxu0 %v15
  %v153 = vpop.f32.mrb[0].mxu0
  %v154 = vadd.f32 %v69, %v153
  %v155 = vpop.f32.mrb[0].mxu0
  %v156 = vadd.f32 %v73, %v155
  %157 = vdwg.mxu0
  %158 = vmatprep.subr.mxu0 0.0
  %159 = vmatpush1.msra.mxu0 %v18
  %160 = vmatprep.subr.mxu0 0.0
  %161 = vmatpush1.msra.mxu0 %v21
  %162 = vmatprep.subr.mxu0 0.0
  %163 = vmatpush1.msra.mxu0 %v24
  %164 = vmatprep.subr.mxu0 0.0
  %165 = vmatpush1.msra.mxu0 %v27
  %166 = vmatprep.subr.mxu0 0.0
  %167 = vmatpush1.msra.mxu0 %v30
  %168 = vmatprep.subr.mxu0 0.0
  %169 = vmatpush1.msra.mxu0 %v33
  %170 = vmatprep.subr.mxu0 0.0
  %171 = vmatpush1.msra.mxu0 %v36
  %172 = vmatprep.subr.mxu0 0.0
  %173 = vmatpush1.msra.mxu0 %v39
  %174 = vmatprep.subr.mxu0 0.0
  %175 = vmatpush1.msra.mxu0 %v42
  %176 = vmatprep.subr.mxu0 0.0
  %177 = vmatpush1.msra.mxu0 %v45
  %178 = vmatprep.subr.mxu0 0.0
  %179 = vmatpush1.msra.mxu0 %v48
  %180 = vmatprep.subr.mxu0 0.0
  %181 = vmatpush1.msra.mxu0 %v51
  %182 = vmatprep.subr.mxu0 0.0
  %183 = vmatpush1.msra.mxu0 %v54
  %184 = vmatprep.subr.mxu0 0.0
  %185 = vmatpush1.msra.mxu0 %v57
  %186 = vmatprep.subr.mxu0 0.0
  %187 = vmatpush1.msra.mxu0 %v60
  %188 = vmatprep.subr.mxu0 0.0
  %189 = vmatpush1.msra.mxu0 %v63
  %190 = vmatprep.subr.mxu0 0.0
  %191 = vmatpush1.msra.mxu0 0.0
  %192 = vmatprep.subr.mxu0 0.0
  %193 = vmatpush1.msra.mxu0 0.0
  %194 = vmatprep.subr.mxu0 0.0
  %195 = vmatpush1.msra.mxu0 0.0
  %196 = vmatprep.subr.mxu0 0.0
  %197 = vmatpush1.msra.mxu0 0.0
  %198 = vmatprep.subr.mxu0 0.0
  %199 = vmatpush1.msra.mxu0 0.0
  %200 = vmatprep.subr.mxu0 0.0
  %201 = vmatpush1.msra.mxu0 0.0
  %202 = vmatprep.subr.mxu0 0.0
  %203 = vmatpush1.msra.mxu0 0.0
  %204 = vmatprep.subr.mxu0 0.0
  %205 = vmatpush1.msra.mxu0 0.0
  %206 = vmatprep.subr.mxu0 0.0
  %207 = vmatpush1.msra.mxu0 0.0
  %208 = vmatprep.subr.mxu0 0.0
  %209 = vmatpush1.msra.mxu0 0.0
  %210 = vmatprep.subr.mxu0 0.0
  %211 = vmatpush1.msra.mxu0 0.0
  %212 = vmatprep.subr.mxu0 0.0
  %213 = vmatpush1.msra.mxu0 0.0
  %214 = vmatprep.subr.mxu0 0.0
  %215 = vmatpush1.msra.mxu0 0.0
  %216 = vmatprep.subr.mxu0 0.0
  %217 = vmatpush1.msra.mxu0 0.0
  %218 = vmatprep.subr.mxu0 0.0
  %219 = vmatpush1.msra.mxu0 0.0
  %220 = vmatprep.subr.mxu0 0.0
  %221 = vmatpush1.msra.mxu0 0.0
  %222 = vmatprep.mubr.f32.mxu0 0.0
  %223 = vmatmul.mubr.f32.gmra.mrb[0].mxu0 %v14
  %v224 = vpop.f32.mrb[0].mxu0
  %v225 = vadd.f32 %v77, %v224
  %v226 = vpop.f32.mrb[0].mxu0
  %227 = vmatprep.mubr.f32.mxu0 0.0
  %228 = vmatmul.mubr.f32.gmra.mrb[0].mxu0 %v15
  %v229 = vpop.f32.mrb[0].mxu0
  %v230 = vadd.f32 %v77, %v229
  %v231 = vpop.f32.mrb[0].mxu0
  %232 = vdwg.mxu0
  %233 = vst [vmem:[%s3] sm:$0xff] %v148
  %234 = vst [vmem:[%s3 + $0x8] sm:$0xff] %v150
  %235 = vst [vmem:[%s3 + $0x10] sm:$0xff] %v225
  %236 = vst [vmem:[%s3 + $0x18] sm:$0xff] %v154
  %237 = vst [vmem:[%s3 + $0x20] sm:$0xff] %v156
  %238 = vst [vmem:[%s3 + $0x28] sm:$0xff] %v230
  // Predicated region
  $region14: #{forward.26} parent=0 // pred_check
    _
  $region15: #{forward.26} parent=0 // pred_check_branch
    %240 = sbr.rel (0) target = $region17
  $region16: #{forward.26} parent=0 // pred_region
    _
  $region17: #{forward.26} parent=0 // pred_fallthru
    _
  // Predicated region
  $region18: #{forward.26} parent=0 // pred_check
    _
  $region19: #{forward.26} parent=0 // pred_check_branch
    %242 = sbr.rel (0) target = $region21
  $region20: #{forward.26} parent=0 // pred_region
    _
  $region21: #{forward.26} parent=0 // pred_fallthru
    _

// kernel: forward.24
$region0: #{forward.24}
  #allocation0 [shape = 'u32[]', space=smem, size = 0x4, offset = 0x4, fixed_abs, tag = 'smem constant byte address 0x4 - core index']
  #allocation1 [shape = 'u32[144,128]{1,0:T(1,128)}', space=vmem, size = 0x12000, scoped, tag = 'internal scratch']
  %s0 = inlined_call_operand.vmem [shape: f32[8,2,96], index: 0, kind: input, shape index: {}]
  %s1 = inlined_call_operand.vmem [shape: f32[8,2,96], index: 1, kind: input, shape index: {}]
  %s2 = inlined_call_operand.vmem [shape: f32[32,96], index: 2, kind: input, shape index: {}]
  %s3 = inlined_call_operand.vmem [shape: f32[32,96], index: 3, kind: input, shape index: {}]
  %s4 = inlined_call_operand.vmem [shape: f32[1,96], index: 4, kind: input, shape index: {}]
  %s5 = inlined_call_operand.vmem [shape: f32[1,96], index: 5, kind: input, shape index: {}]
  %s6 = inlined_call_operand.vmem [shape: f32[8,2,32], index: 6, kind: output, shape index: {0}]
  %s7 = inlined_call_operand.vmem [shape: f32[8,2,32], index: 7, kind: output, shape index: {1}]
  %8 = xla_tuple %s6, %s7
  %s9 = sld [smem:[#allocation0]]
  $region42: #{forward.24} parent=0
    _
  %s11 = ssub.s32 1, %s9
  %s12 = scalar_select 0, %s11, %s9
  // Predicated region
  $region2: #{forward.24} parent=0 // pred_check
    _
  $region3: #{forward.24} parent=0 // pred_check_branch
    %14 = sbr.rel (0) target = $region5
  $region4: #{forward.24} parent=0 // pred_region
    _
  $region5: #{forward.24} parent=0 // pred_fallthru
    _
  // Predicated region
  $region6: #{forward.24} parent=0 // pred_check
    _
  $region7: #{forward.24} parent=0 // pred_check_branch
    %16 = sbr.rel (0) target = $region9
  $region8: #{forward.24} parent=0 // pred_region
    _
  $region9: #{forward.24} parent=0 // pred_fallthru
    _
  // Predicated region
  $region10: #{forward.24} parent=0 // pred_check
    _
  $region11: #{forward.24} parent=0 // pred_check_branch
    %18 = sbr.rel (0) target = $region13
  $region12: #{forward.24} parent=0 // pred_region
    _
  $region13: #{forward.24} parent=0 // pred_fallthru
    _
  // Predicated region
  $region14: #{forward.24} parent=0 // pred_check
    _
  $region15: #{forward.24} parent=0 // pred_check_branch
    %20 = sbr.rel (0) target = $region17
  $region16: #{forward.24} parent=0 // pred_region
    _
  $region17: #{forward.24} parent=0 // pred_fallthru
    _
  // Predicated region
  $region18: #{forward.24} parent=0 // pred_check
    _
  $region19: #{forward.24} parent=0 // pred_check_branch
    %22 = sbr.rel (0) target = $region21
  $region20: #{forward.24} parent=0 // pred_region
    _
  $region21: #{forward.24} parent=0 // pred_fallthru
    _
  // Predicated region
  $region22: #{forward.24} parent=0 // pred_check
    _
  $region23: #{forward.24} parent=0 // pred_check_branch
    %24 = sbr.rel (0) target = $region25
  $region24: #{forward.24} parent=0 // pred_region
    _
  $region25: #{forward.24} parent=0 // pred_fallthru
    _
  %v25 = vld [vmem:[%s2] sm:$0xff]
  %v26 = vld [vmem:[%s2 + $0x8] sm:$0xff]
  %v27 = vld [vmem:[%s2 + $0x10] sm:$0xff]
  %v28 = vld [vmem:[%s2 + $0x18] sm:$0xff]
  %v29 = vld [vmem:[%s3] sm:$0xff]
  %v30 = vld [vmem:[%s3 + $0x8] sm:$0xff]
  %v31 = vld [vmem:[%s3 + $0x10] sm:$0xff]
  %v32 = vld [vmem:[%s3 + $0x18] sm:$0xff]
  %v33 = vld [vmem:[%s4] sm:$0x1]
  %v34 = vld [vmem:[%s5] sm:$0x1]
  %v35 = vld [vmem:[%s0] sm:$0x3]
  %s36 = scalar_lea.vmem %s1, 14
  %v37 = vld [vmem:[%s36] sm:$0x3]
  %v39 = vlaneseq
  %v40 = vshrl.u32 %v39, 7
  %v41 = vsub.s32 0, %v40
  %v42 = vrot.slane %v33, %v41
  %vm44 = vcmask 261120
  %v46 = vsel %vm44, 0.0, 0
  %48 = vmatprep.subr.mxu0 0.0
  %49 = vmatpush1.msra.mxu0 %v25
  %50 = vmatprep.subr.mxu0 0.0
  %51 = vmatpush1.msra.mxu0 %v26
  %52 = vmatprep.subr.mxu0 0.0
  %53 = vmatpush1.msra.mxu0 %v27
  %54 = vmatprep.subr.mxu0 0.0
  %55 = vmatpush1.msra.mxu0 %v28
  %56 = vmatprep.subr.mxu0 0.0
  %57 = vmatpush1.msra.mxu0 0.0
  %58 = vmatprep.subr.mxu0 0.0
  %59 = vmatpush1.msra.mxu0 0.0
  %60 = vmatprep.subr.mxu0 0.0
  %61 = vmatpush1.msra.mxu0 0.0
  %62 = vmatprep.subr.mxu0 0.0
  %63 = vmatpush1.msra.mxu0 0.0
  %64 = vmatprep.subr.mxu0 0.0
  %65 = vmatpush1.msra.mxu0 0.0
  %66 = vmatprep.subr.mxu0 0.0
  %67 = vmatpush1.msra.mxu0 0.0
  %68 = vmatprep.subr.mxu0 0.0
  %69 = vmatpush1.msra.mxu0 0.0
  %70 = vmatprep.subr.mxu0 0.0
  %71 = vmatpush1.msra.mxu0 0.0
  %72 = vmatprep.subr.mxu0 0.0
  %73 = vmatpush1.msra.mxu0 0.0
  %74 = vmatprep.subr.mxu0 0.0
  %75 = vmatpush1.msra.mxu0 0.0
  %76 = vmatprep.subr.mxu0 0.0
  %77 = vmatpush1.msra.mxu0 0.0
  %78 = vmatprep.subr.mxu0 0.0
  %79 = vmatpush1.msra.mxu0 0.0
  %80 = vmatprep.subr.mxu0 0.0
  %81 = vmatpush1.msra.mxu0 0.0
  %82 = vmatprep.subr.mxu0 0.0
  %83 = vmatpush1.msra.mxu0 0.0
  %84 = vmatprep.subr.mxu0 0.0
  %85 = vmatpush1.msra.mxu0 0.0
  %86 = vmatprep.subr.mxu0 0.0
  %87 = vmatpush1.msra.mxu0 0.0
  %88 = vmatprep.subr.mxu0 0.0
  %89 = vmatpush1.msra.mxu0 0.0
  %90 = vmatprep.subr.mxu0 0.0
  %91 = vmatpush1.msra.mxu0 0.0
  %92 = vmatprep.subr.mxu0 0.0
  %93 = vmatpush1.msra.mxu0 0.0
  %94 = vmatprep.subr.mxu0 0.0
  %95 = vmatpush1.msra.mxu0 0.0
  %96 = vmatprep.subr.mxu0 0.0
  %97 = vmatpush1.msra.mxu0 0.0
  %98 = vmatprep.subr.mxu0 0.0
  %99 = vmatpush1.msra.mxu0 0.0
  %100 = vmatprep.subr.mxu0 0.0
  %101 = vmatpush1.msra.mxu0 0.0
  %102 = vmatprep.subr.mxu0 0.0
  %103 = vmatpush1.msra.mxu0 0.0
  %104 = vmatprep.subr.mxu0 0.0
  %105 = vmatpush1.msra.mxu0 0.0
  %106 = vmatprep.subr.mxu0 0.0
  %107 = vmatpush1.msra.mxu0 0.0
  %108 = vmatprep.subr.mxu0 0.0
  %109 = vmatpush1.msra.mxu0 0.0
  %110 = vmatprep.subr.mxu0 0.0
  %111 = vmatpush1.msra.mxu0 0.0
  %112 = vmatprep.mubr.f32.mxu0 0.0
  %113 = vmatmul.mubr.f32.gmra.mrb[0].mxu0 %v46
  %v114 = vpop.f32.mrb[0].mxu0
  %v115 = vadd.f32 %v42, %v114
  %v116 = vpop.f32.mrb[0].mxu0
  %117 = vdwg.mxu0
  %v119 = vlaneseq
  %v120 = vshrl.u32 %v119, 7
  %v121 = vsub.s32 0, %v120
  %v122 = vrot.slane %v34, %v121
  %124 = vmatprep.subr.mxu0 0.0
  %125 = vmatpush1.msra.mxu0 %v29
  %126 = vmatprep.subr.mxu0 0.0
  %127 = vmatpush1.msra.mxu0 %v30
  %128 = vmatprep.subr.mxu0 0.0
  %129 = vmatpush1.msra.mxu0 %v31
  %130 = vmatprep.subr.mxu0 0.0
  %131 = vmatpush1.msra.mxu0 %v32
  %132 = vmatprep.subr.mxu0 0.0
  %133 = vmatpush1.msra.mxu0 0.0
  %134 = vmatprep.subr.mxu0 0.0
  %135 = vmatpush1.msra.mxu0 0.0
  %136 = vmatprep.subr.mxu0 0.0
  %137 = vmatpush1.msra.mxu0 0.0
  %138 = vmatprep.subr.mxu0 0.0
  %139 = vmatpush1.msra.mxu0 0.0
  %140 = vmatprep.subr.mxu0 0.0
  %141 = vmatpush1.msra.mxu0 0.0
  %142 = vmatprep.subr.mxu0 0.0
  %143 = vmatpush1.msra.mxu0 0.0
  %144 = vmatprep.subr.mxu0 0.0
  %145 = vmatpush1.msra.mxu0 0.0
  %146 = vmatprep.subr.mxu0 0.0
  %147 = vmatpush1.msra.mxu0 0.0
  %148 = vmatprep.subr.mxu0 0.0
  %149 = vmatpush1.msra.mxu0 0.0
  %150 = vmatprep.subr.mxu0 0.0
  %151 = vmatpush1.msra.mxu0 0.0
  %152 = vmatprep.subr.mxu0 0.0
  %153 = vmatpush1.msra.mxu0 0.0
  %154 = vmatprep.subr.mxu0 0.0
  %155 = vmatpush1.msra.mxu0 0.0
  %156 = vmatprep.subr.mxu0 0.0
  %157 = vmatpush1.msra.mxu0 0.0
  %158 = vmatprep.subr.mxu0 0.0
  %159 = vmatpush1.msra.mxu0 0.0
  %160 = vmatprep.subr.mxu0 0.0
  %161 = vmatpush1.msra.mxu0 0.0
  %162 = vmatprep.subr.mxu0 0.0
  %163 = vmatpush1.msra.mxu0 0.0
  %164 = vmatprep.subr.mxu0 0.0
  %165 = vmatpush1.msra.mxu0 0.0
  %166 = vmatprep.subr.mxu0 0.0
  %167 = vmatpush1.msra.mxu0 0.0
  %168 = vmatprep.subr.mxu0 0.0
  %169 = vmatpush1.msra.mxu0 0.0
  %170 = vmatprep.subr.mxu0 0.0
  %171 = vmatpush1.msra.mxu0 0.0
  %172 = vmatprep.subr.mxu0 0.0
  %173 = vmatpush1.msra.mxu0 0.0
  %174 = vmatprep.subr.mxu0 0.0
  %175 = vmatpush1.msra.mxu0 0.0
  %176 = vmatprep.subr.mxu0 0.0
  %177 = vmatpush1.msra.mxu0 0.0
  %178 = vmatprep.subr.mxu0 0.0
  %179 = vmatpush1.msra.mxu0 0.0
  %180 = vmatprep.subr.mxu0 0.0
  %181 = vmatpush1.msra.mxu0 0.0
  %182 = vmatprep.subr.mxu0 0.0
  %183 = vmatpush1.msra.mxu0 0.0
  %184 = vmatprep.subr.mxu0 0.0
  %185 = vmatpush1.msra.mxu0 0.0
  %186 = vmatprep.subr.mxu0 0.0
  %187 = vmatpush1.msra.mxu0 0.0
  %188 = vmatprep.mubr.f32.mxu0 0.0
  %189 = vmatmul.mubr.f32.gmra.mrb[0].mxu0 %v46
  %v190 = vpop.f32.mrb[0].mxu0
  %v191 = vadd.f32 %v122, %v190
  %v192 = vpop.f32.mrb[0].mxu0
  %193 = vdwg.mxu0
  %v194 = vadd.f32 %v35, %v115
  %v195 = vxor.u32 %v194, 2147483648
  %v196 = vmul.f32 %v195, 1.442695
  %v197 = vpow.pop %v196
  %v198 = vadd.f32 %v197, 1.0
  %v199 = vrcp.pop %v198
  %v200 = vmul.f32 1.0, %v199
  %202 = vrot.lane.b32.xlu0 %v115, 64
  %v203 = vpop.permute.xlu0 %202
  %v205 = vmul.f32 %v200, %v203
  %207 = vrot.lane.b32.xlu0 %v205, 64
  %v208 = vpop.permute.xlu0 %207
  %v210 = vadd.f32 %v35, %v208
  %v211 = vtanh.pop %v210
  %v212 = vsub.f32 1.0, %v200
  %214 = vrot.lane.b32.xlu0 %v211, 96
  %v215 = vpop.permute.xlu0 %214
  %v217 = vmul.f32 %v212, %v215
  %v218 = vmul.f32 %v200, 0.0
  %v219 = vadd.f32 %v217, %v218
  %v220 = vadd.f32 %v37, %v191
  %v221 = vxor.u32 %v220, 2147483648
  %v222 = vmul.f32 %v221, 1.442695
  %v223 = vpow.pop %v222
  %v224 = vadd.f32 %v223, 1.0
  %v225 = vrcp.pop %v224
  %v226 = vmul.f32 1.0, %v225
  %228 = vrot.lane.b32.xlu0 %v191, 64
  %v229 = vpop.permute.xlu0 %228
  %v231 = vmul.f32 %v226, %v229
  %233 = vrot.lane.b32.xlu0 %v231, 64
  %v234 = vpop.permute.xlu0 %233
  %v236 = vadd.f32 %v37, %v234
  %v237 = vtanh.pop %v236
  %v238 = vsub.f32 1.0, %v226
  %240 = vrot.lane.b32.xlu0 %v237, 96
  %v241 = vpop.permute.xlu0 %240
  %v243 = vmul.f32 %v238, %v241
  %v244 = vmul.f32 %v226, 0.0
  %v245 = vadd.f32 %v243, %v244
  %247 = vrot.lane.b32.xlu0 %v219, 96
  %v248 = vpop.permute.xlu0 %247
  %vm250 = vcmask 254976
  %251 = vst.msk [vmem:[%s6] sm:$0x3] %vm250, %v248
  %253 = vrot.lane.b32.xlu0 %v245, 96
  %v254 = vpop.permute.xlu0 %253
  %s256 = scalar_lea.vmem %s7, 14
  %257 = vst.msk [vmem:[%s256] sm:$0x3] %vm250, %v254
  %s258 = scalar_lea.vmem %s0, 2
  %v259 = vld [vmem:[%s258] sm:$0x3]
  %s260 = scalar_lea.vmem %s1, 12
  %v261 = vld [vmem:[%s260] sm:$0x3]
  %v262 = vsel %vm44, %v248, 0
  %264 = vmatprep.subr.mxu0 0.0
  %265 = vmatpush1.msra.mxu0 %v25
  %266 = vmatprep.subr.mxu0 0.0
  %267 = vmatpush1.msra.mxu0 %v26
  %268 = vmatprep.subr.mxu0 0.0
  %269 = vmatpush1.msra.mxu0 %v27
  %270 = vmatprep.subr.mxu0 0.0
  %271 = vmatpush1.msra.mxu0 %v28
  %272 = vmatprep.subr.mxu0 0.0
  %273 = vmatpush1.msra.mxu0 0.0
  %274 = vmatprep.subr.mxu0 0.0
  %275 = vmatpush1.msra.mxu0 0.0
  %276 = vmatprep.subr.mxu0 0.0
  %277 = vmatpush1.msra.mxu0 0.0
  %278 = vmatprep.subr.mxu0 0.0
  %279 = vmatpush1.msra.mxu0 0.0
  %280 = vmatprep.subr.mxu0 0.0
  %281 = vmatpush1.msra.mxu0 0.0
  %282 = vmatprep.subr.mxu0 0.0
  %283 = vmatpush1.msra.mxu0 0.0
  %284 = vmatprep.subr.mxu0 0.0
  %285 = vmatpush1.msra.mxu0 0.0
  %286 = vmatprep.subr.mxu0 0.0
  %287 = vmatpush1.msra.mxu0 0.0
  %288 = vmatprep.subr.mxu0 0.0
  %289 = vmatpush1.msra.mxu0 0.0
  %290 = vmatprep.subr.mxu0 0.0
  %291 = vmatpush1.msra.mxu0 0.0
  %292 = vmatprep.subr.mxu0 0.0
  %293 = vmatpush1.msra.mxu0 0.0
  %294 = vmatprep.subr.mxu0 0.0
  %295 = vmatpush1.msra.mxu0 0.0
  %296 = vmatprep.subr.mxu0 0.0
  %297 = vmatpush1.msra.mxu0 0.0
  %298 = vmatprep.subr.mxu0 0.0
  %299 = vmatpush1.msra.mxu0 0.0
  %300 = vmatprep.subr.mxu0 0.0
  %301 = vmatpush1.msra.mxu0 0.0
  %302 = vmatprep.subr.mxu0 0.0
  %303 = vmatpush1.msra.mxu0 0.0
  %304 = vmatprep.subr.mxu0 0.0
  %305 = vmatpush1.msra.mxu0 0.0
  %306 = vmatprep.subr.mxu0 0.0
  %307 = vmatpush1.msra.mxu0 0.0
  %308 = vmatprep.subr.mxu0 0.0
  %309 = vmatpush1.msra.mxu0 0.0
  %310 = vmatprep.subr.mxu0 0.0
  %311 = vmatpush1.msra.mxu0 0.0
  %312 = vmatprep.subr.mxu0 0.0
  %313 = vmatpush1.msra.mxu0 0.0
  %314 = vmatprep.subr.mxu0 0.0
  %315 = vmatpush1.msra.mxu0 0.0
  %316 = vmatprep.subr.mxu0 0.0
  %317 = vmatpush1.msra.mxu0 0.0
  %318 = vmatprep.subr.mxu0 0.0
  %319 = vmatpush1.msra.mxu0 0.0
  %320 = vmatprep.subr.mxu0 0.0
  %321 = vmatpush1.msra.mxu0 0.0
  %322 = vmatprep.subr.mxu0 0.0
  %323 = vmatpush1.msra.mxu0 0.0
  %324 = vmatprep.subr.mxu0 0.0
  %325 = vmatpush1.msra.mxu0 0.0
  %326 = vmatprep.subr.mxu0 0.0
  %327 = vmatpush1.msra.mxu0 0.0
  %328 = vmatprep.mubr.f32.mxu0 0.0
  %329 = vmatmul.mubr.f32.gmra.mrb[0].mxu0 %v262
  %v330 = vpop.f32.mrb[0].mxu0
  %v331 = vadd.f32 %v42, %v330
  %v332 = vpop.f32.mrb[0].mxu0
  %333 = vdwg.mxu0
  %v334 = vsel %vm44, %v254, 0
  %336 = vmatprep.subr.mxu0 0.0
  %337 = vmatpush1.msra.mxu0 %v29
  %338 = vmatprep.subr.mxu0 0.0
  %339 = vmatpush1.msra.mxu0 %v30
  %340 = vmatprep.subr.mxu0 0.0
  %341 = vmatpush1.msra.mxu0 %v31
  %342 = vmatprep.subr.mxu0 0.0
  %343 = vmatpush1.msra.mxu0 %v32
  %344 = vmatprep.subr.mxu0 0.0
  %345 = vmatpush1.msra.mxu0 0.0
  %346 = vmatprep.subr.mxu0 0.0
  %347 = vmatpush1.msra.mxu0 0.0
  %348 = vmatprep.subr.mxu0 0.0
  %349 = vmatpush1.msra.mxu0 0.0
  %350 = vmatprep.subr.mxu0 0.0
  %351 = vmatpush1.msra.mxu0 0.0
  %352 = vmatprep.subr.mxu0 0.0
  %353 = vmatpush1.msra.mxu0 0.0
  %354 = vmatprep.subr.mxu0 0.0
  %355 = vmatpush1.msra.mxu0 0.0
  %356 = vmatprep.subr.mxu0 0.0
  %357 = vmatpush1.msra.mxu0 0.0
  %358 = vmatprep.subr.mxu0 0.0
  %359 = vmatpush1.msra.mxu0 0.0
  %360 = vmatprep.subr.mxu0 0.0
  %361 = vmatpush1.msra.mxu0 0.0
  %362 = vmatprep.subr.mxu0 0.0
  %363 = vmatpush1.msra.mxu0 0.0
  %364 = vmatprep.subr.mxu0 0.0
  %365 = vmatpush1.msra.mxu0 0.0
  %366 = vmatprep.subr.mxu0 0.0
  %367 = vmatpush1.msra.mxu0 0.0
  %368 = vmatprep.subr.mxu0 0.0
  %369 = vmatpush1.msra.mxu0 0.0
  %370 = vmatprep.subr.mxu0 0.0
  %371 = vmatpush1.msra.mxu0 0.0
  %372 = vmatprep.subr.mxu0 0.0
  %373 = vmatpush1.msra.mxu0 0.0
  %374 = vmatprep.subr.mxu0 0.0
  %375 = vmatpush1.msra.mxu0 0.0
  %376 = vmatprep.subr.mxu0 0.0
  %377 = vmatpush1.msra.mxu0 0.0
  %378 = vmatprep.subr.mxu0 0.0
  %379 = vmatpush1.msra.mxu0 0.0
  %380 = vmatprep.subr.mxu0 0.0
  %381 = vmatpush1.msra.mxu0 0.0
  %382 = vmatprep.subr.mxu0 0.0
  %383 = vmatpush1.msra.mxu0 0.0
  %384 = vmatprep.subr.mxu0 0.0
  %385 = vmatpush1.msra.mxu0 0.0
  %386 = vmatprep.subr.mxu0 0.0
  %387 = vmatpush1.msra.mxu0 0.0
  %388 = vmatprep.subr.mxu0 0.0
  %389 = vmatpush1.msra.mxu0 0.0
  %390 = vmatprep.subr.mxu0 0.0
  %391 = vmatpush1.msra.mxu0 0.0
  %392 = vmatprep.subr.mxu0 0.0
  %393 = vmatpush1.msra.mxu0 0.0
  %394 = vmatprep.subr.mxu0 0.0
  %395 = vmatpush1.msra.mxu0 0.0
  %396 = vmatprep.subr.mxu0 0.0
  %397 = vmatpush1.msra.mxu0 0.0
  %398 = vmatprep.subr.mxu0 0.0
  %399 = vmatpush1.msra.mxu0 0.0
  %400 = vmatprep.mubr.f32.mxu0 0.0
  %401 = vmatmul.mubr.f32.gmra.mrb[0].mxu0 %v334
  %v402 = vpop.f32.mrb[0].mxu0
  %v403 = vadd.f32 %v122, %v402
  %v404 = vpop.f32.mrb[0].mxu0
  %405 = vdwg.mxu0
  %v406 = vadd.f32 %v259, %v331
  %v407 = vxor.u32 %v406, 2147483648
  %v408 = vmul.f32 %v407, 1.442695
  %v409 = vpow.pop %v408
  %v410 = vadd.f32 %v409, 1.0
  %v411 = vrcp.pop %v410
  %v412 = vmul.f32 1.0, %v411
  %414 = vrot.lane.b32.xlu0 %v331, 64
  %v415 = vpop.permute.xlu0 %414
  %v417 = vmul.f32 %v412, %v415
  %419 = vrot.lane.b32.xlu0 %v417, 64
  %v420 = vpop.permute.xlu0 %419
  %v422 = vadd.f32 %v259, %v420
  %v423 = vtanh.pop %v422
  %v424 = vsub.f32 1.0, %v412
  %426 = vrot.lane.b32.xlu0 %v423, 96
  %v427 = vpop.permute.xlu0 %426
  %v429 = vmul.f32 %v424, %v427
  %v430 = vmul.f32 %v412, %v219
  %v431 = vadd.f32 %v429, %v430
  %v432 = vadd.f32 %v261, %v403
  %v433 = vxor.u32 %v432, 2147483648
  %v434 = vmul.f32 %v433, 1.442695
  %v435 = vpow.pop %v434
  %v436 = vadd.f32 %v435, 1.0
  %v437 = vrcp.pop %v436
  %v438 = vmul.f32 1.0, %v437
  %440 = vrot.lane.b32.xlu0 %v403, 64
  %v441 = vpop.permute.xlu0 %440
  %v443 = vmul.f32 %v438, %v441
  %445 = vrot.lane.b32.xlu0 %v443, 64
  %v446 = vpop.permute.xlu0 %445
  %v448 = vadd.f32 %v261, %v446
  %v449 = vtanh.pop %v448
  %v450 = vsub.f32 1.0, %v438
  %452 = vrot.lane.b32.xlu0 %v449, 96
  %v453 = vpop.permute.xlu0 %452
  %v455 = vmul.f32 %v450, %v453
  %v456 = vmul.f32 %v438, %v245
  %v457 = vadd.f32 %v455, %v456
  %459 = vrot.lane.b32.xlu0 %v431, 96
  %v460 = vpop.permute.xlu0 %459
  %s462 = scalar_lea.vmem %s6, 2
  %463 = vst.msk [vmem:[%s462] sm:$0x3] %vm250, %v460
  %465 = vrot.lane.b32.xlu0 %v457, 96
  %v466 = vpop.permute.xlu0 %465
  %s468 = scalar_lea.vmem %s7, 12
  %469 = vst.msk [vmem:[%s468] sm:$0x3] %vm250, %v466
  %s470 = scalar_lea.vmem %s0, 4
  %v471 = vld [vmem:[%s470] sm:$0x3]
  %s472 = scalar_lea.vmem %s1, 10
  %v473 = vld [vmem:[%s472] sm:$0x3]
  %v474 = vsel %vm44, %v460, 0
  %476 = vmatprep.subr.mxu0 0.0
  %477 = vmatpush1.msra.mxu0 %v25
  %478 = vmatprep.subr.mxu0 0.0
  %479 = vmatpush1.msra.mxu0 %v26
  %480 = vmatprep.subr.mxu0 0.0
  %481 = vmatpush1.msra.mxu0 %v27
  %482 = vmatprep.subr.mxu0 0.0
  %483 = vmatpush1.msra.mxu0 %v28
  %484 = vmatprep.subr.mxu0 0.0
  %485 = vmatpush1.msra.mxu0 0.0
  %486 = vmatprep.subr.mxu0 0.0
  %487 = vmatpush1.msra.mxu0 0.0
  %488 = vmatprep.subr.mxu0 0.0
  %489 = vmatpush1.msra.mxu0 0.0
  %490 = vmatprep.subr.mxu0 0.0
  %491 = vmatpush1.msra.mxu0 0.0
  %492 = vmatprep.subr.mxu0 0.0
  %493 = vmatpush1.msra.mxu0 0.0
  %494 = vmatprep.subr.mxu0 0.0
  %495 = vmatpush1.msra.mxu0 0.0
  %496 = vmatprep.subr.mxu0 0.0
  %497 = vmatpush1.msra.mxu0 0.0
  %498 = vmatprep.subr.mxu0 0.0
  %499 = vmatpush1.msra.mxu0 0.0
  %500 = vmatprep.subr.mxu0 0.0
  %501 = vmatpush1.msra.mxu0 0.0
  %502 = vmatprep.subr.mxu0 0.0
  %503 = vmatpush1.msra.mxu0 0.0
  %504 = vmatprep.subr.mxu0 0.0
  %505 = vmatpush1.msra.mxu0 0.0
  %506 = vmatprep.subr.mxu0 0.0
  %507 = vmatpush1.msra.mxu0 0.0
  %508 = vmatprep.subr.mxu0 0.0
  %509 = vmatpush1.msra.mxu0 0.0
  %510 = vmatprep.subr.mxu0 0.0
  %511 = vmatpush1.msra.mxu0 0.0
  %512 = vmatprep.subr.mxu0 0.0
  %513 = vmatpush1.msra.mxu0 0.0
  %514 = vmatprep.subr.mxu0 0.0
  %515 = vmatpush1.msra.mxu0 0.0
  %516 = vmatprep.subr.mxu0 0.0
  %517 = vmatpush1.msra.mxu0 0.0
  %518 = vmatprep.subr.mxu0 0.0
  %519 = vmatpush1.msra.mxu0 0.0
  %520 = vmatprep.subr.mxu0 0.0
  %521 = vmatpush1.msra.mxu0 0.0
  %522 = vmatprep.subr.mxu0 0.0
  %523 = vmatpush1.msra.mxu0 0.0
  %524 = vmatprep.subr.mxu0 0.0
  %525 = vmatpush1.msra.mxu0 0.0
  %526 = vmatprep.subr.mxu0 0.0
  %527 = vmatpush1.msra.mxu0 0.0
  %528 = vmatprep.subr.mxu0 0.0
  %529 = vmatpush1.msra.mxu0 0.0
  %530 = vmatprep.subr.mxu0 0.0
  %531 = vmatpush1.msra.mxu0 0.0
  %532 = vmatprep.subr.mxu0 0.0
  %533 = vmatpush1.msra.mxu0 0.0
  %534 = vmatprep.subr.mxu0 0.0
  %535 = vmatpush1.msra.mxu0 0.0
  %536 = vmatprep.subr.mxu0 0.0
  %537 = vmatpush1.msra.mxu0 0.0
  %538 = vmatprep.subr.mxu0 0.0
  %539 = vmatpush1.msra.mxu0 0.0
  %540 = vmatprep.mubr.f32.mxu0 0.0
  %541 = vmatmul.mubr.f32.gmra.mrb[0].mxu0 %v474
  %v542 = vpop.f32.mrb[0].mxu0
  %v543 = vadd.f32 %v42, %v542
  %v544 = vpop.f32.mrb[0].mxu0
  %545 = vdwg.mxu0
  %v546 = vsel %vm44, %v466, 0
  %548 = vmatprep.subr.mxu0 0.0
  %549 = vmatpush1.msra.mxu0 %v29
  %550 = vmatprep.subr.mxu0 0.0
  %551 = vmatpush1.msra.mxu0 %v30
  %552 = vmatprep.subr.mxu0 0.0
  %553 = vmatpush1.msra.mxu0 %v31
  %554 = vmatprep.subr.mxu0 0.0
  %555 = vmatpush1.msra.mxu0 %v32
  %556 = vmatprep.subr.mxu0 0.0
  %557 = vmatpush1.msra.mxu0 0.0
  %558 = vmatprep.subr.mxu0 0.0
  %559 = vmatpush1.msra.mxu0 0.0
  %560 = vmatprep.subr.mxu0 0.0
  %561 = vmatpush1.msra.mxu0 0.0
  %562 = vmatprep.subr.mxu0 0.0
  %563 = vmatpush1.msra.mxu0 0.0
  %564 = vmatprep.subr.mxu0 0.0
  %565 = vmatpush1.msra.mxu0 0.0
  %566 = vmatprep.subr.mxu0 0.0
  %567 = vmatpush1.msra.mxu0 0.0
  %568 = vmatprep.subr.mxu0 0.0
  %569 = vmatpush1.msra.mxu0 0.0
  %570 = vmatprep.subr.mxu0 0.0
  %571 = vmatpush1.msra.mxu0 0.0
  %572 = vmatprep.subr.mxu0 0.0
  %573 = vmatpush1.msra.mxu0 0.0
  %574 = vmatprep.subr.mxu0 0.0
  %575 = vmatpush1.msra.mxu0 0.0
  %576 = vmatprep.subr.mxu0 0.0
  %577 = vmatpush1.msra.mxu0 0.0
  %578 = vmatprep.subr.mxu0 0.0
  %579 = vmatpush1.msra.mxu0 0.0
  %580 = vmatprep.subr.mxu0 0.0
  %581 = vmatpush1.msra.mxu0 0.0
  %582 = vmatprep.subr.mxu0 0.0
  %583 = vmatpush1.msra.mxu0 0.0
  %584 = vmatprep.subr.mxu0 0.0
  %585 = vmatpush1.msra.mxu0 0.0
  %586 = vmatprep.subr.mxu0 0.0
  %587 = vmatpush1.msra.mxu0 0.0
  %588 = vmatprep.subr.mxu0 0.0
  %589 = vmatpush1.msra.mxu0 0.0
  %590 = vmatprep.subr.mxu0 0.0
  %591 = vmatpush1.msra.mxu0 0.0
  %592 = vmatprep.subr.mxu0 0.0
  %593 = vmatpush1.msra.mxu0 0.0
  %594 = vmatprep.subr.mxu0 0.0
  %595 = vmatpush1.msra.mxu0 0.0
  %596 = vmatprep.subr.mxu0 0.0
  %597 = vmatpush1.msra.mxu0 0.0
  %598 = vmatprep.subr.mxu0 0.0
  %599 = vmatpush1.msra.mxu0 0.0
  %600 = vmatprep.subr.mxu0 0.0
  %601 = vmatpush1.msra.mxu0 0.0
  %602 = vmatprep.subr.mxu0 0.0
  %603 = vmatpush1.msra.mxu0 0.0
  %604 = vmatprep.subr.mxu0 0.0
  %605 = vmatpush1.msra.mxu0 0.0
  %606 = vmatprep.subr.mxu0 0.0
  %607 = vmatpush1.msra.mxu0 0.0
  %608 = vmatprep.subr.mxu0 0.0
  %609 = vmatpush1.msra.mxu0 0.0
  %610 = vmatprep.subr.mxu0 0.0
  %611 = vmatpush1.msra.mxu0 0.0
  %612 = vmatprep.mubr.f32.mxu0 0.0
  %613 = vmatmul.mubr.f32.gmra.mrb[0].mxu0 %v546
  %v614 = vpop.f32.mrb[0].mxu0
  %v615 = vadd.f32 %v122, %v614
  %v616 = vpop.f32.mrb[0].mxu0
  %617 = vdwg.mxu0
  %v618 = vadd.f32 %v471, %v543
  %v619 = vxor.u32 %v618, 2147483648
  %v620 = vmul.f32 %v619, 1.442695
  %v621 = vpow.pop %v620
  %v622 = vadd.f32 %v621, 1.0
  %v623 = vrcp.pop %v622
  %v624 = vmul.f32 1.0, %v623
  %626 = vrot.lane.b32.xlu0 %v543, 64
  %v627 = vpop.permute.xlu0 %626
  %v629 = vmul.f32 %v624, %v627
  %631 = vrot.lane.b32.xlu0 %v629, 64
  %v632 = vpop.permute.xlu0 %631
  %v634 = vadd.f32 %v471, %v632
  %v635 = vtanh.pop %v634
  %v636 = vsub.f32 1.0, %v624
  %638 = vrot.lane.b32.xlu0 %v635, 96
  %v639 = vpop.permute.xlu0 %638
  %v641 = vmul.f32 %v636, %v639
  %v642 = vmul.f32 %v624, %v431
  %v643 = vadd.f32 %v641, %v642
  %v644 = vadd.f32 %v473, %v615
  %v645 = vxor.u32 %v644, 2147483648
  %v646 = vmul.f32 %v645, 1.442695
  %v647 = vpow.pop %v646
  %v648 = vadd.f32 %v647, 1.0
  %v649 = vrcp.pop %v648
  %v650 = vmul.f32 1.0, %v649
  %652 = vrot.lane.b32.xlu0 %v615, 64
  %v653 = vpop.permute.xlu0 %652
  %v655 = vmul.f32 %v650, %v653
  %657 = vrot.lane.b32.xlu0 %v655, 64
  %v658 = vpop.permute.xlu0 %657
  %v660 = vadd.f32 %v473, %v658
  %v661 = vtanh.pop %v660
  %v662 = vsub.f32 1.0, %v650
  %664 = vrot.lane.b32.xlu0 %v661, 96
  %v665 = vpop.permute.xlu0 %664
  %v667 = vmul.f32 %v662, %v665
  %v668 = vmul.f32 %v650, %v457
  %v669 = vadd.f32 %v667, %v668
  %671 = vrot.lane.b32.xlu0 %v643, 96
  %v672 = vpop.permute.xlu0 %671
  %s674 = scalar_lea.vmem %s6, 4
  %675 = vst.msk [vmem:[%s674] sm:$0x3] %vm250, %v672
  %677 = vrot.lane.b32.xlu0 %v669, 96
  %v678 = vpop.permute.xlu0 %677
  %s680 = scalar_lea.vmem %s7, 10
  %681 = vst.msk [vmem:[%s680] sm:$0x3] %vm250, %v678
  %s682 = scalar_lea.vmem %s0, 6
  %v683 = vld [vmem:[%s682] sm:$0x3]
  %s684 = scalar_lea.vmem %s1, 8
  %v685 = vld [vmem:[%s684] sm:$0x3]
  %v686 = vsel %vm44, %v672, 0
  %688 = vmatprep.subr.mxu0 0.0
  %689 = vmatpush1.msra.mxu0 %v25
  %690 = vmatprep.subr.mxu0 0.0
  %691 = vmatpush1.msra.mxu0 %v26
  %692 = vmatprep.subr.mxu0 0.0
  %693 = vmatpush1.msra.mxu0 %v27
  %694 = vmatprep.subr.mxu0 0.0
  %695 = vmatpush1.msra.mxu0 %v28
  %696 = vmatprep.subr.mxu0 0.0
  %697 = vmatpush1.msra.mxu0 0.0
  %698 = vmatprep.subr.mxu0 0.0
  %699 = vmatpush1.msra.mxu0 0.0
  %700 = vmatprep.subr.mxu0 0.0
  %701 = vmatpush1.msra.mxu0 0.0
  %702 = vmatprep.subr.mxu0 0.0
  %703 = vmatpush1.msra.mxu0 0.0
  %704 = vmatprep.subr.mxu0 0.0
  %705 = vmatpush1.msra.mxu0 0.0
  %706 = vmatprep.subr.mxu0 0.0
  %707 = vmatpush1.msra.mxu0 0.0
  %708 = vmatprep.subr.mxu0 0.0
  %709 = vmatpush1.msra.mxu0 0.0
  %710 = vmatprep.subr.mxu0 0.0
  %711 = vmatpush1.msra.mxu0 0.0
  %712 = vmatprep.subr.mxu0 0.0
  %713 = vmatpush1.msra.mxu0 0.0
  %714 = vmatprep.subr.mxu0 0.0
  %715 = vmatpush1.msra.mxu0 0.0
  %716 = vmatprep.subr.mxu0 0.0
  %717 = vmatpush1.msra.mxu0 0.0
  %718 = vmatprep.subr.mxu0 0.0
  %719 = vmatpush1.msra.mxu0 0.0
  %720 = vmatprep.subr.mxu0 0.0
  %721 = vmatpush1.msra.mxu0 0.0
  %722 = vmatprep.subr.mxu0 0.0
  %723 = vmatpush1.msra.mxu0 0.0
  %724 = vmatprep.subr.mxu0 0.0
  %725 = vmatpush1.msra.mxu0 0.0
  %726 = vmatprep.subr.mxu0 0.0
  %727 = vmatpush1.msra.mxu0 0.0
  %728 = vmatprep.subr.mxu0 0.0
  %729 = vmatpush1.msra.mxu0 0.0
  %730 = vmatprep.subr.mxu0 0.0
  %731 = vmatpush1.msra.mxu0 0.0
  %732 = vmatprep.subr.mxu0 0.0
  %733 = vmatpush1.msra.mxu0 0.0
  %734 = vmatprep.subr.mxu0 0.0
  %735 = vmatpush1.msra.mxu0 0.0
  %736 = vmatprep.subr.mxu0 0.0
  %737 = vmatpush1.msra.mxu0 0.0
  %738 = vmatprep.subr.mxu0 0.0
  %739 = vmatpush1.msra.mxu0 0.0
  %740 = vmatprep.subr.mxu0 0.0
  %741 = vmatpush1.msra.mxu0 0.0
  %742 = vmatprep.subr.mxu0 0.0
  %743 = vmatpush1.msra.mxu0 0.0
  %744 = vmatprep.subr.mxu0 0.0
  %745 = vmatpush1.msra.mxu0 0.0
  %746 = vmatprep.subr.mxu0 0.0
  %747 = vmatpush1.msra.mxu0 0.0
  %748 = vmatprep.subr.mxu0 0.0
  %749 = vmatpush1.msra.mxu0 0.0
  %750 = vmatprep.subr.mxu0 0.0
  %751 = vmatpush1.msra.mxu0 0.0
  %752 = vmatprep.mubr.f32.mxu0 0.0
  %753 = vmatmul.mubr.f32.gmra.mrb[0].mxu0 %v686
  %v754 = vpop.f32.mrb[0].mxu0
  %v755 = vadd.f32 %v42, %v754
  %v756 = vpop.f32.mrb[0].mxu0
  %757 = vdwg.mxu0
  %v758 = vsel %vm44, %v678, 0
  %760 = vmatprep.subr.mxu0 0.0
  %761 = vmatpush1.msra.mxu0 %v29
  %762 = vmatprep.subr.mxu0 0.0
  %763 = vmatpush1.msra.mxu0 %v30
  %764 = vmatprep.subr.mxu0 0.0
  %765 = vmatpush1.msra.mxu0 %v31
  %766 = vmatprep.subr.mxu0 0.0
  %767 = vmatpush1.msra.mxu0 %v32
  %768 = vmatprep.subr.mxu0 0.0
  %769 = vmatpush1.msra.mxu0 0.0
  %770 = vmatprep.subr.mxu0 0.0
  %771 = vmatpush1.msra.mxu0 0.0
  %772 = vmatprep.subr.mxu0 0.0
  %773 = vmatpush1.msra.mxu0 0.0
  %774 = vmatprep.subr.mxu0 0.0
  %775 = vmatpush1.msra.mxu0 0.0
  %776 = vmatprep.subr.mxu0 0.0
  %777 = vmatpush1.msra.mxu0 0.0
  %778 = vmatprep.subr.mxu0 0.0
  %779 = vmatpush1.msra.mxu0 0.0
  %780 = vmatprep.subr.mxu0 0.0
  %781 = vmatpush1.msra.mxu0 0.0
  %782 = vmatprep.subr.mxu0 0.0
  %783 = vmatpush1.msra.mxu0 0.0
  %784 = vmatprep.subr.mxu0 0.0
  %785 = vmatpush1.msra.mxu0 0.0
  %786 = vmatprep.subr.mxu0 0.0
  %787 = vmatpush1.msra.mxu0 0.0
  %788 = vmatprep.subr.mxu0 0.0
  %789 = vmatpush1.msra.mxu0 0.0
  %790 = vmatprep.subr.mxu0 0.0
  %791 = vmatpush1.msra.mxu0 0.0
  %792 = vmatprep.subr.mxu0 0.0
  %793 = vmatpush1.msra.mxu0 0.0
  %794 = vmatprep.subr.mxu0 0.0
  %795 = vmatpush1.msra.mxu0 0.0
  %796 = vmatprep.subr.mxu0 0.0
  %797 = vmatpush1.msra.mxu0 0.0
  %798 = vmatprep.subr.mxu0 0.0
  %799 = vmatpush1.msra.mxu0 0.0
  %800 = vmatprep.subr.mxu0 0.0
  %801 = vmatpush1.msra.mxu0 0.0
  %802 = vmatprep.subr.mxu0 0.0
  %803 = vmatpush1.msra.mxu0 0.0
  %804 = vmatprep.subr.mxu0 0.0
  %805 = vmatpush1.msra.mxu0 0.0
  %806 = vmatprep.subr.mxu0 0.0
  %807 = vmatpush1.msra.mxu0 0.0
  %808 = vmatprep.subr.mxu0 0.0
  %809 = vmatpush1.msra.mxu0 0.0
  %810 = vmatprep.subr.mxu0 0.0
  %811 = vmatpush1.msra.mxu0 0.0
  %812 = vmatprep.subr.mxu0 0.0
  %813 = vmatpush1.msra.mxu0 0.0
  %814 = vmatprep.subr.mxu0 0.0
  %815 = vmatpush1.msra.mxu0 0.0
  %816 = vmatprep.subr.mxu0 0.0
  %817 = vmatpush1.msra.mxu0 0.0
  %818 = vmatprep.subr.mxu0 0.0
  %819 = vmatpush1.msra.mxu0 0.0
  %820 = vmatprep.subr.mxu0 0.0
  %821 = vmatpush1.msra.mxu0 0.0
  %822 = vmatprep.subr.mxu0 0.0
  %823 = vmatpush1.msra.mxu0 0.0
  %824 = vmatprep.mubr.f32.mxu0 0.0
  %825 = vmatmul.mubr.f32.gmra.mrb[0].mxu0 %v758
  %v826 = vpop.f32.mrb[0].mxu0
  %v827 = vadd.f32 %v122, %v826
  %v828 = vpop.f32.mrb[0].mxu0
  %829 = vdwg.mxu0
  %v830 = vadd.f32 %v683, %v755
  %v831 = vxor.u32 %v830, 2147483648
  %v832 = vmul.f32 %v831, 1.442695
  %v833 = vpow.pop %v832
  %v834 = vadd.f32 %v833, 1.0
  %v835 = vrcp.pop %v834
  %v836 = vmul.f32 1.0, %v835
  %838 = vrot.lane.b32.xlu0 %v755, 64
  %v839 = vpop.permute.xlu0 %838
  %v841 = vmul.f32 %v836, %v839
  %843 = vrot.lane.b32.xlu0 %v841, 64
  %v844 = vpop.permute.xlu0 %843
  %v846 = vadd.f32 %v683, %v844
  %v847 = vtanh.pop %v846
  %v848 = vsub.f32 1.0, %v836
  %850 = vrot.lane.b32.xlu0 %v847, 96
  %v851 = vpop.permute.xlu0 %850
  %v853 = vmul.f32 %v848, %v851
  %v854 = vmul.f32 %v836, %v643
  %v855 = vadd.f32 %v853, %v854
  %v856 = vadd.f32 %v685, %v827
  %v857 = vxor.u32 %v856, 2147483648
  %v858 = vmul.f32 %v857, 1.442695
  %v859 = vpow.pop %v858
  %v860 = vadd.f32 %v859, 1.0
  %v861 = vrcp.pop %v860
  %v862 = vmul.f32 1.0, %v861
  %864 = vrot.lane.b32.xlu0 %v827, 64
  %v865 = vpop.permute.xlu0 %864
  %v867 = vmul.f32 %v862, %v865
  %869 = vrot.lane.b32.xlu0 %v867, 64
  %v870 = vpop.permute.xlu0 %869
  %v872 = vadd.f32 %v685, %v870
  %v873 = vtanh.pop %v872
  %v874 = vsub.f32 1.0, %v862
  %876 = vrot.lane.b32.xlu0 %v873, 96
  %v877 = vpop.permute.xlu0 %876
  %v879 = vmul.f32 %v874, %v877
  %v880 = vmul.f32 %v862, %v669
  %v881 = vadd.f32 %v879, %v880
  %883 = vrot.lane.b32.xlu0 %v855, 96
  %v884 = vpop.permute.xlu0 %883
  %s886 = scalar_lea.vmem %s6, 6
  %887 = vst.msk [vmem:[%s886] sm:$0x3] %vm250, %v884
  %889 = vrot.lane.b32.xlu0 %v881, 96
  %v890 = vpop.permute.xlu0 %889
  %s892 = scalar_lea.vmem %s7, 8
  %893 = vst.msk [vmem:[%s892] sm:$0x3] %vm250, %v890
  %s894 = scalar_lea.vmem %s0, 8
  %v895 = vld [vmem:[%s894] sm:$0x3]
  %s896 = scalar_lea.vmem %s1, 6
  %v897 = vld [vmem:[%s896] sm:$0x3]
  %v898 = vsel %vm44, %v884, 0
  %900 = vmatprep.subr.mxu0 0.0
  %901 = vmatpush1.msra.mxu0 %v25
  %902 = vmatprep.subr.mxu0 0.0
  %903 = vmatpush1.msra.mxu0 %v26
  %904 = vmatprep.subr.mxu0 0.0
  %905 = vmatpush1.msra.mxu0 %v27
  %906 = vmatprep.subr.mxu0 0.0
  %907 = vmatpush1.msra.mxu0 %v28
  %908 = vmatprep.subr.mxu0 0.0
  %909 = vmatpush1.msra.mxu0 0.0
  %910 = vmatprep.subr.mxu0 0.0
  %911 = vmatpush1.msra.mxu0 0.0
  %912 = vmatprep.subr.mxu0 0.0
  %913 = vmatpush1.msra.mxu0 0.0
  %914 = vmatprep.subr.mxu0 0.0
  %915 = vmatpush1.msra.mxu0 0.0
  %916 = vmatprep.subr.mxu0 0.0
  %917 = vmatpush1.msra.mxu0 0.0
  %918 = vmatprep.subr.mxu0 0.0
  %919 = vmatpush1.msra.mxu0 0.0
  %920 = vmatprep.subr.mxu0 0.0
  %921 = vmatpush1.msra.mxu0 0.0
  %922 = vmatprep.subr.mxu0 0.0
  %923 = vmatpush1.msra.mxu0 0.0
  %924 = vmatprep.subr.mxu0 0.0
  %925 = vmatpush1.msra.mxu0 0.0
  %926 = vmatprep.subr.mxu0 0.0
  %927 = vmatpush1.msra.mxu0 0.0
  %928 = vmatprep.subr.mxu0 0.0
  %929 = vmatpush1.msra.mxu0 0.0
  %930 = vmatprep.subr.mxu0 0.0
  %931 = vmatpush1.msra.mxu0 0.0
  %932 = vmatprep.subr.mxu0 0.0
  %933 = vmatpush1.msra.mxu0 0.0
  %934 = vmatprep.subr.mxu0 0.0
  %935 = vmatpush1.msra.mxu0 0.0
  %936 = vmatprep.subr.mxu0 0.0
  %937 = vmatpush1.msra.mxu0 0.0
  %938 = vmatprep.subr.mxu0 0.0
  %939 = vmatpush1.msra.mxu0 0.0
  %940 = vmatprep.subr.mxu0 0.0
  %941 = vmatpush1.msra.mxu0 0.0
  %942 = vmatprep.subr.mxu0 0.0
  %943 = vmatpush1.msra.mxu0 0.0
  %944 = vmatprep.subr.mxu0 0.0
  %945 = vmatpush1.msra.mxu0 0.0
  %946 = vmatprep.subr.mxu0 0.0
  %947 = vmatpush1.msra.mxu0 0.0
  %948 = vmatprep.subr.mxu0 0.0
  %949 = vmatpush1.msra.mxu0 0.0
  %950 = vmatprep.subr.mxu0 0.0
  %951 = vmatpush1.msra.mxu0 0.0
  %952 = vmatprep.subr.mxu0 0.0
  %953 = vmatpush1.msra.mxu0 0.0
  %954 = vmatprep.subr.mxu0 0.0
  %955 = vmatpush1.msra.mxu0 0.0
  %956 = vmatprep.subr.mxu0 0.0
  %957 = vmatpush1.msra.mxu0 0.0
  %958 = vmatprep.subr.mxu0 0.0
  %959 = vmatpush1.msra.mxu0 0.0
  %960 = vmatprep.subr.mxu0 0.0
  %961 = vmatpush1.msra.mxu0 0.0
  %962 = vmatprep.subr.mxu0 0.0
  %963 = vmatpush1.msra.mxu0 0.0
  %964 = vmatprep.mubr.f32.mxu0 0.0
  %965 = vmatmul.mubr.f32.gmra.mrb[0].mxu0 %v898
  %v966 = vpop.f32.mrb[0].mxu0
  %v967 = vadd.f32 %v42, %v966
  %v968 = vpop.f32.mrb[0].mxu0
  %969 = vdwg.mxu0
  %v970 = vsel %vm44, %v890, 0
  %972 = vmatprep.subr.mxu0 0.0
  %973 = vmatpush1.msra.mxu0 %v29
  %974 = vmatprep.subr.mxu0 0.0
  %975 = vmatpush1.msra.mxu0 %v30
  %976 = vmatprep.subr.mxu0 0.0
  %977 = vmatpush1.msra.mxu0 %v31
  %978 = vmatprep.subr.mxu0 0.0
  %979 = vmatpush1.msra.mxu0 %v32
  %980 = vmatprep.subr.mxu0 0.0
  %981 = vmatpush1.msra.mxu0 0.0
  %982 = vmatprep.subr.mxu0 0.0
  %983 = vmatpush1.msra.mxu0 0.0
  %984 = vmatprep.subr.mxu0 0.0
  %985 = vmatpush1.msra.mxu0 0.0
  %986 = vmatprep.subr.mxu0 0.0
  %987 = vmatpush1.msra.mxu0 0.0
  %988 = vmatprep.subr.mxu0 0.0
  %989 = vmatpush1.msra.mxu0 0.0
  %990 = vmatprep.subr.mxu0 0.0
  %991 = vmatpush1.msra.mxu0 0.0
  %992 = vmatprep.subr.mxu0 0.0
  %993 = vmatpush1.msra.mxu0 0.0
  %994 = vmatprep.subr.mxu0 0.0
  %995 = vmatpush1.msra.mxu0 0.0
  %996 = vmatprep.subr.mxu0 0.0
  %997 = vmatpush1.msra.mxu0 0.0
  %998 = vmatprep.subr.mxu0 0.0
  %999 = vmatpush1.msra.mxu0 0.0
  %1000 = vmatprep.subr.mxu0 0.0
  %1001 = vmatpush1.msra.mxu0 0.0
  %1002 = vmatprep.subr.mxu0 0.0
  %1003 = vmatpush1.msra.mxu0 0.0
  %1004 = vmatprep.subr.mxu0 0.0
  %1005 = vmatpush1.msra.mxu0 0.0
  %1006 = vmatprep.subr.mxu0 0.0
  %1007 = vmatpush1.msra.mxu0 0.0
  %1008 = vmatprep.subr.mxu0 0.0
  %1009 = vmatpush1.msra.mxu0 0.0
  %1010 = vmatprep.subr.mxu0 0.0
  %1011 = vmatpush1.msra.mxu0 0.0
  %1012 = vmatprep.subr.mxu0 0.0
  %1013 = vmatpush1.msra.mxu0 0.0
  %1014 = vmatprep.subr.mxu0 0.0
  %1015 = vmatpush1.msra.mxu0 0.0
  %1016 = vmatprep.subr.mxu0 0.0
  %1017 = vmatpush1.msra.mxu0 0.0
  %1018 = vmatprep.subr.mxu0 0.0
  %1019 = vmatpush1.msra.mxu0 0.0
  %1020 = vmatprep.subr.mxu0 0.0
  %1021 = vmatpush1.msra.mxu0 0.0
  %1022 = vmatprep.subr.mxu0 0.0
  %1023 = vmatpush1.msra.mxu0 0.0
  %1024 = vmatprep.subr.mxu0 0.0
  %1025 = vmatpush1.msra.mxu0 0.0
  %1026 = vmatprep.subr.mxu0 0.0
  %1027 = vmatpush1.msra.mxu0 0.0
  %1028 = vmatprep.subr.mxu0 0.0
  %1029 = vmatpush1.msra.mxu0 0.0
  %1030 = vmatprep.subr.mxu0 0.0
  %1031 = vmatpush1.msra.mxu0 0.0
  %1032 = vmatprep.subr.mxu0 0.0
  %1033 = vmatpush1.msra.mxu0 0.0
  %1034 = vmatprep.subr.mxu0 0.0
  %1035 = vmatpush1.msra.mxu0 0.0
  %1036 = vmatprep.mubr.f32.mxu0 0.0
  %1037 = vmatmul.mubr.f32.gmra.mrb[0].mxu0 %v970
  %v1038 = vpop.f32.mrb[0].mxu0
  %v1039 = vadd.f32 %v122, %v1038
  %v1040 = vpop.f32.mrb[0].mxu0
  %1041 = vdwg.mxu0
  %v1042 = vadd.f32 %v895, %v967
  %v1043 = vxor.u32 %v1042, 2147483648
  %v1044 = vmul.f32 %v1043, 1.442695
  %v1045 = vpow.pop %v1044
  %v1046 = vadd.f32 %v1045, 1.0
  %v1047 = vrcp.pop %v1046
  %v1048 = vmul.f32 1.0, %v1047
  %1050 = vrot.lane.b32.xlu0 %v967, 64
  %v1051 = vpop.permute.xlu0 %1050
  %v1053 = vmul.f32 %v1048, %v1051
  %1055 = vrot.lane.b32.xlu0 %v1053, 64
  %v1056 = vpop.permute.xlu0 %1055
  %v1058 = vadd.f32 %v895, %v1056
  %v1059 = vtanh.pop %v1058
  %v1060 = vsub.f32 1.0, %v1048
  %1062 = vrot.lane.b32.xlu0 %v1059, 96
  %v1063 = vpop.permute.xlu0 %1062
  %v1065 = vmul.f32 %v1060, %v1063
  %v1066 = vmul.f32 %v1048, %v855
  %v1067 = vadd.f32 %v1065, %v1066
  %v1068 = vadd.f32 %v897, %v1039
  %v1069 = vxor.u32 %v1068, 2147483648
  %v1070 = vmul.f32 %v1069, 1.442695
  %v1071 = vpow.pop %v1070
  %v1072 = vadd.f32 %v1071, 1.0
  %v1073 = vrcp.pop %v1072
  %v1074 = vmul.f32 1.0, %v1073
  %1076 = vrot.lane.b32.xlu0 %v1039, 64
  %v1077 = vpop.permute.xlu0 %1076
  %v1079 = vmul.f32 %v1074, %v1077
  %1081 = vrot.lane.b32.xlu0 %v1079, 64
  %v1082 = vpop.permute.xlu0 %1081
  %v1084 = vadd.f32 %v897, %v1082
  %v1085 = vtanh.pop %v1084
  %v1086 = vsub.f32 1.0, %v1074
  %1088 = vrot.lane.b32.xlu0 %v1085, 96
  %v1089 = vpop.permute.xlu0 %1088
  %v1091 = vmul.f32 %v1086, %v1089
  %v1092 = vmul.f32 %v1074, %v881
  %v1093 = vadd.f32 %v1091, %v1092
  %1095 = vrot.lane.b32.xlu0 %v1067, 96
  %v1096 = vpop.permute.xlu0 %1095
  %s1098 = scalar_lea.vmem %s6, 8
  %1099 = vst.msk [vmem:[%s1098] sm:$0x3] %vm250, %v1096
  %1101 = vrot.lane.b32.xlu0 %v1093, 96
  %v1102 = vpop.permute.xlu0 %1101
  %s1104 = scalar_lea.vmem %s7, 6
  %1105 = vst.msk [vmem:[%s1104] sm:$0x3] %vm250, %v1102
  %s1106 = scalar_lea.vmem %s0, 10
  %v1107 = vld [vmem:[%s1106] sm:$0x3]
  %s1108 = scalar_lea.vmem %s1, 4
  %v1109 = vld [vmem:[%s1108] sm:$0x3]
  %v1110 = vsel %vm44, %v1096, 0
  %1112 = vmatprep.subr.mxu0 0.0
  %1113 = vmatpush1.msra.mxu0 %v25
  %1114 = vmatprep.subr.mxu0 0.0
  %1115 = vmatpush1.msra.mxu0 %v26
  %1116 = vmatprep.subr.mxu0 0.0
  %1117 = vmatpush1.msra.mxu0 %v27
  %1118 = vmatprep.subr.mxu0 0.0
  %1119 = vmatpush1.msra.mxu0 %v28
  %1120 = vmatprep.subr.mxu0 0.0
  %1121 = vmatpush1.msra.mxu0 0.0
  %1122 = vmatprep.subr.mxu0 0.0
  %1123 = vmatpush1.msra.mxu0 0.0
  %1124 = vmatprep.subr.mxu0 0.0
  %1125 = vmatpush1.msra.mxu0 0.0
  %1126 = vmatprep.subr.mxu0 0.0
  %1127 = vmatpush1.msra.mxu0 0.0
  %1128 = vmatprep.subr.mxu0 0.0
  %1129 = vmatpush1.msra.mxu0 0.0
  %1130 = vmatprep.subr.mxu0 0.0
  %1131 = vmatpush1.msra.mxu0 0.0
  %1132 = vmatprep.subr.mxu0 0.0
  %1133 = vmatpush1.msra.mxu0 0.0
  %1134 = vmatprep.subr.mxu0 0.0
  %1135 = vmatpush1.msra.mxu0 0.0
  %1136 = vmatprep.subr.mxu0 0.0
  %1137 = vmatpush1.msra.mxu0 0.0
  %1138 = vmatprep.subr.mxu0 0.0
  %1139 = vmatpush1.msra.mxu0 0.0
  %1140 = vmatprep.subr.mxu0 0.0
  %1141 = vmatpush1.msra.mxu0 0.0
  %1142 = vmatprep.subr.mxu0 0.0
  %1143 = vmatpush1.msra.mxu0 0.0
  %1144 = vmatprep.subr.mxu0 0.0
  %1145 = vmatpush1.msra.mxu0 0.0
  %1146 = vmatprep.subr.mxu0 0.0
  %1147 = vmatpush1.msra.mxu0 0.0
  %1148 = vmatprep.subr.mxu0 0.0
  %1149 = vmatpush1.msra.mxu0 0.0
  %1150 = vmatprep.subr.mxu0 0.0
  %1151 = vmatpush1.msra.mxu0 0.0
  %1152 = vmatprep.subr.mxu0 0.0
  %1153 = vmatpush1.msra.mxu0 0.0
  %1154 = vmatprep.subr.mxu0 0.0
  %1155 = vmatpush1.msra.mxu0 0.0
  %1156 = vmatprep.subr.mxu0 0.0
  %1157 = vmatpush1.msra.mxu0 0.0
  %1158 = vmatprep.subr.mxu0 0.0
  %1159 = vmatpush1.msra.mxu0 0.0
  %1160 = vmatprep.subr.mxu0 0.0
  %1161 = vmatpush1.msra.mxu0 0.0
  %1162 = vmatprep.subr.mxu0 0.0
  %1163 = vmatpush1.msra.mxu0 0.0
  %1164 = vmatprep.subr.mxu0 0.0
  %1165 = vmatpush1.msra.mxu0 0.0
  %1166 = vmatprep.subr.mxu0 0.0
  %1167 = vmatpush1.msra.mxu0 0.0
  %1168 = vmatprep.subr.mxu0 0.0
  %1169 = vmatpush1.msra.mxu0 0.0
  %1170 = vmatprep.subr.mxu0 0.0
  %1171 = vmatpush1.msra.mxu0 0.0
  %1172 = vmatprep.subr.mxu0 0.0
  %1173 = vmatpush1.msra.mxu0 0.0
  %1174 = vmatprep.subr.mxu0 0.0
  %1175 = vmatpush1.msra.mxu0 0.0
  %1176 = vmatprep.mubr.f32.mxu0 0.0
  %1177 = vmatmul.mubr.f32.gmra.mrb[0].mxu0 %v1110
  %v1178 = vpop.f32.mrb[0].mxu0
  %v1179 = vadd.f32 %v42, %v1178
  %v1180 = vpop.f32.mrb[0].mxu0
  %1181 = vdwg.mxu0
  %v1182 = vsel %vm44, %v1102, 0
  %1184 = vmatprep.subr.mxu0 0.0
  %1185 = vmatpush1.msra.mxu0 %v29
  %1186 = vmatprep.subr.mxu0 0.0
  %1187 = vmatpush1.msra.mxu0 %v30
  %1188 = vmatprep.subr.mxu0 0.0
  %1189 = vmatpush1.msra.mxu0 %v31
  %1190 = vmatprep.subr.mxu0 0.0
  %1191 = vmatpush1.msra.mxu0 %v32
  %1192 = vmatprep.subr.mxu0 0.0
  %1193 = vmatpush1.msra.mxu0 0.0
  %1194 = vmatprep.subr.mxu0 0.0
  %1195 = vmatpush1.msra.mxu0 0.0
  %1196 = vmatprep.subr.mxu0 0.0
  %1197 = vmatpush1.msra.mxu0 0.0
  %1198 = vmatprep.subr.mxu0 0.0
  %1199 = vmatpush1.msra.mxu0 0.0
  %1200 = vmatprep.subr.mxu0 0.0
  %1201 = vmatpush1.msra.mxu0 0.0
  %1202 = vmatprep.subr.mxu0 0.0
  %1203 = vmatpush1.msra.mxu0 0.0
  %1204 = vmatprep.subr.mxu0 0.0
  %1205 = vmatpush1.msra.mxu0 0.0
  %1206 = vmatprep.subr.mxu0 0.0
  %1207 = vmatpush1.msra.mxu0 0.0
  %1208 = vmatprep.subr.mxu0 0.0
  %1209 = vmatpush1.msra.mxu0 0.0
  %1210 = vmatprep.subr.mxu0 0.0
  %1211 = vmatpush1.msra.mxu0 0.0
  %1212 = vmatprep.subr.mxu0 0.0
  %1213 = vmatpush1.msra.mxu0 0.0
  %1214 = vmatprep.subr.mxu0 0.0
  %1215 = vmatpush1.msra.mxu0 0.0
  %1216 = vmatprep.subr.mxu0 0.0
  %1217 = vmatpush1.msra.mxu0 0.0
  %1218 = vmatprep.subr.mxu0 0.0
  %1219 = vmatpush1.msra.mxu0 0.0
  %1220 = vmatprep.subr.mxu0 0.0
  %1221 = vmatpush1.msra.mxu0 0.0
  %1222 = vmatprep.subr.mxu0 0.0
  %1223 = vmatpush1.msra.mxu0 0.0
  %1224 = vmatprep.subr.mxu0 0.0
  %1225 = vmatpush1.msra.mxu0 0.0
  %1226 = vmatprep.subr.mxu0 0.0
  %1227 = vmatpush1.msra.mxu0 0.0
  %1228 = vmatprep.subr.mxu0 0.0
  %1229 = vmatpush1.msra.mxu0 0.0
  %1230 = vmatprep.subr.mxu0 0.0
  %1231 = vmatpush1.msra.mxu0 0.0
  %1232 = vmatprep.subr.mxu0 0.0
  %1233 = vmatpush1.msra.mxu0 0.0
  %1234 = vmatprep.subr.mxu0 0.0
  %1235 = vmatpush1.msra.mxu0 0.0
  %1236 = vmatprep.subr.mxu0 0.0
  %1237 = vmatpush1.msra.mxu0 0.0
  %1238 = vmatprep.subr.mxu0 0.0
  %1239 = vmatpush1.msra.mxu0 0.0
  %1240 = vmatprep.subr.mxu0 0.0
  %1241 = vmatpush1.msra.mxu0 0.0
  %1242 = vmatprep.subr.mxu0 0.0
  %1243 = vmatpush1.msra.mxu0 0.0
  %1244 = vmatprep.subr.mxu0 0.0
  %1245 = vmatpush1.msra.mxu0 0.0
  %1246 = vmatprep.subr.mxu0 0.0
  %1247 = vmatpush1.msra.mxu0 0.0
  %1248 = vmatprep.mubr.f32.mxu0 0.0
  %1249 = vmatmul.mubr.f32.gmra.mrb[0].mxu0 %v1182
  %v1250 = vpop.f32.mrb[0].mxu0
  %v1251 = vadd.f32 %v122, %v1250
  %v1252 = vpop.f32.mrb[0].mxu0
  %1253 = vdwg.mxu0
  %v1254 = vadd.f32 %v1107, %v1179
  %v1255 = vxor.u32 %v1254, 2147483648
  %v1256 = vmul.f32 %v1255, 1.442695
  %v1257 = vpow.pop %v1256
  %v1258 = vadd.f32 %v1257, 1.0
  %v1259 = vrcp.pop %v1258
  %v1260 = vmul.f32 1.0, %v1259
  %1262 = vrot.lane.b32.xlu0 %v1179, 64
  %v1263 = vpop.permute.xlu0 %1262
  %v1265 = vmul.f32 %v1260, %v1263
  %1267 = vrot.lane.b32.xlu0 %v1265, 64
  %v1268 = vpop.permute.xlu0 %1267
  %v1270 = vadd.f32 %v1107, %v1268
  %v1271 = vtanh.pop %v1270
  %v1272 = vsub.f32 1.0, %v1260
  %1274 = vrot.lane.b32.xlu0 %v1271, 96
  %v1275 = vpop.permute.xlu0 %1274
  %v1277 = vmul.f32 %v1272, %v1275
  %v1278 = vmul.f32 %v1260, %v1067
  %v1279 = vadd.f32 %v1277, %v1278
  %v1280 = vadd.f32 %v1109, %v1251
  %v1281 = vxor.u32 %v1280, 2147483648
  %v1282 = vmul.f32 %v1281, 1.442695
  %v1283 = vpow.pop %v1282
  %v1284 = vadd.f32 %v1283, 1.0
  %v1285 = vrcp.pop %v1284
  %v1286 = vmul.f32 1.0, %v1285
  %1288 = vrot.lane.b32.xlu0 %v1251, 64
  %v1289 = vpop.permute.xlu0 %1288
  %v1291 = vmul.f32 %v1286, %v1289
  %1293 = vrot.lane.b32.xlu0 %v1291, 64
  %v1294 = vpop.permute.xlu0 %1293
  %v1296 = vadd.f32 %v1109, %v1294
  %v1297 = vtanh.pop %v1296
  %v1298 = vsub.f32 1.0, %v1286
  %1300 = vrot.lane.b32.xlu0 %v1297, 96
  %v1301 = vpop.permute.xlu0 %1300
  %v1303 = vmul.f32 %v1298, %v1301
  %v1304 = vmul.f32 %v1286, %v1093
  %v1305 = vadd.f32 %v1303, %v1304
  %1307 = vrot.lane.b32.xlu0 %v1279, 96
  %v1308 = vpop.permute.xlu0 %1307
  %s1310 = scalar_lea.vmem %s6, 10
  %1311 = vst.msk [vmem:[%s1310] sm:$0x3] %vm250, %v1308
  %1313 = vrot.lane.b32.xlu0 %v1305, 96
  %v1314 = vpop.permute.xlu0 %1313
  %s1316 = scalar_lea.vmem %s7, 4
  %1317 = vst.msk [vmem:[%s1316] sm:$0x3] %vm250, %v1314
  %s1318 = scalar_lea.vmem %s0, 12
  %v1319 = vld [vmem:[%s1318] sm:$0x3]
  %s1320 = scalar_lea.vmem %s1, 2
  %v1321 = vld [vmem:[%s1320] sm:$0x3]
  %v1322 = vsel %vm44, %v1308, 0
  %1324 = vmatprep.subr.mxu0 0.0
  %1325 = vmatpush1.msra.mxu0 %v25
  %1326 = vmatprep.subr.mxu0 0.0
  %1327 = vmatpush1.msra.mxu0 %v26
  %1328 = vmatprep.subr.mxu0 0.0
  %1329 = vmatpush1.msra.mxu0 %v27
  %1330 = vmatprep.subr.mxu0 0.0
  %1331 = vmatpush1.msra.mxu0 %v28
  %1332 = vmatprep.subr.mxu0 0.0
  %1333 = vmatpush1.msra.mxu0 0.0
  %1334 = vmatprep.subr.mxu0 0.0
  %1335 = vmatpush1.msra.mxu0 0.0
  %1336 = vmatprep.subr.mxu0 0.0
  %1337 = vmatpush1.msra.mxu0 0.0
  %1338 = vmatprep.subr.mxu0 0.0
  %1339 = vmatpush1.msra.mxu0 0.0
  %1340 = vmatprep.subr.mxu0 0.0
  %1341 = vmatpush1.msra.mxu0 0.0
  %1342 = vmatprep.subr.mxu0 0.0
  %1343 = vmatpush1.msra.mxu0 0.0
  %1344 = vmatprep.subr.mxu0 0.0
  %1345 = vmatpush1.msra.mxu0 0.0
  %1346 = vmatprep.subr.mxu0 0.0
  %1347 = vmatpush1.msra.mxu0 0.0
  %1348 = vmatprep.subr.mxu0 0.0
  %1349 = vmatpush1.msra.mxu0 0.0
  %1350 = vmatprep.subr.mxu0 0.0
  %1351 = vmatpush1.msra.mxu0 0.0
  %1352 = vmatprep.subr.mxu0 0.0
  %1353 = vmatpush1.msra.mxu0 0.0
  %1354 = vmatprep.subr.mxu0 0.0
  %1355 = vmatpush1.msra.mxu0 0.0
  %1356 = vmatprep.subr.mxu0 0.0
  %1357 = vmatpush1.msra.mxu0 0.0
  %1358 = vmatprep.subr.mxu0 0.0
  %1359 = vmatpush1.msra.mxu0 0.0
  %1360 = vmatprep.subr.mxu0 0.0
  %1361 = vmatpush1.msra.mxu0 0.0
  %1362 = vmatprep.subr.mxu0 0.0
  %1363 = vmatpush1.msra.mxu0 0.0
  %1364 = vmatprep.subr.mxu0 0.0
  %1365 = vmatpush1.msra.mxu0 0.0
  %1366 = vmatprep.subr.mxu0 0.0
  %1367 = vmatpush1.msra.mxu0 0.0
  %1368 = vmatprep.subr.mxu0 0.0
  %1369 = vmatpush1.msra.mxu0 0.0
  %1370 = vmatprep.subr.mxu0 0.0
  %1371 = vmatpush1.msra.mxu0 0.0
  %1372 = vmatprep.subr.mxu0 0.0
  %1373 = vmatpush1.msra.mxu0 0.0
  %1374 = vmatprep.subr.mxu0 0.0
  %1375 = vmatpush1.msra.mxu0 0.0
  %1376 = vmatprep.subr.mxu0 0.0
  %1377 = vmatpush1.msra.mxu0 0.0
  %1378 = vmatprep.subr.mxu0 0.0
  %1379 = vmatpush1.msra.mxu0 0.0
  %1380 = vmatprep.subr.mxu0 0.0
  %1381 = vmatpush1.msra.mxu0 0.0
  %1382 = vmatprep.subr.mxu0 0.0
  %1383 = vmatpush1.msra.mxu0 0.0
  %1384 = vmatprep.subr.mxu0 0.0
  %1385 = vmatpush1.msra.mxu0 0.0
  %1386 = vmatprep.subr.mxu0 0.0
  %1387 = vmatpush1.msra.mxu0 0.0
  %1388 = vmatprep.mubr.f32.mxu0 0.0
  %1389 = vmatmul.mubr.f32.gmra.mrb[0].mxu0 %v1322
  %v1390 = vpop.f32.mrb[0].mxu0
  %v1391 = vadd.f32 %v42, %v1390
  %v1392 = vpop.f32.mrb[0].mxu0
  %1393 = vdwg.mxu0
  %v1394 = vsel %vm44, %v1314, 0
  %1396 = vmatprep.subr.mxu0 0.0
  %1397 = vmatpush1.msra.mxu0 %v29
  %1398 = vmatprep.subr.mxu0 0.0
  %1399 = vmatpush1.msra.mxu0 %v30
  %1400 = vmatprep.subr.mxu0 0.0
  %1401 = vmatpush1.msra.mxu0 %v31
  %1402 = vmatprep.subr.mxu0 0.0
  %1403 = vmatpush1.msra.mxu0 %v32
  %1404 = vmatprep.subr.mxu0 0.0
  %1405 = vmatpush1.msra.mxu0 0.0
  %1406 = vmatprep.subr.mxu0 0.0
  %1407 = vmatpush1.msra.mxu0 0.0
  %1408 = vmatprep.subr.mxu0 0.0
  %1409 = vmatpush1.msra.mxu0 0.0
  %1410 = vmatprep.subr.mxu0 0.0
  %1411 = vmatpush1.msra.mxu0 0.0
  %1412 = vmatprep.subr.mxu0 0.0
  %1413 = vmatpush1.msra.mxu0 0.0
  %1414 = vmatprep.subr.mxu0 0.0
  %1415 = vmatpush1.msra.mxu0 0.0
  %1416 = vmatprep.subr.mxu0 0.0
  %1417 = vmatpush1.msra.mxu0 0.0
  %1418 = vmatprep.subr.mxu0 0.0
  %1419 = vmatpush1.msra.mxu0 0.0
  %1420 = vmatprep.subr.mxu0 0.0
  %1421 = vmatpush1.msra.mxu0 0.0
  %1422 = vmatprep.subr.mxu0 0.0
  %1423 = vmatpush1.msra.mxu0 0.0
  %1424 = vmatprep.subr.mxu0 0.0
  %1425 = vmatpush1.msra.mxu0 0.0
  %1426 = vmatprep.subr.mxu0 0.0
  %1427 = vmatpush1.msra.mxu0 0.0
  %1428 = vmatprep.subr.mxu0 0.0
  %1429 = vmatpush1.msra.mxu0 0.0
  %1430 = vmatprep.subr.mxu0 0.0
  %1431 = vmatpush1.msra.mxu0 0.0
  %1432 = vmatprep.subr.mxu0 0.0
  %1433 = vmatpush1.msra.mxu0 0.0
  %1434 = vmatprep.subr.mxu0 0.0
  %1435 = vmatpush1.msra.mxu0 0.0
  %1436 = vmatprep.subr.mxu0 0.0
  %1437 = vmatpush1.msra.mxu0 0.0
  %1438 = vmatprep.subr.mxu0 0.0
  %1439 = vmatpush1.msra.mxu0 0.0
  %1440 = vmatprep.subr.mxu0 0.0
  %1441 = vmatpush1.msra.mxu0 0.0
  %1442 = vmatprep.subr.mxu0 0.0
  %1443 = vmatpush1.msra.mxu0 0.0
  %1444 = vmatprep.subr.mxu0 0.0
  %1445 = vmatpush1.msra.mxu0 0.0
  %1446 = vmatprep.subr.mxu0 0.0
  %1447 = vmatpush1.msra.mxu0 0.0
  %1448 = vmatprep.subr.mxu0 0.0
  %1449 = vmatpush1.msra.mxu0 0.0
  %1450 = vmatprep.subr.mxu0 0.0
  %1451 = vmatpush1.msra.mxu0 0.0
  %1452 = vmatprep.subr.mxu0 0.0
  %1453 = vmatpush1.msra.mxu0 0.0
  %1454 = vmatprep.subr.mxu0 0.0
  %1455 = vmatpush1.msra.mxu0 0.0
  %1456 = vmatprep.subr.mxu0 0.0
  %1457 = vmatpush1.msra.mxu0 0.0
  %1458 = vmatprep.subr.mxu0 0.0
  %1459 = vmatpush1.msra.mxu0 0.0
  %1460 = vmatprep.mubr.f32.mxu0 0.0
  %1461 = vmatmul.mubr.f32.gmra.mrb[0].mxu0 %v1394
  %v1462 = vpop.f32.mrb[0].mxu0
  %v1463 = vadd.f32 %v122, %v1462
  %v1464 = vpop.f32.mrb[0].mxu0
  %1465 = vdwg.mxu0
  %v1466 = vadd.f32 %v1319, %v1391
  %v1467 = vxor.u32 %v1466, 2147483648
  %v1468 = vmul.f32 %v1467, 1.442695
  %v1469 = vpow.pop %v1468
  %v1470 = vadd.f32 %v1469, 1.0
  %v1471 = vrcp.pop %v1470
  %v1472 = vmul.f32 1.0, %v1471
  %1474 = vrot.lane.b32.xlu0 %v1391, 64
  %v1475 = vpop.permute.xlu0 %1474
  %v1477 = vmul.f32 %v1472, %v1475
  %1479 = vrot.lane.b32.xlu0 %v1477, 64
  %v1480 = vpop.permute.xlu0 %1479
  %v1482 = vadd.f32 %v1319, %v1480
  %v1483 = vtanh.pop %v1482
  %v1484 = vsub.f32 1.0, %v1472
  %1486 = vrot.lane.b32.xlu0 %v1483, 96
  %v1487 = vpop.permute.xlu0 %1486
  %v1489 = vmul.f32 %v1484, %v1487
  %v1490 = vmul.f32 %v1472, %v1279
  %v1491 = vadd.f32 %v1489, %v1490
  %v1492 = vadd.f32 %v1321, %v1463
  %v1493 = vxor.u32 %v1492, 2147483648
  %v1494 = vmul.f32 %v1493, 1.442695
  %v1495 = vpow.pop %v1494
  %v1496 = vadd.f32 %v1495, 1.0
  %v1497 = vrcp.pop %v1496
  %v1498 = vmul.f32 1.0, %v1497
  %1500 = vrot.lane.b32.xlu0 %v1463, 64
  %v1501 = vpop.permute.xlu0 %1500
  %v1503 = vmul.f32 %v1498, %v1501
  %1505 = vrot.lane.b32.xlu0 %v1503, 64
  %v1506 = vpop.permute.xlu0 %1505
  %v1508 = vadd.f32 %v1321, %v1506
  %v1509 = vtanh.pop %v1508
  %v1510 = vsub.f32 1.0, %v1498
  %1512 = vrot.lane.b32.xlu0 %v1509, 96
  %v1513 = vpop.permute.xlu0 %1512
  %v1515 = vmul.f32 %v1510, %v1513
  %v1516 = vmul.f32 %v1498, %v1305
  %v1517 = vadd.f32 %v1515, %v1516
  %1519 = vrot.lane.b32.xlu0 %v1491, 96
  %v1520 = vpop.permute.xlu0 %1519
  %s1522 = scalar_lea.vmem %s6, 12
  %1523 = vst.msk [vmem:[%s1522] sm:$0x3] %vm250, %v1520
  %1525 = vrot.lane.b32.xlu0 %v1517, 96
  %v1526 = vpop.permute.xlu0 %1525
  %s1528 = scalar_lea.vmem %s7, 2
  %1529 = vst.msk [vmem:[%s1528] sm:$0x3] %vm250, %v1526
  %s1530 = scalar_lea.vmem %s0, 14
  %v1531 = vld [vmem:[%s1530] sm:$0x3]
  %v1532 = vld [vmem:[%s1] sm:$0x3]
  %v1533 = vsel %vm44, %v1520, 0
  %1535 = vmatprep.subr.mxu0 0.0
  %1536 = vmatpush1.msra.mxu0 %v25
  %1537 = vmatprep.subr.mxu0 0.0
  %1538 = vmatpush1.msra.mxu0 %v26
  %1539 = vmatprep.subr.mxu0 0.0
  %1540 = vmatpush1.msra.mxu0 %v27
  %1541 = vmatprep.subr.mxu0 0.0
  %1542 = vmatpush1.msra.mxu0 %v28
  %1543 = vmatprep.subr.mxu0 0.0
  %1544 = vmatpush1.msra.mxu0 0.0
  %1545 = vmatprep.subr.mxu0 0.0
  %1546 = vmatpush1.msra.mxu0 0.0
  %1547 = vmatprep.subr.mxu0 0.0
  %1548 = vmatpush1.msra.mxu0 0.0
  %1549 = vmatprep.subr.mxu0 0.0
  %1550 = vmatpush1.msra.mxu0 0.0
  %1551 = vmatprep.subr.mxu0 0.0
  %1552 = vmatpush1.msra.mxu0 0.0
  %1553 = vmatprep.subr.mxu0 0.0
  %1554 = vmatpush1.msra.mxu0 0.0
  %1555 = vmatprep.subr.mxu0 0.0
  %1556 = vmatpush1.msra.mxu0 0.0
  %1557 = vmatprep.subr.mxu0 0.0
  %1558 = vmatpush1.msra.mxu0 0.0
  %1559 = vmatprep.subr.mxu0 0.0
  %1560 = vmatpush1.msra.mxu0 0.0
  %1561 = vmatprep.subr.mxu0 0.0
  %1562 = vmatpush1.msra.mxu0 0.0
  %1563 = vmatprep.subr.mxu0 0.0
  %1564 = vmatpush1.msra.mxu0 0.0
  %1565 = vmatprep.subr.mxu0 0.0
  %1566 = vmatpush1.msra.mxu0 0.0
  %1567 = vmatprep.subr.mxu0 0.0
  %1568 = vmatpush1.msra.mxu0 0.0
  %1569 = vmatprep.subr.mxu0 0.0
  %1570 = vmatpush1.msra.mxu0 0.0
  %1571 = vmatprep.subr.mxu0 0.0
  %1572 = vmatpush1.msra.mxu0 0.0
  %1573 = vmatprep.subr.mxu0 0.0
  %1574 = vmatpush1.msra.mxu0 0.0
  %1575 = vmatprep.subr.mxu0 0.0
  %1576 = vmatpush1.msra.mxu0 0.0
  %1577 = vmatprep.subr.mxu0 0.0
  %1578 = vmatpush1.msra.mxu0 0.0
  %1579 = vmatprep.subr.mxu0 0.0
  %1580 = vmatpush1.msra.mxu0 0.0
  %1581 = vmatprep.subr.mxu0 0.0
  %1582 = vmatpush1.msra.mxu0 0.0
  %1583 = vmatprep.subr.mxu0 0.0
  %1584 = vmatpush1.msra.mxu0 0.0
  %1585 = vmatprep.subr.mxu0 0.0
  %1586 = vmatpush1.msra.mxu0 0.0
  %1587 = vmatprep.subr.mxu0 0.0
  %1588 = vmatpush1.msra.mxu0 0.0
  %1589 = vmatprep.subr.mxu0 0.0
  %1590 = vmatpush1.msra.mxu0 0.0
  %1591 = vmatprep.subr.mxu0 0.0
  %1592 = vmatpush1.msra.mxu0 0.0
  %1593 = vmatprep.subr.mxu0 0.0
  %1594 = vmatpush1.msra.mxu0 0.0
  %1595 = vmatprep.subr.mxu0 0.0
  %1596 = vmatpush1.msra.mxu0 0.0
  %1597 = vmatprep.subr.mxu0 0.0
  %1598 = vmatpush1.msra.mxu0 0.0
  %1599 = vmatprep.mubr.f32.mxu0 0.0
  %1600 = vmatmul.mubr.f32.gmra.mrb[0].mxu0 %v1533
  %v1601 = vpop.f32.mrb[0].mxu0
  %v1602 = vadd.f32 %v42, %v1601
  %v1603 = vpop.f32.mrb[0].mxu0
  %1604 = vdwg.mxu0
  %v1605 = vsel %vm44, %v1526, 0
  %1607 = vmatprep.subr.mxu0 0.0
  %1608 = vmatpush1.msra.mxu0 %v29
  %1609 = vmatprep.subr.mxu0 0.0
  %1610 = vmatpush1.msra.mxu0 %v30
  %1611 = vmatprep.subr.mxu0 0.0
  %1612 = vmatpush1.msra.mxu0 %v31
  %1613 = vmatprep.subr.mxu0 0.0
  %1614 = vmatpush1.msra.mxu0 %v32
  %1615 = vmatprep.subr.mxu0 0.0
  %1616 = vmatpush1.msra.mxu0 0.0
  %1617 = vmatprep.subr.mxu0 0.0
  %1618 = vmatpush1.msra.mxu0 0.0
  %1619 = vmatprep.subr.mxu0 0.0
  %1620 = vmatpush1.msra.mxu0 0.0
  %1621 = vmatprep.subr.mxu0 0.0
  %1622 = vmatpush1.msra.mxu0 0.0
  %1623 = vmatprep.subr.mxu0 0.0
  %1624 = vmatpush1.msra.mxu0 0.0
  %1625 = vmatprep.subr.mxu0 0.0
  %1626 = vmatpush1.msra.mxu0 0.0
  %1627 = vmatprep.subr.mxu0 0.0
  %1628 = vmatpush1.msra.mxu0 0.0
  %1629 = vmatprep.subr.mxu0 0.0
  %1630 = vmatpush1.msra.mxu0 0.0
  %1631 = vmatprep.subr.mxu0 0.0
  %1632 = vmatpush1.msra.mxu0 0.0
  %1633 = vmatprep.subr.mxu0 0.0
  %1634 = vmatpush1.msra.mxu0 0.0
  %1635 = vmatprep.subr.mxu0 0.0
  %1636 = vmatpush1.msra.mxu0 0.0
  %1637 = vmatprep.subr.mxu0 0.0
  %1638 = vmatpush1.msra.mxu0 0.0
  %1639 = vmatprep.subr.mxu0 0.0
  %1640 = vmatpush1.msra.mxu0 0.0
  %1641 = vmatprep.subr.mxu0 0.0
  %1642 = vmatpush1.msra.mxu0 0.0
  %1643 = vmatprep.subr.mxu0 0.0
  %1644 = vmatpush1.msra.mxu0 0.0
  %1645 = vmatprep.subr.mxu0 0.0
  %1646 = vmatpush1.msra.mxu0 0.0
  %1647 = vmatprep.subr.mxu0 0.0
  %1648 = vmatpush1.msra.mxu0 0.0
  %1649 = vmatprep.subr.mxu0 0.0
  %1650 = vmatpush1.msra.mxu0 0.0
  %1651 = vmatprep.subr.mxu0 0.0
  %1652 = vmatpush1.msra.mxu0 0.0
  %1653 = vmatprep.subr.mxu0 0.0
  %1654 = vmatpush1.msra.mxu0 0.0
  %1655 = vmatprep.subr.mxu0 0.0
  %1656 = vmatpush1.msra.mxu0 0.0
  %1657 = vmatprep.subr.mxu0 0.0
  %1658 = vmatpush1.msra.mxu0 0.0
  %1659 = vmatprep.subr.mxu0 0.0
  %1660 = vmatpush1.msra.mxu0 0.0
  %1661 = vmatprep.subr.mxu0 0.0
  %1662 = vmatpush1.msra.mxu0 0.0
  %1663 = vmatprep.subr.mxu0 0.0
  %1664 = vmatpush1.msra.mxu0 0.0
  %1665 = vmatprep.subr.mxu0 0.0
  %1666 = vmatpush1.msra.mxu0 0.0
  %1667 = vmatprep.subr.mxu0 0.0
  %1668 = vmatpush1.msra.mxu0 0.0
  %1669 = vmatprep.subr.mxu0 0.0
  %1670 = vmatpush1.msra.mxu0 0.0
  %1671 = vmatprep.mubr.f32.mxu0 0.0
  %1672 = vmatmul.mubr.f32.gmra.mrb[0].mxu0 %v1605
  %v1673 = vpop.f32.mrb[0].mxu0
  %v1674 = vadd.f32 %v122, %v1673
  %v1675 = vpop.f32.mrb[0].mxu0
  %1676 = vdwg.mxu0
  %v1677 = vadd.f32 %v1531, %v1602
  %v1678 = vxor.u32 %v1677, 2147483648
  %v1679 = vmul.f32 %v1678, 1.442695
  %v1680 = vpow.pop %v1679
  %v1681 = vadd.f32 %v1680, 1.0
  %v1682 = vrcp.pop %v1681
  %v1683 = vmul.f32 1.0, %v1682
  %1685 = vrot.lane.b32.xlu0 %v1602, 64
  %v1686 = vpop.permute.xlu0 %1685
  %v1688 = vmul.f32 %v1683, %v1686
  %1690 = vrot.lane.b32.xlu0 %v1688, 64
  %v1691 = vpop.permute.xlu0 %1690
  %v1693 = vadd.f32 %v1531, %v1691
  %v1694 = vtanh.pop %v1693
  %v1695 = vsub.f32 1.0, %v1683
  %1697 = vrot.lane.b32.xlu0 %v1694, 96
  %v1698 = vpop.permute.xlu0 %1697
  %v1700 = vmul.f32 %v1695, %v1698
  %v1701 = vmul.f32 %v1683, %v1491
  %v1702 = vadd.f32 %v1700, %v1701
  %v1703 = vadd.f32 %v1532, %v1674
  %v1704 = vxor.u32 %v1703, 2147483648
  %v1705 = vmul.f32 %v1704, 1.442695
  %v1706 = vpow.pop %v1705
  %v1707 = vadd.f32 %v1706, 1.0
  %v1708 = vrcp.pop %v1707
  %v1709 = vmul.f32 1.0, %v1708
  %1711 = vrot.lane.b32.xlu0 %v1674, 64
  %v1712 = vpop.permute.xlu0 %1711
  %v1714 = vmul.f32 %v1709, %v1712
  %1716 = vrot.lane.b32.xlu0 %v1714, 64
  %v1717 = vpop.permute.xlu0 %1716
  %v1719 = vadd.f32 %v1532, %v1717
  %v1720 = vtanh.pop %v1719
  %v1721 = vsub.f32 1.0, %v1709
  %1723 = vrot.lane.b32.xlu0 %v1720, 96
  %v1724 = vpop.permute.xlu0 %1723
  %v1726 = vmul.f32 %v1721, %v1724
  %v1727 = vmul.f32 %v1709, %v1517
  %v1728 = vadd.f32 %v1726, %v1727
  %1730 = vrot.lane.b32.xlu0 %v1702, 96
  %v1731 = vpop.permute.xlu0 %1730
  %s1733 = scalar_lea.vmem %s6, 14
  %1734 = vst.msk [vmem:[%s1733] sm:$0x3] %vm250, %v1731
  %1736 = vrot.lane.b32.xlu0 %v1728, 96
  %v1737 = vpop.permute.xlu0 %1736
  %1739 = vst.msk [vmem:[%s7] sm:$0x3] %vm250, %v1737
  // Predicated region
  $region26: #{forward.24} parent=0 // pred_check
    _
  $region27: #{forward.24} parent=0 // pred_check_branch
    %1741 = sbr.rel (0) target = $region29
  $region28: #{forward.24} parent=0 // pred_region
    _
  $region29: #{forward.24} parent=0 // pred_fallthru
    _
  // Predicated region
  $region30: #{forward.24} parent=0 // pred_check
    _
  $region31: #{forward.24} parent=0 // pred_check_branch
    %1743 = sbr.rel (0) target = $region33
  $region32: #{forward.24} parent=0 // pred_region
    _
  $region33: #{forward.24} parent=0 // pred_fallthru
    _
  // Predicated region
  $region34: #{forward.24} parent=0 // pred_check
    _
  $region35: #{forward.24} parent=0 // pred_check_branch
    %1745 = sbr.rel (0) target = $region37
  $region36: #{forward.24} parent=0 // pred_region
    _
  $region37: #{forward.24} parent=0 // pred_fallthru
    _
  // Predicated region
  $region38: #{forward.24} parent=0 // pred_check
    _
  $region39: #{forward.24} parent=0 // pred_check_branch
    %1747 = sbr.rel (0) target = $region41
  $region40: #{forward.24} parent=0 // pred_region
    _
  $region41: #{forward.24} parent=0 // pred_fallthru
    _

// kernel: forward.27
$region0: #{forward.27}
  #allocation0 [shape = 'u32[]', space=smem, size = 0x4, offset = 0x4, fixed_abs, tag = 'smem constant byte address 0x4 - core index']
  #allocation1 [shape = 'u32[144,128]{1,0:T(1,128)}', space=vmem, size = 0x12000, scoped, tag = 'internal scratch']
  %s0 = inlined_call_operand.vmem [shape: f32[4,8,64], index: 0, kind: input, shape index: {}]
  %s1 = inlined_call_operand.vmem [shape: f32[4,8,64], index: 1, kind: input, shape index: {}]
  %s2 = inlined_call_operand.vmem [shape: f32[4,8,64], index: 2, kind: input, shape index: {}]
  %s3 = inlined_call_operand.vmem [shape: f32[4,8,8], index: 3, kind: input, shape index: {}]
  %s4 = inlined_call_operand.vmem [shape: f32[4,8,64], index: 4, kind: output, shape index: {}]
  %s5 = sld [smem:[#allocation0]]
  $region26: #{forward.27} parent=0
    _
  %s7 = ssub.s32 1, %s5
  %s8 = scalar_select 0, %s7, %s5
  // Predicated region
  $region2: #{forward.27} parent=0 // pred_check
    _
  $region3: #{forward.27} parent=0 // pred_check_branch
    %10 = sbr.rel (0) target = $region5
  $region4: #{forward.27} parent=0 // pred_region
    _
  $region5: #{forward.27} parent=0 // pred_fallthru
    _
  // Predicated region
  $region6: #{forward.27} parent=0 // pred_check
    _
  $region7: #{forward.27} parent=0 // pred_check_branch
    %12 = sbr.rel (0) target = $region9
  $region8: #{forward.27} parent=0 // pred_region
    _
  $region9: #{forward.27} parent=0 // pred_fallthru
    _
  // Predicated region
  $region10: #{forward.27} parent=0 // pred_check
    _
  $region11: #{forward.27} parent=0 // pred_check_branch
    %14 = sbr.rel (0) target = $region13
  $region12: #{forward.27} parent=0 // pred_region
    _
  $region13: #{forward.27} parent=0 // pred_fallthru
    _
  // Predicated region
  $region14: #{forward.27} parent=0 // pred_check
    _
  $region15: #{forward.27} parent=0 // pred_check_branch
    %16 = sbr.rel (0) target = $region17
  $region16: #{forward.27} parent=0 // pred_region
    _
  $region17: #{forward.27} parent=0 // pred_fallthru
    _
  %v17 = vld [vmem:[%s0] sm:$0xff]
  %v18 = vld [vmem:[%s0 + $0x8] sm:$0xff]
  %v19 = vld [vmem:[%s0 + $0x10] sm:$0xff]
  %v20 = vld [vmem:[%s0 + $0x18] sm:$0xff]
  %v21 = vld [vmem:[%s1] sm:$0xff]
  %v22 = vld [vmem:[%s1 + $0x8] sm:$0xff]
  %v23 = vld [vmem:[%s1 + $0x10] sm:$0xff]
  %v24 = vld [vmem:[%s1 + $0x18] sm:$0xff]
  %vm25 = vcmask 523264
  %v27 = vsel %vm25, %v17, 0
  %v30 = vsel %vm25, %v21, 0
  %32 = vmatprep.subr.mxu0 0.0
  %33 = vmatpush1.xpose.msra.mxu0 %v30
  %34 = vmatprep.subr.mxu0 0.0
  %35 = vmatpush1.xpose.msra.mxu0 0.0
  %36 = vmatprep.subr.mxu0 0.0
  %37 = vmatpush1.xpose.msra.mxu0 0.0
  %38 = vmatprep.subr.mxu0 0.0
  %39 = vmatpush1.xpose.msra.mxu0 0.0
  %40 = vmatprep.subr.mxu0 0.0
  %41 = vmatpush1.xpose.msra.mxu0 0.0
  %42 = vmatprep.subr.mxu0 0.0
  %43 = vmatpush1.xpose.msra.mxu0 0.0
  %44 = vmatprep.subr.mxu0 0.0
  %45 = vmatpush1.xpose.msra.mxu0 0.0
  %46 = vmatprep.subr.mxu0 0.0
  %47 = vmatpush1.xpose.msra.mxu0 0.0
  %48 = vmatprep.subr.mxu0 0.0
  %49 = vmatpush1.xpose.msra.mxu0 0.0
  %50 = vmatprep.subr.mxu0 0.0
  %51 = vmatpush1.xpose.msra.mxu0 0.0
  %52 = vmatprep.subr.mxu0 0.0
  %53 = vmatpush1.xpose.msra.mxu0 0.0
  %54 = vmatprep.subr.mxu0 0.0
  %55 = vmatpush1.xpose.msra.mxu0 0.0
  %56 = vmatprep.subr.mxu0 0.0
  %57 = vmatpush1.xpose.msra.mxu0 0.0
  %58 = vmatprep.subr.mxu0 0.0
  %59 = vmatpush1.xpose.msra.mxu0 0.0
  %60 = vmatprep.subr.mxu0 0.0
  %61 = vmatpush1.xpose.msra.mxu0 0.0
  %62 = vmatprep.subr.mxu0 0.0
  %63 = vmatpush1.xpose.msra.mxu0 0.0
  %64 = vmatprep.subr.mxu0 0.0
  %65 = vmatpush1.xpose.msra.mxu0 0.0
  %66 = vmatprep.subr.mxu0 0.0
  %67 = vmatpush1.xpose.msra.mxu0 0.0
  %68 = vmatprep.subr.mxu0 0.0
  %69 = vmatpush1.xpose.msra.mxu0 0.0
  %70 = vmatprep.subr.mxu0 0.0
  %71 = vmatpush1.xpose.msra.mxu0 0.0
  %72 = vmatprep.subr.mxu0 0.0
  %73 = vmatpush1.xpose.msra.mxu0 0.0
  %74 = vmatprep.subr.mxu0 0.0
  %75 = vmatpush1.xpose.msra.mxu0 0.0
  %76 = vmatprep.subr.mxu0 0.0
  %77 = vmatpush1.xpose.msra.mxu0 0.0
  %78 = vmatprep.subr.mxu0 0.0
  %79 = vmatpush1.xpose.msra.mxu0 0.0
  %80 = vmatprep.subr.mxu0 0.0
  %81 = vmatpush1.xpose.msra.mxu0 0.0
  %82 = vmatprep.subr.mxu0 0.0
  %83 = vmatpush1.xpose.msra.mxu0 0.0
  %84 = vmatprep.subr.mxu0 0.0
  %85 = vmatpush1.xpose.msra.mxu0 0.0
  %86 = vmatprep.subr.mxu0 0.0
  %87 = vmatpush1.xpose.msra.mxu0 0.0
  %88 = vmatprep.subr.mxu0 0.0
  %89 = vmatpush1.xpose.msra.mxu0 0.0
  %90 = vmatprep.subr.mxu0 0.0
  %91 = vmatpush1.xpose.msra.mxu0 0.0
  %92 = vmatprep.subr.mxu0 0.0
  %93 = vmatpush1.xpose.msra.mxu0 0.0
  %94 = vmatprep.subr.mxu0 0.0
  %95 = vmatpush1.xpose.msra.mxu0 0.0
  %96 = vmatprep.mubr.f32.mxu0 0.0
  %97 = vmatmul.mubr.f32.gmra.mrb[0].mxu0 %v27
  %v98 = vpop.f32.mrb[0].mxu0
  %v99 = vadd.f32 0.0, %v98
  %v100 = vpop.f32.mrb[0].mxu0
  %101 = vdwg.mxu0
  %v103 = vsel %vm25, %v18, 0
  %v106 = vsel %vm25, %v22, 0
  %108 = vmatprep.subr.mxu0 0.0
  %109 = vmatpush1.xpose.msra.mxu0 %v106
  %110 = vmatprep.subr.mxu0 0.0
  %111 = vmatpush1.xpose.msra.mxu0 0.0
  %112 = vmatprep.subr.mxu0 0.0
  %113 = vmatpush1.xpose.msra.mxu0 0.0
  %114 = vmatprep.subr.mxu0 0.0
  %115 = vmatpush1.xpose.msra.mxu0 0.0
  %116 = vmatprep.subr.mxu0 0.0
  %117 = vmatpush1.xpose.msra.mxu0 0.0
  %118 = vmatprep.subr.mxu0 0.0
  %119 = vmatpush1.xpose.msra.mxu0 0.0
  %120 = vmatprep.subr.mxu0 0.0
  %121 = vmatpush1.xpose.msra.mxu0 0.0
  %122 = vmatprep.subr.mxu0 0.0
  %123 = vmatpush1.xpose.msra.mxu0 0.0
  %124 = vmatprep.subr.mxu0 0.0
  %125 = vmatpush1.xpose.msra.mxu0 0.0
  %126 = vmatprep.subr.mxu0 0.0
  %127 = vmatpush1.xpose.msra.mxu0 0.0
  %128 = vmatprep.subr.mxu0 0.0
  %129 = vmatpush1.xpose.msra.mxu0 0.0
  %130 = vmatprep.subr.mxu0 0.0
  %131 = vmatpush1.xpose.msra.mxu0 0.0
  %132 = vmatprep.subr.mxu0 0.0
  %133 = vmatpush1.xpose.msra.mxu0 0.0
  %134 = vmatprep.subr.mxu0 0.0
  %135 = vmatpush1.xpose.msra.mxu0 0.0
  %136 = vmatprep.subr.mxu0 0.0
  %137 = vmatpush1.xpose.msra.mxu0 0.0
  %138 = vmatprep.subr.mxu0 0.0
  %139 = vmatpush1.xpose.msra.mxu0 0.0
  %140 = vmatprep.subr.mxu0 0.0
  %141 = vmatpush1.xpose.msra.mxu0 0.0
  %142 = vmatprep.subr.mxu0 0.0
  %143 = vmatpush1.xpose.msra.mxu0 0.0
  %144 = vmatprep.subr.mxu0 0.0
  %145 = vmatpush1.xpose.msra.mxu0 0.0
  %146 = vmatprep.subr.mxu0 0.0
  %147 = vmatpush1.xpose.msra.mxu0 0.0
  %148 = vmatprep.subr.mxu0 0.0
  %149 = vmatpush1.xpose.msra.mxu0 0.0
  %150 = vmatprep.subr.mxu0 0.0
  %151 = vmatpush1.xpose.msra.mxu0 0.0
  %152 = vmatprep.subr.mxu0 0.0
  %153 = vmatpush1.xpose.msra.mxu0 0.0
  %154 = vmatprep.subr.mxu0 0.0
  %155 = vmatpush1.xpose.msra.mxu0 0.0
  %156 = vmatprep.subr.mxu0 0.0
  %157 = vmatpush1.xpose.msra.mxu0 0.0
  %158 = vmatprep.subr.mxu0 0.0
  %159 = vmatpush1.xpose.msra.mxu0 0.0
  %160 = vmatprep.subr.mxu0 0.0
  %161 = vmatpush1.xpose.msra.mxu0 0.0
  %162 = vmatprep.subr.mxu0 0.0
  %163 = vmatpush1.xpose.msra.mxu0 0.0
  %164 = vmatprep.subr.mxu0 0.0
  %165 = vmatpush1.xpose.msra.mxu0 0.0
  %166 = vmatprep.subr.mxu0 0.0
  %167 = vmatpush1.xpose.msra.mxu0 0.0
  %168 = vmatprep.subr.mxu0 0.0
  %169 = vmatpush1.xpose.msra.mxu0 0.0
  %170 = vmatprep.subr.mxu0 0.0
  %171 = vmatpush1.xpose.msra.mxu0 0.0
  %172 = vmatprep.mubr.f32.mxu0 0.0
  %173 = vmatmul.mubr.f32.gmra.mrb[0].mxu0 %v103
  %v174 = vpop.f32.mrb[0].mxu0
  %v175 = vadd.f32 0.0, %v174
  %v176 = vpop.f32.mrb[0].mxu0
  %177 = vdwg.mxu0
  %v179 = vsel %vm25, %v19, 0
  %v182 = vsel %vm25, %v23, 0
  %184 = vmatprep.subr.mxu0 0.0
  %185 = vmatpush1.xpose.msra.mxu0 %v182
  %186 = vmatprep.subr.mxu0 0.0
  %187 = vmatpush1.xpose.msra.mxu0 0.0
  %188 = vmatprep.subr.mxu0 0.0
  %189 = vmatpush1.xpose.msra.mxu0 0.0
  %190 = vmatprep.subr.mxu0 0.0
  %191 = vmatpush1.xpose.msra.mxu0 0.0
  %192 = vmatprep.subr.mxu0 0.0
  %193 = vmatpush1.xpose.msra.mxu0 0.0
  %194 = vmatprep.subr.mxu0 0.0
  %195 = vmatpush1.xpose.msra.mxu0 0.0
  %196 = vmatprep.subr.mxu0 0.0
  %197 = vmatpush1.xpose.msra.mxu0 0.0
  %198 = vmatprep.subr.mxu0 0.0
  %199 = vmatpush1.xpose.msra.mxu0 0.0
  %200 = vmatprep.subr.mxu0 0.0
  %201 = vmatpush1.xpose.msra.mxu0 0.0
  %202 = vmatprep.subr.mxu0 0.0
  %203 = vmatpush1.xpose.msra.mxu0 0.0
  %204 = vmatprep.subr.mxu0 0.0
  %205 = vmatpush1.xpose.msra.mxu0 0.0
  %206 = vmatprep.subr.mxu0 0.0
  %207 = vmatpush1.xpose.msra.mxu0 0.0
  %208 = vmatprep.subr.mxu0 0.0
  %209 = vmatpush1.xpose.msra.mxu0 0.0
  %210 = vmatprep.subr.mxu0 0.0
  %211 = vmatpush1.xpose.msra.mxu0 0.0
  %212 = vmatprep.subr.mxu0 0.0
  %213 = vmatpush1.xpose.msra.mxu0 0.0
  %214 = vmatprep.subr.mxu0 0.0
  %215 = vmatpush1.xpose.msra.mxu0 0.0
  %216 = vmatprep.subr.mxu0 0.0
  %217 = vmatpush1.xpose.msra.mxu0 0.0
  %218 = vmatprep.subr.mxu0 0.0
  %219 = vmatpush1.xpose.msra.mxu0 0.0
  %220 = vmatprep.subr.mxu0 0.0
  %221 = vmatpush1.xpose.msra.mxu0 0.0
  %222 = vmatprep.subr.mxu0 0.0
  %223 = vmatpush1.xpose.msra.mxu0 0.0
  %224 = vmatprep.subr.mxu0 0.0
  %225 = vmatpush1.xpose.msra.mxu0 0.0
  %226 = vmatprep.subr.mxu0 0.0
  %227 = vmatpush1.xpose.msra.mxu0 0.0
  %228 = vmatprep.subr.mxu0 0.0
  %229 = vmatpush1.xpose.msra.mxu0 0.0
  %230 = vmatprep.subr.mxu0 0.0
  %231 = vmatpush1.xpose.msra.mxu0 0.0
  %232 = vmatprep.subr.mxu0 0.0
  %233 = vmatpush1.xpose.msra.mxu0 0.0
  %234 = vmatprep.subr.mxu0 0.0
  %235 = vmatpush1.xpose.msra.mxu0 0.0
  %236 = vmatprep.subr.mxu0 0.0
  %237 = vmatpush1.xpose.msra.mxu0 0.0
  %238 = vmatprep.subr.mxu0 0.0
  %239 = vmatpush1.xpose.msra.mxu0 0.0
  %240 = vmatprep.subr.mxu0 0.0
  %241 = vmatpush1.xpose.msra.mxu0 0.0
  %242 = vmatprep.subr.mxu0 0.0
  %243 = vmatpush1.xpose.msra.mxu0 0.0
  %244 = vmatprep.subr.mxu0 0.0
  %245 = vmatpush1.xpose.msra.mxu0 0.0
  %246 = vmatprep.subr.mxu0 0.0
  %247 = vmatpush1.xpose.msra.mxu0 0.0
  %248 = vmatprep.mubr.f32.mxu0 0.0
  %249 = vmatmul.mubr.f32.gmra.mrb[0].mxu0 %v179
  %v250 = vpop.f32.mrb[0].mxu0
  %v251 = vadd.f32 0.0, %v250
  %v252 = vpop.f32.mrb[0].mxu0
  %253 = vdwg.mxu0
  %v255 = vsel %vm25, %v20, 0
  %v258 = vsel %vm25, %v24, 0
  %260 = vmatprep.subr.mxu0 0.0
  %261 = vmatpush1.xpose.msra.mxu0 %v258
  %262 = vmatprep.subr.mxu0 0.0
  %263 = vmatpush1.xpose.msra.mxu0 0.0
  %264 = vmatprep.subr.mxu0 0.0
  %265 = vmatpush1.xpose.msra.mxu0 0.0
  %266 = vmatprep.subr.mxu0 0.0
  %267 = vmatpush1.xpose.msra.mxu0 0.0
  %268 = vmatprep.subr.mxu0 0.0
  %269 = vmatpush1.xpose.msra.mxu0 0.0
  %270 = vmatprep.subr.mxu0 0.0
  %271 = vmatpush1.xpose.msra.mxu0 0.0
  %272 = vmatprep.subr.mxu0 0.0
  %273 = vmatpush1.xpose.msra.mxu0 0.0
  %274 = vmatprep.subr.mxu0 0.0
  %275 = vmatpush1.xpose.msra.mxu0 0.0
  %276 = vmatprep.subr.mxu0 0.0
  %277 = vmatpush1.xpose.msra.mxu0 0.0
  %278 = vmatprep.subr.mxu0 0.0
  %279 = vmatpush1.xpose.msra.mxu0 0.0
  %280 = vmatprep.subr.mxu0 0.0
  %281 = vmatpush1.xpose.msra.mxu0 0.0
  %282 = vmatprep.subr.mxu0 0.0
  %283 = vmatpush1.xpose.msra.mxu0 0.0
  %284 = vmatprep.subr.mxu0 0.0
  %285 = vmatpush1.xpose.msra.mxu0 0.0
  %286 = vmatprep.subr.mxu0 0.0
  %287 = vmatpush1.xpose.msra.mxu0 0.0
  %288 = vmatprep.subr.mxu0 0.0
  %289 = vmatpush1.xpose.msra.mxu0 0.0
  %290 = vmatprep.subr.mxu0 0.0
  %291 = vmatpush1.xpose.msra.mxu0 0.0
  %292 = vmatprep.subr.mxu0 0.0
  %293 = vmatpush1.xpose.msra.mxu0 0.0
  %294 = vmatprep.subr.mxu0 0.0
  %295 = vmatpush1.xpose.msra.mxu0 0.0
  %296 = vmatprep.subr.mxu0 0.0
  %297 = vmatpush1.xpose.msra.mxu0 0.0
  %298 = vmatprep.subr.mxu0 0.0
  %299 = vmatpush1.xpose.msra.mxu0 0.0
  %300 = vmatprep.subr.mxu0 0.0
  %301 = vmatpush1.xpose.msra.mxu0 0.0
  %302 = vmatprep.subr.mxu0 0.0
  %303 = vmatpush1.xpose.msra.mxu0 0.0
  %304 = vmatprep.subr.mxu0 0.0
  %305 = vmatpush1.xpose.msra.mxu0 0.0
  %306 = vmatprep.subr.mxu0 0.0
  %307 = vmatpush1.xpose.msra.mxu0 0.0
  %308 = vmatprep.subr.mxu0 0.0
  %309 = vmatpush1.xpose.msra.mxu0 0.0
  %310 = vmatprep.subr.mxu0 0.0
  %311 = vmatpush1.xpose.msra.mxu0 0.0
  %312 = vmatprep.subr.mxu0 0.0
  %313 = vmatpush1.xpose.msra.mxu0 0.0
  %314 = vmatprep.subr.mxu0 0.0
  %315 = vmatpush1.xpose.msra.mxu0 0.0
  %316 = vmatprep.subr.mxu0 0.0
  %317 = vmatpush1.xpose.msra.mxu0 0.0
  %318 = vmatprep.subr.mxu0 0.0
  %319 = vmatpush1.xpose.msra.mxu0 0.0
  %320 = vmatprep.subr.mxu0 0.0
  %321 = vmatpush1.xpose.msra.mxu0 0.0
  %322 = vmatprep.subr.mxu0 0.0
  %323 = vmatpush1.xpose.msra.mxu0 0.0
  %324 = vmatprep.mubr.f32.mxu0 0.0
  %325 = vmatmul.mubr.f32.gmra.mrb[0].mxu0 %v255
  %v326 = vpop.f32.mrb[0].mxu0
  %v327 = vadd.f32 0.0, %v326
  %v328 = vpop.f32.mrb[0].mxu0
  %329 = vdwg.mxu0
  %v330 = vmul.f32 %v99, 0.125
  %v331 = vmul.f32 %v175, 0.125
  %v332 = vmul.f32 %v251, 0.125
  %v333 = vmul.f32 %v327, 0.125
  %v334 = vld [vmem:[%s3] sm:$0xff]
  %v335 = vld [vmem:[%s3 + $0x8] sm:$0xff]
  %v336 = vld [vmem:[%s3 + $0x10] sm:$0xff]
  %v337 = vld [vmem:[%s3 + $0x18] sm:$0xff]
  %v338 = vadd.f32 %v330, %v334
  %v339 = vadd.f32 %v331, %v335
  %v340 = vadd.f32 %v332, %v336
  %v341 = vadd.f32 %v333, %v337
  %vm342 = vcmask 64512
  %v343 = vsel %vm342, %v338, -inf
  %344 = vmax.xlane.f32.xlu0 %v343
  %v345 = vpop.xlane.xlu0 %344
  %v346 = vsel %vm342, %v339, -inf
  %347 = vmax.xlane.f32.xlu0 %v346
  %v348 = vpop.xlane.xlu0 %347
  %v349 = vsel %vm342, %v340, -inf
  %350 = vmax.xlane.f32.xlu0 %v349
  %v351 = vpop.xlane.xlu0 %350
  %v352 = vsel %vm342, %v341, -inf
  %353 = vmax.xlane.f32.xlu0 %v352
  %v354 = vpop.xlane.xlu0 %353
  %v355 = vsub.f32 %v338, %v345
  %v356 = vsub.f32 %v339, %v348
  %v357 = vsub.f32 %v340, %v351
  %v358 = vsub.f32 %v341, %v354
  %v359 = vmul.f32 %v355, 1.442695
  %v360 = vpow.pop %v359
  %v361 = vmul.f32 %v356, 1.442695
  %v362 = vpow.pop %v361
  %v363 = vmul.f32 %v357, 1.442695
  %v364 = vpow.pop %v363
  %v365 = vmul.f32 %v358, 1.442695
  %v366 = vpow.pop %v365
  %v367 = vsel %vm342, %v360, 0.0
  %368 = vadd.xlane.f32.xlu0 %v367
  %v369 = vpop.xlane.xlu0 %368
  %v370 = vsel %vm342, %v362, 0.0
  %371 = vadd.xlane.f32.xlu0 %v370
  %v372 = vpop.xlane.xlu0 %371
  %v373 = vsel %vm342, %v364, 0.0
  %374 = vadd.xlane.f32.xlu0 %v373
  %v375 = vpop.xlane.xlu0 %374
  %v376 = vsel %vm342, %v366, 0.0
  %377 = vadd.xlane.f32.xlu0 %v376
  %v378 = vpop.xlane.xlu0 %377
  %v379 = vrcp.pop %v369
  %v380 = vrcp.pop %v372
  %v381 = vrcp.pop %v375
  %v382 = vrcp.pop %v378
  %v383 = vmul.f32 %v360, %v379
  %v384 = vmul.f32 %v362, %v380
  %v385 = vmul.f32 %v364, %v381
  %v386 = vmul.f32 %v366, %v382
  %v387 = vld [vmem:[%s2] sm:$0xff]
  %v388 = vld [vmem:[%s2 + $0x8] sm:$0xff]
  %v389 = vld [vmem:[%s2 + $0x10] sm:$0xff]
  %v390 = vld [vmem:[%s2 + $0x18] sm:$0xff]
  %v392 = vsel %vm342, %v383, 0
  %394 = vmatprep.subr.mxu0 0.0
  %395 = vmatpush1.msra.mxu0 %v387
  %396 = vmatprep.subr.mxu0 0.0
  %397 = vmatpush1.msra.mxu0 0.0
  %398 = vmatprep.subr.mxu0 0.0
  %399 = vmatpush1.msra.mxu0 0.0
  %400 = vmatprep.subr.mxu0 0.0
  %401 = vmatpush1.msra.mxu0 0.0
  %402 = vmatprep.subr.mxu0 0.0
  %403 = vmatpush1.msra.mxu0 0.0
  %404 = vmatprep.subr.mxu0 0.0
  %405 = vmatpush1.msra.mxu0 0.0
  %406 = vmatprep.subr.mxu0 0.0
  %407 = vmatpush1.msra.mxu0 0.0
  %408 = vmatprep.subr.mxu0 0.0
  %409 = vmatpush1.msra.mxu0 0.0
  %410 = vmatprep.subr.mxu0 0.0
  %411 = vmatpush1.msra.mxu0 0.0
  %412 = vmatprep.subr.mxu0 0.0
  %413 = vmatpush1.msra.mxu0 0.0
  %414 = vmatprep.subr.mxu0 0.0
  %415 = vmatpush1.msra.mxu0 0.0
  %416 = vmatprep.subr.mxu0 0.0
  %417 = vmatpush1.msra.mxu0 0.0
  %418 = vmatprep.subr.mxu0 0.0
  %419 = vmatpush1.msra.mxu0 0.0
  %420 = vmatprep.subr.mxu0 0.0
  %421 = vmatpush1.msra.mxu0 0.0
  %422 = vmatprep.subr.mxu0 0.0
  %423 = vmatpush1.msra.mxu0 0.0
  %424 = vmatprep.subr.mxu0 0.0
  %425 = vmatpush1.msra.mxu0 0.0
  %426 = vmatprep.subr.mxu0 0.0
  %427 = vmatpush1.msra.mxu0 0.0
  %428 = vmatprep.subr.mxu0 0.0
  %429 = vmatpush1.msra.mxu0 0.0
  %430 = vmatprep.subr.mxu0 0.0
  %431 = vmatpush1.msra.mxu0 0.0
  %432 = vmatprep.subr.mxu0 0.0
  %433 = vmatpush1.msra.mxu0 0.0
  %434 = vmatprep.subr.mxu0 0.0
  %435 = vmatpush1.msra.mxu0 0.0
  %436 = vmatprep.subr.mxu0 0.0
  %437 = vmatpush1.msra.mxu0 0.0
  %438 = vmatprep.subr.mxu0 0.0
  %439 = vmatpush1.msra.mxu0 0.0
  %440 = vmatprep.subr.mxu0 0.0
  %441 = vmatpush1.msra.mxu0 0.0
  %442 = vmatprep.subr.mxu0 0.0
  %443 = vmatpush1.msra.mxu0 0.0
  %444 = vmatprep.subr.mxu0 0.0
  %445 = vmatpush1.msra.mxu0 0.0
  %446 = vmatprep.subr.mxu0 0.0
  %447 = vmatpush1.msra.mxu0 0.0
  %448 = vmatprep.subr.mxu0 0.0
  %449 = vmatpush1.msra.mxu0 0.0
  %450 = vmatprep.subr.mxu0 0.0
  %451 = vmatpush1.msra.mxu0 0.0
  %452 = vmatprep.subr.mxu0 0.0
  %453 = vmatpush1.msra.mxu0 0.0
  %454 = vmatprep.subr.mxu0 0.0
  %455 = vmatpush1.msra.mxu0 0.0
  %456 = vmatprep.subr.mxu0 0.0
  %457 = vmatpush1.msra.mxu0 0.0
  %458 = vmatprep.mubr.f32.mxu0 0.0
  %459 = vmatmul.mubr.f32.gmra.mrb[0].mxu0 %v392
  %v460 = vpop.f32.mrb[0].mxu0
  %v461 = vadd.f32 0.0, %v460
  %v462 = vpop.f32.mrb[0].mxu0
  %463 = vdwg.mxu0
  %v465 = vsel %vm342, %v384, 0
  %467 = vmatprep.subr.mxu0 0.0
  %468 = vmatpush1.msra.mxu0 %v388
  %469 = vmatprep.subr.mxu0 0.0
  %470 = vmatpush1.msra.mxu0 0.0
  %471 = vmatprep.subr.mxu0 0.0
  %472 = vmatpush1.msra.mxu0 0.0
  %473 = vmatprep.subr.mxu0 0.0
  %474 = vmatpush1.msra.mxu0 0.0
  %475 = vmatprep.subr.mxu0 0.0
  %476 = vmatpush1.msra.mxu0 0.0
  %477 = vmatprep.subr.mxu0 0.0
  %478 = vmatpush1.msra.mxu0 0.0
  %479 = vmatprep.subr.mxu0 0.0
  %480 = vmatpush1.msra.mxu0 0.0
  %481 = vmatprep.subr.mxu0 0.0
  %482 = vmatpush1.msra.mxu0 0.0
  %483 = vmatprep.subr.mxu0 0.0
  %484 = vmatpush1.msra.mxu0 0.0
  %485 = vmatprep.subr.mxu0 0.0
  %486 = vmatpush1.msra.mxu0 0.0
  %487 = vmatprep.subr.mxu0 0.0
  %488 = vmatpush1.msra.mxu0 0.0
  %489 = vmatprep.subr.mxu0 0.0
  %490 = vmatpush1.msra.mxu0 0.0
  %491 = vmatprep.subr.mxu0 0.0
  %492 = vmatpush1.msra.mxu0 0.0
  %493 = vmatprep.subr.mxu0 0.0
  %494 = vmatpush1.msra.mxu0 0.0
  %495 = vmatprep.subr.mxu0 0.0
  %496 = vmatpush1.msra.mxu0 0.0
  %497 = vmatprep.subr.mxu0 0.0
  %498 = vmatpush1.msra.mxu0 0.0
  %499 = vmatprep.subr.mxu0 0.0
  %500 = vmatpush1.msra.mxu0 0.0
  %501 = vmatprep.subr.mxu0 0.0
  %502 = vmatpush1.msra.mxu0 0.0
  %503 = vmatprep.subr.mxu0 0.0
  %504 = vmatpush1.msra.mxu0 0.0
  %505 = vmatprep.subr.mxu0 0.0
  %506 = vmatpush1.msra.mxu0 0.0
  %507 = vmatprep.subr.mxu0 0.0
  %508 = vmatpush1.msra.mxu0 0.0
  %509 = vmatprep.subr.mxu0 0.0
  %510 = vmatpush1.msra.mxu0 0.0
  %511 = vmatprep.subr.mxu0 0.0
  %512 = vmatpush1.msra.mxu0 0.0
  %513 = vmatprep.subr.mxu0 0.0
  %514 = vmatpush1.msra.mxu0 0.0
  %515 = vmatprep.subr.mxu0 0.0
  %516 = vmatpush1.msra.mxu0 0.0
  %517 = vmatprep.subr.mxu0 0.0
  %518 = vmatpush1.msra.mxu0 0.0
  %519 = vmatprep.subr.mxu0 0.0
  %520 = vmatpush1.msra.mxu0 0.0
  %521 = vmatprep.subr.mxu0 0.0
  %522 = vmatpush1.msra.mxu0 0.0
  %523 = vmatprep.subr.mxu0 0.0
  %524 = vmatpush1.msra.mxu0 0.0
  %525 = vmatprep.subr.mxu0 0.0
  %526 = vmatpush1.msra.mxu0 0.0
  %527 = vmatprep.subr.mxu0 0.0
  %528 = vmatpush1.msra.mxu0 0.0
  %529 = vmatprep.subr.mxu0 0.0
  %530 = vmatpush1.msra.mxu0 0.0
  %531 = vmatprep.mubr.f32.mxu0 0.0
  %532 = vmatmul.mubr.f32.gmra.mrb[0].mxu0 %v465
  %v533 = vpop.f32.mrb[0].mxu0
  %v534 = vadd.f32 0.0, %v533
  %v535 = vpop.f32.mrb[0].mxu0
  %536 = vdwg.mxu0
  %v538 = vsel %vm342, %v385, 0
  %540 = vmatprep.subr.mxu0 0.0
  %541 = vmatpush1.msra.mxu0 %v389
  %542 = vmatprep.subr.mxu0 0.0
  %543 = vmatpush1.msra.mxu0 0.0
  %544 = vmatprep.subr.mxu0 0.0
  %545 = vmatpush1.msra.mxu0 0.0
  %546 = vmatprep.subr.mxu0 0.0
  %547 = vmatpush1.msra.mxu0 0.0
  %548 = vmatprep.subr.mxu0 0.0
  %549 = vmatpush1.msra.mxu0 0.0
  %550 = vmatprep.subr.mxu0 0.0
  %551 = vmatpush1.msra.mxu0 0.0
  %552 = vmatprep.subr.mxu0 0.0
  %553 = vmatpush1.msra.mxu0 0.0
  %554 = vmatprep.subr.mxu0 0.0
  %555 = vmatpush1.msra.mxu0 0.0
  %556 = vmatprep.subr.mxu0 0.0
  %557 = vmatpush1.msra.mxu0 0.0
  %558 = vmatprep.subr.mxu0 0.0
  %559 = vmatpush1.msra.mxu0 0.0
  %560 = vmatprep.subr.mxu0 0.0
  %561 = vmatpush1.msra.mxu0 0.0
  %562 = vmatprep.subr.mxu0 0.0
  %563 = vmatpush1.msra.mxu0 0.0
  %564 = vmatprep.subr.mxu0 0.0
  %565 = vmatpush1.msra.mxu0 0.0
  %566 = vmatprep.subr.mxu0 0.0
  %567 = vmatpush1.msra.mxu0 0.0
  %568 = vmatprep.subr.mxu0 0.0
  %569 = vmatpush1.msra.mxu0 0.0
  %570 = vmatprep.subr.mxu0 0.0
  %571 = vmatpush1.msra.mxu0 0.0
  %572 = vmatprep.subr.mxu0 0.0
  %573 = vmatpush1.msra.mxu0 0.0
  %574 = vmatprep.subr.mxu0 0.0
  %575 = vmatpush1.msra.mxu0 0.0
  %576 = vmatprep.subr.mxu0 0.0
  %577 = vmatpush1.msra.mxu0 0.0
  %578 = vmatprep.subr.mxu0 0.0
  %579 = vmatpush1.msra.mxu0 0.0
  %580 = vmatprep.subr.mxu0 0.0
  %581 = vmatpush1.msra.mxu0 0.0
  %582 = vmatprep.subr.mxu0 0.0
  %583 = vmatpush1.msra.mxu0 0.0
  %584 = vmatprep.subr.mxu0 0.0
  %585 = vmatpush1.msra.mxu0 0.0
  %586 = vmatprep.subr.mxu0 0.0
  %587 = vmatpush1.msra.mxu0 0.0
  %588 = vmatprep.subr.mxu0 0.0
  %589 = vmatpush1.msra.mxu0 0.0
  %590 = vmatprep.subr.mxu0 0.0
  %591 = vmatpush1.msra.mxu0 0.0
  %592 = vmatprep.subr.mxu0 0.0
  %593 = vmatpush1.msra.mxu0 0.0
  %594 = vmatprep.subr.mxu0 0.0
  %595 = vmatpush1.msra.mxu0 0.0
  %596 = vmatprep.subr.mxu0 0.0
  %597 = vmatpush1.msra.mxu0 0.0
  %598 = vmatprep.subr.mxu0 0.0
  %599 = vmatpush1.msra.mxu0 0.0
  %600 = vmatprep.subr.mxu0 0.0
  %601 = vmatpush1.msra.mxu0 0.0
  %602 = vmatprep.subr.mxu0 0.0
  %603 = vmatpush1.msra.mxu0 0.0
  %604 = vmatprep.mubr.f32.mxu0 0.0
  %605 = vmatmul.mubr.f32.gmra.mrb[0].mxu0 %v538
  %v606 = vpop.f32.mrb[0].mxu0
  %v607 = vadd.f32 0.0, %v606
  %v608 = vpop.f32.mrb[0].mxu0
  %609 = vdwg.mxu0
  %v611 = vsel %vm342, %v386, 0
  %613 = vmatprep.subr.mxu0 0.0
  %614 = vmatpush1.msra.mxu0 %v390
  %615 = vmatprep.subr.mxu0 0.0
  %616 = vmatpush1.msra.mxu0 0.0
  %617 = vmatprep.subr.mxu0 0.0
  %618 = vmatpush1.msra.mxu0 0.0
  %619 = vmatprep.subr.mxu0 0.0
  %620 = vmatpush1.msra.mxu0 0.0
  %621 = vmatprep.subr.mxu0 0.0
  %622 = vmatpush1.msra.mxu0 0.0
  %623 = vmatprep.subr.mxu0 0.0
  %624 = vmatpush1.msra.mxu0 0.0
  %625 = vmatprep.subr.mxu0 0.0
  %626 = vmatpush1.msra.mxu0 0.0
  %627 = vmatprep.subr.mxu0 0.0
  %628 = vmatpush1.msra.mxu0 0.0
  %629 = vmatprep.subr.mxu0 0.0
  %630 = vmatpush1.msra.mxu0 0.0
  %631 = vmatprep.subr.mxu0 0.0
  %632 = vmatpush1.msra.mxu0 0.0
  %633 = vmatprep.subr.mxu0 0.0
  %634 = vmatpush1.msra.mxu0 0.0
  %635 = vmatprep.subr.mxu0 0.0
  %636 = vmatpush1.msra.mxu0 0.0
  %637 = vmatprep.subr.mxu0 0.0
  %638 = vmatpush1.msra.mxu0 0.0
  %639 = vmatprep.subr.mxu0 0.0
  %640 = vmatpush1.msra.mxu0 0.0
  %641 = vmatprep.subr.mxu0 0.0
  %642 = vmatpush1.msra.mxu0 0.0
  %643 = vmatprep.subr.mxu0 0.0
  %644 = vmatpush1.msra.mxu0 0.0
  %645 = vmatprep.subr.mxu0 0.0
  %646 = vmatpush1.msra.mxu0 0.0
  %647 = vmatprep.subr.mxu0 0.0
  %648 = vmatpush1.msra.mxu0 0.0
  %649 = vmatprep.subr.mxu0 0.0
  %650 = vmatpush1.msra.mxu0 0.0
  %651 = vmatprep.subr.mxu0 0.0
  %652 = vmatpush1.msra.mxu0 0.0
  %653 = vmatprep.subr.mxu0 0.0
  %654 = vmatpush1.msra.mxu0 0.0
  %655 = vmatprep.subr.mxu0 0.0
  %656 = vmatpush1.msra.mxu0 0.0
  %657 = vmatprep.subr.mxu0 0.0
  %658 = vmatpush1.msra.mxu0 0.0
  %659 = vmatprep.subr.mxu0 0.0
  %660 = vmatpush1.msra.mxu0 0.0
  %661 = vmatprep.subr.mxu0 0.0
  %662 = vmatpush1.msra.mxu0 0.0
  %663 = vmatprep.subr.mxu0 0.0
  %664 = vmatpush1.msra.mxu0 0.0
  %665 = vmatprep.subr.mxu0 0.0
  %666 = vmatpush1.msra.mxu0 0.0
  %667 = vmatprep.subr.mxu0 0.0
  %668 = vmatpush1.msra.mxu0 0.0
  %669 = vmatprep.subr.mxu0 0.0
  %670 = vmatpush1.msra.mxu0 0.0
  %671 = vmatprep.subr.mxu0 0.0
  %672 = vmatpush1.msra.mxu0 0.0
  %673 = vmatprep.subr.mxu0 0.0
  %674 = vmatpush1.msra.mxu0 0.0
  %675 = vmatprep.subr.mxu0 0.0
  %676 = vmatpush1.msra.mxu0 0.0
  %677 = vmatprep.mubr.f32.mxu0 0.0
  %678 = vmatmul.mubr.f32.gmra.mrb[0].mxu0 %v611
  %v679 = vpop.f32.mrb[0].mxu0
  %v680 = vadd.f32 0.0, %v679
  %v681 = vpop.f32.mrb[0].mxu0
  %682 = vdwg.mxu0
  %683 = vst.msk [vmem:[%s4] sm:$0xff] %vm25, %v461
  %684 = vst.msk [vmem:[%s4 + $0x8] sm:$0xff] %vm25, %v534
  %685 = vst.msk [vmem:[%s4 + $0x10] sm:$0xff] %vm25, %v607
  %686 = vst.msk [vmem:[%s4 + $0x18] sm:$0xff] %vm25, %v680
  // Predicated region
  $region18: #{forward.27} parent=0 // pred_check
    _
  $region19: #{forward.27} parent=0 // pred_check_branch
    %688 = sbr.rel (0) target = $region21
  $region20: #{forward.27} parent=0 // pred_region
    _
  $region21: #{forward.27} parent=0 // pred_fallthru
    _
  // Predicated region
  $region22: #{forward.27} parent=0 // pred_check
    _
  $region23: #{forward.27} parent=0 // pred_check_branch
    %690 = sbr.rel (0) target = $region25
  $region24: #{forward.27} parent=0 // pred_region
    _
  $region25: #{forward.27} parent=0 // pred_fallthru
    _

// kernel: forward.29
$region0: #{forward.29}
  #allocation0 [shape = 'u32[]', space=smem, size = 0x4, offset = 0x4, fixed_abs, tag = 'smem constant byte address 0x4 - core index']
  #allocation1 [shape = 'u32[144,128]{1,0:T(1,128)}', space=vmem, size = 0x12000, scoped, tag = 'internal scratch']
  %s0 = inlined_call_operand.vmem [shape: f32[16,128], index: 0, kind: input, shape index: {}]
  %s1 = inlined_call_operand.vmem [shape: f32[128,128], index: 1, kind: input, shape index: {}]
  %s2 = inlined_call_operand.vmem [shape: f32[1,128], index: 2, kind: input, shape index: {}]
  %s3 = inlined_call_operand.vmem [shape: f32[16,128], index: 3, kind: output, shape index: {}]
  %s4 = sld [smem:[#allocation0]]
  $region22: #{forward.29} parent=0
    _
  %s6 = ssub.s32 1, %s4
  %s7 = scalar_select 0, %s6, %s4
  // Predicated region
  $region2: #{forward.29} parent=0 // pred_check
    _
  $region3: #{forward.29} parent=0 // pred_check_branch
    %9 = sbr.rel (0) target = $region5
  $region4: #{forward.29} parent=0 // pred_region
    _
  $region5: #{forward.29} parent=0 // pred_fallthru
    _
  // Predicated region
  $region6: #{forward.29} parent=0 // pred_check
    _
  $region7: #{forward.29} parent=0 // pred_check_branch
    %11 = sbr.rel (0) target = $region9
  $region8: #{forward.29} parent=0 // pred_region
    _
  $region9: #{forward.29} parent=0 // pred_fallthru
    _
  // Predicated region
  $region10: #{forward.29} parent=0 // pred_check
    _
  $region11: #{forward.29} parent=0 // pred_check_branch
    %13 = sbr.rel (0) target = $region13
  $region12: #{forward.29} parent=0 // pred_region
    _
  $region13: #{forward.29} parent=0 // pred_fallthru
    _
  %v14 = vld [vmem:[%s0] sm:$0xff]
  %v15 = vld [vmem:[%s0 + $0x8] sm:$0xff]
  %v16 = vld [vmem:[%s1] sm:$0xff]
  %v17 = vld [vmem:[%s1 + $0x8] sm:$0xff]
  %v18 = vld [vmem:[%s1 + $0x10] sm:$0xff]
  %v19 = vld [vmem:[%s1 + $0x18] sm:$0xff]
  %v20 = vld [vmem:[%s1 + $0x20] sm:$0xff]
  %v21 = vld [vmem:[%s1 + $0x28] sm:$0xff]
  %v22 = vld [vmem:[%s1 + $0x30] sm:$0xff]
  %v23 = vld [vmem:[%s1 + $0x38] sm:$0xff]
  %v24 = vld [vmem:[%s1 + $0x40] sm:$0xff]
  %v25 = vld [vmem:[%s1 + $0x48] sm:$0xff]
  %v26 = vld [vmem:[%s1 + $0x50] sm:$0xff]
  %v27 = vld [vmem:[%s1 + $0x58] sm:$0xff]
  %v28 = vld [vmem:[%s1 + $0x60] sm:$0xff]
  %v29 = vld [vmem:[%s1 + $0x68] sm:$0xff]
  %v30 = vld [vmem:[%s1 + $0x70] sm:$0xff]
  %v31 = vld [vmem:[%s1 + $0x78] sm:$0xff]
  %v32 = vld [vmem:[%s2] sm:$0x1]
  %v34 = vlaneseq
  %v35 = vshrl.u32 %v34, 7
  %v36 = vsub.s32 0, %v35
  %v37 = vrot.slane %v32, %v36
  %39 = vmatprep.subr.mxu0 0.0
  %40 = vmatpush1.msra.mxu0 %v16
  %41 = vmatprep.subr.mxu0 0.0
  %42 = vmatpush1.msra.mxu0 %v17
  %43 = vmatprep.subr.mxu0 0.0
  %44 = vmatpush1.msra.mxu0 %v18
  %45 = vmatprep.subr.mxu0 0.0
  %46 = vmatpush1.msra.mxu0 %v19
  %47 = vmatprep.subr.mxu0 0.0
  %48 = vmatpush1.msra.mxu0 %v20
  %49 = vmatprep.subr.mxu0 0.0
  %50 = vmatpush1.msra.mxu0 %v21
  %51 = vmatprep.subr.mxu0 0.0
  %52 = vmatpush1.msra.mxu0 %v22
  %53 = vmatprep.subr.mxu0 0.0
  %54 = vmatpush1.msra.mxu0 %v23
  %55 = vmatprep.subr.mxu0 0.0
  %56 = vmatpush1.msra.mxu0 %v24
  %57 = vmatprep.subr.mxu0 0.0
  %58 = vmatpush1.msra.mxu0 %v25
  %59 = vmatprep.subr.mxu0 0.0
  %60 = vmatpush1.msra.mxu0 %v26
  %61 = vmatprep.subr.mxu0 0.0
  %62 = vmatpush1.msra.mxu0 %v27
  %63 = vmatprep.subr.mxu0 0.0
  %64 = vmatpush1.msra.mxu0 %v28
  %65 = vmatprep.subr.mxu0 0.0
  %66 = vmatpush1.msra.mxu0 %v29
  %67 = vmatprep.subr.mxu0 0.0
  %68 = vmatpush1.msra.mxu0 %v30
  %69 = vmatprep.subr.mxu0 0.0
  %70 = vmatpush1.msra.mxu0 %v31
  %71 = vmatprep.subr.mxu0 0.0
  %72 = vmatpush1.msra.mxu0 0.0
  %73 = vmatprep.subr.mxu0 0.0
  %74 = vmatpush1.msra.mxu0 0.0
  %75 = vmatprep.subr.mxu0 0.0
  %76 = vmatpush1.msra.mxu0 0.0
  %77 = vmatprep.subr.mxu0 0.0
  %78 = vmatpush1.msra.mxu0 0.0
  %79 = vmatprep.subr.mxu0 0.0
  %80 = vmatpush1.msra.mxu0 0.0
  %81 = vmatprep.subr.mxu0 0.0
  %82 = vmatpush1.msra.mxu0 0.0
  %83 = vmatprep.subr.mxu0 0.0
  %84 = vmatpush1.msra.mxu0 0.0
  %85 = vmatprep.subr.mxu0 0.0
  %86 = vmatpush1.msra.mxu0 0.0
  %87 = vmatprep.subr.mxu0 0.0
  %88 = vmatpush1.msra.mxu0 0.0
  %89 = vmatprep.subr.mxu0 0.0
  %90 = vmatpush1.msra.mxu0 0.0
  %91 = vmatprep.subr.mxu0 0.0
  %92 = vmatpush1.msra.mxu0 0.0
  %93 = vmatprep.subr.mxu0 0.0
  %94 = vmatpush1.msra.mxu0 0.0
  %95 = vmatprep.subr.mxu0 0.0
  %96 = vmatpush1.msra.mxu0 0.0
  %97 = vmatprep.subr.mxu0 0.0
  %98 = vmatpush1.msra.mxu0 0.0
  %99 = vmatprep.subr.mxu0 0.0
  %100 = vmatpush1.msra.mxu0 0.0
  %101 = vmatprep.subr.mxu0 0.0
  %102 = vmatpush1.msra.mxu0 0.0
  %103 = vmatprep.mubr.f32.mxu0 0.0
  %104 = vmatmul.mubr.f32.gmra.mrb[0].mxu0 %v14
  %v105 = vpop.f32.mrb[0].mxu0
  %v106 = vadd.f32 %v37, %v105
  %v107 = vpop.f32.mrb[0].mxu0
  %108 = vmatprep.mubr.f32.mxu0 0.0
  %109 = vmatmul.mubr.f32.gmra.mrb[0].mxu0 %v15
  %v110 = vpop.f32.mrb[0].mxu0
  %v111 = vadd.f32 %v37, %v110
  %v112 = vpop.f32.mrb[0].mxu0
  %113 = vdwg.mxu0
  %114 = vst [vmem:[%s3] sm:$0xff] %v106
  %115 = vst [vmem:[%s3 + $0x8] sm:$0xff] %v111
  // Predicated region
  $region14: #{forward.29} parent=0 // pred_check
    _
  $region15: #{forward.29} parent=0 // pred_check_branch
    %117 = sbr.rel (0) target = $region17
  $region16: #{forward.29} parent=0 // pred_region
    _
  $region17: #{forward.29} parent=0 // pred_fallthru
    _
  // Predicated region
  $region18: #{forward.29} parent=0 // pred_check
    _
  $region19: #{forward.29} parent=0 // pred_check_branch
    %119 = sbr.rel (0) target = $region21
  $region20: #{forward.29} parent=0 // pred_region
    _
  $region21: #{forward.29} parent=0 // pred_fallthru
    _

// kernel: forward.28
$region0: #{forward.28}
  #allocation0 [shape = 'u32[]', space=smem, size = 0x4, offset = 0x4, fixed_abs, tag = 'smem constant byte address 0x4 - core index']
  #allocation1 [shape = 'u32[144,128]{1,0:T(1,128)}', space=vmem, size = 0x12000, scoped, tag = 'internal scratch']
  %s0 = inlined_call_operand.vmem [shape: f32[16,128], index: 0, kind: input, shape index: {}]
  %s1 = inlined_call_operand.vmem [shape: f32[128,128], index: 1, kind: input, shape index: {}]
  %s2 = inlined_call_operand.vmem [shape: f32[1,128], index: 2, kind: input, shape index: {}]
  %s3 = inlined_call_operand.vmem [shape: f32[16,128], index: 3, kind: input, shape index: {}]
  %s4 = inlined_call_operand.vmem [shape: f32[1,128], index: 4, kind: input, shape index: {}]
  %s5 = inlined_call_operand.vmem [shape: f32[1,128], index: 5, kind: input, shape index: {}]
  %s6 = inlined_call_operand.vmem [shape: f32[16,128], index: 6, kind: output, shape index: {}]
  %s7 = sld [smem:[#allocation0]]
  $region34: #{forward.28} parent=0
    _
  %s9 = ssub.s32 1, %s7
  %s10 = scalar_select 0, %s9, %s7
  // Predicated region
  $region2: #{forward.28} parent=0 // pred_check
    _
  $region3: #{forward.28} parent=0 // pred_check_branch
    %12 = sbr.rel (0) target = $region5
  $region4: #{forward.28} parent=0 // pred_region
    _
  $region5: #{forward.28} parent=0 // pred_fallthru
    _
  // Predicated region
  $region6: #{forward.28} parent=0 // pred_check
    _
  $region7: #{forward.28} parent=0 // pred_check_branch
    %14 = sbr.rel (0) target = $region9
  $region8: #{forward.28} parent=0 // pred_region
    _
  $region9: #{forward.28} parent=0 // pred_fallthru
    _
  // Predicated region
  $region10: #{forward.28} parent=0 // pred_check
    _
  $region11: #{forward.28} parent=0 // pred_check_branch
    %16 = sbr.rel (0) target = $region13
  $region12: #{forward.28} parent=0 // pred_region
    _
  $region13: #{forward.28} parent=0 // pred_fallthru
    _
  // Predicated region
  $region14: #{forward.28} parent=0 // pred_check
    _
  $region15: #{forward.28} parent=0 // pred_check_branch
    %18 = sbr.rel (0) target = $region17
  $region16: #{forward.28} parent=0 // pred_region
    _
  $region17: #{forward.28} parent=0 // pred_fallthru
    _
  // Predicated region
  $region18: #{forward.28} parent=0 // pred_check
    _
  $region19: #{forward.28} parent=0 // pred_check_branch
    %20 = sbr.rel (0) target = $region21
  $region20: #{forward.28} parent=0 // pred_region
    _
  $region21: #{forward.28} parent=0 // pred_fallthru
    _
  // Predicated region
  $region22: #{forward.28} parent=0 // pred_check
    _
  $region23: #{forward.28} parent=0 // pred_check_branch
    %22 = sbr.rel (0) target = $region25
  $region24: #{forward.28} parent=0 // pred_region
    _
  $region25: #{forward.28} parent=0 // pred_fallthru
    _
  %v23 = vld [vmem:[%s0] sm:$0xff]
  %v24 = vld [vmem:[%s0 + $0x8] sm:$0xff]
  %v25 = vld [vmem:[%s1] sm:$0xff]
  %v26 = vld [vmem:[%s1 + $0x8] sm:$0xff]
  %v27 = vld [vmem:[%s1 + $0x10] sm:$0xff]
  %v28 = vld [vmem:[%s1 + $0x18] sm:$0xff]
  %v29 = vld [vmem:[%s1 + $0x20] sm:$0xff]
  %v30 = vld [vmem:[%s1 + $0x28] sm:$0xff]
  %v31 = vld [vmem:[%s1 + $0x30] sm:$0xff]
  %v32 = vld [vmem:[%s1 + $0x38] sm:$0xff]
  %v33 = vld [vmem:[%s1 + $0x40] sm:$0xff]
  %v34 = vld [vmem:[%s1 + $0x48] sm:$0xff]
  %v35 = vld [vmem:[%s1 + $0x50] sm:$0xff]
  %v36 = vld [vmem:[%s1 + $0x58] sm:$0xff]
  %v37 = vld [vmem:[%s1 + $0x60] sm:$0xff]
  %v38 = vld [vmem:[%s1 + $0x68] sm:$0xff]
  %v39 = vld [vmem:[%s1 + $0x70] sm:$0xff]
  %v40 = vld [vmem:[%s1 + $0x78] sm:$0xff]
  %v41 = vld [vmem:[%s2] sm:$0x1]
  %v43 = vlaneseq
  %v44 = vshrl.u32 %v43, 7
  %v45 = vsub.s32 0, %v44
  %v46 = vrot.slane %v41, %v45
  %48 = vmatprep.subr.mxu0 0.0
  %49 = vmatpush1.msra.mxu0 %v25
  %50 = vmatprep.subr.mxu0 0.0
  %51 = vmatpush1.msra.mxu0 %v26
  %52 = vmatprep.subr.mxu0 0.0
  %53 = vmatpush1.msra.mxu0 %v27
  %54 = vmatprep.subr.mxu0 0.0
  %55 = vmatpush1.msra.mxu0 %v28
  %56 = vmatprep.subr.mxu0 0.0
  %57 = vmatpush1.msra.mxu0 %v29
  %58 = vmatprep.subr.mxu0 0.0
  %59 = vmatpush1.msra.mxu0 %v30
  %60 = vmatprep.subr.mxu0 0.0
  %61 = vmatpush1.msra.mxu0 %v31
  %62 = vmatprep.subr.mxu0 0.0
  %63 = vmatpush1.msra.mxu0 %v32
  %64 = vmatprep.subr.mxu0 0.0
  %65 = vmatpush1.msra.mxu0 %v33
  %66 = vmatprep.subr.mxu0 0.0
  %67 = vmatpush1.msra.mxu0 %v34
  %68 = vmatprep.subr.mxu0 0.0
  %69 = vmatpush1.msra.mxu0 %v35
  %70 = vmatprep.subr.mxu0 0.0
  %71 = vmatpush1.msra.mxu0 %v36
  %72 = vmatprep.subr.mxu0 0.0
  %73 = vmatpush1.msra.mxu0 %v37
  %74 = vmatprep.subr.mxu0 0.0
  %75 = vmatpush1.msra.mxu0 %v38
  %76 = vmatprep.subr.mxu0 0.0
  %77 = vmatpush1.msra.mxu0 %v39
  %78 = vmatprep.subr.mxu0 0.0
  %79 = vmatpush1.msra.mxu0 %v40
  %80 = vmatprep.subr.mxu0 0.0
  %81 = vmatpush1.msra.mxu0 0.0
  %82 = vmatprep.subr.mxu0 0.0
  %83 = vmatpush1.msra.mxu0 0.0
  %84 = vmatprep.subr.mxu0 0.0
  %85 = vmatpush1.msra.mxu0 0.0
  %86 = vmatprep.subr.mxu0 0.0
  %87 = vmatpush1.msra.mxu0 0.0
  %88 = vmatprep.subr.mxu0 0.0
  %89 = vmatpush1.msra.mxu0 0.0
  %90 = vmatprep.subr.mxu0 0.0
  %91 = vmatpush1.msra.mxu0 0.0
  %92 = vmatprep.subr.mxu0 0.0
  %93 = vmatpush1.msra.mxu0 0.0
  %94 = vmatprep.subr.mxu0 0.0
  %95 = vmatpush1.msra.mxu0 0.0
  %96 = vmatprep.subr.mxu0 0.0
  %97 = vmatpush1.msra.mxu0 0.0
  %98 = vmatprep.subr.mxu0 0.0
  %99 = vmatpush1.msra.mxu0 0.0
  %100 = vmatprep.subr.mxu0 0.0
  %101 = vmatpush1.msra.mxu0 0.0
  %102 = vmatprep.subr.mxu0 0.0
  %103 = vmatpush1.msra.mxu0 0.0
  %104 = vmatprep.subr.mxu0 0.0
  %105 = vmatpush1.msra.mxu0 0.0
  %106 = vmatprep.subr.mxu0 0.0
  %107 = vmatpush1.msra.mxu0 0.0
  %108 = vmatprep.subr.mxu0 0.0
  %109 = vmatpush1.msra.mxu0 0.0
  %110 = vmatprep.subr.mxu0 0.0
  %111 = vmatpush1.msra.mxu0 0.0
  %112 = vmatprep.mubr.f32.mxu0 0.0
  %113 = vmatmul.mubr.f32.gmra.mrb[0].mxu0 %v23
  %v114 = vpop.f32.mrb[0].mxu0
  %v115 = vadd.f32 %v46, %v114
  %v116 = vpop.f32.mrb[0].mxu0
  %117 = vmatprep.mubr.f32.mxu0 0.0
  %118 = vmatmul.mubr.f32.gmra.mrb[0].mxu0 %v24
  %v119 = vpop.f32.mrb[0].mxu0
  %v120 = vadd.f32 %v46, %v119
  %v121 = vpop.f32.mrb[0].mxu0
  %122 = vdwg.mxu0
  %v123 = vld [vmem:[%s3] sm:$0xff]
  %v124 = vld [vmem:[%s3 + $0x8] sm:$0xff]
  %v125 = vadd.f32 %v115, %v123
  %v126 = vadd.f32 %v120, %v124
  %127 = vadd.xlane.f32.xlu0 %v125
  %v128 = vpop.xlane.xlu0 %127
  %129 = vadd.xlane.f32.xlu0 %v126
  %v130 = vpop.xlane.xlu0 %129
  %v131 = vrcp.pop 128.0
  %v132 = vmul.f32 %v128, %v131
  %v133 = vmul.f32 %v130, %v131
  %v134 = vsub.f32 %v125, %v132
  %v135 = vsub.f32 %v126, %v133
  %v136 = vmul.f32 %v134, %v134
  %v137 = vmul.f32 %v135, %v135
  %138 = vadd.xlane.f32.xlu0 %v136
  %v139 = vpop.xlane.xlu0 %138
  %140 = vadd.xlane.f32.xlu0 %v137
  %v141 = vpop.xlane.xlu0 %140
  %v142 = vmul.f32 %v139, %v131
  %v143 = vmul.f32 %v141, %v131
  %v144 = vadd.f32 %v142, 1e-05
  %v145 = vadd.f32 %v143, 1e-05
  %v146 = vrsqrt.pop %v144
  %v147 = vrsqrt.pop %v145
  %v148 = vmul.f32 %v134, %v146
  %v149 = vmul.f32 %v135, %v147
  %v150 = vld [vmem:[%s4] sm:$0x1]
  %v152 = vlaneseq
  %v153 = vshrl.u32 %v152, 7
  %v154 = vsub.s32 0, %v153
  %v155 = vrot.slane %v150, %v154
  %v157 = vmul.f32 %v148, %v155
  %v158 = vmul.f32 %v149, %v155
  %v159 = vld [vmem:[%s5] sm:$0x1]
  %v161 = vlaneseq
  %v162 = vshrl.u32 %v161, 7
  %v163 = vsub.s32 0, %v162
  %v164 = vrot.slane %v159, %v163
  %v166 = vadd.f32 %v157, %v164
  %v167 = vadd.f32 %v158, %v164
  %168 = vst [vmem:[%s6] sm:$0xff] %v166
  %169 = vst [vmem:[%s6 + $0x8] sm:$0xff] %v167
  // Predicated region
  $region26: #{forward.28} parent=0 // pred_check
    _
  $region27: #{forward.28} parent=0 // pred_check_branch
    %171 = sbr.rel (0) target = $region29
  $region28: #{forward.28} parent=0 // pred_region
    _
  $region29: #{forward.28} parent=0 // pred_fallthru
    _
  // Predicated region
  $region30: #{forward.28} parent=0 // pred_check
    _
  $region31: #{forward.28} parent=0 // pred_check_branch
    %173 = sbr.rel (0) target = $region33
  $region32: #{forward.28} parent=0 // pred_region
    _
  $region33: #{forward.28} parent=0 // pred_fallthru
    _

// kernel: forward.30
$region0: #{forward.30}
  #allocation0 [shape = 'u32[]', space=smem, size = 0x4, offset = 0x4, fixed_abs, tag = 'smem constant byte address 0x4 - core index']
  #allocation1 [shape = 'u32[144,128]{1,0:T(1,128)}', space=vmem, size = 0x12000, scoped, tag = 'internal scratch']
  %s0 = inlined_call_operand.vmem [shape: f32[16,128], index: 0, kind: input, shape index: {}]
  %s1 = inlined_call_operand.vmem [shape: f32[128,256], index: 1, kind: input, shape index: {}]
  %s2 = inlined_call_operand.vmem [shape: f32[1,256], index: 2, kind: input, shape index: {}]
  %s3 = inlined_call_operand.vmem [shape: f32[16,256], index: 3, kind: output, shape index: {}]
  %s4 = sld [smem:[#allocation0]]
  $region22: #{forward.30} parent=0
    _
  %s6 = ssub.s32 1, %s4
  %s7 = scalar_select 0, %s6, %s4
  // Predicated region
  $region2: #{forward.30} parent=0 // pred_check
    _
  $region3: #{forward.30} parent=0 // pred_check_branch
    %9 = sbr.rel (0) target = $region5
  $region4: #{forward.30} parent=0 // pred_region
    _
  $region5: #{forward.30} parent=0 // pred_fallthru
    _
  // Predicated region
  $region6: #{forward.30} parent=0 // pred_check
    _
  $region7: #{forward.30} parent=0 // pred_check_branch
    %11 = sbr.rel (0) target = $region9
  $region8: #{forward.30} parent=0 // pred_region
    _
  $region9: #{forward.30} parent=0 // pred_fallthru
    _
  // Predicated region
  $region10: #{forward.30} parent=0 // pred_check
    _
  $region11: #{forward.30} parent=0 // pred_check_branch
    %13 = sbr.rel (0) target = $region13
  $region12: #{forward.30} parent=0 // pred_region
    _
  $region13: #{forward.30} parent=0 // pred_fallthru
    _
  %v14 = vld [vmem:[%s0] sm:$0xff]
  %v15 = vld [vmem:[%s0 + $0x8] sm:$0xff]
  %v16 = vld [vmem:[%s1] sm:$0xff]
  %v17 = vld [vmem:[%s1 + $0x8] sm:$0xff]
  %v18 = vld [vmem:[%s1 + $0x10] sm:$0xff]
  %v19 = vld [vmem:[%s1 + $0x18] sm:$0xff]
  %v20 = vld [vmem:[%s1 + $0x20] sm:$0xff]
  %v21 = vld [vmem:[%s1 + $0x28] sm:$0xff]
  %v22 = vld [vmem:[%s1 + $0x30] sm:$0xff]
  %v23 = vld [vmem:[%s1 + $0x38] sm:$0xff]
  %v24 = vld [vmem:[%s1 + $0x40] sm:$0xff]
  %v25 = vld [vmem:[%s1 + $0x48] sm:$0xff]
  %v26 = vld [vmem:[%s1 + $0x50] sm:$0xff]
  %v27 = vld [vmem:[%s1 + $0x58] sm:$0xff]
  %v28 = vld [vmem:[%s1 + $0x60] sm:$0xff]
  %v29 = vld [vmem:[%s1 + $0x68] sm:$0xff]
  %v30 = vld [vmem:[%s1 + $0x70] sm:$0xff]
  %v31 = vld [vmem:[%s1 + $0x78] sm:$0xff]
  %v32 = vld [vmem:[%s1 + $0x80] sm:$0xff]
  %v33 = vld [vmem:[%s1 + $0x88] sm:$0xff]
  %v34 = vld [vmem:[%s1 + $0x90] sm:$0xff]
  %v35 = vld [vmem:[%s1 + $0x98] sm:$0xff]
  %v36 = vld [vmem:[%s1 + $0xa0] sm:$0xff]
  %v37 = vld [vmem:[%s1 + $0xa8] sm:$0xff]
  %v38 = vld [vmem:[%s1 + $0xb0] sm:$0xff]
  %v39 = vld [vmem:[%s1 + $0xb8] sm:$0xff]
  %v40 = vld [vmem:[%s1 + $0xc0] sm:$0xff]
  %v41 = vld [vmem:[%s1 + $0xc8] sm:$0xff]
  %v42 = vld [vmem:[%s1 + $0xd0] sm:$0xff]
  %v43 = vld [vmem:[%s1 + $0xd8] sm:$0xff]
  %v44 = vld [vmem:[%s1 + $0xe0] sm:$0xff]
  %v45 = vld [vmem:[%s1 + $0xe8] sm:$0xff]
  %v46 = vld [vmem:[%s1 + $0xf0] sm:$0xff]
  %v47 = vld [vmem:[%s1 + $0xf8] sm:$0xff]
  %v48 = vld [vmem:[%s2] sm:$0x3]
  %v50 = vlaneseq
  %v51 = vshrl.u32 %v50, 7
  %v52 = vsub.s32 0, %v51
  %v53 = vrot.slane %v48, %v52
  %v54 = vlaneseq
  %v55 = vshrl.u32 %v54, 7
  %v56 = vsub.s32 1, %v55
  %v57 = vrot.slane %v48, %v56
  %60 = vmatprep.subr.mxu0 %v17
  %61 = vmatpush1.msra.mxu0 %v16
  %62 = vmatprep.subr.mxu0 %v19
  %63 = vmatpush1.msra.mxu0 %v18
  %64 = vmatprep.subr.mxu0 %v21
  %65 = vmatpush1.msra.mxu0 %v20
  %66 = vmatprep.subr.mxu0 %v23
  %67 = vmatpush1.msra.mxu0 %v22
  %68 = vmatprep.subr.mxu0 %v25
  %69 = vmatpush1.msra.mxu0 %v24
  %70 = vmatprep.subr.mxu0 %v27
  %71 = vmatpush1.msra.mxu0 %v26
  %72 = vmatprep.subr.mxu0 %v29
  %73 = vmatpush1.msra.mxu0 %v28
  %74 = vmatprep.subr.mxu0 %v31
  %75 = vmatpush1.msra.mxu0 %v30
  %76 = vmatprep.subr.mxu0 %v33
  %77 = vmatpush1.msra.mxu0 %v32
  %78 = vmatprep.subr.mxu0 %v35
  %79 = vmatpush1.msra.mxu0 %v34
  %80 = vmatprep.subr.mxu0 %v37
  %81 = vmatpush1.msra.mxu0 %v36
  %82 = vmatprep.subr.mxu0 %v39
  %83 = vmatpush1.msra.mxu0 %v38
  %84 = vmatprep.subr.mxu0 %v41
  %85 = vmatpush1.msra.mxu0 %v40
  %86 = vmatprep.subr.mxu0 %v43
  %87 = vmatpush1.msra.mxu0 %v42
  %88 = vmatprep.subr.mxu0 %v45
  %89 = vmatpush1.msra.mxu0 %v44
  %90 = vmatprep.subr.mxu0 %v47
  %91 = vmatpush1.msra.mxu0 %v46
  %92 = vmatprep.subr.mxu0 0.0
  %93 = vmatpush1.msra.mxu0 0.0
  %94 = vmatprep.subr.mxu0 0.0
  %95 = vmatpush1.msra.mxu0 0.0
  %96 = vmatprep.subr.mxu0 0.0
  %97 = vmatpush1.msra.mxu0 0.0
  %98 = vmatprep.subr.mxu0 0.0
  %99 = vmatpush1.msra.mxu0 0.0
  %100 = vmatprep.subr.mxu0 0.0
  %101 = vmatpush1.msra.mxu0 0.0
  %102 = vmatprep.subr.mxu0 0.0
  %103 = vmatpush1.msra.mxu0 0.0
  %104 = vmatprep.subr.mxu0 0.0
  %105 = vmatpush1.msra.mxu0 0.0
  %106 = vmatprep.subr.mxu0 0.0
  %107 = vmatpush1.msra.mxu0 0.0
  %108 = vmatprep.subr.mxu0 0.0
  %109 = vmatpush1.msra.mxu0 0.0
  %110 = vmatprep.subr.mxu0 0.0
  %111 = vmatpush1.msra.mxu0 0.0
  %112 = vmatprep.subr.mxu0 0.0
  %113 = vmatpush1.msra.mxu0 0.0
  %114 = vmatprep.subr.mxu0 0.0
  %115 = vmatpush1.msra.mxu0 0.0
  %116 = vmatprep.subr.mxu0 0.0
  %117 = vmatpush1.msra.mxu0 0.0
  %118 = vmatprep.subr.mxu0 0.0
  %119 = vmatpush1.msra.mxu0 0.0
  %120 = vmatprep.subr.mxu0 0.0
  %121 = vmatpush1.msra.mxu0 0.0
  %122 = vmatprep.subr.mxu0 0.0
  %123 = vmatpush1.msra.mxu0 0.0
  %124 = vmatprep.mubr.f32.mxu0 0.0
  %125 = vmatmul.mubr.f32.gmra.mrb[0].mxu0 %v14
  %v126 = vpop.f32.mrb[0].mxu0
  %v127 = vadd.f32 %v53, %v126
  %v128 = vpop.f32.mrb[0].mxu0
  %v129 = vadd.f32 %v57, %v128
  %130 = vmatprep.mubr.f32.mxu0 0.0
  %131 = vmatmul.mubr.f32.gmra.mrb[0].mxu0 %v15
  %v132 = vpop.f32.mrb[0].mxu0
  %v133 = vadd.f32 %v53, %v132
  %v134 = vpop.f32.mrb[0].mxu0
  %v135 = vadd.f32 %v57, %v134
  %136 = vdwg.mxu0
  %137 = vst [vmem:[%s3] sm:$0xff] %v127
  %138 = vst [vmem:[%s3 + $0x8] sm:$0xff] %v129
  %139 = vst [vmem:[%s3 + $0x10] sm:$0xff] %v133
  %140 = vst [vmem:[%s3 + $0x18] sm:$0xff] %v135
  // Predicated region
  $region14: #{forward.30} parent=0 // pred_check
    _
  $region15: #{forward.30} parent=0 // pred_check_branch
    %142 = sbr.rel (0) target = $region17
  $region16: #{forward.30} parent=0 // pred_region
    _
  $region17: #{forward.30} parent=0 // pred_fallthru
    _
  // Predicated region
  $region18: #{forward.30} parent=0 // pred_check
    _
  $region19: #{forward.30} parent=0 // pred_check_branch
    %144 = sbr.rel (0) target = $region21
  $region20: #{forward.30} parent=0 // pred_region
    _
  $region21: #{forward.30} parent=0 // pred_fallthru
    _

// kernel: forward.34
$region0: #{forward.34}
  #allocation0 [shape = 'u32[]', space=smem, size = 0x4, offset = 0x4, fixed_abs, tag = 'smem constant byte address 0x4 - core index']
  #allocation1 [shape = 'u32[144,128]{1,0:T(1,128)}', space=vmem, size = 0x12000, scoped, tag = 'internal scratch']
  %s0 = inlined_call_operand.vmem [shape: f32[16,512], index: 0, kind: input, shape index: {}]
  %s1 = inlined_call_operand.vmem [shape: f32[512,128], index: 1, kind: input, shape index: {}]
  %s2 = inlined_call_operand.vmem [shape: f32[1,128], index: 2, kind: input, shape index: {}]
  %s3 = inlined_call_operand.vmem [shape: f32[16,128], index: 3, kind: input, shape index: {}]
  %s4 = inlined_call_operand.vmem [shape: f32[1,128], index: 4, kind: input, shape index: {}]
  %s5 = inlined_call_operand.vmem [shape: f32[1,128], index: 5, kind: input, shape index: {}]
  %s6 = inlined_call_operand.vmem [shape: f32[16,128], index: 6, kind: output, shape index: {}]
  %s7 = sld [smem:[#allocation0]]
  $region34: #{forward.34} parent=0
    _
  %s9 = ssub.s32 1, %s7
  %s10 = scalar_select 0, %s9, %s7
  // Predicated region
  $region2: #{forward.34} parent=0 // pred_check
    _
  $region3: #{forward.34} parent=0 // pred_check_branch
    %12 = sbr.rel (0) target = $region5
  $region4: #{forward.34} parent=0 // pred_region
    _
  $region5: #{forward.34} parent=0 // pred_fallthru
    _
  // Predicated region
  $region6: #{forward.34} parent=0 // pred_check
    _
  $region7: #{forward.34} parent=0 // pred_check_branch
    %14 = sbr.rel (0) target = $region9
  $region8: #{forward.34} parent=0 // pred_region
    _
  $region9: #{forward.34} parent=0 // pred_fallthru
    _
  // Predicated region
  $region10: #{forward.34} parent=0 // pred_check
    _
  $region11: #{forward.34} parent=0 // pred_check_branch
    %16 = sbr.rel (0) target = $region13
  $region12: #{forward.34} parent=0 // pred_region
    _
  $region13: #{forward.34} parent=0 // pred_fallthru
    _
  // Predicated region
  $region14: #{forward.34} parent=0 // pred_check
    _
  $region15: #{forward.34} parent=0 // pred_check_branch
    %18 = sbr.rel (0) target = $region17
  $region16: #{forward.34} parent=0 // pred_region
    _
  $region17: #{forward.34} parent=0 // pred_fallthru
    _
  // Predicated region
  $region18: #{forward.34} parent=0 // pred_check
    _
  $region19: #{forward.34} parent=0 // pred_check_branch
    %20 = sbr.rel (0) target = $region21
  $region20: #{forward.34} parent=0 // pred_region
    _
  $region21: #{forward.34} parent=0 // pred_fallthru
    _
  // Predicated region
  $region22: #{forward.34} parent=0 // pred_check
    _
  $region23: #{forward.34} parent=0 // pred_check_branch
    %22 = sbr.rel (0) target = $region25
  $region24: #{forward.34} parent=0 // pred_region
    _
  $region25: #{forward.34} parent=0 // pred_fallthru
    _
  %v23 = vld [vmem:[%s0] sm:$0xff]
  %v24 = vld [vmem:[%s0 + $0x8] sm:$0xff]
  %v25 = vld [vmem:[%s0 + $0x10] sm:$0xff]
  %v26 = vld [vmem:[%s0 + $0x18] sm:$0xff]
  %v27 = vld [vmem:[%s0 + $0x20] sm:$0xff]
  %v28 = vld [vmem:[%s0 + $0x28] sm:$0xff]
  %v29 = vld [vmem:[%s0 + $0x30] sm:$0xff]
  %v30 = vld [vmem:[%s0 + $0x38] sm:$0xff]
  %v31 = vld [vmem:[%s1] sm:$0xff]
  %v32 = vld [vmem:[%s1 + $0x8] sm:$0xff]
  %v33 = vld [vmem:[%s1 + $0x10] sm:$0xff]
  %v34 = vld [vmem:[%s1 + $0x18] sm:$0xff]
  %v35 = vld [vmem:[%s1 + $0x20] sm:$0xff]
  %v36 = vld [vmem:[%s1 + $0x28] sm:$0xff]
  %v37 = vld [vmem:[%s1 + $0x30] sm:$0xff]
  %v38 = vld [vmem:[%s1 + $0x38] sm:$0xff]
  %v39 = vld [vmem:[%s1 + $0x40] sm:$0xff]
  %v40 = vld [vmem:[%s1 + $0x48] sm:$0xff]
  %v41 = vld [vmem:[%s1 + $0x50] sm:$0xff]
  %v42 = vld [vmem:[%s1 + $0x58] sm:$0xff]
  %v43 = vld [vmem:[%s1 + $0x60] sm:$0xff]
  %v44 = vld [vmem:[%s1 + $0x68] sm:$0xff]
  %v45 = vld [vmem:[%s1 + $0x70] sm:$0xff]
  %v46 = vld [vmem:[%s1 + $0x78] sm:$0xff]
  %v47 = vld [vmem:[%s1 + $0x80] sm:$0xff]
  %v48 = vld [vmem:[%s1 + $0x88] sm:$0xff]
  %v49 = vld [vmem:[%s1 + $0x90] sm:$0xff]
  %v50 = vld [vmem:[%s1 + $0x98] sm:$0xff]
  %v51 = vld [vmem:[%s1 + $0xa0] sm:$0xff]
  %v52 = vld [vmem:[%s1 + $0xa8] sm:$0xff]
  %v53 = vld [vmem:[%s1 + $0xb0] sm:$0xff]
  %v54 = vld [vmem:[%s1 + $0xb8] sm:$0xff]
  %v55 = vld [vmem:[%s1 + $0xc0] sm:$0xff]
  %v56 = vld [vmem:[%s1 + $0xc8] sm:$0xff]
  %v57 = vld [vmem:[%s1 + $0xd0] sm:$0xff]
  %v58 = vld [vmem:[%s1 + $0xd8] sm:$0xff]
  %v59 = vld [vmem:[%s1 + $0xe0] sm:$0xff]
  %v60 = vld [vmem:[%s1 + $0xe8] sm:$0xff]
  %v61 = vld [vmem:[%s1 + $0xf0] sm:$0xff]
  %v62 = vld [vmem:[%s1 + $0xf8] sm:$0xff]
  %v63 = vld [vmem:[%s1 + $0x100] sm:$0xff]
  %v64 = vld [vmem:[%s1 + $0x108] sm:$0xff]
  %v65 = vld [vmem:[%s1 + $0x110] sm:$0xff]
  %v66 = vld [vmem:[%s1 + $0x118] sm:$0xff]
  %v67 = vld [vmem:[%s1 + $0x120] sm:$0xff]
  %v68 = vld [vmem:[%s1 + $0x128] sm:$0xff]
  %v69 = vld [vmem:[%s1 + $0x130] sm:$0xff]
  %v70 = vld [vmem:[%s1 + $0x138] sm:$0xff]
  %v71 = vld [vmem:[%s1 + $0x140] sm:$0xff]
  %v72 = vld [vmem:[%s1 + $0x148] sm:$0xff]
  %v73 = vld [vmem:[%s1 + $0x150] sm:$0xff]
  %v74 = vld [vmem:[%s1 + $0x158] sm:$0xff]
  %v75 = vld [vmem:[%s1 + $0x160] sm:$0xff]
  %v76 = vld [vmem:[%s1 + $0x168] sm:$0xff]
  %v77 = vld [vmem:[%s1 + $0x170] sm:$0xff]
  %v78 = vld [vmem:[%s1 + $0x178] sm:$0xff]
  %v79 = vld [vmem:[%s1 + $0x180] sm:$0xff]
  %v80 = vld [vmem:[%s1 + $0x188] sm:$0xff]
  %v81 = vld [vmem:[%s1 + $0x190] sm:$0xff]
  %v82 = vld [vmem:[%s1 + $0x198] sm:$0xff]
  %v83 = vld [vmem:[%s1 + $0x1a0] sm:$0xff]
  %v84 = vld [vmem:[%s1 + $0x1a8] sm:$0xff]
  %v85 = vld [vmem:[%s1 + $0x1b0] sm:$0xff]
  %v86 = vld [vmem:[%s1 + $0x1b8] sm:$0xff]
  %v87 = vld [vmem:[%s1 + $0x1c0] sm:$0xff]
  %v88 = vld [vmem:[%s1 + $0x1c8] sm:$0xff]
  %v89 = vld [vmem:[%s1 + $0x1d0] sm:$0xff]
  %v90 = vld [vmem:[%s1 + $0x1d8] sm:$0xff]
  %v91 = vld [vmem:[%s1 + $0x1e0] sm:$0xff]
  %v92 = vld [vmem:[%s1 + $0x1e8] sm:$0xff]
  %v93 = vld [vmem:[%s1 + $0x1f0] sm:$0xff]
  %v94 = vld [vmem:[%s1 + $0x1f8] sm:$0xff]
  %v95 = vld [vmem:[%s2] sm:$0x1]
  %v97 = vlaneseq
  %v98 = vshrl.u32 %v97, 7
  %v99 = vsub.s32 0, %v98
  %v100 = vrot.slane %v95, %v99
  %102 = vmatprep.subr.mxu0 0.0
  %103 = vmatpush1.msra.mxu0 %v31
  %104 = vmatprep.subr.mxu0 0.0
  %105 = vmatpush1.msra.mxu0 %v32
  %106 = vmatprep.subr.mxu0 0.0
  %107 = vmatpush1.msra.mxu0 %v33
  %108 = vmatprep.subr.mxu0 0.0
  %109 = vmatpush1.msra.mxu0 %v34
  %110 = vmatprep.subr.mxu0 0.0
  %111 = vmatpush1.msra.mxu0 %v35
  %112 = vmatprep.subr.mxu0 0.0
  %113 = vmatpush1.msra.mxu0 %v36
  %114 = vmatprep.subr.mxu0 0.0
  %115 = vmatpush1.msra.mxu0 %v37
  %116 = vmatprep.subr.mxu0 0.0
  %117 = vmatpush1.msra.mxu0 %v38
  %118 = vmatprep.subr.mxu0 0.0
  %119 = vmatpush1.msra.mxu0 %v39
  %120 = vmatprep.subr.mxu0 0.0
  %121 = vmatpush1.msra.mxu0 %v40
  %122 = vmatprep.subr.mxu0 0.0
  %123 = vmatpush1.msra.mxu0 %v41
  %124 = vmatprep.subr.mxu0 0.0
  %125 = vmatpush1.msra.mxu0 %v42
  %126 = vmatprep.subr.mxu0 0.0
  %127 = vmatpush1.msra.mxu0 %v43
  %128 = vmatprep.subr.mxu0 0.0
  %129 = vmatpush1.msra.mxu0 %v44
  %130 = vmatprep.subr.mxu0 0.0
  %131 = vmatpush1.msra.mxu0 %v45
  %132 = vmatprep.subr.mxu0 0.0
  %133 = vmatpush1.msra.mxu0 %v46
  %134 = vmatprep.subr.mxu0 0.0
  %135 = vmatpush1.msra.mxu0 %v47
  %136 = vmatprep.subr.mxu0 0.0
  %137 = vmatpush1.msra.mxu0 %v48
  %138 = vmatprep.subr.mxu0 0.0
  %139 = vmatpush1.msra.mxu0 %v49
  %140 = vmatprep.subr.mxu0 0.0
  %141 = vmatpush1.msra.mxu0 %v50
  %142 = vmatprep.subr.mxu0 0.0
  %143 = vmatpush1.msra.mxu0 %v51
  %144 = vmatprep.subr.mxu0 0.0
  %145 = vmatpush1.msra.mxu0 %v52
  %146 = vmatprep.subr.mxu0 0.0
  %147 = vmatpush1.msra.mxu0 %v53
  %148 = vmatprep.subr.mxu0 0.0
  %149 = vmatpush1.msra.mxu0 %v54
  %150 = vmatprep.subr.mxu0 0.0
  %151 = vmatpush1.msra.mxu0 %v55
  %152 = vmatprep.subr.mxu0 0.0
  %153 = vmatpush1.msra.mxu0 %v56
  %154 = vmatprep.subr.mxu0 0.0
  %155 = vmatpush1.msra.mxu0 %v57
  %156 = vmatprep.subr.mxu0 0.0
  %157 = vmatpush1.msra.mxu0 %v58
  %158 = vmatprep.subr.mxu0 0.0
  %159 = vmatpush1.msra.mxu0 %v59
  %160 = vmatprep.subr.mxu0 0.0
  %161 = vmatpush1.msra.mxu0 %v60
  %162 = vmatprep.subr.mxu0 0.0
  %163 = vmatpush1.msra.mxu0 %v61
  %164 = vmatprep.subr.mxu0 0.0
  %165 = vmatpush1.msra.mxu0 %v62
  %166 = vmatprep.mubr.f32.mxu0 %v24
  %167 = vmatmul.mubr.f32.gmra.mrb[0].mxu0 %v23
  %v168 = vpop.f32.mrb[0].mxu0
  %v169 = vadd.f32 %v100, %v168
  %v170 = vpop.f32.mrb[0].mxu0
  %171 = vmatprep.mubr.f32.mxu0 %v28
  %172 = vmatmul.mubr.f32.gmra.mrb[0].mxu0 %v27
  %v173 = vpop.f32.mrb[0].mxu0
  %v174 = vadd.f32 %v100, %v173
  %v175 = vpop.f32.mrb[0].mxu0
  %176 = vdwg.mxu0
  %177 = vmatprep.subr.mxu0 0.0
  %178 = vmatpush1.msra.mxu0 %v63
  %179 = vmatprep.subr.mxu0 0.0
  %180 = vmatpush1.msra.mxu0 %v64
  %181 = vmatprep.subr.mxu0 0.0
  %182 = vmatpush1.msra.mxu0 %v65
  %183 = vmatprep.subr.mxu0 0.0
  %184 = vmatpush1.msra.mxu0 %v66
  %185 = vmatprep.subr.mxu0 0.0
  %186 = vmatpush1.msra.mxu0 %v67
  %187 = vmatprep.subr.mxu0 0.0
  %188 = vmatpush1.msra.mxu0 %v68
  %189 = vmatprep.subr.mxu0 0.0
  %190 = vmatpush1.msra.mxu0 %v69
  %191 = vmatprep.subr.mxu0 0.0
  %192 = vmatpush1.msra.mxu0 %v70
  %193 = vmatprep.subr.mxu0 0.0
  %194 = vmatpush1.msra.mxu0 %v71
  %195 = vmatprep.subr.mxu0 0.0
  %196 = vmatpush1.msra.mxu0 %v72
  %197 = vmatprep.subr.mxu0 0.0
  %198 = vmatpush1.msra.mxu0 %v73
  %199 = vmatprep.subr.mxu0 0.0
  %200 = vmatpush1.msra.mxu0 %v74
  %201 = vmatprep.subr.mxu0 0.0
  %202 = vmatpush1.msra.mxu0 %v75
  %203 = vmatprep.subr.mxu0 0.0
  %204 = vmatpush1.msra.mxu0 %v76
  %205 = vmatprep.subr.mxu0 0.0
  %206 = vmatpush1.msra.mxu0 %v77
  %207 = vmatprep.subr.mxu0 0.0
  %208 = vmatpush1.msra.mxu0 %v78
  %209 = vmatprep.subr.mxu0 0.0
  %210 = vmatpush1.msra.mxu0 %v79
  %211 = vmatprep.subr.mxu0 0.0
  %212 = vmatpush1.msra.mxu0 %v80
  %213 = vmatprep.subr.mxu0 0.0
  %214 = vmatpush1.msra.mxu0 %v81
  %215 = vmatprep.subr.mxu0 0.0
  %216 = vmatpush1.msra.mxu0 %v82
  %217 = vmatprep.subr.mxu0 0.0
  %218 = vmatpush1.msra.mxu0 %v83
  %219 = vmatprep.subr.mxu0 0.0
  %220 = vmatpush1.msra.mxu0 %v84
  %221 = vmatprep.subr.mxu0 0.0
  %222 = vmatpush1.msra.mxu0 %v85
  %223 = vmatprep.subr.mxu0 0.0
  %224 = vmatpush1.msra.mxu0 %v86
  %225 = vmatprep.subr.mxu0 0.0
  %226 = vmatpush1.msra.mxu0 %v87
  %227 = vmatprep.subr.mxu0 0.0
  %228 = vmatpush1.msra.mxu0 %v88
  %229 = vmatprep.subr.mxu0 0.0
  %230 = vmatpush1.msra.mxu0 %v89
  %231 = vmatprep.subr.mxu0 0.0
  %232 = vmatpush1.msra.mxu0 %v90
  %233 = vmatprep.subr.mxu0 0.0
  %234 = vmatpush1.msra.mxu0 %v91
  %235 = vmatprep.subr.mxu0 0.0
  %236 = vmatpush1.msra.mxu0 %v92
  %237 = vmatprep.subr.mxu0 0.0
  %238 = vmatpush1.msra.mxu0 %v93
  %239 = vmatprep.subr.mxu0 0.0
  %240 = vmatpush1.msra.mxu0 %v94
  %241 = vmatprep.mubr.f32.mxu0 %v26
  %242 = vmatmul.mubr.f32.gmra.mrb[0].mxu0 %v25
  %v243 = vpop.f32.mrb[0].mxu0
  %v244 = vadd.f32 %v169, %v243
  %v245 = vpop.f32.mrb[0].mxu0
  %246 = vmatprep.mubr.f32.mxu0 %v30
  %247 = vmatmul.mubr.f32.gmra.mrb[0].mxu0 %v29
  %v248 = vpop.f32.mrb[0].mxu0
  %v249 = vadd.f32 %v174, %v248
  %v250 = vpop.f32.mrb[0].mxu0
  %251 = vdwg.mxu0
  %v252 = vld [vmem:[%s3] sm:$0xff]
  %v253 = vld [vmem:[%s3 + $0x8] sm:$0xff]
  %v254 = vadd.f32 %v244, %v252
  %v255 = vadd.f32 %v249, %v253
  %256 = vadd.xlane.f32.xlu0 %v254
  %v257 = vpop.xlane.xlu0 %256
  %258 = vadd.xlane.f32.xlu0 %v255
  %v259 = vpop.xlane.xlu0 %258
  %v260 = vrcp.pop 128.0
  %v261 = vmul.f32 %v257, %v260
  %v262 = vmul.f32 %v259, %v260
  %v263 = vsub.f32 %v254, %v261
  %v264 = vsub.f32 %v255, %v262
  %v265 = vmul.f32 %v263, %v263
  %v266 = vmul.f32 %v264, %v264
  %267 = vadd.xlane.f32.xlu0 %v265
  %v268 = vpop.xlane.xlu0 %267
  %269 = vadd.xlane.f32.xlu0 %v266
  %v270 = vpop.xlane.xlu0 %269
  %v271 = vmul.f32 %v268, %v260
  %v272 = vmul.f32 %v270, %v260
  %v273 = vadd.f32 %v271, 1e-05
  %v274 = vadd.f32 %v272, 1e-05
  %v275 = vrsqrt.pop %v273
  %v276 = vrsqrt.pop %v274
  %v277 = vmul.f32 %v263, %v275
  %v278 = vmul.f32 %v264, %v276
  %v279 = vld [vmem:[%s4] sm:$0x1]
  %v281 = vlaneseq
  %v282 = vshrl.u32 %v281, 7
  %v283 = vsub.s32 0, %v282
  %v284 = vrot.slane %v279, %v283
  %v286 = vmul.f32 %v277, %v284
  %v287 = vmul.f32 %v278, %v284
  %v288 = vld [vmem:[%s5] sm:$0x1]
  %v290 = vlaneseq
  %v291 = vshrl.u32 %v290, 7
  %v292 = vsub.s32 0, %v291
  %v293 = vrot.slane %v288, %v292
  %v295 = vadd.f32 %v286, %v293
  %v296 = vadd.f32 %v287, %v293
  %297 = vst [vmem:[%s6] sm:$0xff] %v295
  %298 = vst [vmem:[%s6 + $0x8] sm:$0xff] %v296
  // Predicated region
  $region26: #{forward.34} parent=0 // pred_check
    _
  $region27: #{forward.34} parent=0 // pred_check_branch
    %300 = sbr.rel (0) target = $region29
  $region28: #{forward.34} parent=0 // pred_region
    _
  $region29: #{forward.34} parent=0 // pred_fallthru
    _
  // Predicated region
  $region30: #{forward.34} parent=0 // pred_check
    _
  $region31: #{forward.34} parent=0 // pred_check_branch
    %302 = sbr.rel (0) target = $region33
  $region32: #{forward.34} parent=0 // pred_region
    _
  $region33: #{forward.34} parent=0 // pred_fallthru
    _

// kernel: forward.33
$region0: #{forward.33}
  #allocation0 [shape = 'u32[]', space=smem, size = 0x4, offset = 0x4, fixed_abs, tag = 'smem constant byte address 0x4 - core index']
  #allocation1 [shape = 'u32[144,128]{1,0:T(1,128)}', space=vmem, size = 0x12000, scoped, tag = 'internal scratch']
  %s0 = inlined_call_operand.vmem [shape: f32[16,128], index: 0, kind: input, shape index: {}]
  %s1 = inlined_call_operand.vmem [shape: f32[128,512], index: 1, kind: input, shape index: {}]
  %s2 = inlined_call_operand.vmem [shape: f32[1,512], index: 2, kind: input, shape index: {}]
  %s3 = inlined_call_operand.vmem [shape: f32[16,512], index: 3, kind: output, shape index: {}]
  %s4 = sld [smem:[#allocation0]]
  $region22: #{forward.33} parent=0
    _
  %s6 = ssub.s32 1, %s4
  %s7 = scalar_select 0, %s6, %s4
  // Predicated region
  $region2: #{forward.33} parent=0 // pred_check
    _
  $region3: #{forward.33} parent=0 // pred_check_branch
    %9 = sbr.rel (0) target = $region5
  $region4: #{forward.33} parent=0 // pred_region
    _
  $region5: #{forward.33} parent=0 // pred_fallthru
    _
  // Predicated region
  $region6: #{forward.33} parent=0 // pred_check
    _
  $region7: #{forward.33} parent=0 // pred_check_branch
    %11 = sbr.rel (0) target = $region9
  $region8: #{forward.33} parent=0 // pred_region
    _
  $region9: #{forward.33} parent=0 // pred_fallthru
    _
  // Predicated region
  $region10: #{forward.33} parent=0 // pred_check
    _
  $region11: #{forward.33} parent=0 // pred_check_branch
    %13 = sbr.rel (0) target = $region13
  $region12: #{forward.33} parent=0 // pred_region
    _
  $region13: #{forward.33} parent=0 // pred_fallthru
    _
  %v14 = vld [vmem:[%s0] sm:$0xff]
  %v15 = vld [vmem:[%s0 + $0x8] sm:$0xff]
  %v16 = vld [vmem:[%s1] sm:$0xff]
  %v17 = vld [vmem:[%s1 + $0x8] sm:$0xff]
  %v18 = vld [vmem:[%s1 + $0x10] sm:$0xff]
  %v19 = vld [vmem:[%s1 + $0x18] sm:$0xff]
  %v20 = vld [vmem:[%s1 + $0x20] sm:$0xff]
  %v21 = vld [vmem:[%s1 + $0x28] sm:$0xff]
  %v22 = vld [vmem:[%s1 + $0x30] sm:$0xff]
  %v23 = vld [vmem:[%s1 + $0x38] sm:$0xff]
  %v24 = vld [vmem:[%s1 + $0x40] sm:$0xff]
  %v25 = vld [vmem:[%s1 + $0x48] sm:$0xff]
  %v26 = vld [vmem:[%s1 + $0x50] sm:$0xff]
  %v27 = vld [vmem:[%s1 + $0x58] sm:$0xff]
  %v28 = vld [vmem:[%s1 + $0x60] sm:$0xff]
  %v29 = vld [vmem:[%s1 + $0x68] sm:$0xff]
  %v30 = vld [vmem:[%s1 + $0x70] sm:$0xff]
  %v31 = vld [vmem:[%s1 + $0x78] sm:$0xff]
  %v32 = vld [vmem:[%s1 + $0x80] sm:$0xff]
  %v33 = vld [vmem:[%s1 + $0x88] sm:$0xff]
  %v34 = vld [vmem:[%s1 + $0x90] sm:$0xff]
  %v35 = vld [vmem:[%s1 + $0x98] sm:$0xff]
  %v36 = vld [vmem:[%s1 + $0xa0] sm:$0xff]
  %v37 = vld [vmem:[%s1 + $0xa8] sm:$0xff]
  %v38 = vld [vmem:[%s1 + $0xb0] sm:$0xff]
  %v39 = vld [vmem:[%s1 + $0xb8] sm:$0xff]
  %v40 = vld [vmem:[%s1 + $0xc0] sm:$0xff]
  %v41 = vld [vmem:[%s1 + $0xc8] sm:$0xff]
  %v42 = vld [vmem:[%s1 + $0xd0] sm:$0xff]
  %v43 = vld [vmem:[%s1 + $0xd8] sm:$0xff]
  %v44 = vld [vmem:[%s1 + $0xe0] sm:$0xff]
  %v45 = vld [vmem:[%s1 + $0xe8] sm:$0xff]
  %v46 = vld [vmem:[%s1 + $0xf0] sm:$0xff]
  %v47 = vld [vmem:[%s1 + $0xf8] sm:$0xff]
  %v48 = vld [vmem:[%s1 + $0x100] sm:$0xff]
  %v49 = vld [vmem:[%s1 + $0x108] sm:$0xff]
  %v50 = vld [vmem:[%s1 + $0x110] sm:$0xff]
  %v51 = vld [vmem:[%s1 + $0x118] sm:$0xff]
  %v52 = vld [vmem:[%s1 + $0x120] sm:$0xff]
  %v53 = vld [vmem:[%s1 + $0x128] sm:$0xff]
  %v54 = vld [vmem:[%s1 + $0x130] sm:$0xff]
  %v55 = vld [vmem:[%s1 + $0x138] sm:$0xff]
  %v56 = vld [vmem:[%s1 + $0x140] sm:$0xff]
  %v57 = vld [vmem:[%s1 + $0x148] sm:$0xff]
  %v58 = vld [vmem:[%s1 + $0x150] sm:$0xff]
  %v59 = vld [vmem:[%s1 + $0x158] sm:$0xff]
  %v60 = vld [vmem:[%s1 + $0x160] sm:$0xff]
  %v61 = vld [vmem:[%s1 + $0x168] sm:$0xff]
  %v62 = vld [vmem:[%s1 + $0x170] sm:$0xff]
  %v63 = vld [vmem:[%s1 + $0x178] sm:$0xff]
  %v64 = vld [vmem:[%s1 + $0x180] sm:$0xff]
  %v65 = vld [vmem:[%s1 + $0x188] sm:$0xff]
  %v66 = vld [vmem:[%s1 + $0x190] sm:$0xff]
  %v67 = vld [vmem:[%s1 + $0x198] sm:$0xff]
  %v68 = vld [vmem:[%s1 + $0x1a0] sm:$0xff]
  %v69 = vld [vmem:[%s1 + $0x1a8] sm:$0xff]
  %v70 = vld [vmem:[%s1 + $0x1b0] sm:$0xff]
  %v71 = vld [vmem:[%s1 + $0x1b8] sm:$0xff]
  %v72 = vld [vmem:[%s1 + $0x1c0] sm:$0xff]
  %v73 = vld [vmem:[%s1 + $0x1c8] sm:$0xff]
  %v74 = vld [vmem:[%s1 + $0x1d0] sm:$0xff]
  %v75 = vld [vmem:[%s1 + $0x1d8] sm:$0xff]
  %v76 = vld [vmem:[%s1 + $0x1e0] sm:$0xff]
  %v77 = vld [vmem:[%s1 + $0x1e8] sm:$0xff]
  %v78 = vld [vmem:[%s1 + $0x1f0] sm:$0xff]
  %v79 = vld [vmem:[%s1 + $0x1f8] sm:$0xff]
  %v80 = vld [vmem:[%s2] sm:$0xf]
  %v82 = vlaneseq
  %v83 = vshrl.u32 %v82, 7
  %v84 = vsub.s32 0, %v83
  %v85 = vrot.slane %v80, %v84
  %v86 = vlaneseq
  %v87 = vshrl.u32 %v86, 7
  %v88 = vsub.s32 1, %v87
  %v89 = vrot.slane %v80, %v88
  %v90 = vlaneseq
  %v91 = vshrl.u32 %v90, 7
  %v92 = vsub.s32 2, %v91
  %v93 = vrot.slane %v80, %v92
  %v94 = vlaneseq
  %v95 = vshrl.u32 %v94, 7
  %v96 = vsub.s32 3, %v95
  %v97 = vrot.slane %v80, %v96
  %102 = vmatprep.subr.mxu0 %v17
  %103 = vmatpush1.msra.mxu0 %v16
  %104 = vmatprep.subr.mxu0 %v21
  %105 = vmatpush1.msra.mxu0 %v20
  %106 = vmatprep.subr.mxu0 %v25
  %107 = vmatpush1.msra.mxu0 %v24
  %108 = vmatprep.subr.mxu0 %v29
  %109 = vmatpush1.msra.mxu0 %v28
  %110 = vmatprep.subr.mxu0 %v33
  %111 = vmatpush1.msra.mxu0 %v32
  %112 = vmatprep.subr.mxu0 %v37
  %113 = vmatpush1.msra.mxu0 %v36
  %114 = vmatprep.subr.mxu0 %v41
  %115 = vmatpush1.msra.mxu0 %v40
  %116 = vmatprep.subr.mxu0 %v45
  %117 = vmatpush1.msra.mxu0 %v44
  %118 = vmatprep.subr.mxu0 %v49
  %119 = vmatpush1.msra.mxu0 %v48
  %120 = vmatprep.subr.mxu0 %v53
  %121 = vmatpush1.msra.mxu0 %v52
  %122 = vmatprep.subr.mxu0 %v57
  %123 = vmatpush1.msra.mxu0 %v56
  %124 = vmatprep.subr.mxu0 %v61
  %125 = vmatpush1.msra.mxu0 %v60
  %126 = vmatprep.subr.mxu0 %v65
  %127 = vmatpush1.msra.mxu0 %v64
  %128 = vmatprep.subr.mxu0 %v69
  %129 = vmatpush1.msra.mxu0 %v68
  %130 = vmatprep.subr.mxu0 %v73
  %131 = vmatpush1.msra.mxu0 %v72
  %132 = vmatprep.subr.mxu0 %v77
  %133 = vmatpush1.msra.mxu0 %v76
  %134 = vmatprep.subr.mxu0 0.0
  %135 = vmatpush1.msra.mxu0 0.0
  %136 = vmatprep.subr.mxu0 0.0
  %137 = vmatpush1.msra.mxu0 0.0
  %138 = vmatprep.subr.mxu0 0.0
  %139 = vmatpush1.msra.mxu0 0.0
  %140 = vmatprep.subr.mxu0 0.0
  %141 = vmatpush1.msra.mxu0 0.0
  %142 = vmatprep.subr.mxu0 0.0
  %143 = vmatpush1.msra.mxu0 0.0
  %144 = vmatprep.subr.mxu0 0.0
  %145 = vmatpush1.msra.mxu0 0.0
  %146 = vmatprep.subr.mxu0 0.0
  %147 = vmatpush1.msra.mxu0 0.0
  %148 = vmatprep.subr.mxu0 0.0
  %149 = vmatpush1.msra.mxu0 0.0
  %150 = vmatprep.subr.mxu0 0.0
  %151 = vmatpush1.msra.mxu0 0.0
  %152 = vmatprep.subr.mxu0 0.0
  %153 = vmatpush1.msra.mxu0 0.0
  %154 = vmatprep.subr.mxu0 0.0
  %155 = vmatpush1.msra.mxu0 0.0
  %156 = vmatprep.subr.mxu0 0.0
  %157 = vmatpush1.msra.mxu0 0.0
  %158 = vmatprep.subr.mxu0 0.0
  %159 = vmatpush1.msra.mxu0 0.0
  %160 = vmatprep.subr.mxu0 0.0
  %161 = vmatpush1.msra.mxu0 0.0
  %162 = vmatprep.subr.mxu0 0.0
  %163 = vmatpush1.msra.mxu0 0.0
  %164 = vmatprep.subr.mxu0 0.0
  %165 = vmatpush1.msra.mxu0 0.0
  %166 = vmatprep.mubr.f32.mxu0 0.0
  %167 = vmatmul.mubr.f32.gmra.mrb[0].mxu0 %v14
  %v168 = vpop.f32.mrb[0].mxu0
  %v169 = vadd.f32 %v85, %v168
  %v170 = vpop.f32.mrb[0].mxu0
  %v171 = vadd.f32 %v89, %v170
  %172 = vmatprep.mubr.f32.mxu0 0.0
  %173 = vmatmul.mubr.f32.gmra.mrb[0].mxu0 %v15
  %v174 = vpop.f32.mrb[0].mxu0
  %v175 = vadd.f32 %v85, %v174
  %v176 = vpop.f32.mrb[0].mxu0
  %v177 = vadd.f32 %v89, %v176
  %178 = vdwg.mxu0
  %179 = vmatprep.subr.mxu0 %v19
  %180 = vmatpush1.msra.mxu0 %v18
  %181 = vmatprep.subr.mxu0 %v23
  %182 = vmatpush1.msra.mxu0 %v22
  %183 = vmatprep.subr.mxu0 %v27
  %184 = vmatpush1.msra.mxu0 %v26
  %185 = vmatprep.subr.mxu0 %v31
  %186 = vmatpush1.msra.mxu0 %v30
  %187 = vmatprep.subr.mxu0 %v35
  %188 = vmatpush1.msra.mxu0 %v34
  %189 = vmatprep.subr.mxu0 %v39
  %190 = vmatpush1.msra.mxu0 %v38
  %191 = vmatprep.subr.mxu0 %v43
  %192 = vmatpush1.msra.mxu0 %v42
  %193 = vmatprep.subr.mxu0 %v47
  %194 = vmatpush1.msra.mxu0 %v46
  %195 = vmatprep.subr.mxu0 %v51
  %196 = vmatpush1.msra.mxu0 %v50
  %197 = vmatprep.subr.mxu0 %v55
  %198 = vmatpush1.msra.mxu0 %v54
  %199 = vmatprep.subr.mxu0 %v59
  %200 = vmatpush1.msra.mxu0 %v58
  %201 = vmatprep.subr.mxu0 %v63
  %202 = vmatpush1.msra.mxu0 %v62
  %203 = vmatprep.subr.mxu0 %v67
  %204 = vmatpush1.msra.mxu0 %v66
  %205 = vmatprep.subr.mxu0 %v71
  %206 = vmatpush1.msra.mxu0 %v70
  %207 = vmatprep.subr.mxu0 %v75
  %208 = vmatpush1.msra.mxu0 %v74
  %209 = vmatprep.subr.mxu0 %v79
  %210 = vmatpush1.msra.mxu0 %v78
  %211 = vmatprep.subr.mxu0 0.0
  %212 = vmatpush1.msra.mxu0 0.0
  %213 = vmatprep.subr.mxu0 0.0
  %214 = vmatpush1.msra.mxu0 0.0
  %215 = vmatprep.subr.mxu0 0.0
  %216 = vmatpush1.msra.mxu0 0.0
  %217 = vmatprep.subr.mxu0 0.0
  %218 = vmatpush1.msra.mxu0 0.0
  %219 = vmatprep.subr.mxu0 0.0
  %220 = vmatpush1.msra.mxu0 0.0
  %221 = vmatprep.subr.mxu0 0.0
  %222 = vmatpush1.msra.mxu0 0.0
  %223 = vmatprep.subr.mxu0 0.0
  %224 = vmatpush1.msra.mxu0 0.0
  %225 = vmatprep.subr.mxu0 0.0
  %226 = vmatpush1.msra.mxu0 0.0
  %227 = vmatprep.subr.mxu0 0.0
  %228 = vmatpush1.msra.mxu0 0.0
  %229 = vmatprep.subr.mxu0 0.0
  %230 = vmatpush1.msra.mxu0 0.0
  %231 = vmatprep.subr.mxu0 0.0
  %232 = vmatpush1.msra.mxu0 0.0
  %233 = vmatprep.subr.mxu0 0.0
  %234 = vmatpush1.msra.mxu0 0.0
  %235 = vmatprep.subr.mxu0 0.0
  %236 = vmatpush1.msra.mxu0 0.0
  %237 = vmatprep.subr.mxu0 0.0
  %238 = vmatpush1.msra.mxu0 0.0
  %239 = vmatprep.subr.mxu0 0.0
  %240 = vmatpush1.msra.mxu0 0.0
  %241 = vmatprep.subr.mxu0 0.0
  %242 = vmatpush1.msra.mxu0 0.0
  %243 = vmatprep.mubr.f32.mxu0 0.0
  %244 = vmatmul.mubr.f32.gmra.mrb[0].mxu0 %v14
  %v245 = vpop.f32.mrb[0].mxu0
  %v246 = vadd.f32 %v93, %v245
  %v247 = vpop.f32.mrb[0].mxu0
  %v248 = vadd.f32 %v97, %v247
  %249 = vmatprep.mubr.f32.mxu0 0.0
  %250 = vmatmul.mubr.f32.gmra.mrb[0].mxu0 %v15
  %v251 = vpop.f32.mrb[0].mxu0
  %v252 = vadd.f32 %v93, %v251
  %v253 = vpop.f32.mrb[0].mxu0
  %v254 = vadd.f32 %v97, %v253
  %255 = vdwg.mxu0
  %v256 = vmax.f32 %v169, 0.0
  %v257 = vmax.f32 %v171, 0.0
  %v258 = vmax.f32 %v246, 0.0
  %v259 = vmax.f32 %v248, 0.0
  %v260 = vmax.f32 %v175, 0.0
  %v261 = vmax.f32 %v177, 0.0
  %v262 = vmax.f32 %v252, 0.0
  %v263 = vmax.f32 %v254, 0.0
  %264 = vst [vmem:[%s3] sm:$0xff] %v256
  %265 = vst [vmem:[%s3 + $0x8] sm:$0xff] %v257
  %266 = vst [vmem:[%s3 + $0x10] sm:$0xff] %v258
  %267 = vst [vmem:[%s3 + $0x18] sm:$0xff] %v259
  %268 = vst [vmem:[%s3 + $0x20] sm:$0xff] %v260
  %269 = vst [vmem:[%s3 + $0x28] sm:$0xff] %v261
  %270 = vst [vmem:[%s3 + $0x30] sm:$0xff] %v262
  %271 = vst [vmem:[%s3 + $0x38] sm:$0xff] %v263
  // Predicated region
  $region14: #{forward.33} parent=0 // pred_check
    _
  $region15: #{forward.33} parent=0 // pred_check_branch
    %273 = sbr.rel (0) target = $region17
  $region16: #{forward.33} parent=0 // pred_region
    _
  $region17: #{forward.33} parent=0 // pred_fallthru
    _
  // Predicated region
  $region18: #{forward.33} parent=0 // pred_check
    _
  $region19: #{forward.33} parent=0 // pred_check_branch
    %275 = sbr.rel (0) target = $region21
  $region20: #{forward.33} parent=0 // pred_region
    _
  $region21: #{forward.33} parent=0 // pred_fallthru
    _

// kernel: forward.44
$region0: #{forward.44}
  #allocation0 [shape = 'u32[]', space=smem, size = 0x4, offset = 0x4, fixed_abs, tag = 'smem constant byte address 0x4 - core index']
  #allocation1 [shape = 'u32[144,128]{1,0:T(1,128)}', space=vmem, size = 0x12000, scoped, tag = 'internal scratch']
  %s0 = inlined_call_operand.vmem [shape: f32[16,128], index: 0, kind: input, shape index: {}]
  %s1 = inlined_call_operand.vmem [shape: f32[128,52], index: 1, kind: input, shape index: {}]
  %s2 = inlined_call_operand.vmem [shape: f32[1,52], index: 2, kind: input, shape index: {}]
  %s3 = inlined_call_operand.hbm [shape: f32[16,52], index: 3, kind: output, shape index: {}]
  %s4 = sld [smem:[#allocation0]]
  $region22: #{forward.44} parent=0
    _
  %s6 = ssub.s32 1, %s4
  %s7 = scalar_select 0, %s6, %s4
  $region1: #{forward.44} parent=0
    #allocation2 [shape = 'u8[8192]{0}', space=vmem, size = 0x2000, scoped, tag = 'output window, operand 0, single buffered']
    #allocation3 [shape = 's32[1]{0}', space=sflag, size = 0x4, scoped, tag = 'scoped memory for forward.44']
    %8 = vsyncpa [#allocation3], 0
    // Predicated region
    $region2: #{forward.44} parent=1 // pred_check
      _
    $region3: #{forward.44} parent=1 // pred_check_branch
      %10 = sbr.rel (0) target = $region5
    $region4: #{forward.44} parent=1 // pred_region
      _
    $region5: #{forward.44} parent=1 // pred_fallthru
      _
    // Predicated region
    $region6: #{forward.44} parent=1 // pred_check
      _
    $region7: #{forward.44} parent=1 // pred_check_branch
      %12 = sbr.rel (0) target = $region9
    $region8: #{forward.44} parent=1 // pred_region
      _
    $region9: #{forward.44} parent=1 // pred_fallthru
      _
    // Predicated region
    $region10: #{forward.44} parent=1 // pred_check
      _
    $region11: #{forward.44} parent=1 // pred_check_branch
      %14 = sbr.rel (0) target = $region13
    $region12: #{forward.44} parent=1 // pred_region
      _
    $region13: #{forward.44} parent=1 // pred_fallthru
      _
    %v15 = vld [vmem:[%s0] sm:$0xff]
    %v16 = vld [vmem:[%s0 + $0x8] sm:$0xff]
    %v17 = vld [vmem:[%s1] sm:$0xff]
    %v18 = vld [vmem:[%s1 + $0x8] sm:$0xff]
    %v19 = vld [vmem:[%s1 + $0x10] sm:$0xff]
    %v20 = vld [vmem:[%s1 + $0x18] sm:$0xff]
    %v21 = vld [vmem:[%s1 + $0x20] sm:$0xff]
    %v22 = vld [vmem:[%s1 + $0x28] sm:$0xff]
    %v23 = vld [vmem:[%s1 + $0x30] sm:$0xff]
    %v24 = vld [vmem:[%s1 + $0x38] sm:$0xff]
    %v25 = vld [vmem:[%s1 + $0x40] sm:$0xff]
    %v26 = vld [vmem:[%s1 + $0x48] sm:$0xff]
    %v27 = vld [vmem:[%s1 + $0x50] sm:$0xff]
    %v28 = vld [vmem:[%s1 + $0x58] sm:$0xff]
    %v29 = vld [vmem:[%s1 + $0x60] sm:$0xff]
    %v30 = vld [vmem:[%s1 + $0x68] sm:$0xff]
    %v31 = vld [vmem:[%s1 + $0x70] sm:$0xff]
    %v32 = vld [vmem:[%s1 + $0x78] sm:$0xff]
    %v33 = vld [vmem:[%s2] sm:$0x1]
    %v35 = vlaneseq
    %v36 = vshrl.u32 %v35, 7
    %v37 = vsub.s32 0, %v36
    %v38 = vrot.slane %v33, %v37
    %40 = vmatprep.subr.mxu0 0.0
    %41 = vmatpush1.msra.mxu0 %v17
    %42 = vmatprep.subr.mxu0 0.0
    %43 = vmatpush1.msra.mxu0 %v18
    %44 = vmatprep.subr.mxu0 0.0
    %45 = vmatpush1.msra.mxu0 %v19
    %46 = vmatprep.subr.mxu0 0.0
    %47 = vmatpush1.msra.mxu0 %v20
    %48 = vmatprep.subr.mxu0 0.0
    %49 = vmatpush1.msra.mxu0 %v21
    %50 = vmatprep.subr.mxu0 0.0
    %51 = vmatpush1.msra.mxu0 %v22
    %52 = vmatprep.subr.mxu0 0.0
    %53 = vmatpush1.msra.mxu0 %v23
    %54 = vmatprep.subr.mxu0 0.0
    %55 = vmatpush1.msra.mxu0 %v24
    %56 = vmatprep.subr.mxu0 0.0
    %57 = vmatpush1.msra.mxu0 %v25
    %58 = vmatprep.subr.mxu0 0.0
    %59 = vmatpush1.msra.mxu0 %v26
    %60 = vmatprep.subr.mxu0 0.0
    %61 = vmatpush1.msra.mxu0 %v27
    %62 = vmatprep.subr.mxu0 0.0
    %63 = vmatpush1.msra.mxu0 %v28
    %64 = vmatprep.subr.mxu0 0.0
    %65 = vmatpush1.msra.mxu0 %v29
    %66 = vmatprep.subr.mxu0 0.0
    %67 = vmatpush1.msra.mxu0 %v30
    %68 = vmatprep.subr.mxu0 0.0
    %69 = vmatpush1.msra.mxu0 %v31
    %70 = vmatprep.subr.mxu0 0.0
    %71 = vmatpush1.msra.mxu0 %v32
    %72 = vmatprep.subr.mxu0 0.0
    %73 = vmatpush1.msra.mxu0 0.0
    %74 = vmatprep.subr.mxu0 0.0
    %75 = vmatpush1.msra.mxu0 0.0
    %76 = vmatprep.subr.mxu0 0.0
    %77 = vmatpush1.msra.mxu0 0.0
    %78 = vmatprep.subr.mxu0 0.0
    %79 = vmatpush1.msra.mxu0 0.0
    %80 = vmatprep.subr.mxu0 0.0
    %81 = vmatpush1.msra.mxu0 0.0
    %82 = vmatprep.subr.mxu0 0.0
    %83 = vmatpush1.msra.mxu0 0.0
    %84 = vmatprep.subr.mxu0 0.0
    %85 = vmatpush1.msra.mxu0 0.0
    %86 = vmatprep.subr.mxu0 0.0
    %87 = vmatpush1.msra.mxu0 0.0
    %88 = vmatprep.subr.mxu0 0.0
    %89 = vmatpush1.msra.mxu0 0.0
    %90 = vmatprep.subr.mxu0 0.0
    %91 = vmatpush1.msra.mxu0 0.0
    %92 = vmatprep.subr.mxu0 0.0
    %93 = vmatpush1.msra.mxu0 0.0
    %94 = vmatprep.subr.mxu0 0.0
    %95 = vmatpush1.msra.mxu0 0.0
    %96 = vmatprep.subr.mxu0 0.0
    %97 = vmatpush1.msra.mxu0 0.0
    %98 = vmatprep.subr.mxu0 0.0
    %99 = vmatpush1.msra.mxu0 0.0
    %100 = vmatprep.subr.mxu0 0.0
    %101 = vmatpush1.msra.mxu0 0.0
    %102 = vmatprep.subr.mxu0 0.0
    %103 = vmatpush1.msra.mxu0 0.0
    %104 = vmatprep.mubr.f32.mxu0 0.0
    %105 = vmatmul.mubr.f32.gmra.mrb[0].mxu0 %v15
    %v106 = vpop.f32.mrb[0].mxu0
    %v107 = vadd.f32 %v38, %v106
    %v108 = vpop.f32.mrb[0].mxu0
    %109 = vmatprep.mubr.f32.mxu0 0.0
    %110 = vmatmul.mubr.f32.gmra.mrb[0].mxu0 %v16
    %v111 = vpop.f32.mrb[0].mxu0
    %v112 = vadd.f32 %v38, %v111
    %v113 = vpop.f32.mrb[0].mxu0
    %114 = vdwg.mxu0
    %vm115 = vcmask 424960
    %116 = vst.msk [vmem:[#allocation2] sm:$0xff] %vm115, %v107
    %117 = vst.msk [vmem:[#allocation2 + $0x8] sm:$0xff] %vm115, %v112
    // Predicated region
    $region14: #{forward.44} parent=1 // pred_check
      _
    $region15: #{forward.44} parent=1 // pred_check_branch
      %119 = sbr.rel (0) target = $region17
    $region16: #{forward.44} parent=1 // pred_region
      %s121 = ssub.s32 256, 256
      %122 = vsyncadd [#allocation3], %s121
      %s123 = sshll.u32 [#allocation2], 4
      %s124 = int_to_ptr.vmem [resolvable:$true] %s123
      %129 = dma.vmem_to_hbm [thread:$0]  %s124, 256, %s3, [#allocation3], 128, 128, 8
    $region17: #{forward.44} parent=1 // pred_fallthru
      _
    // Predicated region
    $region18: #{forward.44} parent=1 // pred_check
      _
    $region19: #{forward.44} parent=1 // pred_check_branch
      %131 = sbr.rel (0) target = $region21
    $region20: #{forward.44} parent=1 // pred_region
      %132 = dma.done [#allocation3], 256
    $region21: #{forward.44} parent=1 // pred_fallthru
      _
    %133 = vsyncpa [#allocation3], 1

// kernel: forward.45
$region0: #{forward.45}
  #allocation0 [shape = 'u32[]', space=smem, size = 0x4, offset = 0x4, fixed_abs, tag = 'smem constant byte address 0x4 - core index']
  #allocation1 [shape = 'u32[144,128]{1,0:T(1,128)}', space=vmem, size = 0x12000, scoped, tag = 'internal scratch']
  %s0 = inlined_call_operand.vmem [shape: f32[2,64], index: 0, kind: input, shape index: {}]
  %s1 = inlined_call_operand.vmem [shape: f32[64,4], index: 1, kind: input, shape index: {}]
  %s2 = inlined_call_operand.vmem [shape: f32[1,4], index: 2, kind: input, shape index: {}]
  %s3 = inlined_call_operand.hbm [shape: f32[2,4], index: 3, kind: output, shape index: {}]
  %s4 = sld [smem:[#allocation0]]
  $region22: #{forward.45} parent=0
    _
  %s6 = ssub.s32 1, %s4
  %s7 = scalar_select 0, %s6, %s4
  $region1: #{forward.45} parent=0
    #allocation2 [shape = 'u8[1024]{0}', space=vmem, size = 0x400, scoped, tag = 'output window, operand 0, single buffered']
    #allocation3 [shape = 's32[1]{0}', space=sflag, size = 0x4, scoped, tag = 'scoped memory for forward.45']
    %8 = vsyncpa [#allocation3], 0
    // Predicated region
    $region2: #{forward.45} parent=1 // pred_check
      _
    $region3: #{forward.45} parent=1 // pred_check_branch
      %10 = sbr.rel (0) target = $region5
    $region4: #{forward.45} parent=1 // pred_region
      _
    $region5: #{forward.45} parent=1 // pred_fallthru
      _
    // Predicated region
    $region6: #{forward.45} parent=1 // pred_check
      _
    $region7: #{forward.45} parent=1 // pred_check_branch
      %12 = sbr.rel (0) target = $region9
    $region8: #{forward.45} parent=1 // pred_region
      _
    $region9: #{forward.45} parent=1 // pred_fallthru
      _
    // Predicated region
    $region10: #{forward.45} parent=1 // pred_check
      _
    $region11: #{forward.45} parent=1 // pred_check_branch
      %14 = sbr.rel (0) target = $region13
    $region12: #{forward.45} parent=1 // pred_region
      _
    $region13: #{forward.45} parent=1 // pred_fallthru
      _
    %v15 = vld [vmem:[%s0] sm:$0x3]
    %v16 = vld [vmem:[%s1] sm:$0xff]
    %v17 = vld [vmem:[%s1 + $0x8] sm:$0xff]
    %v18 = vld [vmem:[%s1 + $0x10] sm:$0xff]
    %v19 = vld [vmem:[%s1 + $0x18] sm:$0xff]
    %v20 = vld [vmem:[%s1 + $0x20] sm:$0xff]
    %v21 = vld [vmem:[%s1 + $0x28] sm:$0xff]
    %v22 = vld [vmem:[%s1 + $0x30] sm:$0xff]
    %v23 = vld [vmem:[%s1 + $0x38] sm:$0xff]
    %v24 = vld [vmem:[%s2] sm:$0x1]
    %v26 = vlaneseq
    %v27 = vshrl.u32 %v26, 7
    %v28 = vsub.s32 0, %v27
    %v29 = vrot.slane %v24, %v28
    %vm31 = vcmask 523264
    %v33 = vsel %vm31, %v15, 0
    %35 = vmatprep.subr.mxu0 0.0
    %36 = vmatpush1.msra.mxu0 %v16
    %37 = vmatprep.subr.mxu0 0.0
    %38 = vmatpush1.msra.mxu0 %v17
    %39 = vmatprep.subr.mxu0 0.0
    %40 = vmatpush1.msra.mxu0 %v18
    %41 = vmatprep.subr.mxu0 0.0
    %42 = vmatpush1.msra.mxu0 %v19
    %43 = vmatprep.subr.mxu0 0.0
    %44 = vmatpush1.msra.mxu0 %v20
    %45 = vmatprep.subr.mxu0 0.0
    %46 = vmatpush1.msra.mxu0 %v21
    %47 = vmatprep.subr.mxu0 0.0
    %48 = vmatpush1.msra.mxu0 %v22
    %49 = vmatprep.subr.mxu0 0.0
    %50 = vmatpush1.msra.mxu0 %v23
    %51 = vmatprep.subr.mxu0 0.0
    %52 = vmatpush1.msra.mxu0 0.0
    %53 = vmatprep.subr.mxu0 0.0
    %54 = vmatpush1.msra.mxu0 0.0
    %55 = vmatprep.subr.mxu0 0.0
    %56 = vmatpush1.msra.mxu0 0.0
    %57 = vmatprep.subr.mxu0 0.0
    %58 = vmatpush1.msra.mxu0 0.0
    %59 = vmatprep.subr.mxu0 0.0
    %60 = vmatpush1.msra.mxu0 0.0
    %61 = vmatprep.subr.mxu0 0.0
    %62 = vmatpush1.msra.mxu0 0.0
    %63 = vmatprep.subr.mxu0 0.0
    %64 = vmatpush1.msra.mxu0 0.0
    %65 = vmatprep.subr.mxu0 0.0
    %66 = vmatpush1.msra.mxu0 0.0
    %67 = vmatprep.subr.mxu0 0.0
    %68 = vmatpush1.msra.mxu0 0.0
    %69 = vmatprep.subr.mxu0 0.0
    %70 = vmatpush1.msra.mxu0 0.0
    %71 = vmatprep.subr.mxu0 0.0
    %72 = vmatpush1.msra.mxu0 0.0
    %73 = vmatprep.subr.mxu0 0.0
    %74 = vmatpush1.msra.mxu0 0.0
    %75 = vmatprep.subr.mxu0 0.0
    %76 = vmatpush1.msra.mxu0 0.0
    %77 = vmatprep.subr.mxu0 0.0
    %78 = vmatpush1.msra.mxu0 0.0
    %79 = vmatprep.subr.mxu0 0.0
    %80 = vmatpush1.msra.mxu0 0.0
    %81 = vmatprep.subr.mxu0 0.0
    %82 = vmatpush1.msra.mxu0 0.0
    %83 = vmatprep.subr.mxu0 0.0
    %84 = vmatpush1.msra.mxu0 0.0
    %85 = vmatprep.subr.mxu0 0.0
    %86 = vmatpush1.msra.mxu0 0.0
    %87 = vmatprep.subr.mxu0 0.0
    %88 = vmatpush1.msra.mxu0 0.0
    %89 = vmatprep.subr.mxu0 0.0
    %90 = vmatpush1.msra.mxu0 0.0
    %91 = vmatprep.subr.mxu0 0.0
    %92 = vmatpush1.msra.mxu0 0.0
    %93 = vmatprep.subr.mxu0 0.0
    %94 = vmatpush1.msra.mxu0 0.0
    %95 = vmatprep.subr.mxu0 0.0
    %96 = vmatpush1.msra.mxu0 0.0
    %97 = vmatprep.subr.mxu0 0.0
    %98 = vmatpush1.msra.mxu0 0.0
    %99 = vmatprep.mubr.f32.mxu0 0.0
    %100 = vmatmul.mubr.f32.gmra.mrb[0].mxu0 %v33
    %v101 = vpop.f32.mrb[0].mxu0
    %v102 = vadd.f32 %v29, %v101
    %v103 = vpop.f32.mrb[0].mxu0
    %104 = vdwg.mxu0
    %vm105 = vcmask 25600
    %106 = vst.msk [vmem:[#allocation2] sm:$0x3] %vm105, %v102
    // Predicated region
    $region14: #{forward.45} parent=1 // pred_check
      _
    $region15: #{forward.45} parent=1 // pred_check_branch
      %108 = sbr.rel (0) target = $region17
    $region16: #{forward.45} parent=1 // pred_region
      %s110 = ssub.s32 32, 32
      %111 = vsyncadd [#allocation3], %s110
      %s113 = sshll.u32 [#allocation2], 4
      %s114 = int_to_ptr.vmem [resolvable:$true] %s113
      %116 = dma.vmem_to_hbm [thread:$0]  %s114, 32, %s3, [#allocation3]
    $region17: #{forward.45} parent=1 // pred_fallthru
      _
    // Predicated region
    $region18: #{forward.45} parent=1 // pred_check
      _
    $region19: #{forward.45} parent=1 // pred_check_branch
      %118 = sbr.rel (0) target = $region21
    $region20: #{forward.45} parent=1 // pred_region
      %119 = dma.done [#allocation3], 32
    $region21: #{forward.45} parent=1 // pred_fallthru
      _
    %120 = vsyncpa [#allocation3], 1

</llo_original>
